<compile_context>
chip_gen: v7x
topology: tpu7x:2x2x1
jax: 0.10.0
libtpu: 0.0.40
codegen_flags: <defaults>
</compile_context>

<pallas_src>
import math

import jax
import jax.numpy as jnp
from jax import lax
from jax.experimental import pallas as pl
from jax.experimental.pallas import tpu as pltpu

_SQRT1_2 = 0.7071067811865476
_LANE = 128


def _round_up(n, m=_LANE):
    return ((n + m - 1) // m) * m


def _gelu_exact(y):
    # nn.GELU() default = exact erf-based GELU.
    return 0.5 * y * (1.0 + lax.erf(y * _SQRT1_2))


# ----------------------------------------------------------------------------
# Fused Pallas kernel: 6 x (Conv1d k=3 s=3 -> GELU), all on-chip.
# ----------------------------------------------------------------------------
def _conv_layer(a, w_ref, b_ref):
    """One Conv1d(k=3, s=3) + GELU on an in-kernel activation.

    a:      (L, C_in_p) float32 value, channels-last, L divisible by 3.
    w_ref:  (3*C_in_p, C_out_p) ref, tap-major/channel-minor flattened weight,
            stored in the compute dtype (bf16 or f32).
    b_ref:  (1, C_out_p) float32 ref.
    returns (L // 3, C_out_p) float32 value.
    """
    L, c_in = a.shape
    T = L // 3
    c_out = w_ref.shape[1]

    rows = lax.broadcasted_iota(jnp.int32, (T, L), 0)
    cols = lax.broadcasted_iota(jnp.int32, (T, L), 1)

    acc = jnp.zeros((T, c_out), jnp.float32)
    for k in range(3):  # static unroll over the 3 conv taps
        # Exact one-hot row gather of rows {3t+k} via the MXU (rows are copied,
        # all other contributions are exactly 0.0).
        sel = (cols == 3 * rows + k).astype(jnp.float32)                 # (T, L)
        xk = jnp.dot(sel, a, preferred_element_type=jnp.float32)        # (T, C_in_p)
        wk = w_ref[pl.ds(k * c_in, c_in), :]                            # (C_in_p, C_out_p)
        acc = acc + jnp.dot(xk.astype(w_ref.dtype), wk,
                            preferred_element_type=jnp.float32)
    return _gelu_exact(acc + b_ref[...])


def _fused_encoder_kernel(x_ref, *args):
    # x_ref : (1, T1, 3*C0_p)  pre-patched first-layer input (compute dtype)
    # args  : w1, b1, ..., w6, b6 refs, then the output ref (1, 1, C_last_p).
    o_ref = args[-1]
    wb = args[:-1]

    # Layer 1: the input arrives pre-patched -> one plain lane-aligned matmul.
    w1_ref, b1_ref = wb[0], wb[1]
    p = x_ref[0].astype(w1_ref.dtype)                                    # (T1, 3*C0_p)
    y = jnp.dot(p, w1_ref[...], preferred_element_type=jnp.float32) + b1_ref[...]
    a = _gelu_exact(y)

    # Layers 2..6: gather stride-3 patches in-kernel, matmul, bias, GELU.
    for i in range(1, len(wb) // 2):
        a = _conv_layer(a, wb[2 * i], wb[2 * i + 1])

    o_ref[0] = a.astype(o_ref.dtype)                                     # (1, C_last_p)


# ----------------------------------------------------------------------------
# Wrapper: layout prep + single pallas_call
# ----------------------------------------------------------------------------
def full_cnn_latent_encoder_forward(src, params, *, compute_dtype=jnp.bfloat16):
    """src: (seq, batch, d_model) -> latent: (batch, d_latent).

    params: list of 6 (w, b), w: (C_out, C_in, 3), b: (C_out,) (PyTorch Conv1d
    layout).  compute_dtype is the MXU input dtype (bf16 default, f32 exact).
    """
    n_layers = len(params)
    l_need = 3 ** n_layers
    S, B, D = src.shape
    if not (l_need <= S < 2 * l_need):
        raise ValueError(
            f"token_length must lie in [{l_need}, {2 * l_need}) so the encoder "
            f"collapses to a single position (got {S})")
    # PyTorch's stride-3 convs silently drop trailing elements; only the first
    # 3**n_layers positions can reach the single surviving output.
    src = src[:l_need]

    c_ins = [w.shape[1] for (w, _) in params]
    c_outs = [w.shape[0] for (w, _) in params]
    d_latent = c_outs[-1]
    c0_p = _round_up(c_ins[0])

    # Channels-last, zero-pad channels to a lane multiple, then pre-patch the
    # first layer:  (B, L, C0_p) -> (B, L/3, 3*C0_p)   (a free reshape).
    x = jnp.transpose(src, (1, 0, 2)).astype(jnp.float32)                # (B, L, D)
    x = jnp.pad(x, ((0, 0), (0, 0), (0, c0_p - D)))
    t1 = l_need // 3
    x_p = x.reshape(B, t1, 3 * c0_p).astype(compute_dtype)

    # Flatten + lane-pad conv weights once: (C_out, C_in, 3) ->
    # (3*C_in_p, C_out_p), tap-major / channel-minor, matching the patches.
    prepped = []
    for (w, b) in params:
        c_out, c_in, _ = w.shape
        c_in_p, c_out_p = _round_up(c_in), _round_up(c_out)
        w_pad = jnp.pad(w.astype(jnp.float32),
                        ((0, c_out_p - c_out), (0, c_in_p - c_in), (0, 0)))
        w_flat = w_pad.transpose(2, 1, 0).reshape(3 * c_in_p, c_out_p)
        w_flat = w_flat.astype(compute_dtype)
        b_pad = jnp.pad(b.astype(jnp.float32),
                        (0, c_out_p - c_out)).reshape(1, c_out_p)
        prepped.append((w_flat, b_pad))
    c_last_p = prepped[-1][1].shape[1]

    # BlockSpecs: input/output tiled over the batch grid; weights & biases use
    # constant index_maps so they stay VMEM-resident across grid steps.
    in_specs = [pl.BlockSpec((1, t1, 3 * c0_p), lambda bi: (bi, 0, 0))]
    flat_wb = []
    for (w_flat, b_pad) in prepped:
        in_specs.append(pl.BlockSpec(w_flat.shape, lambda bi: (0, 0)))
        in_specs.append(pl.BlockSpec(b_pad.shape, lambda bi: (0, 0)))
        flat_wb.extend((w_flat, b_pad))
    out_spec = pl.BlockSpec((1, 1, c_last_p), lambda bi: (bi, 0, 0))

    # Advisory cost estimate for the XLA scheduler.
    flops = 0
    transcendentals = 0
    L = l_need
    for i, (w_flat, _) in enumerate(prepped):
        k_dim, n_dim = w_flat.shape
        T = L // 3
        flops += 2 * B * T * k_dim * n_dim                 # conv matmuls
        if i > 0:
            flops += 2 * B * 3 * T * L * (k_dim // 3)      # one-hot row gathers
        transcendentals += B * T * n_dim                   # erf
        L = T
    bytes_accessed = (int(x_p.size) * x_p.dtype.itemsize
                      + sum(int(a.size) * a.dtype.itemsize for a in flat_wb)
                      + B * c_last_p * 4)
    cost = pl.CostEstimate(flops=int(flops),
                           transcendentals=int(transcendentals),
                           bytes_accessed=int(bytes_accessed))

    out = pl.pallas_call(
        _fused_encoder_kernel,
        out_shape=jax.ShapeDtypeStruct((B, 1, c_last_p), jnp.float32),
        grid=(B,),
        in_specs=in_specs,
        out_specs=out_spec,
        compiler_params=pltpu.CompilerParams(
            dimension_semantics=("parallel",),       # dual-TC sharding on v7x
            vmem_limit_bytes=48 * 1024 * 1024,       # headroom for larger d_model
        ),
        cost_estimate=cost,
    )(x_p, *flat_wb)

    return out[:, 0, :d_latent]


# ----------------------------------------------------------------------------
# Parameter construction (matches the PyTorch module's Conv1d shapes)
# ----------------------------------------------------------------------------
def make_params(key, d_model, d_latent):
    channel_pairs = [
        (d_model, d_model),
        (d_model, 512),
        (512, 256),
        (256, 256),
        (256, d_latent),
        (d_latent, d_latent),
    ]
    params = []
    for (c_in, c_out) in channel_pairs:
        key, kw, kb = jax.random.split(key, 3)
        fan_in = c_in * 3
        bound = 1.0 / math.sqrt(fan_in)  # PyTorch Conv1d default init range
        w = jax.random.uniform(kw, (c_out, c_in, 3), jnp.float32, -bound, bound)
        b = jax.random.uniform(kb, (c_out,), jnp.float32, -bound, bound)
        params.append((w, b))
    return params


# ----------------------------------------------------------------------------
# Pure-JAX reference (XLA conv) for correctness checks
# ----------------------------------------------------------------------------
def _reference_forward(src, params):
    x = jnp.transpose(src, (1, 2, 0))  # (B, C, L)
    for (w, b) in params:
        y = lax.conv_general_dilated(
            x, w, window_strides=(3,), padding="VALID",
            dimension_numbers=("NCH", "OIH", "NCH"),
        )
        y = y + b[None, :, None]
        x = 0.5 * y * (1.0 + lax.erf(y * _SQRT1_2))
    return x[:, :, 0]


if __name__ == "__main__":
    d_model = 32
    d_latent = 16
    token_length = 729   # 3**6 -> final conv length is exactly 1
    batch = 2

    key = jax.random.PRNGKey(0)
    key, k_src = jax.random.split(key)
    src = jax.random.normal(k_src, (token_length, batch, d_model), jnp.float32)
    params = make_params(key, d_model, d_latent)

    ref = jax.block_until_ready(_reference_forward(src, params))

    # Exact path (f32 MXU inputs): tight tolerance vs the XLA conv reference.
    lat_f32 = jax.block_until_ready(
        full_cnn_latent_encoder_forward(src, params, compute_dtype=jnp.float32))
    assert lat_f32.shape == (batch, d_latent), lat_f32.shape
    assert jnp.allclose(lat_f32, ref, atol=1e-4, rtol=1e-4), (
        float(jnp.max(jnp.abs(lat_f32 - ref))))

    # Fast path (bf16 MXU inputs, f32 accumulation): looser tolerance.
    lat_bf16 = jax.block_until_ready(full_cnn_latent_encoder_forward(src, params))
    assert lat_bf16.shape == (batch, d_latent), lat_bf16.shape
    assert jnp.allclose(lat_bf16, ref, atol=5e-2, rtol=5e-2), (
        float(jnp.max(jnp.abs(lat_bf16 - ref))))

    print("KERNEL_OK")
</pallas_src>

<mosaic_0001>
module attributes {stable_mosaic.version = 11 : i64} {
  func.func @_fused_encoder_kernel(%arg0: i32, %arg1: memref<1x243x384xf32, #tpu.memory_space<vmem>>, %arg2: memref<384x128xf32, #tpu.memory_space<vmem>>, %arg3: memref<1x128xf32, #tpu.memory_space<vmem>>, %arg4: memref<384x512xf32, #tpu.memory_space<vmem>>, %arg5: memref<1x512xf32, #tpu.memory_space<vmem>>, %arg6: memref<1536x256xf32, #tpu.memory_space<vmem>>, %arg7: memref<1x256xf32, #tpu.memory_space<vmem>>, %arg8: memref<768x256xf32, #tpu.memory_space<vmem>>, %arg9: memref<1x256xf32, #tpu.memory_space<vmem>>, %arg10: memref<768x128xf32, #tpu.memory_space<vmem>>, %arg11: memref<1x128xf32, #tpu.memory_space<vmem>>, %arg12: memref<384x128xf32, #tpu.memory_space<vmem>>, %arg13: memref<1x128xf32, #tpu.memory_space<vmem>>, %arg14: memref<1x1x128xf32, #tpu.memory_space<vmem>>) attributes {dimension_semantics = [#tpu.dimension_semantics<parallel>], iteration_bounds = array<i64: 2>, scalar_prefetch = 0 : i64, scratch_operands = 0 : i64, tpu.core_type = #tpu.core_type<tc>, window_params = [{transform_indices = @transform_0, window_bounds = array<i64: 1, 243, 384>}, {pipeline_mode = #tpu.pipeline_mode<synchronous>, transform_indices = @transform_1, window_bounds = array<i64: 384, 128>}, {pipeline_mode = #tpu.pipeline_mode<synchronous>, transform_indices = @transform_2, window_bounds = array<i64: 1, 128>}, {pipeline_mode = #tpu.pipeline_mode<synchronous>, transform_indices = @transform_3, window_bounds = array<i64: 384, 512>}, {pipeline_mode = #tpu.pipeline_mode<synchronous>, transform_indices = @transform_4, window_bounds = array<i64: 1, 512>}, {pipeline_mode = #tpu.pipeline_mode<synchronous>, transform_indices = @transform_5, window_bounds = array<i64: 1536, 256>}, {pipeline_mode = #tpu.pipeline_mode<synchronous>, transform_indices = @transform_6, window_bounds = array<i64: 1, 256>}, {pipeline_mode = #tpu.pipeline_mode<synchronous>, transform_indices = @transform_7, window_bounds = array<i64: 768, 256>}, {pipeline_mode = #tpu.pipeline_mode<synchronous>, transform_indices = @transform_8, window_bounds = array<i64: 1, 256>}, {pipeline_mode = #tpu.pipeline_mode<synchronous>, transform_indices = @transform_9, window_bounds = array<i64: 768, 128>}, {pipeline_mode = #tpu.pipeline_mode<synchronous>, transform_indices = @transform_10, window_bounds = array<i64: 1, 128>}, {pipeline_mode = #tpu.pipeline_mode<synchronous>, transform_indices = @transform_11, window_bounds = array<i64: 384, 128>}, {pipeline_mode = #tpu.pipeline_mode<synchronous>, transform_indices = @transform_12, window_bounds = array<i64: 1, 128>}, {transform_indices = @transform_13, window_bounds = array<i64: 1, 1, 128>}]} {
    %c0 = arith.constant 0 : index
    %c0_0 = arith.constant 0 : index
    %c0_1 = arith.constant 0 : index
    %0 = vector.load %arg1[%c0, %c0_0, %c0_1] : memref<1x243x384xf32, #tpu.memory_space<vmem>>, vector<1x243x384xf32>
    %1 = vector.shape_cast %0 : vector<1x243x384xf32> to vector<243x384xf32>
    %c0_2 = arith.constant 0 : index
    %c0_3 = arith.constant 0 : index
    %2 = vector.load %arg2[%c0_2, %c0_3] : memref<384x128xf32, #tpu.memory_space<vmem>>, vector<384x128xf32>
    %cst = arith.constant dense<0.000000e+00> : vector<243x128xf32>
    %3 = tpu.matmul %1, %2, %cst {dimension_numbers = #tpu.dot_dimension_numbers<[1], [0], [0], [1], [0, 0, 1, 1], [], []>} : vector<243x384xf32>, vector<384x128xf32>, vector<243x128xf32> -> vector<243x128xf32>
    %c0_4 = arith.constant 0 : index
    %c0_5 = arith.constant 0 : index
    %4 = vector.load %arg3[%c0_4, %c0_5] : memref<1x128xf32, #tpu.memory_space<vmem>>, vector<1x128xf32>
    %5 = vector.broadcast %4 : vector<1x128xf32> to vector<243x128xf32>
    %6 = arith.addf %3, %5 : vector<243x128xf32>
    %cst_6 = arith.constant 5.000000e-01 : f32
    %7 = vector.broadcast %cst_6 : f32 to vector<243x128xf32>
    %8 = arith.mulf %7, %6 : vector<243x128xf32>
    %cst_7 = arith.constant 0.707106769 : f32
    %9 = vector.broadcast %cst_7 : f32 to vector<243x128xf32>
    %10 = arith.mulf %6, %9 : vector<243x128xf32>
    %11 = math.erf %10 : vector<243x128xf32>
    %cst_8 = arith.constant 1.000000e+00 : f32
    %12 = vector.broadcast %cst_8 : f32 to vector<243x128xf32>
    %13 = arith.addf %12, %11 : vector<243x128xf32>
    %14 = arith.mulf %8, %13 : vector<243x128xf32>
    %15 = tpu.iota {dimensions = array<i32: 0>} : vector<81x243xi32>
    %16 = tpu.iota {dimensions = array<i32: 1>} : vector<81x243xi32>
    %cst_9 = arith.constant 0.000000e+00 : f32
    %17 = vector.broadcast %cst_9 : f32 to vector<81x512xf32>
    %c3_i32 = arith.constant 3 : i32
    %18 = vector.broadcast %c3_i32 : i32 to vector<81x243xi32>
    %19 = arith.muli %18, %15 : vector<81x243xi32>
    %c0_i32 = arith.constant 0 : i32
    %20 = vector.broadcast %c0_i32 : i32 to vector<81x243xi32>
    %21 = arith.addi %19, %20 : vector<81x243xi32>
    %22 = arith.cmpi eq, %16, %21 : vector<81x243xi32>
    %23 = arith.extui %22 : vector<81x243xi1> to vector<81x243xi32>
    %24 = arith.sitofp %23 : vector<81x243xi32> to vector<81x243xf32>
    %cst_10 = arith.constant dense<0.000000e+00> : vector<81x128xf32>
    %25 = tpu.matmul %24, %14, %cst_10 {dimension_numbers = #tpu.dot_dimension_numbers<[1], [0], [0], [1], [0, 0, 1, 1], [], []>} : vector<81x243xf32>, vector<243x128xf32>, vector<81x128xf32> -> vector<81x128xf32>
    %c0_11 = arith.constant 0 : index
    %c0_12 = arith.constant 0 : index
    %26 = vector.load %arg4[%c0_11, %c0_12] : memref<384x512xf32, #tpu.memory_space<vmem>>, vector<128x512xf32>
    %cst_13 = arith.constant dense<0.000000e+00> : vector<81x512xf32>
    %27 = tpu.matmul %25, %26, %cst_13 {dimension_numbers = #tpu.dot_dimension_numbers<[1], [0], [0], [1], [0, 0, 1, 1], [], []>} : vector<81x128xf32>, vector<128x512xf32>, vector<81x512xf32> -> vector<81x512xf32>
    %28 = arith.addf %17, %27 : vector<81x512xf32>
    %c3_i32_14 = arith.constant 3 : i32
    %29 = vector.broadcast %c3_i32_14 : i32 to vector<81x243xi32>
    %30 = arith.muli %29, %15 : vector<81x243xi32>
    %c1_i32 = arith.constant 1 : i32
    %31 = vector.broadcast %c1_i32 : i32 to vector<81x243xi32>
    %32 = arith.addi %30, %31 : vector<81x243xi32>
    %33 = arith.cmpi eq, %16, %32 : vector<81x243xi32>
    %34 = arith.extui %33 : vector<81x243xi1> to vector<81x243xi32>
    %35 = arith.sitofp %34 : vector<81x243xi32> to vector<81x243xf32>
    %cst_15 = arith.constant dense<0.000000e+00> : vector<81x128xf32>
    %36 = tpu.matmul %35, %14, %cst_15 {dimension_numbers = #tpu.dot_dimension_numbers<[1], [0], [0], [1], [0, 0, 1, 1], [], []>} : vector<81x243xf32>, vector<243x128xf32>, vector<81x128xf32> -> vector<81x128xf32>
    %c128 = arith.constant 128 : index
    %c0_16 = arith.constant 0 : index
    %37 = vector.load %arg4[%c128, %c0_16] : memref<384x512xf32, #tpu.memory_space<vmem>>, vector<128x512xf32>
    %cst_17 = arith.constant dense<0.000000e+00> : vector<81x512xf32>
    %38 = tpu.matmul %36, %37, %cst_17 {dimension_numbers = #tpu.dot_dimension_numbers<[1], [0], [0], [1], [0, 0, 1, 1], [], []>} : vector<81x128xf32>, vector<128x512xf32>, vector<81x512xf32> -> vector<81x512xf32>
    %39 = arith.addf %28, %38 : vector<81x512xf32>
    %c3_i32_18 = arith.constant 3 : i32
    %40 = vector.broadcast %c3_i32_18 : i32 to vector<81x243xi32>
    %41 = arith.muli %40, %15 : vector<81x243xi32>
    %c2_i32 = arith.constant 2 : i32
    %42 = vector.broadcast %c2_i32 : i32 to vector<81x243xi32>
    %43 = arith.addi %41, %42 : vector<81x243xi32>
    %44 = arith.cmpi eq, %16, %43 : vector<81x243xi32>
    %45 = arith.extui %44 : vector<81x243xi1> to vector<81x243xi32>
    %46 = arith.sitofp %45 : vector<81x243xi32> to vector<81x243xf32>
    %cst_19 = arith.constant dense<0.000000e+00> : vector<81x128xf32>
    %47 = tpu.matmul %46, %14, %cst_19 {dimension_numbers = #tpu.dot_dimension_numbers<[1], [0], [0], [1], [0, 0, 1, 1], [], []>} : vector<81x243xf32>, vector<243x128xf32>, vector<81x128xf32> -> vector<81x128xf32>
    %c256 = arith.constant 256 : index
    %c0_20 = arith.constant 0 : index
    %48 = vector.load %arg4[%c256, %c0_20] : memref<384x512xf32, #tpu.memory_space<vmem>>, vector<128x512xf32>
    %cst_21 = arith.constant dense<0.000000e+00> : vector<81x512xf32>
    %49 = tpu.matmul %47, %48, %cst_21 {dimension_numbers = #tpu.dot_dimension_numbers<[1], [0], [0], [1], [0, 0, 1, 1], [], []>} : vector<81x128xf32>, vector<128x512xf32>, vector<81x512xf32> -> vector<81x512xf32>
    %50 = arith.addf %39, %49 : vector<81x512xf32>
    %c0_22 = arith.constant 0 : index
    %c0_23 = arith.constant 0 : index
    %51 = vector.load %arg5[%c0_22, %c0_23] : memref<1x512xf32, #tpu.memory_space<vmem>>, vector<1x512xf32>
    %52 = vector.broadcast %51 : vector<1x512xf32> to vector<81x512xf32>
    %53 = arith.addf %50, %52 : vector<81x512xf32>
    %cst_24 = arith.constant 5.000000e-01 : f32
    %54 = vector.broadcast %cst_24 : f32 to vector<81x512xf32>
    %55 = arith.mulf %54, %53 : vector<81x512xf32>
    %cst_25 = arith.constant 0.707106769 : f32
    %56 = vector.broadcast %cst_25 : f32 to vector<81x512xf32>
    %57 = arith.mulf %53, %56 : vector<81x512xf32>
    %58 = math.erf %57 : vector<81x512xf32>
    %cst_26 = arith.constant 1.000000e+00 : f32
    %59 = vector.broadcast %cst_26 : f32 to vector<81x512xf32>
    %60 = arith.addf %59, %58 : vector<81x512xf32>
    %61 = arith.mulf %55, %60 : vector<81x512xf32>
    %62 = tpu.iota {dimensions = array<i32: 0>} : vector<27x81xi32>
    %63 = tpu.iota {dimensions = array<i32: 1>} : vector<27x81xi32>
    %cst_27 = arith.constant 0.000000e+00 : f32
    %64 = vector.broadcast %cst_27 : f32 to vector<27x256xf32>
    %c3_i32_28 = arith.constant 3 : i32
    %65 = vector.broadcast %c3_i32_28 : i32 to vector<27x81xi32>
    %66 = arith.muli %65, %62 : vector<27x81xi32>
    %c0_i32_29 = arith.constant 0 : i32
    %67 = vector.broadcast %c0_i32_29 : i32 to vector<27x81xi32>
    %68 = arith.addi %66, %67 : vector<27x81xi32>
    %69 = arith.cmpi eq, %63, %68 : vector<27x81xi32>
    %70 = arith.extui %69 : vector<27x81xi1> to vector<27x81xi32>
    %71 = arith.sitofp %70 : vector<27x81xi32> to vector<27x81xf32>
    %cst_30 = arith.constant dense<0.000000e+00> : vector<27x512xf32>
    %72 = tpu.matmul %71, %61, %cst_30 {dimension_numbers = #tpu.dot_dimension_numbers<[1], [0], [0], [1], [0, 0, 1, 1], [], []>} : vector<27x81xf32>, vector<81x512xf32>, vector<27x512xf32> -> vector<27x512xf32>
    %c0_31 = arith.constant 0 : index
    %c0_32 = arith.constant 0 : index
    %73 = vector.load %arg6[%c0_31, %c0_32] : memref<1536x256xf32, #tpu.memory_space<vmem>>, vector<512x256xf32>
    %cst_33 = arith.constant dense<0.000000e+00> : vector<27x256xf32>
    %74 = tpu.matmul %72, %73, %cst_33 {dimension_numbers = #tpu.dot_dimension_numbers<[1], [0], [0], [1], [0, 0, 1, 1], [], []>} : vector<27x512xf32>, vector<512x256xf32>, vector<27x256xf32> -> vector<27x256xf32>
    %75 = arith.addf %64, %74 : vector<27x256xf32>
    %c3_i32_34 = arith.constant 3 : i32
    %76 = vector.broadcast %c3_i32_34 : i32 to vector<27x81xi32>
    %77 = arith.muli %76, %62 : vector<27x81xi32>
    %c1_i32_35 = arith.constant 1 : i32
    %78 = vector.broadcast %c1_i32_35 : i32 to vector<27x81xi32>
    %79 = arith.addi %77, %78 : vector<27x81xi32>
    %80 = arith.cmpi eq, %63, %79 : vector<27x81xi32>
    %81 = arith.extui %80 : vector<27x81xi1> to vector<27x81xi32>
    %82 = arith.sitofp %81 : vector<27x81xi32> to vector<27x81xf32>
    %cst_36 = arith.constant dense<0.000000e+00> : vector<27x512xf32>
    %83 = tpu.matmul %82, %61, %cst_36 {dimension_numbers = #tpu.dot_dimension_numbers<[1], [0], [0], [1], [0, 0, 1, 1], [], []>} : vector<27x81xf32>, vector<81x512xf32>, vector<27x512xf32> -> vector<27x512xf32>
    %c512 = arith.constant 512 : index
    %c0_37 = arith.constant 0 : index
    %84 = vector.load %arg6[%c512, %c0_37] : memref<1536x256xf32, #tpu.memory_space<vmem>>, vector<512x256xf32>
    %cst_38 = arith.constant dense<0.000000e+00> : vector<27x256xf32>
    %85 = tpu.matmul %83, %84, %cst_38 {dimension_numbers = #tpu.dot_dimension_numbers<[1], [0], [0], [1], [0, 0, 1, 1], [], []>} : vector<27x512xf32>, vector<512x256xf32>, vector<27x256xf32> -> vector<27x256xf32>
    %86 = arith.addf %75, %85 : vector<27x256xf32>
    %c3_i32_39 = arith.constant 3 : i32
    %87 = vector.broadcast %c3_i32_39 : i32 to vector<27x81xi32>
    %88 = arith.muli %87, %62 : vector<27x81xi32>
    %c2_i32_40 = arith.constant 2 : i32
    %89 = vector.broadcast %c2_i32_40 : i32 to vector<27x81xi32>
    %90 = arith.addi %88, %89 : vector<27x81xi32>
    %91 = arith.cmpi eq, %63, %90 : vector<27x81xi32>
    %92 = arith.extui %91 : vector<27x81xi1> to vector<27x81xi32>
    %93 = arith.sitofp %92 : vector<27x81xi32> to vector<27x81xf32>
    %cst_41 = arith.constant dense<0.000000e+00> : vector<27x512xf32>
    %94 = tpu.matmul %93, %61, %cst_41 {dimension_numbers = #tpu.dot_dimension_numbers<[1], [0], [0], [1], [0, 0, 1, 1], [], []>} : vector<27x81xf32>, vector<81x512xf32>, vector<27x512xf32> -> vector<27x512xf32>
    %c1024 = arith.constant 1024 : index
    %c0_42 = arith.constant 0 : index
    %95 = vector.load %arg6[%c1024, %c0_42] : memref<1536x256xf32, #tpu.memory_space<vmem>>, vector<512x256xf32>
    %cst_43 = arith.constant dense<0.000000e+00> : vector<27x256xf32>
    %96 = tpu.matmul %94, %95, %cst_43 {dimension_numbers = #tpu.dot_dimension_numbers<[1], [0], [0], [1], [0, 0, 1, 1], [], []>} : vector<27x512xf32>, vector<512x256xf32>, vector<27x256xf32> -> vector<27x256xf32>
    %97 = arith.addf %86, %96 : vector<27x256xf32>
    %c0_44 = arith.constant 0 : index
    %c0_45 = arith.constant 0 : index
    %98 = vector.load %arg7[%c0_44, %c0_45] : memref<1x256xf32, #tpu.memory_space<vmem>>, vector<1x256xf32>
    %99 = vector.broadcast %98 : vector<1x256xf32> to vector<27x256xf32>
    %100 = arith.addf %97, %99 : vector<27x256xf32>
    %cst_46 = arith.constant 5.000000e-01 : f32
    %101 = vector.broadcast %cst_46 : f32 to vector<27x256xf32>
    %102 = arith.mulf %101, %100 : vector<27x256xf32>
    %cst_47 = arith.constant 0.707106769 : f32
    %103 = vector.broadcast %cst_47 : f32 to vector<27x256xf32>
    %104 = arith.mulf %100, %103 : vector<27x256xf32>
    %105 = math.erf %104 : vector<27x256xf32>
    %cst_48 = arith.constant 1.000000e+00 : f32
    %106 = vector.broadcast %cst_48 : f32 to vector<27x256xf32>
    %107 = arith.addf %106, %105 : vector<27x256xf32>
    %108 = arith.mulf %102, %107 : vector<27x256xf32>
    %109 = tpu.iota {dimensions = array<i32: 0>} : vector<9x27xi32>
    %110 = tpu.iota {dimensions = array<i32: 1>} : vector<9x27xi32>
    %cst_49 = arith.constant 0.000000e+00 : f32
    %111 = vector.broadcast %cst_49 : f32 to vector<9x256xf32>
    %c3_i32_50 = arith.constant 3 : i32
    %112 = vector.broadcast %c3_i32_50 : i32 to vector<9x27xi32>
    %113 = arith.muli %112, %109 : vector<9x27xi32>
    %c0_i32_51 = arith.constant 0 : i32
    %114 = vector.broadcast %c0_i32_51 : i32 to vector<9x27xi32>
    %115 = arith.addi %113, %114 : vector<9x27xi32>
    %116 = arith.cmpi eq, %110, %115 : vector<9x27xi32>
    %117 = arith.extui %116 : vector<9x27xi1> to vector<9x27xi32>
    %118 = arith.sitofp %117 : vector<9x27xi32> to vector<9x27xf32>
    %cst_52 = arith.constant dense<0.000000e+00> : vector<9x256xf32>
    %119 = tpu.matmul %118, %108, %cst_52 {dimension_numbers = #tpu.dot_dimension_numbers<[1], [0], [0], [1], [0, 0, 1, 1], [], []>} : vector<9x27xf32>, vector<27x256xf32>, vector<9x256xf32> -> vector<9x256xf32>
    %c0_53 = arith.constant 0 : index
    %c0_54 = arith.constant 0 : index
    %120 = vector.load %arg8[%c0_53, %c0_54] : memref<768x256xf32, #tpu.memory_space<vmem>>, vector<256x256xf32>
    %cst_55 = arith.constant dense<0.000000e+00> : vector<9x256xf32>
    %121 = tpu.matmul %119, %120, %cst_55 {dimension_numbers = #tpu.dot_dimension_numbers<[1], [0], [0], [1], [0, 0, 1, 1], [], []>} : vector<9x256xf32>, vector<256x256xf32>, vector<9x256xf32> -> vector<9x256xf32>
    %122 = arith.addf %111, %121 : vector<9x256xf32>
    %c3_i32_56 = arith.constant 3 : i32
    %123 = vector.broadcast %c3_i32_56 : i32 to vector<9x27xi32>
    %124 = arith.muli %123, %109 : vector<9x27xi32>
    %c1_i32_57 = arith.constant 1 : i32
    %125 = vector.broadcast %c1_i32_57 : i32 to vector<9x27xi32>
    %126 = arith.addi %124, %125 : vector<9x27xi32>
    %127 = arith.cmpi eq, %110, %126 : vector<9x27xi32>
    %128 = arith.extui %127 : vector<9x27xi1> to vector<9x27xi32>
    %129 = arith.sitofp %128 : vector<9x27xi32> to vector<9x27xf32>
    %cst_58 = arith.constant dense<0.000000e+00> : vector<9x256xf32>
    %130 = tpu.matmul %129, %108, %cst_58 {dimension_numbers = #tpu.dot_dimension_numbers<[1], [0], [0], [1], [0, 0, 1, 1], [], []>} : vector<9x27xf32>, vector<27x256xf32>, vector<9x256xf32> -> vector<9x256xf32>
    %c256_59 = arith.constant 256 : index
    %c0_60 = arith.constant 0 : index
    %131 = vector.load %arg8[%c256_59, %c0_60] : memref<768x256xf32, #tpu.memory_space<vmem>>, vector<256x256xf32>
    %cst_61 = arith.constant dense<0.000000e+00> : vector<9x256xf32>
    %132 = tpu.matmul %130, %131, %cst_61 {dimension_numbers = #tpu.dot_dimension_numbers<[1], [0], [0], [1], [0, 0, 1, 1], [], []>} : vector<9x256xf32>, vector<256x256xf32>, vector<9x256xf32> -> vector<9x256xf32>
    %133 = arith.addf %122, %132 : vector<9x256xf32>
    %c3_i32_62 = arith.constant 3 : i32
    %134 = vector.broadcast %c3_i32_62 : i32 to vector<9x27xi32>
    %135 = arith.muli %134, %109 : vector<9x27xi32>
    %c2_i32_63 = arith.constant 2 : i32
    %136 = vector.broadcast %c2_i32_63 : i32 to vector<9x27xi32>
    %137 = arith.addi %135, %136 : vector<9x27xi32>
    %138 = arith.cmpi eq, %110, %137 : vector<9x27xi32>
    %139 = arith.extui %138 : vector<9x27xi1> to vector<9x27xi32>
    %140 = arith.sitofp %139 : vector<9x27xi32> to vector<9x27xf32>
    %cst_64 = arith.constant dense<0.000000e+00> : vector<9x256xf32>
    %141 = tpu.matmul %140, %108, %cst_64 {dimension_numbers = #tpu.dot_dimension_numbers<[1], [0], [0], [1], [0, 0, 1, 1], [], []>} : vector<9x27xf32>, vector<27x256xf32>, vector<9x256xf32> -> vector<9x256xf32>
    %c512_65 = arith.constant 512 : index
    %c0_66 = arith.constant 0 : index
    %142 = vector.load %arg8[%c512_65, %c0_66] : memref<768x256xf32, #tpu.memory_space<vmem>>, vector<256x256xf32>
    %cst_67 = arith.constant dense<0.000000e+00> : vector<9x256xf32>
    %143 = tpu.matmul %141, %142, %cst_67 {dimension_numbers = #tpu.dot_dimension_numbers<[1], [0], [0], [1], [0, 0, 1, 1], [], []>} : vector<9x256xf32>, vector<256x256xf32>, vector<9x256xf32> -> vector<9x256xf32>
    %144 = arith.addf %133, %143 : vector<9x256xf32>
    %c0_68 = arith.constant 0 : index
    %c0_69 = arith.constant 0 : index
    %145 = vector.load %arg9[%c0_68, %c0_69] : memref<1x256xf32, #tpu.memory_space<vmem>>, vector<1x256xf32>
    %146 = vector.broadcast %145 : vector<1x256xf32> to vector<9x256xf32>
    %147 = arith.addf %144, %146 : vector<9x256xf32>
    %cst_70 = arith.constant 5.000000e-01 : f32
    %148 = vector.broadcast %cst_70 : f32 to vector<9x256xf32>
    %149 = arith.mulf %148, %147 : vector<9x256xf32>
    %cst_71 = arith.constant 0.707106769 : f32
    %150 = vector.broadcast %cst_71 : f32 to vector<9x256xf32>
    %151 = arith.mulf %147, %150 : vector<9x256xf32>
    %152 = math.erf %151 : vector<9x256xf32>
    %cst_72 = arith.constant 1.000000e+00 : f32
    %153 = vector.broadcast %cst_72 : f32 to vector<9x256xf32>
    %154 = arith.addf %153, %152 : vector<9x256xf32>
    %155 = arith.mulf %149, %154 : vector<9x256xf32>
    %156 = tpu.iota {dimensions = array<i32: 0>} : vector<3x9xi32>
    %157 = tpu.iota {dimensions = array<i32: 1>} : vector<3x9xi32>
    %cst_73 = arith.constant 0.000000e+00 : f32
    %158 = vector.broadcast %cst_73 : f32 to vector<3x128xf32>
    %c3_i32_74 = arith.constant 3 : i32
    %159 = vector.broadcast %c3_i32_74 : i32 to vector<3x9xi32>
    %160 = arith.muli %159, %156 : vector<3x9xi32>
    %c0_i32_75 = arith.constant 0 : i32
    %161 = vector.broadcast %c0_i32_75 : i32 to vector<3x9xi32>
    %162 = arith.addi %160, %161 : vector<3x9xi32>
    %163 = arith.cmpi eq, %157, %162 : vector<3x9xi32>
    %164 = arith.extui %163 : vector<3x9xi1> to vector<3x9xi32>
    %165 = arith.sitofp %164 : vector<3x9xi32> to vector<3x9xf32>
    %cst_76 = arith.constant dense<0.000000e+00> : vector<3x256xf32>
    %166 = tpu.matmul %165, %155, %cst_76 {dimension_numbers = #tpu.dot_dimension_numbers<[1], [0], [0], [1], [0, 0, 1, 1], [], []>} : vector<3x9xf32>, vector<9x256xf32>, vector<3x256xf32> -> vector<3x256xf32>
    %c0_77 = arith.constant 0 : index
    %c0_78 = arith.constant 0 : index
    %167 = vector.load %arg10[%c0_77, %c0_78] : memref<768x128xf32, #tpu.memory_space<vmem>>, vector<256x128xf32>
    %cst_79 = arith.constant dense<0.000000e+00> : vector<3x128xf32>
    %168 = tpu.matmul %166, %167, %cst_79 {dimension_numbers = #tpu.dot_dimension_numbers<[1], [0], [0], [1], [0, 0, 1, 1], [], []>} : vector<3x256xf32>, vector<256x128xf32>, vector<3x128xf32> -> vector<3x128xf32>
    %169 = arith.addf %158, %168 : vector<3x128xf32>
    %c3_i32_80 = arith.constant 3 : i32
    %170 = vector.broadcast %c3_i32_80 : i32 to vector<3x9xi32>
    %171 = arith.muli %170, %156 : vector<3x9xi32>
    %c1_i32_81 = arith.constant 1 : i32
    %172 = vector.broadcast %c1_i32_81 : i32 to vector<3x9xi32>
    %173 = arith.addi %171, %172 : vector<3x9xi32>
    %174 = arith.cmpi eq, %157, %173 : vector<3x9xi32>
    %175 = arith.extui %174 : vector<3x9xi1> to vector<3x9xi32>
    %176 = arith.sitofp %175 : vector<3x9xi32> to vector<3x9xf32>
    %cst_82 = arith.constant dense<0.000000e+00> : vector<3x256xf32>
    %177 = tpu.matmul %176, %155, %cst_82 {dimension_numbers = #tpu.dot_dimension_numbers<[1], [0], [0], [1], [0, 0, 1, 1], [], []>} : vector<3x9xf32>, vector<9x256xf32>, vector<3x256xf32> -> vector<3x256xf32>
    %c256_83 = arith.constant 256 : index
    %c0_84 = arith.constant 0 : index
    %178 = vector.load %arg10[%c256_83, %c0_84] : memref<768x128xf32, #tpu.memory_space<vmem>>, vector<256x128xf32>
    %cst_85 = arith.constant dense<0.000000e+00> : vector<3x128xf32>
    %179 = tpu.matmul %177, %178, %cst_85 {dimension_numbers = #tpu.dot_dimension_numbers<[1], [0], [0], [1], [0, 0, 1, 1], [], []>} : vector<3x256xf32>, vector<256x128xf32>, vector<3x128xf32> -> vector<3x128xf32>
    %180 = arith.addf %169, %179 : vector<3x128xf32>
    %c3_i32_86 = arith.constant 3 : i32
    %181 = vector.broadcast %c3_i32_86 : i32 to vector<3x9xi32>
    %182 = arith.muli %181, %156 : vector<3x9xi32>
    %c2_i32_87 = arith.constant 2 : i32
    %183 = vector.broadcast %c2_i32_87 : i32 to vector<3x9xi32>
    %184 = arith.addi %182, %183 : vector<3x9xi32>
    %185 = arith.cmpi eq, %157, %184 : vector<3x9xi32>
    %186 = arith.extui %185 : vector<3x9xi1> to vector<3x9xi32>
    %187 = arith.sitofp %186 : vector<3x9xi32> to vector<3x9xf32>
    %cst_88 = arith.constant dense<0.000000e+00> : vector<3x256xf32>
    %188 = tpu.matmul %187, %155, %cst_88 {dimension_numbers = #tpu.dot_dimension_numbers<[1], [0], [0], [1], [0, 0, 1, 1], [], []>} : vector<3x9xf32>, vector<9x256xf32>, vector<3x256xf32> -> vector<3x256xf32>
    %c512_89 = arith.constant 512 : index
    %c0_90 = arith.constant 0 : index
    %189 = vector.load %arg10[%c512_89, %c0_90] : memref<768x128xf32, #tpu.memory_space<vmem>>, vector<256x128xf32>
    %cst_91 = arith.constant dense<0.000000e+00> : vector<3x128xf32>
    %190 = tpu.matmul %188, %189, %cst_91 {dimension_numbers = #tpu.dot_dimension_numbers<[1], [0], [0], [1], [0, 0, 1, 1], [], []>} : vector<3x256xf32>, vector<256x128xf32>, vector<3x128xf32> -> vector<3x128xf32>
    %191 = arith.addf %180, %190 : vector<3x128xf32>
    %c0_92 = arith.constant 0 : index
    %c0_93 = arith.constant 0 : index
    %192 = vector.load %arg11[%c0_92, %c0_93] : memref<1x128xf32, #tpu.memory_space<vmem>>, vector<1x128xf32>
    %193 = vector.broadcast %192 : vector<1x128xf32> to vector<3x128xf32>
    %194 = arith.addf %191, %193 : vector<3x128xf32>
    %cst_94 = arith.constant 5.000000e-01 : f32
    %195 = vector.broadcast %cst_94 : f32 to vector<3x128xf32>
    %196 = arith.mulf %195, %194 : vector<3x128xf32>
    %cst_95 = arith.constant 0.707106769 : f32
    %197 = vector.broadcast %cst_95 : f32 to vector<3x128xf32>
    %198 = arith.mulf %194, %197 : vector<3x128xf32>
    %199 = math.erf %198 : vector<3x128xf32>
    %cst_96 = arith.constant 1.000000e+00 : f32
    %200 = vector.broadcast %cst_96 : f32 to vector<3x128xf32>
    %201 = arith.addf %200, %199 : vector<3x128xf32>
    %202 = arith.mulf %196, %201 : vector<3x128xf32>
    %203 = tpu.iota {dimensions = array<i32: 0>} : vector<1x3xi32>
    %204 = tpu.iota {dimensions = array<i32: 1>} : vector<1x3xi32>
    %cst_97 = arith.constant 0.000000e+00 : f32
    %205 = vector.broadcast %cst_97 : f32 to vector<1x128xf32>
    %c3_i32_98 = arith.constant 3 : i32
    %206 = vector.broadcast %c3_i32_98 : i32 to vector<1x3xi32>
    %207 = arith.muli %206, %203 : vector<1x3xi32>
    %c0_i32_99 = arith.constant 0 : i32
    %208 = vector.broadcast %c0_i32_99 : i32 to vector<1x3xi32>
    %209 = arith.addi %207, %208 : vector<1x3xi32>
    %210 = arith.cmpi eq, %204, %209 : vector<1x3xi32>
    %211 = arith.extui %210 : vector<1x3xi1> to vector<1x3xi32>
    %212 = arith.sitofp %211 : vector<1x3xi32> to vector<1x3xf32>
    %cst_100 = arith.constant dense<0.000000e+00> : vector<1x128xf32>
    %213 = tpu.matmul %212, %202, %cst_100 {dimension_numbers = #tpu.dot_dimension_numbers<[1], [0], [0], [1], [0, 0, 1, 1], [], []>} : vector<1x3xf32>, vector<3x128xf32>, vector<1x128xf32> -> vector<1x128xf32>
    %c0_101 = arith.constant 0 : index
    %c0_102 = arith.constant 0 : index
    %214 = vector.load %arg12[%c0_101, %c0_102] : memref<384x128xf32, #tpu.memory_space<vmem>>, vector<128x128xf32>
    %cst_103 = arith.constant dense<0.000000e+00> : vector<1x128xf32>
    %215 = tpu.matmul %213, %214, %cst_103 {dimension_numbers = #tpu.dot_dimension_numbers<[1], [0], [0], [1], [0, 0, 1, 1], [], []>} : vector<1x128xf32>, vector<128x128xf32>, vector<1x128xf32> -> vector<1x128xf32>
    %216 = arith.addf %205, %215 : vector<1x128xf32>
    %c3_i32_104 = arith.constant 3 : i32
    %217 = vector.broadcast %c3_i32_104 : i32 to vector<1x3xi32>
    %218 = arith.muli %217, %203 : vector<1x3xi32>
    %c1_i32_105 = arith.constant 1 : i32
    %219 = vector.broadcast %c1_i32_105 : i32 to vector<1x3xi32>
    %220 = arith.addi %218, %219 : vector<1x3xi32>
    %221 = arith.cmpi eq, %204, %220 : vector<1x3xi32>
    %222 = arith.extui %221 : vector<1x3xi1> to vector<1x3xi32>
    %223 = arith.sitofp %222 : vector<1x3xi32> to vector<1x3xf32>
    %cst_106 = arith.constant dense<0.000000e+00> : vector<1x128xf32>
    %224 = tpu.matmul %223, %202, %cst_106 {dimension_numbers = #tpu.dot_dimension_numbers<[1], [0], [0], [1], [0, 0, 1, 1], [], []>} : vector<1x3xf32>, vector<3x128xf32>, vector<1x128xf32> -> vector<1x128xf32>
    %c128_107 = arith.constant 128 : index
    %c0_108 = arith.constant 0 : index
    %225 = vector.load %arg12[%c128_107, %c0_108] : memref<384x128xf32, #tpu.memory_space<vmem>>, vector<128x128xf32>
    %cst_109 = arith.constant dense<0.000000e+00> : vector<1x128xf32>
    %226 = tpu.matmul %224, %225, %cst_109 {dimension_numbers = #tpu.dot_dimension_numbers<[1], [0], [0], [1], [0, 0, 1, 1], [], []>} : vector<1x128xf32>, vector<128x128xf32>, vector<1x128xf32> -> vector<1x128xf32>
    %227 = arith.addf %216, %226 : vector<1x128xf32>
    %c3_i32_110 = arith.constant 3 : i32
    %228 = vector.broadcast %c3_i32_110 : i32 to vector<1x3xi32>
    %229 = arith.muli %228, %203 : vector<1x3xi32>
    %c2_i32_111 = arith.constant 2 : i32
    %230 = vector.broadcast %c2_i32_111 : i32 to vector<1x3xi32>
    %231 = arith.addi %229, %230 : vector<1x3xi32>
    %232 = arith.cmpi eq, %204, %231 : vector<1x3xi32>
    %233 = arith.extui %232 : vector<1x3xi1> to vector<1x3xi32>
    %234 = arith.sitofp %233 : vector<1x3xi32> to vector<1x3xf32>
    %cst_112 = arith.constant dense<0.000000e+00> : vector<1x128xf32>
    %235 = tpu.matmul %234, %202, %cst_112 {dimension_numbers = #tpu.dot_dimension_numbers<[1], [0], [0], [1], [0, 0, 1, 1], [], []>} : vector<1x3xf32>, vector<3x128xf32>, vector<1x128xf32> -> vector<1x128xf32>
    %c256_113 = arith.constant 256 : index
    %c0_114 = arith.constant 0 : index
    %236 = vector.load %arg12[%c256_113, %c0_114] : memref<384x128xf32, #tpu.memory_space<vmem>>, vector<128x128xf32>
    %cst_115 = arith.constant dense<0.000000e+00> : vector<1x128xf32>
    %237 = tpu.matmul %235, %236, %cst_115 {dimension_numbers = #tpu.dot_dimension_numbers<[1], [0], [0], [1], [0, 0, 1, 1], [], []>} : vector<1x128xf32>, vector<128x128xf32>, vector<1x128xf32> -> vector<1x128xf32>
    %238 = arith.addf %227, %237 : vector<1x128xf32>
    %c0_116 = arith.constant 0 : index
    %c0_117 = arith.constant 0 : index
    %239 = vector.load %arg13[%c0_116, %c0_117] : memref<1x128xf32, #tpu.memory_space<vmem>>, vector<1x128xf32>
    %240 = arith.addf %238, %239 : vector<1x128xf32>
    %cst_118 = arith.constant 5.000000e-01 : f32
    %241 = vector.broadcast %cst_118 : f32 to vector<1x128xf32>
    %242 = arith.mulf %241, %240 : vector<1x128xf32>
    %cst_119 = arith.constant 0.707106769 : f32
    %243 = vector.broadcast %cst_119 : f32 to vector<1x128xf32>
    %244 = arith.mulf %240, %243 : vector<1x128xf32>
    %245 = math.erf %244 : vector<1x128xf32>
    %cst_120 = arith.constant 1.000000e+00 : f32
    %246 = vector.broadcast %cst_120 : f32 to vector<1x128xf32>
    %247 = arith.addf %246, %245 : vector<1x128xf32>
    %248 = arith.mulf %242, %247 : vector<1x128xf32>
    %c0_121 = arith.constant 0 : index
    %c0_122 = arith.constant 0 : index
    %c0_123 = arith.constant 0 : index
    %249 = vector.load %arg14[%c0_121, %c0_122, %c0_123] : memref<1x1x128xf32, #tpu.memory_space<vmem>>, vector<1x1x128xf32>
    %250 = vector.shape_cast %249 : vector<1x1x128xf32> to vector<1x128xf32>
    %251 = vector.shape_cast %248 : vector<1x128xf32> to vector<1x1x128xf32>
    tpu.vector_store %arg14[%c0_121, %c0_122, %c0_123], %251 {strides = array<i32>} : memref<1x1x128xf32, #tpu.memory_space<vmem>>, vector<1x1x128xf32>,
    return
  }
  func.func @transform_0(%arg0: i32) -> (i32, i32, i32) {
    %c0_i32 = arith.constant 0 : i32
    %c0_i32_0 = arith.constant 0 : i32
    %c0_i32_1 = arith.constant 0 : i32
    return %arg0, %c0_i32, %c0_i32_0 : i32, i32, i32
  }
  func.func @transform_1(%arg0: i32) -> (i32, i32) {
    %c0_i32 = arith.constant 0 : i32
    %c0_i32_0 = arith.constant 0 : i32
    %c0_i32_1 = arith.constant 0 : i32
    return %c0_i32, %c0_i32_0 : i32, i32
  }
  func.func @transform_2(%arg0: i32) -> (i32, i32) {
    %c0_i32 = arith.constant 0 : i32
    %c0_i32_0 = arith.constant 0 : i32
    %c0_i32_1 = arith.constant 0 : i32
    return %c0_i32, %c0_i32_0 : i32, i32
  }
  func.func @transform_3(%arg0: i32) -> (i32, i32) {
    %c0_i32 = arith.constant 0 : i32
    %c0_i32_0 = arith.constant 0 : i32
    %c0_i32_1 = arith.constant 0 : i32
    return %c0_i32, %c0_i32_0 : i32, i32
  }
  func.func @transform_4(%arg0: i32) -> (i32, i32) {
    %c0_i32 = arith.constant 0 : i32
    %c0_i32_0 = arith.constant 0 : i32
    %c0_i32_1 = arith.constant 0 : i32
    return %c0_i32, %c0_i32_0 : i32, i32
  }
  func.func @transform_5(%arg0: i32) -> (i32, i32) {
    %c0_i32 = arith.constant 0 : i32
    %c0_i32_0 = arith.constant 0 : i32
    %c0_i32_1 = arith.constant 0 : i32
    return %c0_i32, %c0_i32_0 : i32, i32
  }
  func.func @transform_6(%arg0: i32) -> (i32, i32) {
    %c0_i32 = arith.constant 0 : i32
    %c0_i32_0 = arith.constant 0 : i32
    %c0_i32_1 = arith.constant 0 : i32
    return %c0_i32, %c0_i32_0 : i32, i32
  }
  func.func @transform_7(%arg0: i32) -> (i32, i32) {
    %c0_i32 = arith.constant 0 : i32
    %c0_i32_0 = arith.constant 0 : i32
    %c0_i32_1 = arith.constant 0 : i32
    return %c0_i32, %c0_i32_0 : i32, i32
  }
  func.func @transform_8(%arg0: i32) -> (i32, i32) {
    %c0_i32 = arith.constant 0 : i32
    %c0_i32_0 = arith.constant 0 : i32
    %c0_i32_1 = arith.constant 0 : i32
    return %c0_i32, %c0_i32_0 : i32, i32
  }
  func.func @transform_9(%arg0: i32) -> (i32, i32) {
    %c0_i32 = arith.constant 0 : i32
    %c0_i32_0 = arith.constant 0 : i32
    %c0_i32_1 = arith.constant 0 : i32
    return %c0_i32, %c0_i32_0 : i32, i32
  }
  func.func @transform_10(%arg0: i32) -> (i32, i32) {
    %c0_i32 = arith.constant 0 : i32
    %c0_i32_0 = arith.constant 0 : i32
    %c0_i32_1 = arith.constant 0 : i32
    return %c0_i32, %c0_i32_0 : i32, i32
  }
  func.func @transform_11(%arg0: i32) -> (i32, i32) {
    %c0_i32 = arith.constant 0 : i32
    %c0_i32_0 = arith.constant 0 : i32
    %c0_i32_1 = arith.constant 0 : i32
    return %c0_i32, %c0_i32_0 : i32, i32
  }
  func.func @transform_12(%arg0: i32) -> (i32, i32) {
    %c0_i32 = arith.constant 0 : i32
    %c0_i32_0 = arith.constant 0 : i32
    %c0_i32_1 = arith.constant 0 : i32
    return %c0_i32, %c0_i32_0 : i32, i32
  }
  func.func @transform_13(%arg0: i32) -> (i32, i32, i32) {
    %c0_i32 = arith.constant 0 : i32
    %c0_i32_0 = arith.constant 0 : i32
    %c0_i32_1 = arith.constant 0 : i32
    return %arg0, %c0_i32, %c0_i32_0 : i32, i32, i32
  }
}

</mosaic_0001>

<llo_original>
// kernel: tpu_custom_call.1
$region0: #{tpu_custom_call.1}
  #allocation0 [shape = 'u32[]', space=smem, size = 0x4, offset = 0x4, fixed_abs, tag = 'smem constant byte address 0x4 - core index']
  #allocation1 [shape = 'u32[144,128]{1,0:T(1,128)}', space=vmem, size = 0x12000, scoped, tag = 'internal scratch']
  %s0 = inlined_call_operand.vmem [shape: f32[2,243,384], index: 0, kind: input, shape index: {}]
  %s1 = inlined_call_operand.vmem [shape: f32[384,128], index: 1, kind: input, shape index: {}]
  %s2 = inlined_call_operand.hbm [shape: f32[1,128], index: 2, kind: input, shape index: {}]
  %s3 = inlined_call_operand.vmem [shape: f32[384,512], index: 3, kind: input, shape index: {}]
  %s4 = inlined_call_operand.hbm [shape: f32[1,512], index: 4, kind: input, shape index: {}]
  %s5 = inlined_call_operand.hbm [shape: f32[1536,256], index: 5, kind: input, shape index: {}]
  %s6 = inlined_call_operand.hbm [shape: f32[1,256], index: 6, kind: input, shape index: {}]
  %s7 = inlined_call_operand.hbm [shape: f32[768,256], index: 7, kind: input, shape index: {}]
  %s8 = inlined_call_operand.hbm [shape: f32[1,256], index: 8, kind: input, shape index: {}]
  %s9 = inlined_call_operand.vmem [shape: f32[768,128], index: 9, kind: input, shape index: {}]
  %s10 = inlined_call_operand.hbm [shape: f32[1,128], index: 10, kind: input, shape index: {}]
  %s11 = inlined_call_operand.hbm [shape: f32[384,128], index: 11, kind: input, shape index: {}]
  %s12 = inlined_call_operand.hbm [shape: f32[1,128], index: 12, kind: input, shape index: {}]
  %s13 = inlined_call_operand.hbm [shape: f32[2,1,128], index: 13, kind: output, shape index: {}]
  %s14 = sld [smem:[#allocation0]]
  $region121: #{tpu_custom_call.1} parent=0
    _
  %s16 = ssub.s32 1, %s14
  %s17 = scalar_select 0, %s16, %s14
  $region1: #{tpu_custom_call.1} parent=0
    #allocation2 [shape = 'u8[512]{0}', space=vmem, size = 0x400, scoped, tag = 'input window, operand 2, single buffered']
    #allocation3 [shape = 's32[2]{0}', space=sflag, size = 0x8, scoped, tag = 'scoped memory for tpu_custom_call.1']
    #allocation4 [shape = 's32[2]{0}', space=sflag, size = 0x8, scoped, tag = 'scoped memory for tpu_custom_call.1']
    #allocation5 [shape = 'u8[2048]{0}', space=vmem, size = 0x800, scoped, tag = 'input window, operand 4, single buffered']
    #allocation6 [shape = 's32[1]{0}', space=sflag, size = 0x4, scoped, tag = 'scoped memory for tpu_custom_call.1']
    #allocation7 [shape = 'u8[1572864]{0}', space=vmem, size = 0x180000, scoped, tag = 'input window, operand 5, single buffered']
    #allocation8 [shape = 'u8[1024]{0}', space=vmem, size = 0x400, scoped, tag = 'input window, operand 6, single buffered']
    #allocation9 [shape = 's32[1]{0}', space=sflag, size = 0x4, scoped, tag = 'scoped memory for tpu_custom_call.1']
    #allocation10 [shape = 'u8[786432]{0}', space=vmem, size = 0xc0000, scoped, tag = 'input window, operand 7, single buffered']
    #allocation11 [shape = 'u8[1024]{0}', space=vmem, size = 0x400, scoped, tag = 'input window, operand 8, single buffered']
    #allocation12 [shape = 's32[1]{0}', space=sflag, size = 0x4, scoped, tag = 'scoped memory for tpu_custom_call.1']
    #allocation13 [shape = 'u8[512]{0}', space=vmem, size = 0x400, scoped, tag = 'input window, operand 10, single buffered']
    #allocation14 [shape = 'u8[196608]{0}', space=vmem, size = 0x30000, scoped, tag = 'input window, operand 11, single buffered']
    #allocation15 [shape = 's32[1]{0}', space=sflag, size = 0x4, scoped, tag = 'scoped memory for tpu_custom_call.1']
    #allocation16 [shape = 'u8[512]{0}', space=vmem, size = 0x400, scoped, tag = 'input window, operand 12, single buffered']
    #allocation17 [shape = 'u8[1024]{0}', space=vmem, size = 0x400, scoped, tag = 'output window, operand 0']
    %18 = vsyncpa [#allocation3], 0
    %19 = vsyncpa [#allocation6], 0
    %20 = vsyncpa [#allocation9], 0
    %21 = vsyncpa [#allocation12], 0
    %22 = vsyncpa [#allocation15], 0
    %23 = vsyncpa [#allocation4], 0
    %s24 = scalar_lea.sflag [#allocation4], 1
    %25 = vsyncpa %s24, 0
    loop: start=0, step=1, limit=4
    $region2: #{tpu_custom_call.1} parent=1 // loop_pre_header
      _
    $region3: #{tpu_custom_call.1} parent=1 // loop_header
      %s27 = sphi 0, %s31
      %p28 = scmp.ge.s32.totalorder %s27, 4
      %s37 = sphi 0, %s39
      %s40 = sphi 0, %s37
      %s41 = sphi 0, %s40
      %s57 = sphi 0, %s41
      %s61 = sphi 0, %s61
      %s63 = sphi 0, %s61
      %s64 = sphi 0, %s63
      %s78 = sphi 0, %s64
      %s82 = sphi 0, %s82
      %s84 = sphi 0, %s82
      %s85 = sphi 0, %s84
      %s99 = sphi 0, %s85
      %s103 = sphi 0, %s103
      %s105 = sphi 0, %s103
      %s106 = sphi 0, %s105
      %s120 = sphi 0, %s106
      %s124 = sphi 0, %s124
      %s126 = sphi 0, %s124
      %s127 = sphi 0, %s126
      %s141 = sphi 0, %s127
      %s145 = sphi 0, %s145
      %s147 = sphi 0, %s145
      %s148 = sphi 0, %s147
      %s162 = sphi 0, %s148
      %s166 = sphi 0, %s166
      %s168 = sphi 0, %s166
      %s169 = sphi 0, %s168
      %s183 = sphi 0, %s169
      %s187 = sphi 0, %s187
      %s189 = sphi 0, %s187
      %s190 = sphi 0, %s189
      %s204 = sphi 0, %s190
      %s208 = sphi 0, %s208
      %s210 = sphi 0, %s208
      %s211 = sphi 0, %s210
      %s225 = sphi 0, %s211
      %s229 = sphi 0, %s229
      %s231 = sphi 0, %s229
      %s232 = sphi 0, %s231
      %s246 = sphi 0, %s232
      %s250 = sphi 0, %s250
      %s252 = sphi 0, %s250
      %s253 = sphi 0, %s252
      %s267 = sphi 0, %s253
      %s271 = sphi 0, %s271
      %s273 = sphi 0, %s271
      %s274 = sphi 0, %s273
      %s288 = sphi 0, %s274
      %s292 = sphi 0, %s292
      %s294 = sphi 0, %s292
      %s295 = sphi 0, %s294
      %s309 = sphi 0, %s295
      %s315 = sphi 0, %s317
      %s318 = sphi 0, %s315
      %s319 = sphi 0, %s318
      %s335 = sphi 0, %s319
    $region4: #{tpu_custom_call.1} parent=1 // loop_header_branch
      %30 = sbr.rel (%p28) target = $region8
    $region5: #{tpu_custom_call.1} parent=1 // loop_body
      %s32 = ssub.s32 %s27, 1
      %s33 = ssub.s32 %s27, 2
      %s34 = sadd.s32 %s27, 1
      %s35 = ssub.s32 %s27, %s34
      %p36 = scmp.eq.s32.totalorder %s35, 0
      %s38 = sadd.s32 %s37, 1
      %s39 = scalar_select %p36, %s37, %s38
      %p42 = pneg %p36
      %p43 = scmp.eq.s32.totalorder %s27, 1
      %p44 = por %p42, %p43
      %p45 = scmp.ne.s32.totalorder %s37, %s40
      %p46 = scmp.eq.s32.totalorder %s27, 0
      %p47 = por %p45, %p46
      %p48 = scmp.ne.s32.totalorder %s37, %s40
      %p49 = scmp.eq.s32.totalorder %s32, 1
      %p50 = por %p48, %p49
      %p51 = scmp.ne.s32.totalorder %s40, %s41
      %p52 = scmp.eq.s32.totalorder %s32, 0
      %p53 = por %p51, %p52
      %p54 = scmp.ne.s32.totalorder %s40, %s41
      %p55 = scmp.eq.s32.totalorder %s33, 1
      %p56 = por %p54, %p55
      %p58 = scmp.ne.s32.totalorder %s41, %s57
      %p59 = scmp.eq.s32.totalorder %s33, 0
      %p60 = por %p58, %p59
      %s62 = sadd.s32 %s61, 1
      %p65 = scmp.eq.s32.totalorder %s27, 1
      %p66 = scmp.ne.s32.totalorder %s61, %s63
      %p67 = scmp.eq.s32.totalorder %s27, 0
      %p68 = por %p66, %p67
      %p69 = scmp.ne.s32.totalorder %s61, %s63
      %p70 = scmp.eq.s32.totalorder %s32, 1
      %p71 = por %p69, %p70
      %p72 = scmp.ne.s32.totalorder %s63, %s64
      %p73 = scmp.eq.s32.totalorder %s32, 0
      %p74 = por %p72, %p73
      %p75 = scmp.ne.s32.totalorder %s63, %s64
      %p76 = scmp.eq.s32.totalorder %s33, 1
      %p77 = por %p75, %p76
      %p79 = scmp.ne.s32.totalorder %s64, %s78
      %p80 = scmp.eq.s32.totalorder %s33, 0
      %p81 = por %p79, %p80
      %s83 = sadd.s32 %s82, 1
      %p86 = scmp.eq.s32.totalorder %s27, 1
      %p87 = scmp.ne.s32.totalorder %s82, %s84
      %p88 = scmp.eq.s32.totalorder %s27, 0
      %p89 = por %p87, %p88
      %p90 = scmp.ne.s32.totalorder %s82, %s84
      %p91 = scmp.eq.s32.totalorder %s32, 1
      %p92 = por %p90, %p91
      %p93 = scmp.ne.s32.totalorder %s84, %s85
      %p94 = scmp.eq.s32.totalorder %s32, 0
      %p95 = por %p93, %p94
      %p96 = scmp.ne.s32.totalorder %s84, %s85
      %p97 = scmp.eq.s32.totalorder %s33, 1
      %p98 = por %p96, %p97
      %p100 = scmp.ne.s32.totalorder %s85, %s99
      %p101 = scmp.eq.s32.totalorder %s33, 0
      %p102 = por %p100, %p101
      %s104 = sadd.s32 %s103, 1
      %p107 = scmp.eq.s32.totalorder %s27, 1
      %p108 = scmp.ne.s32.totalorder %s103, %s105
      %p109 = scmp.eq.s32.totalorder %s27, 0
      %p110 = por %p108, %p109
      %p111 = scmp.ne.s32.totalorder %s103, %s105
      %p112 = scmp.eq.s32.totalorder %s32, 1
      %p113 = por %p111, %p112
      %p114 = scmp.ne.s32.totalorder %s105, %s106
      %p115 = scmp.eq.s32.totalorder %s32, 0
      %p116 = por %p114, %p115
      %p117 = scmp.ne.s32.totalorder %s105, %s106
      %p118 = scmp.eq.s32.totalorder %s33, 1
      %p119 = por %p117, %p118
      %p121 = scmp.ne.s32.totalorder %s106, %s120
      %p122 = scmp.eq.s32.totalorder %s33, 0
      %p123 = por %p121, %p122
      %s125 = sadd.s32 %s124, 1
      %p128 = scmp.eq.s32.totalorder %s27, 1
      %p129 = scmp.ne.s32.totalorder %s124, %s126
      %p130 = scmp.eq.s32.totalorder %s27, 0
      %p131 = por %p129, %p130
      %p132 = scmp.ne.s32.totalorder %s124, %s126
      %p133 = scmp.eq.s32.totalorder %s32, 1
      %p134 = por %p132, %p133
      %p135 = scmp.ne.s32.totalorder %s126, %s127
      %p136 = scmp.eq.s32.totalorder %s32, 0
      %p137 = por %p135, %p136
      %p138 = scmp.ne.s32.totalorder %s126, %s127
      %p139 = scmp.eq.s32.totalorder %s33, 1
      %p140 = por %p138, %p139
      %p142 = scmp.ne.s32.totalorder %s127, %s141
      %p143 = scmp.eq.s32.totalorder %s33, 0
      %p144 = por %p142, %p143
      %s146 = sadd.s32 %s145, 1
      %p149 = scmp.eq.s32.totalorder %s27, 1
      %p150 = scmp.ne.s32.totalorder %s145, %s147
      %p151 = scmp.eq.s32.totalorder %s27, 0
      %p152 = por %p150, %p151
      %p153 = scmp.ne.s32.totalorder %s145, %s147
      %p154 = scmp.eq.s32.totalorder %s32, 1
      %p155 = por %p153, %p154
      %p156 = scmp.ne.s32.totalorder %s147, %s148
      %p157 = scmp.eq.s32.totalorder %s32, 0
      %p158 = por %p156, %p157
      %p159 = scmp.ne.s32.totalorder %s147, %s148
      %p160 = scmp.eq.s32.totalorder %s33, 1
      %p161 = por %p159, %p160
      %p163 = scmp.ne.s32.totalorder %s148, %s162
      %p164 = scmp.eq.s32.totalorder %s33, 0
      %p165 = por %p163, %p164
      %s167 = sadd.s32 %s166, 1
      %p170 = scmp.eq.s32.totalorder %s27, 1
      %p171 = scmp.ne.s32.totalorder %s166, %s168
      %p172 = scmp.eq.s32.totalorder %s27, 0
      %p173 = por %p171, %p172
      %p174 = scmp.ne.s32.totalorder %s166, %s168
      %p175 = scmp.eq.s32.totalorder %s32, 1
      %p176 = por %p174, %p175
      %p177 = scmp.ne.s32.totalorder %s168, %s169
      %p178 = scmp.eq.s32.totalorder %s32, 0
      %p179 = por %p177, %p178
      %p180 = scmp.ne.s32.totalorder %s168, %s169
      %p181 = scmp.eq.s32.totalorder %s33, 1
      %p182 = por %p180, %p181
      %p184 = scmp.ne.s32.totalorder %s169, %s183
      %p185 = scmp.eq.s32.totalorder %s33, 0
      %p186 = por %p184, %p185
      %s188 = sadd.s32 %s187, 1
      %p191 = scmp.eq.s32.totalorder %s27, 1
      %p192 = scmp.ne.s32.totalorder %s187, %s189
      %p193 = scmp.eq.s32.totalorder %s27, 0
      %p194 = por %p192, %p193
      %p195 = scmp.ne.s32.totalorder %s187, %s189
      %p196 = scmp.eq.s32.totalorder %s32, 1
      %p197 = por %p195, %p196
      %p198 = scmp.ne.s32.totalorder %s189, %s190
      %p199 = scmp.eq.s32.totalorder %s32, 0
      %p200 = por %p198, %p199
      %p201 = scmp.ne.s32.totalorder %s189, %s190
      %p202 = scmp.eq.s32.totalorder %s33, 1
      %p203 = por %p201, %p202
      %p205 = scmp.ne.s32.totalorder %s190, %s204
      %p206 = scmp.eq.s32.totalorder %s33, 0
      %p207 = por %p205, %p206
      %s209 = sadd.s32 %s208, 1
      %p212 = scmp.eq.s32.totalorder %s27, 1
      %p213 = scmp.ne.s32.totalorder %s208, %s210
      %p214 = scmp.eq.s32.totalorder %s27, 0
      %p215 = por %p213, %p214
      %p216 = scmp.ne.s32.totalorder %s208, %s210
      %p217 = scmp.eq.s32.totalorder %s32, 1
      %p218 = por %p216, %p217
      %p219 = scmp.ne.s32.totalorder %s210, %s211
      %p220 = scmp.eq.s32.totalorder %s32, 0
      %p221 = por %p219, %p220
      %p222 = scmp.ne.s32.totalorder %s210, %s211
      %p223 = scmp.eq.s32.totalorder %s33, 1
      %p224 = por %p222, %p223
      %p226 = scmp.ne.s32.totalorder %s211, %s225
      %p227 = scmp.eq.s32.totalorder %s33, 0
      %p228 = por %p226, %p227
      %s230 = sadd.s32 %s229, 1
      %p233 = scmp.eq.s32.totalorder %s27, 1
      %p234 = scmp.ne.s32.totalorder %s229, %s231
      %p235 = scmp.eq.s32.totalorder %s27, 0
      %p236 = por %p234, %p235
      %p237 = scmp.ne.s32.totalorder %s229, %s231
      %p238 = scmp.eq.s32.totalorder %s32, 1
      %p239 = por %p237, %p238
      %p240 = scmp.ne.s32.totalorder %s231, %s232
      %p241 = scmp.eq.s32.totalorder %s32, 0
      %p242 = por %p240, %p241
      %p243 = scmp.ne.s32.totalorder %s231, %s232
      %p244 = scmp.eq.s32.totalorder %s33, 1
      %p245 = por %p243, %p244
      %p247 = scmp.ne.s32.totalorder %s232, %s246
      %p248 = scmp.eq.s32.totalorder %s33, 0
      %p249 = por %p247, %p248
      %s251 = sadd.s32 %s250, 1
      %p254 = scmp.eq.s32.totalorder %s27, 1
      %p255 = scmp.ne.s32.totalorder %s250, %s252
      %p256 = scmp.eq.s32.totalorder %s27, 0
      %p257 = por %p255, %p256
      %p258 = scmp.ne.s32.totalorder %s250, %s252
      %p259 = scmp.eq.s32.totalorder %s32, 1
      %p260 = por %p258, %p259
      %p261 = scmp.ne.s32.totalorder %s252, %s253
      %p262 = scmp.eq.s32.totalorder %s32, 0
      %p263 = por %p261, %p262
      %p264 = scmp.ne.s32.totalorder %s252, %s253
      %p265 = scmp.eq.s32.totalorder %s33, 1
      %p266 = por %p264, %p265
      %p268 = scmp.ne.s32.totalorder %s253, %s267
      %p269 = scmp.eq.s32.totalorder %s33, 0
      %p270 = por %p268, %p269
      %s272 = sadd.s32 %s271, 1
      %p275 = scmp.eq.s32.totalorder %s27, 1
      %p276 = scmp.ne.s32.totalorder %s271, %s273
      %p277 = scmp.eq.s32.totalorder %s27, 0
      %p278 = por %p276, %p277
      %p279 = scmp.ne.s32.totalorder %s271, %s273
      %p280 = scmp.eq.s32.totalorder %s32, 1
      %p281 = por %p279, %p280
      %p282 = scmp.ne.s32.totalorder %s273, %s274
      %p283 = scmp.eq.s32.totalorder %s32, 0
      %p284 = por %p282, %p283
      %p285 = scmp.ne.s32.totalorder %s273, %s274
      %p286 = scmp.eq.s32.totalorder %s33, 1
      %p287 = por %p285, %p286
      %p289 = scmp.ne.s32.totalorder %s274, %s288
      %p290 = scmp.eq.s32.totalorder %s33, 0
      %p291 = por %p289, %p290
      %s293 = sadd.s32 %s292, 1
      %p296 = scmp.eq.s32.totalorder %s27, 1
      %p297 = scmp.ne.s32.totalorder %s292, %s294
      %p298 = scmp.eq.s32.totalorder %s27, 0
      %p299 = por %p297, %p298
      %p300 = scmp.ne.s32.totalorder %s292, %s294
      %p301 = scmp.eq.s32.totalorder %s32, 1
      %p302 = por %p300, %p301
      %p303 = scmp.ne.s32.totalorder %s294, %s295
      %p304 = scmp.eq.s32.totalorder %s32, 0
      %p305 = por %p303, %p304
      %p306 = scmp.ne.s32.totalorder %s294, %s295
      %p307 = scmp.eq.s32.totalorder %s33, 1
      %p308 = por %p306, %p307
      %p310 = scmp.ne.s32.totalorder %s295, %s309
      %p311 = scmp.eq.s32.totalorder %s33, 0
      %p312 = por %p310, %p311
      %s313 = ssub.s32 %s27, %s34
      %p314 = scmp.eq.s32.totalorder %s313, 0
      %s316 = sadd.s32 %s315, 1
      %s317 = scalar_select %p314, %s315, %s316
      %p320 = pneg %p314
      %p321 = scmp.eq.s32.totalorder %s27, 1
      %p322 = por %p320, %p321
      %p323 = scmp.ne.s32.totalorder %s315, %s318
      %p324 = scmp.eq.s32.totalorder %s27, 0
      %p325 = por %p323, %p324
      %p326 = scmp.ne.s32.totalorder %s315, %s318
      %p327 = scmp.eq.s32.totalorder %s32, 1
      %p328 = por %p326, %p327
      %p329 = scmp.ne.s32.totalorder %s318, %s319
      %p330 = scmp.eq.s32.totalorder %s32, 0
      %p331 = por %p329, %p330
      %p332 = scmp.ne.s32.totalorder %s318, %s319
      %p333 = scmp.eq.s32.totalorder %s33, 1
      %p334 = por %p332, %p333
      %p336 = scmp.ne.s32.totalorder %s319, %s335
      %p337 = scmp.eq.s32.totalorder %s33, 0
      %p338 = por %p336, %p337
      %p339 = scmp.le.s32.totalorder 1, %s27
      %p340 = scmp.lt.s32.totalorder %s27, 3
      %p341 = pnand %p339, %p340
      %p342 = pneg %p341
      // Predicated region
      $region9: #{tpu_custom_call.1} parent=5 // pred_check
        _
      $region10: #{tpu_custom_call.1} parent=5 // pred_check_branch
        %344 = sbr.rel (%p341) target = $region12
      $region11: #{tpu_custom_call.1} parent=5 // pred_region
        %s345 = ssub.s32 %s27, 1
        // Predicated region
        $region13: #{tpu_custom_call.1} parent=11 // pred_check
          %p346 = pneg %p74
        $region14: #{tpu_custom_call.1} parent=11 // pred_check_branch
          %348 = sbr.rel (%p346) target = $region16
        $region15: #{tpu_custom_call.1} parent=11 // pred_region
          _
        $region16: #{tpu_custom_call.1} parent=11 // pred_fallthru
          _
        // Predicated region
        $region17: #{tpu_custom_call.1} parent=11 // pred_check
          %p349 = pneg %p95
        $region18: #{tpu_custom_call.1} parent=11 // pred_check_branch
          %351 = sbr.rel (%p349) target = $region20
        $region19: #{tpu_custom_call.1} parent=11 // pred_region
          %s353 = ssub.s32 16, 16
          %354 = vsyncadd [#allocation3], %s353
          %s356 = sshll.u32 [#allocation2], 4
          %s357 = int_to_ptr.vmem [resolvable:$true] %s356
          %359 = dma.hbm_to_vmem [thread:$0]  %s2, 16, %s357, [#allocation3]
        $region20: #{tpu_custom_call.1} parent=11 // pred_fallthru
          _
        // Predicated region
        $region21: #{tpu_custom_call.1} parent=11 // pred_check
          %p360 = pneg %p116
        $region22: #{tpu_custom_call.1} parent=11 // pred_check_branch
          %362 = sbr.rel (%p360) target = $region24
        $region23: #{tpu_custom_call.1} parent=11 // pred_region
          _
        $region24: #{tpu_custom_call.1} parent=11 // pred_fallthru
          _
        // Predicated region
        $region25: #{tpu_custom_call.1} parent=11 // pred_check
          %p363 = pneg %p137
        $region26: #{tpu_custom_call.1} parent=11 // pred_check_branch
          %365 = sbr.rel (%p363) target = $region28
        $region27: #{tpu_custom_call.1} parent=11 // pred_region
          %s367 = ssub.s32 64, 64
          %368 = vsyncadd [#allocation6], %s367
          %s370 = sshll.u32 [#allocation5], 4
          %s371 = int_to_ptr.vmem [resolvable:$true] %s370
          %373 = dma.hbm_to_vmem [thread:$0]  %s4, 64, %s371, [#allocation6]
        $region28: #{tpu_custom_call.1} parent=11 // pred_fallthru
          _
        // Predicated region
        $region29: #{tpu_custom_call.1} parent=11 // pred_check
          %p374 = pneg %p158
        $region30: #{tpu_custom_call.1} parent=11 // pred_check_branch
          %376 = sbr.rel (%p374) target = $region32
        $region31: #{tpu_custom_call.1} parent=11 // pred_region
          %s378 = ssub.s32 49152, 49152
          %379 = vsyncadd [#allocation6], %s378
          %s380 = sshll.u32 [#allocation7], 4
          %s381 = int_to_ptr.vmem [resolvable:$true] %s380
          %386 = dma.hbm_to_vmem [thread:$0]  %s5, 49152, %s381, [#allocation6], 256, 256, 16
        $region32: #{tpu_custom_call.1} parent=11 // pred_fallthru
          _
        // Predicated region
        $region33: #{tpu_custom_call.1} parent=11 // pred_check
          %p387 = pneg %p179
        $region34: #{tpu_custom_call.1} parent=11 // pred_check_branch
          %389 = sbr.rel (%p387) target = $region36
        $region35: #{tpu_custom_call.1} parent=11 // pred_region
          %s391 = ssub.s32 32, 32
          %392 = vsyncadd [#allocation9], %s391
          %s394 = sshll.u32 [#allocation8], 4
          %s395 = int_to_ptr.vmem [resolvable:$true] %s394
          %397 = dma.hbm_to_vmem [thread:$0]  %s6, 32, %s395, [#allocation9]
        $region36: #{tpu_custom_call.1} parent=11 // pred_fallthru
          _
        // Predicated region
        $region37: #{tpu_custom_call.1} parent=11 // pred_check
          %p398 = pneg %p200
        $region38: #{tpu_custom_call.1} parent=11 // pred_check_branch
          %400 = sbr.rel (%p398) target = $region40
        $region39: #{tpu_custom_call.1} parent=11 // pred_region
          %s402 = ssub.s32 24576, 24576
          %403 = vsyncadd [#allocation9], %s402
          %s404 = sshll.u32 [#allocation10], 4
          %s405 = int_to_ptr.vmem [resolvable:$true] %s404
          %410 = dma.hbm_to_vmem [thread:$0]  %s7, 24576, %s405, [#allocation9], 256, 256, 16
        $region40: #{tpu_custom_call.1} parent=11 // pred_fallthru
          _
        // Predicated region
        $region41: #{tpu_custom_call.1} parent=11 // pred_check
          %p411 = pneg %p221
        $region42: #{tpu_custom_call.1} parent=11 // pred_check_branch
          %413 = sbr.rel (%p411) target = $region44
        $region43: #{tpu_custom_call.1} parent=11 // pred_region
          %s415 = ssub.s32 32, 32
          %416 = vsyncadd [#allocation12], %s415
          %s418 = sshll.u32 [#allocation11], 4
          %s419 = int_to_ptr.vmem [resolvable:$true] %s418
          %421 = dma.hbm_to_vmem [thread:$0]  %s8, 32, %s419, [#allocation12]
        $region44: #{tpu_custom_call.1} parent=11 // pred_fallthru
          _
        // Predicated region
        $region45: #{tpu_custom_call.1} parent=11 // pred_check
          %p422 = pneg %p242
        $region46: #{tpu_custom_call.1} parent=11 // pred_check_branch
          %424 = sbr.rel (%p422) target = $region48
        $region47: #{tpu_custom_call.1} parent=11 // pred_region
          _
        $region48: #{tpu_custom_call.1} parent=11 // pred_fallthru
          _
        // Predicated region
        $region49: #{tpu_custom_call.1} parent=11 // pred_check
          %p425 = pneg %p263
        $region50: #{tpu_custom_call.1} parent=11 // pred_check_branch
          %427 = sbr.rel (%p425) target = $region52
        $region51: #{tpu_custom_call.1} parent=11 // pred_region
          %s429 = ssub.s32 16, 16
          %430 = vsyncadd [#allocation12], %s429
          %s432 = sshll.u32 [#allocation13], 4
          %s433 = int_to_ptr.vmem [resolvable:$true] %s432
          %435 = dma.hbm_to_vmem [thread:$0]  %s10, 16, %s433, [#allocation12]
        $region52: #{tpu_custom_call.1} parent=11 // pred_fallthru
          _
        // Predicated region
        $region53: #{tpu_custom_call.1} parent=11 // pred_check
          %p436 = pneg %p284
        $region54: #{tpu_custom_call.1} parent=11 // pred_check_branch
          %438 = sbr.rel (%p436) target = $region56
        $region55: #{tpu_custom_call.1} parent=11 // pred_region
          %s440 = ssub.s32 6144, 6144
          %441 = vsyncadd [#allocation15], %s440
          %s442 = sshll.u32 [#allocation14], 4
          %s443 = int_to_ptr.vmem [resolvable:$true] %s442
          %448 = dma.hbm_to_vmem [thread:$0]  %s11, 6144, %s443, [#allocation15], 128, 128, 8
        $region56: #{tpu_custom_call.1} parent=11 // pred_fallthru
          _
        // Predicated region
        $region57: #{tpu_custom_call.1} parent=11 // pred_check
          %p449 = pneg %p305
        $region58: #{tpu_custom_call.1} parent=11 // pred_check_branch
          %451 = sbr.rel (%p449) target = $region60
        $region59: #{tpu_custom_call.1} parent=11 // pred_region
          %s453 = ssub.s32 16, 16
          %454 = vsyncadd [#allocation15], %s453
          %s456 = sshll.u32 [#allocation16], 4
          %s457 = int_to_ptr.vmem [resolvable:$true] %s456
          %459 = dma.hbm_to_vmem [thread:$0]  %s12, 16, %s457, [#allocation15]
        $region60: #{tpu_custom_call.1} parent=11 // pred_fallthru
          _
      $region12: #{tpu_custom_call.1} parent=5 // pred_fallthru
        _
      %p460 = scmp.lt.s32.totalorder %s27, 2
      // Predicated region
      $region61: #{tpu_custom_call.1} parent=5 // pred_check
        %p461 = pneg %p460
      $region62: #{tpu_custom_call.1} parent=5 // pred_check_branch
        %463 = sbr.rel (%p461) target = $region64
      $region63: #{tpu_custom_call.1} parent=5 // pred_region
        // Predicated region
        $region65: #{tpu_custom_call.1} parent=63 // pred_check
          %p464 = pneg %p47
        $region66: #{tpu_custom_call.1} parent=63 // pred_check_branch
          %466 = sbr.rel (%p464) target = $region68
        $region67: #{tpu_custom_call.1} parent=63 // pred_region
          %p467 = scmp.lt.s32.totalorder %s27, 1
          %s468 = scalar_select %p467, %s27, 1
          %s469 = smul.addr %s468, 93
          %s470 = smul.addr %s469, 8
          %s471 = scalar_lea.vmem %s0, %s470
        $region68: #{tpu_custom_call.1} parent=63 // pred_fallthru
          _
      $region64: #{tpu_custom_call.1} parent=5 // pred_fallthru
        _
      %p472 = scmp.le.s32.totalorder 1, %s27
      %p473 = scmp.lt.s32.totalorder %s27, 3
      %p474 = pnand %p472, %p473
      %p475 = pneg %p474
      // Predicated region
      $region69: #{tpu_custom_call.1} parent=5 // pred_check
        _
      $region70: #{tpu_custom_call.1} parent=5 // pred_check_branch
        %477 = sbr.rel (%p474) target = $region72
      $region71: #{tpu_custom_call.1} parent=5 // pred_region
        %s478 = ssub.s32 %s27, 1
        // Predicated region
        $region73: #{tpu_custom_call.1} parent=71 // pred_check
          %p479 = pneg %p95
        $region74: #{tpu_custom_call.1} parent=71 // pred_check_branch
          %481 = sbr.rel (%p479) target = $region76
        $region75: #{tpu_custom_call.1} parent=71 // pred_region
          %482 = dma.done [#allocation3], 16
        $region76: #{tpu_custom_call.1} parent=71 // pred_fallthru
          _
        // Predicated region
        $region77: #{tpu_custom_call.1} parent=71 // pred_check
          %p483 = pneg %p137
        $region78: #{tpu_custom_call.1} parent=71 // pred_check_branch
          %485 = sbr.rel (%p483) target = $region80
        $region79: #{tpu_custom_call.1} parent=71 // pred_region
          %486 = dma.done [#allocation6], 64
        $region80: #{tpu_custom_call.1} parent=71 // pred_fallthru
          _
        // Predicated region
        $region81: #{tpu_custom_call.1} parent=71 // pred_check
          %p487 = pneg %p158
        $region82: #{tpu_custom_call.1} parent=71 // pred_check_branch
          %489 = sbr.rel (%p487) target = $region84
        $region83: #{tpu_custom_call.1} parent=71 // pred_region
          %490 = dma.done [#allocation6], 49152
        $region84: #{tpu_custom_call.1} parent=71 // pred_fallthru
          _
        // Predicated region
        $region85: #{tpu_custom_call.1} parent=71 // pred_check
          %p491 = pneg %p179
        $region86: #{tpu_custom_call.1} parent=71 // pred_check_branch
          %493 = sbr.rel (%p491) target = $region88
        $region87: #{tpu_custom_call.1} parent=71 // pred_region
          %494 = dma.done [#allocation9], 32
        $region88: #{tpu_custom_call.1} parent=71 // pred_fallthru
          _
        // Predicated region
        $region89: #{tpu_custom_call.1} parent=71 // pred_check
          %p495 = pneg %p200
        $region90: #{tpu_custom_call.1} parent=71 // pred_check_branch
          %497 = sbr.rel (%p495) target = $region92
        $region91: #{tpu_custom_call.1} parent=71 // pred_region
          %498 = dma.done [#allocation9], 24576
        $region92: #{tpu_custom_call.1} parent=71 // pred_fallthru
          _
        // Predicated region
        $region93: #{tpu_custom_call.1} parent=71 // pred_check
          %p499 = pneg %p221
        $region94: #{tpu_custom_call.1} parent=71 // pred_check_branch
          %501 = sbr.rel (%p499) target = $region96
        $region95: #{tpu_custom_call.1} parent=71 // pred_region
          %502 = dma.done [#allocation12], 32
        $region96: #{tpu_custom_call.1} parent=71 // pred_fallthru
          _
        // Predicated region
        $region97: #{tpu_custom_call.1} parent=71 // pred_check
          %p503 = pneg %p263
        $region98: #{tpu_custom_call.1} parent=71 // pred_check_branch
          %505 = sbr.rel (%p503) target = $region100
        $region99: #{tpu_custom_call.1} parent=71 // pred_region
          %506 = dma.done [#allocation12], 16
        $region100: #{tpu_custom_call.1} parent=71 // pred_fallthru
          _
        // Predicated region
        $region101: #{tpu_custom_call.1} parent=71 // pred_check
          %p507 = pneg %p284
        $region102: #{tpu_custom_call.1} parent=71 // pred_check_branch
          %509 = sbr.rel (%p507) target = $region104
        $region103: #{tpu_custom_call.1} parent=71 // pred_region
          %510 = dma.done [#allocation15], 6144
        $region104: #{tpu_custom_call.1} parent=71 // pred_fallthru
          _
        // Predicated region
        $region105: #{tpu_custom_call.1} parent=71 // pred_check
          %p511 = pneg %p305
        $region106: #{tpu_custom_call.1} parent=71 // pred_check_branch
          %513 = sbr.rel (%p511) target = $region108
        $region107: #{tpu_custom_call.1} parent=71 // pred_region
          %514 = dma.done [#allocation15], 16
        $region108: #{tpu_custom_call.1} parent=71 // pred_fallthru
          _
        %p515 = scmp.lt.s32.totalorder %s32, 1
        %s516 = scalar_select %p515, %s32, 1
        %s517 = smul.addr %s516, 93
        %s518 = smul.addr %s517, 8
        %s519 = scalar_lea.vmem %s0, %s518
        %p520 = pneg %p53
        %p521 = pneg %p50
        %p522 = pneg %p74
        %p523 = pneg %p71
        %p524 = pneg %p95
        %p525 = pneg %p92
        %p526 = pneg %p116
        %p527 = pneg %p113
        %p528 = pneg %p137
        %p529 = pneg %p134
        %p530 = pneg %p158
        %p531 = pneg %p155
        %p532 = pneg %p179
        %p533 = pneg %p176
        %p534 = pneg %p200
        %p535 = pneg %p197
        %p536 = pneg %p221
        %p537 = pneg %p218
        %p538 = pneg %p242
        %p539 = pneg %p239
        %p540 = pneg %p263
        %p541 = pneg %p260
        %p542 = pneg %p284
        %p543 = pneg %p281
        %p544 = pneg %p305
        %p545 = pneg %p302
        %p546 = pneg %p331
        %p547 = pneg %p328
        %s548 = sand.u32 %s318, 1
        %s549 = scalar_lea.sflag [#allocation4], %s548
        %s550 = sand.u32 %s318, 1
        %s551 = scalar_lea.vmem [#allocation17], %s550
        %p552 = scmp.lt.s32.totalorder %s32, 1
        %s553 = scalar_select %p552, %s32, 1
        %s554 = smul.addr %s553, 93
        %s555 = smul.addr %s554, 8
        %s556 = scalar_lea.vmem %s0, %s555
        %v557 = vld [vmem:[%s556] sm:$0xff]
        %v558 = vld [vmem:[%s556 + $0x8] sm:$0xff]
        %v559 = vld [vmem:[%s556 + $0x10] sm:$0xff]
        %v560 = vld [vmem:[%s556 + $0x18] sm:$0xff]
        %v561 = vld [vmem:[%s556 + $0x20] sm:$0xff]
        %v562 = vld [vmem:[%s556 + $0x28] sm:$0xff]
        %v563 = vld [vmem:[%s556 + $0x30] sm:$0xff]
        %v564 = vld [vmem:[%s556 + $0x38] sm:$0xff]
        %v565 = vld [vmem:[%s556 + $0x40] sm:$0xff]
        %v566 = vld [vmem:[%s556 + $0x48] sm:$0xff]
        %v567 = vld [vmem:[%s556 + $0x50] sm:$0xff]
        %v568 = vld [vmem:[%s556 + $0x58] sm:$0xff]
        %v569 = vld [vmem:[%s556 + $0x60] sm:$0xff]
        %v570 = vld [vmem:[%s556 + $0x68] sm:$0xff]
        %v571 = vld [vmem:[%s556 + $0x70] sm:$0xff]
        %v572 = vld [vmem:[%s556 + $0x78] sm:$0xff]
        %v573 = vld [vmem:[%s556 + $0x80] sm:$0xff]
        %v574 = vld [vmem:[%s556 + $0x88] sm:$0xff]
        %v575 = vld [vmem:[%s556 + $0x90] sm:$0xff]
        %v576 = vld [vmem:[%s556 + $0x98] sm:$0xff]
        %v577 = vld [vmem:[%s556 + $0xa0] sm:$0xff]
        %v578 = vld [vmem:[%s556 + $0xa8] sm:$0xff]
        %v579 = vld [vmem:[%s556 + $0xb0] sm:$0xff]
        %v580 = vld [vmem:[%s556 + $0xb8] sm:$0xff]
        %v581 = vld [vmem:[%s556 + $0xc0] sm:$0xff]
        %v582 = vld [vmem:[%s556 + $0xc8] sm:$0xff]
        %v583 = vld [vmem:[%s556 + $0xd0] sm:$0xff]
        %v584 = vld [vmem:[%s556 + $0xd8] sm:$0xff]
        %v585 = vld [vmem:[%s556 + $0xe0] sm:$0xff]
        %v586 = vld [vmem:[%s556 + $0xe8] sm:$0xff]
        %v587 = vld [vmem:[%s556 + $0xf0] sm:$0xff]
        %v588 = vld [vmem:[%s556 + $0xf8] sm:$0xff]
        %v589 = vld [vmem:[%s556 + $0x100] sm:$0xff]
        %v590 = vld [vmem:[%s556 + $0x108] sm:$0xff]
        %v591 = vld [vmem:[%s556 + $0x110] sm:$0xff]
        %v592 = vld [vmem:[%s556 + $0x118] sm:$0xff]
        %v593 = vld [vmem:[%s556 + $0x120] sm:$0xff]
        %v594 = vld [vmem:[%s556 + $0x128] sm:$0xff]
        %v595 = vld [vmem:[%s556 + $0x130] sm:$0xff]
        %v596 = vld [vmem:[%s556 + $0x138] sm:$0xff]
        %v597 = vld [vmem:[%s556 + $0x140] sm:$0xff]
        %v598 = vld [vmem:[%s556 + $0x148] sm:$0xff]
        %v599 = vld [vmem:[%s556 + $0x150] sm:$0xff]
        %v600 = vld [vmem:[%s556 + $0x158] sm:$0xff]
        %v601 = vld [vmem:[%s556 + $0x160] sm:$0xff]
        %v602 = vld [vmem:[%s556 + $0x168] sm:$0xff]
        %v603 = vld [vmem:[%s556 + $0x170] sm:$0xff]
        %v604 = vld [vmem:[%s556 + $0x178] sm:$0xff]
        %v605 = vld [vmem:[%s556 + $0x180] sm:$0xff]
        %v606 = vld [vmem:[%s556 + $0x188] sm:$0xff]
        %v607 = vld [vmem:[%s556 + $0x190] sm:$0xff]
        %v608 = vld [vmem:[%s556 + $0x198] sm:$0xff]
        %v609 = vld [vmem:[%s556 + $0x1a0] sm:$0xff]
        %v610 = vld [vmem:[%s556 + $0x1a8] sm:$0xff]
        %v611 = vld [vmem:[%s556 + $0x1b0] sm:$0xff]
        %v612 = vld [vmem:[%s556 + $0x1b8] sm:$0xff]
        %v613 = vld [vmem:[%s556 + $0x1c0] sm:$0xff]
        %v614 = vld [vmem:[%s556 + $0x1c8] sm:$0xff]
        %v615 = vld [vmem:[%s556 + $0x1d0] sm:$0xff]
        %v616 = vld [vmem:[%s556 + $0x1d8] sm:$0xff]
        %v617 = vld [vmem:[%s556 + $0x1e0] sm:$0xff]
        %v618 = vld [vmem:[%s556 + $0x1e8] sm:$0xff]
        %v619 = vld [vmem:[%s556 + $0x1f0] sm:$0xff]
        %v620 = vld [vmem:[%s556 + $0x1f8] sm:$0xff]
        %v621 = vld [vmem:[%s556 + $0x200] sm:$0xff]
        %v622 = vld [vmem:[%s556 + $0x208] sm:$0xff]
        %v623 = vld [vmem:[%s556 + $0x210] sm:$0xff]
        %v624 = vld [vmem:[%s556 + $0x218] sm:$0xff]
        %v625 = vld [vmem:[%s556 + $0x220] sm:$0xff]
        %v626 = vld [vmem:[%s556 + $0x228] sm:$0xff]
        %v627 = vld [vmem:[%s556 + $0x230] sm:$0xff]
        %v628 = vld [vmem:[%s556 + $0x238] sm:$0xff]
        %v629 = vld [vmem:[%s556 + $0x240] sm:$0xff]
        %v630 = vld [vmem:[%s556 + $0x248] sm:$0xff]
        %v631 = vld [vmem:[%s556 + $0x250] sm:$0xff]
        %v632 = vld [vmem:[%s556 + $0x258] sm:$0xff]
        %v633 = vld [vmem:[%s556 + $0x260] sm:$0xff]
        %v634 = vld [vmem:[%s556 + $0x268] sm:$0xff]
        %v635 = vld [vmem:[%s556 + $0x270] sm:$0xff]
        %v636 = vld [vmem:[%s556 + $0x278] sm:$0xff]
        %v637 = vld [vmem:[%s556 + $0x280] sm:$0xff]
        %v638 = vld [vmem:[%s556 + $0x288] sm:$0xff]
        %v639 = vld [vmem:[%s556 + $0x290] sm:$0xff]
        %v640 = vld [vmem:[%s556 + $0x298] sm:$0xff]
        %v641 = vld [vmem:[%s556 + $0x2a0] sm:$0xff]
        %v642 = vld [vmem:[%s556 + $0x2a8] sm:$0xff]
        %v643 = vld [vmem:[%s556 + $0x2b0] sm:$0xff]
        %v644 = vld [vmem:[%s556 + $0x2b8] sm:$0xff]
        %v645 = vld [vmem:[%s556 + $0x2c0] sm:$0xff]
        %v646 = vld [vmem:[%s556 + $0x2c8] sm:$0xff]
        %v647 = vld [vmem:[%s556 + $0x2d0] sm:$0x7]
        %v648 = vld [vmem:[%s556 + $0x2d8] sm:$0x7]
        %v649 = vld [vmem:[%s556 + $0x2e0] sm:$0x7]
        %v650 = vld [vmem:[%s1] sm:$0xff]
        %v651 = vld [vmem:[%s1 + $0x8] sm:$0xff]
        %v652 = vld [vmem:[%s1 + $0x10] sm:$0xff]
        %v653 = vld [vmem:[%s1 + $0x18] sm:$0xff]
        %v654 = vld [vmem:[%s1 + $0x20] sm:$0xff]
        %v655 = vld [vmem:[%s1 + $0x28] sm:$0xff]
        %v656 = vld [vmem:[%s1 + $0x30] sm:$0xff]
        %v657 = vld [vmem:[%s1 + $0x38] sm:$0xff]
        %v658 = vld [vmem:[%s1 + $0x40] sm:$0xff]
        %v659 = vld [vmem:[%s1 + $0x48] sm:$0xff]
        %v660 = vld [vmem:[%s1 + $0x50] sm:$0xff]
        %v661 = vld [vmem:[%s1 + $0x58] sm:$0xff]
        %v662 = vld [vmem:[%s1 + $0x60] sm:$0xff]
        %v663 = vld [vmem:[%s1 + $0x68] sm:$0xff]
        %v664 = vld [vmem:[%s1 + $0x70] sm:$0xff]
        %v665 = vld [vmem:[%s1 + $0x78] sm:$0xff]
        %v666 = vld [vmem:[%s1 + $0x80] sm:$0xff]
        %v667 = vld [vmem:[%s1 + $0x88] sm:$0xff]
        %v668 = vld [vmem:[%s1 + $0x90] sm:$0xff]
        %v669 = vld [vmem:[%s1 + $0x98] sm:$0xff]
        %v670 = vld [vmem:[%s1 + $0xa0] sm:$0xff]
        %v671 = vld [vmem:[%s1 + $0xa8] sm:$0xff]
        %v672 = vld [vmem:[%s1 + $0xb0] sm:$0xff]
        %v673 = vld [vmem:[%s1 + $0xb8] sm:$0xff]
        %v674 = vld [vmem:[%s1 + $0xc0] sm:$0xff]
        %v675 = vld [vmem:[%s1 + $0xc8] sm:$0xff]
        %v676 = vld [vmem:[%s1 + $0xd0] sm:$0xff]
        %v677 = vld [vmem:[%s1 + $0xd8] sm:$0xff]
        %v678 = vld [vmem:[%s1 + $0xe0] sm:$0xff]
        %v679 = vld [vmem:[%s1 + $0xe8] sm:$0xff]
        %v680 = vld [vmem:[%s1 + $0xf0] sm:$0xff]
        %v681 = vld [vmem:[%s1 + $0xf8] sm:$0xff]
        %v682 = vld [vmem:[%s1 + $0x100] sm:$0xff]
        %v683 = vld [vmem:[%s1 + $0x108] sm:$0xff]
        %v684 = vld [vmem:[%s1 + $0x110] sm:$0xff]
        %v685 = vld [vmem:[%s1 + $0x118] sm:$0xff]
        %v686 = vld [vmem:[%s1 + $0x120] sm:$0xff]
        %v687 = vld [vmem:[%s1 + $0x128] sm:$0xff]
        %v688 = vld [vmem:[%s1 + $0x130] sm:$0xff]
        %v689 = vld [vmem:[%s1 + $0x138] sm:$0xff]
        %v690 = vld [vmem:[%s1 + $0x140] sm:$0xff]
        %v691 = vld [vmem:[%s1 + $0x148] sm:$0xff]
        %v692 = vld [vmem:[%s1 + $0x150] sm:$0xff]
        %v693 = vld [vmem:[%s1 + $0x158] sm:$0xff]
        %v694 = vld [vmem:[%s1 + $0x160] sm:$0xff]
        %v695 = vld [vmem:[%s1 + $0x168] sm:$0xff]
        %v696 = vld [vmem:[%s1 + $0x170] sm:$0xff]
        %v697 = vld [vmem:[%s1 + $0x178] sm:$0xff]
        %v698 = vld [vmem:[#allocation2] sm:$0x1]
        %v700 = vlaneseq
        %v701 = vshrl.u32 %v700, 7
        %v702 = vsub.s32 0, %v701
        %v703 = vrot.slane %v698, %v702
        %705 = vmatprep.subr.mxu0 0.0
        %706 = vmatpush1.msra.mxu0 %v650
        %707 = vmatprep.subr.mxu0 0.0
        %708 = vmatpush1.msra.mxu0 %v651
        %709 = vmatprep.subr.mxu0 0.0
        %710 = vmatpush1.msra.mxu0 %v652
        %711 = vmatprep.subr.mxu0 0.0
        %712 = vmatpush1.msra.mxu0 %v653
        %713 = vmatprep.subr.mxu0 0.0
        %714 = vmatpush1.msra.mxu0 %v654
        %715 = vmatprep.subr.mxu0 0.0
        %716 = vmatpush1.msra.mxu0 %v655
        %717 = vmatprep.subr.mxu0 0.0
        %718 = vmatpush1.msra.mxu0 %v656
        %719 = vmatprep.subr.mxu0 0.0
        %720 = vmatpush1.msra.mxu0 %v657
        %721 = vmatprep.subr.mxu0 0.0
        %722 = vmatpush1.msra.mxu0 %v658
        %723 = vmatprep.subr.mxu0 0.0
        %724 = vmatpush1.msra.mxu0 %v659
        %725 = vmatprep.subr.mxu0 0.0
        %726 = vmatpush1.msra.mxu0 %v660
        %727 = vmatprep.subr.mxu0 0.0
        %728 = vmatpush1.msra.mxu0 %v661
        %729 = vmatprep.subr.mxu0 0.0
        %730 = vmatpush1.msra.mxu0 %v662
        %731 = vmatprep.subr.mxu0 0.0
        %732 = vmatpush1.msra.mxu0 %v663
        %733 = vmatprep.subr.mxu0 0.0
        %734 = vmatpush1.msra.mxu0 %v664
        %735 = vmatprep.subr.mxu0 0.0
        %736 = vmatpush1.msra.mxu0 %v665
        %737 = vmatprep.subr.mxu0 0.0
        %738 = vmatpush1.msra.mxu0 %v666
        %739 = vmatprep.subr.mxu0 0.0
        %740 = vmatpush1.msra.mxu0 %v667
        %741 = vmatprep.subr.mxu0 0.0
        %742 = vmatpush1.msra.mxu0 %v668
        %743 = vmatprep.subr.mxu0 0.0
        %744 = vmatpush1.msra.mxu0 %v669
        %745 = vmatprep.subr.mxu0 0.0
        %746 = vmatpush1.msra.mxu0 %v670
        %747 = vmatprep.subr.mxu0 0.0
        %748 = vmatpush1.msra.mxu0 %v671
        %749 = vmatprep.subr.mxu0 0.0
        %750 = vmatpush1.msra.mxu0 %v672
        %751 = vmatprep.subr.mxu0 0.0
        %752 = vmatpush1.msra.mxu0 %v673
        %753 = vmatprep.subr.mxu0 0.0
        %754 = vmatpush1.msra.mxu0 %v674
        %755 = vmatprep.subr.mxu0 0.0
        %756 = vmatpush1.msra.mxu0 %v675
        %757 = vmatprep.subr.mxu0 0.0
        %758 = vmatpush1.msra.mxu0 %v676
        %759 = vmatprep.subr.mxu0 0.0
        %760 = vmatpush1.msra.mxu0 %v677
        %761 = vmatprep.subr.mxu0 0.0
        %762 = vmatpush1.msra.mxu0 %v678
        %763 = vmatprep.subr.mxu0 0.0
        %764 = vmatpush1.msra.mxu0 %v679
        %765 = vmatprep.subr.mxu0 0.0
        %766 = vmatpush1.msra.mxu0 %v680
        %767 = vmatprep.subr.mxu0 0.0
        %768 = vmatpush1.msra.mxu0 %v681
        %769 = vmatprep.mubr.f32.mxu0 %v558
        %770 = vmatmul.mubr.f32.gmra.mrb[0].mxu0 %v557
        %v771 = vpop.f32.mrb[0].mxu0
        %v772 = vadd.f32 %v703, %v771
        %v773 = vpop.f32.mrb[0].mxu0
        %774 = vmatprep.mubr.f32.mxu0 %v561
        %775 = vmatmul.mubr.f32.gmra.mrb[0].mxu0 %v560
        %v776 = vpop.f32.mrb[0].mxu0
        %v777 = vadd.f32 %v703, %v776
        %v778 = vpop.f32.mrb[0].mxu0
        %779 = vmatprep.mubr.f32.mxu0 %v564
        %780 = vmatmul.mubr.f32.gmra.mrb[0].mxu0 %v563
        %v781 = vpop.f32.mrb[0].mxu0
        %v782 = vadd.f32 %v703, %v781
        %v783 = vpop.f32.mrb[0].mxu0
        %784 = vmatprep.mubr.f32.mxu0 %v567
        %785 = vmatmul.mubr.f32.gmra.mrb[0].mxu0 %v566
        %v786 = vpop.f32.mrb[0].mxu0
        %v787 = vadd.f32 %v703, %v786
        %v788 = vpop.f32.mrb[0].mxu0
        %789 = vmatprep.mubr.f32.mxu0 %v570
        %790 = vmatmul.mubr.f32.gmra.mrb[0].mxu0 %v569
        %v791 = vpop.f32.mrb[0].mxu0
        %v792 = vadd.f32 %v703, %v791
        %v793 = vpop.f32.mrb[0].mxu0
        %794 = vmatprep.mubr.f32.mxu0 %v573
        %795 = vmatmul.mubr.f32.gmra.mrb[0].mxu0 %v572
        %v796 = vpop.f32.mrb[0].mxu0
        %v797 = vadd.f32 %v703, %v796
        %v798 = vpop.f32.mrb[0].mxu0
        %799 = vmatprep.mubr.f32.mxu0 %v576
        %800 = vmatmul.mubr.f32.gmra.mrb[0].mxu0 %v575
        %v801 = vpop.f32.mrb[0].mxu0
        %v802 = vadd.f32 %v703, %v801
        %v803 = vpop.f32.mrb[0].mxu0
        %804 = vmatprep.mubr.f32.mxu0 %v579
        %805 = vmatmul.mubr.f32.gmra.mrb[0].mxu0 %v578
        %v806 = vpop.f32.mrb[0].mxu0
        %v807 = vadd.f32 %v703, %v806
        %v808 = vpop.f32.mrb[0].mxu0
        %809 = vmatprep.mubr.f32.mxu0 %v582
        %810 = vmatmul.mubr.f32.gmra.mrb[0].mxu0 %v581
        %v811 = vpop.f32.mrb[0].mxu0
        %v812 = vadd.f32 %v703, %v811
        %v813 = vpop.f32.mrb[0].mxu0
        %814 = vmatprep.mubr.f32.mxu0 %v585
        %815 = vmatmul.mubr.f32.gmra.mrb[0].mxu0 %v584
        %v816 = vpop.f32.mrb[0].mxu0
        %v817 = vadd.f32 %v703, %v816
        %v818 = vpop.f32.mrb[0].mxu0
        %819 = vmatprep.mubr.f32.mxu0 %v588
        %820 = vmatmul.mubr.f32.gmra.mrb[0].mxu0 %v587
        %v821 = vpop.f32.mrb[0].mxu0
        %v822 = vadd.f32 %v703, %v821
        %v823 = vpop.f32.mrb[0].mxu0
        %824 = vmatprep.mubr.f32.mxu0 %v591
        %825 = vmatmul.mubr.f32.gmra.mrb[0].mxu0 %v590
        %v826 = vpop.f32.mrb[0].mxu0
        %v827 = vadd.f32 %v703, %v826
        %v828 = vpop.f32.mrb[0].mxu0
        %829 = vmatprep.mubr.f32.mxu0 %v594
        %830 = vmatmul.mubr.f32.gmra.mrb[0].mxu0 %v593
        %v831 = vpop.f32.mrb[0].mxu0
        %v832 = vadd.f32 %v703, %v831
        %v833 = vpop.f32.mrb[0].mxu0
        %834 = vmatprep.mubr.f32.mxu0 %v597
        %835 = vmatmul.mubr.f32.gmra.mrb[0].mxu0 %v596
        %v836 = vpop.f32.mrb[0].mxu0
        %v837 = vadd.f32 %v703, %v836
        %v838 = vpop.f32.mrb[0].mxu0
        %839 = vmatprep.mubr.f32.mxu0 %v600
        %840 = vmatmul.mubr.f32.gmra.mrb[0].mxu0 %v599
        %v841 = vpop.f32.mrb[0].mxu0
        %v842 = vadd.f32 %v703, %v841
        %v843 = vpop.f32.mrb[0].mxu0
        %844 = vmatprep.mubr.f32.mxu0 %v603
        %845 = vmatmul.mubr.f32.gmra.mrb[0].mxu0 %v602
        %v846 = vpop.f32.mrb[0].mxu0
        %v847 = vadd.f32 %v703, %v846
        %v848 = vpop.f32.mrb[0].mxu0
        %849 = vmatprep.mubr.f32.mxu0 %v606
        %850 = vmatmul.mubr.f32.gmra.mrb[0].mxu0 %v605
        %v851 = vpop.f32.mrb[0].mxu0
        %v852 = vadd.f32 %v703, %v851
        %v853 = vpop.f32.mrb[0].mxu0
        %854 = vmatprep.mubr.f32.mxu0 %v609
        %855 = vmatmul.mubr.f32.gmra.mrb[0].mxu0 %v608
        %v856 = vpop.f32.mrb[0].mxu0
        %v857 = vadd.f32 %v703, %v856
        %v858 = vpop.f32.mrb[0].mxu0
        %859 = vmatprep.mubr.f32.mxu0 %v612
        %860 = vmatmul.mubr.f32.gmra.mrb[0].mxu0 %v611
        %v861 = vpop.f32.mrb[0].mxu0
        %v862 = vadd.f32 %v703, %v861
        %v863 = vpop.f32.mrb[0].mxu0
        %864 = vmatprep.mubr.f32.mxu0 %v615
        %865 = vmatmul.mubr.f32.gmra.mrb[0].mxu0 %v614
        %v866 = vpop.f32.mrb[0].mxu0
        %v867 = vadd.f32 %v703, %v866
        %v868 = vpop.f32.mrb[0].mxu0
        %869 = vmatprep.mubr.f32.mxu0 %v618
        %870 = vmatmul.mubr.f32.gmra.mrb[0].mxu0 %v617
        %v871 = vpop.f32.mrb[0].mxu0
        %v872 = vadd.f32 %v703, %v871
        %v873 = vpop.f32.mrb[0].mxu0
        %874 = vmatprep.mubr.f32.mxu0 %v621
        %875 = vmatmul.mubr.f32.gmra.mrb[0].mxu0 %v620
        %v876 = vpop.f32.mrb[0].mxu0
        %v877 = vadd.f32 %v703, %v876
        %v878 = vpop.f32.mrb[0].mxu0
        %879 = vmatprep.mubr.f32.mxu0 %v624
        %880 = vmatmul.mubr.f32.gmra.mrb[0].mxu0 %v623
        %v881 = vpop.f32.mrb[0].mxu0
        %v882 = vadd.f32 %v703, %v881
        %v883 = vpop.f32.mrb[0].mxu0
        %884 = vmatprep.mubr.f32.mxu0 %v627
        %885 = vmatmul.mubr.f32.gmra.mrb[0].mxu0 %v626
        %v886 = vpop.f32.mrb[0].mxu0
        %v887 = vadd.f32 %v703, %v886
        %v888 = vpop.f32.mrb[0].mxu0
        %889 = vmatprep.mubr.f32.mxu0 %v630
        %890 = vmatmul.mubr.f32.gmra.mrb[0].mxu0 %v629
        %v891 = vpop.f32.mrb[0].mxu0
        %v892 = vadd.f32 %v703, %v891
        %v893 = vpop.f32.mrb[0].mxu0
        %894 = vmatprep.mubr.f32.mxu0 %v633
        %895 = vmatmul.mubr.f32.gmra.mrb[0].mxu0 %v632
        %v896 = vpop.f32.mrb[0].mxu0
        %v897 = vadd.f32 %v703, %v896
        %v898 = vpop.f32.mrb[0].mxu0
        %899 = vmatprep.mubr.f32.mxu0 %v636
        %900 = vmatmul.mubr.f32.gmra.mrb[0].mxu0 %v635
        %v901 = vpop.f32.mrb[0].mxu0
        %v902 = vadd.f32 %v703, %v901
        %v903 = vpop.f32.mrb[0].mxu0
        %904 = vmatprep.mubr.f32.mxu0 %v639
        %905 = vmatmul.mubr.f32.gmra.mrb[0].mxu0 %v638
        %v906 = vpop.f32.mrb[0].mxu0
        %v907 = vadd.f32 %v703, %v906
        %v908 = vpop.f32.mrb[0].mxu0
        %909 = vmatprep.mubr.f32.mxu0 %v642
        %910 = vmatmul.mubr.f32.gmra.mrb[0].mxu0 %v641
        %v911 = vpop.f32.mrb[0].mxu0
        %v912 = vadd.f32 %v703, %v911
        %v913 = vpop.f32.mrb[0].mxu0
        %914 = vmatprep.mubr.f32.mxu0 %v645
        %915 = vmatmul.mubr.f32.gmra.mrb[0].mxu0 %v644
        %v916 = vpop.f32.mrb[0].mxu0
        %v917 = vadd.f32 %v703, %v916
        %v918 = vpop.f32.mrb[0].mxu0
        %919 = vmatprep.mubr.f32.mxu0 %v648
        %920 = vmatmul.mubr.f32.gmra.mrb[0].mxu0 %v647
        %v921 = vpop.f32.mrb[0].mxu0
        %v922 = vadd.f32 %v703, %v921
        %v923 = vpop.f32.mrb[0].mxu0
        %924 = vdwg.mxu0
        %925 = vmatprep.subr.mxu0 0.0
        %926 = vmatpush1.msra.mxu0 %v682
        %927 = vmatprep.subr.mxu0 0.0
        %928 = vmatpush1.msra.mxu0 %v683
        %929 = vmatprep.subr.mxu0 0.0
        %930 = vmatpush1.msra.mxu0 %v684
        %931 = vmatprep.subr.mxu0 0.0
        %932 = vmatpush1.msra.mxu0 %v685
        %933 = vmatprep.subr.mxu0 0.0
        %934 = vmatpush1.msra.mxu0 %v686
        %935 = vmatprep.subr.mxu0 0.0
        %936 = vmatpush1.msra.mxu0 %v687
        %937 = vmatprep.subr.mxu0 0.0
        %938 = vmatpush1.msra.mxu0 %v688
        %939 = vmatprep.subr.mxu0 0.0
        %940 = vmatpush1.msra.mxu0 %v689
        %941 = vmatprep.subr.mxu0 0.0
        %942 = vmatpush1.msra.mxu0 %v690
        %943 = vmatprep.subr.mxu0 0.0
        %944 = vmatpush1.msra.mxu0 %v691
        %945 = vmatprep.subr.mxu0 0.0
        %946 = vmatpush1.msra.mxu0 %v692
        %947 = vmatprep.subr.mxu0 0.0
        %948 = vmatpush1.msra.mxu0 %v693
        %949 = vmatprep.subr.mxu0 0.0
        %950 = vmatpush1.msra.mxu0 %v694
        %951 = vmatprep.subr.mxu0 0.0
        %952 = vmatpush1.msra.mxu0 %v695
        %953 = vmatprep.subr.mxu0 0.0
        %954 = vmatpush1.msra.mxu0 %v696
        %955 = vmatprep.subr.mxu0 0.0
        %956 = vmatpush1.msra.mxu0 %v697
        %957 = vmatprep.subr.mxu0 0.0
        %958 = vmatpush1.msra.mxu0 0.0
        %959 = vmatprep.subr.mxu0 0.0
        %960 = vmatpush1.msra.mxu0 0.0
        %961 = vmatprep.subr.mxu0 0.0
        %962 = vmatpush1.msra.mxu0 0.0
        %963 = vmatprep.subr.mxu0 0.0
        %964 = vmatpush1.msra.mxu0 0.0
        %965 = vmatprep.subr.mxu0 0.0
        %966 = vmatpush1.msra.mxu0 0.0
        %967 = vmatprep.subr.mxu0 0.0
        %968 = vmatpush1.msra.mxu0 0.0
        %969 = vmatprep.subr.mxu0 0.0
        %970 = vmatpush1.msra.mxu0 0.0
        %971 = vmatprep.subr.mxu0 0.0
        %972 = vmatpush1.msra.mxu0 0.0
        %973 = vmatprep.subr.mxu0 0.0
        %974 = vmatpush1.msra.mxu0 0.0
        %975 = vmatprep.subr.mxu0 0.0
        %976 = vmatpush1.msra.mxu0 0.0
        %977 = vmatprep.subr.mxu0 0.0
        %978 = vmatpush1.msra.mxu0 0.0
        %979 = vmatprep.subr.mxu0 0.0
        %980 = vmatpush1.msra.mxu0 0.0
        %981 = vmatprep.subr.mxu0 0.0
        %982 = vmatpush1.msra.mxu0 0.0
        %983 = vmatprep.subr.mxu0 0.0
        %984 = vmatpush1.msra.mxu0 0.0
        %985 = vmatprep.subr.mxu0 0.0
        %986 = vmatpush1.msra.mxu0 0.0
        %987 = vmatprep.subr.mxu0 0.0
        %988 = vmatpush1.msra.mxu0 0.0
        %989 = vmatprep.mubr.f32.mxu0 0.0
        %990 = vmatmul.mubr.f32.gmra.mrb[0].mxu0 %v559
        %v991 = vpop.f32.mrb[0].mxu0
        %v992 = vadd.f32 %v772, %v991
        %v993 = vpop.f32.mrb[0].mxu0
        %994 = vmatprep.mubr.f32.mxu0 0.0
        %995 = vmatmul.mubr.f32.gmra.mrb[0].mxu0 %v562
        %v996 = vpop.f32.mrb[0].mxu0
        %v997 = vadd.f32 %v777, %v996
        %v998 = vpop.f32.mrb[0].mxu0
        %999 = vmatprep.mubr.f32.mxu0 0.0
        %1000 = vmatmul.mubr.f32.gmra.mrb[0].mxu0 %v565
        %v1001 = vpop.f32.mrb[0].mxu0
        %v1002 = vadd.f32 %v782, %v1001
        %v1003 = vpop.f32.mrb[0].mxu0
        %1004 = vmatprep.mubr.f32.mxu0 0.0
        %1005 = vmatmul.mubr.f32.gmra.mrb[0].mxu0 %v568
        %v1006 = vpop.f32.mrb[0].mxu0
        %v1007 = vadd.f32 %v787, %v1006
        %v1008 = vpop.f32.mrb[0].mxu0
        %1009 = vmatprep.mubr.f32.mxu0 0.0
        %1010 = vmatmul.mubr.f32.gmra.mrb[0].mxu0 %v571
        %v1011 = vpop.f32.mrb[0].mxu0
        %v1012 = vadd.f32 %v792, %v1011
        %v1013 = vpop.f32.mrb[0].mxu0
        %1014 = vmatprep.mubr.f32.mxu0 0.0
        %1015 = vmatmul.mubr.f32.gmra.mrb[0].mxu0 %v574
        %v1016 = vpop.f32.mrb[0].mxu0
        %v1017 = vadd.f32 %v797, %v1016
        %v1018 = vpop.f32.mrb[0].mxu0
        %1019 = vmatprep.mubr.f32.mxu0 0.0
        %1020 = vmatmul.mubr.f32.gmra.mrb[0].mxu0 %v577
        %v1021 = vpop.f32.mrb[0].mxu0
        %v1022 = vadd.f32 %v802, %v1021
        %v1023 = vpop.f32.mrb[0].mxu0
        %1024 = vmatprep.mubr.f32.mxu0 0.0
        %1025 = vmatmul.mubr.f32.gmra.mrb[0].mxu0 %v580
        %v1026 = vpop.f32.mrb[0].mxu0
        %v1027 = vadd.f32 %v807, %v1026
        %v1028 = vpop.f32.mrb[0].mxu0
        %1029 = vmatprep.mubr.f32.mxu0 0.0
        %1030 = vmatmul.mubr.f32.gmra.mrb[0].mxu0 %v583
        %v1031 = vpop.f32.mrb[0].mxu0
        %v1032 = vadd.f32 %v812, %v1031
        %v1033 = vpop.f32.mrb[0].mxu0
        %1034 = vmatprep.mubr.f32.mxu0 0.0
        %1035 = vmatmul.mubr.f32.gmra.mrb[0].mxu0 %v586
        %v1036 = vpop.f32.mrb[0].mxu0
        %v1037 = vadd.f32 %v817, %v1036
        %v1038 = vpop.f32.mrb[0].mxu0
        %1039 = vmatprep.mubr.f32.mxu0 0.0
        %1040 = vmatmul.mubr.f32.gmra.mrb[0].mxu0 %v589
        %v1041 = vpop.f32.mrb[0].mxu0
        %v1042 = vadd.f32 %v822, %v1041
        %v1043 = vpop.f32.mrb[0].mxu0
        %1044 = vmatprep.mubr.f32.mxu0 0.0
        %1045 = vmatmul.mubr.f32.gmra.mrb[0].mxu0 %v592
        %v1046 = vpop.f32.mrb[0].mxu0
        %v1047 = vadd.f32 %v827, %v1046
        %v1048 = vpop.f32.mrb[0].mxu0
        %1049 = vmatprep.mubr.f32.mxu0 0.0
        %1050 = vmatmul.mubr.f32.gmra.mrb[0].mxu0 %v595
        %v1051 = vpop.f32.mrb[0].mxu0
        %v1052 = vadd.f32 %v832, %v1051
        %v1053 = vpop.f32.mrb[0].mxu0
        %1054 = vmatprep.mubr.f32.mxu0 0.0
        %1055 = vmatmul.mubr.f32.gmra.mrb[0].mxu0 %v598
        %v1056 = vpop.f32.mrb[0].mxu0
        %v1057 = vadd.f32 %v837, %v1056
        %v1058 = vpop.f32.mrb[0].mxu0
        %1059 = vmatprep.mubr.f32.mxu0 0.0
        %1060 = vmatmul.mubr.f32.gmra.mrb[0].mxu0 %v601
        %v1061 = vpop.f32.mrb[0].mxu0
        %v1062 = vadd.f32 %v842, %v1061
        %v1063 = vpop.f32.mrb[0].mxu0
        %1064 = vmatprep.mubr.f32.mxu0 0.0
        %1065 = vmatmul.mubr.f32.gmra.mrb[0].mxu0 %v604
        %v1066 = vpop.f32.mrb[0].mxu0
        %v1067 = vadd.f32 %v847, %v1066
        %v1068 = vpop.f32.mrb[0].mxu0
        %1069 = vmatprep.mubr.f32.mxu0 0.0
        %1070 = vmatmul.mubr.f32.gmra.mrb[0].mxu0 %v607
        %v1071 = vpop.f32.mrb[0].mxu0
        %v1072 = vadd.f32 %v852, %v1071
        %v1073 = vpop.f32.mrb[0].mxu0
        %1074 = vmatprep.mubr.f32.mxu0 0.0
        %1075 = vmatmul.mubr.f32.gmra.mrb[0].mxu0 %v610
        %v1076 = vpop.f32.mrb[0].mxu0
        %v1077 = vadd.f32 %v857, %v1076
        %v1078 = vpop.f32.mrb[0].mxu0
        %1079 = vmatprep.mubr.f32.mxu0 0.0
        %1080 = vmatmul.mubr.f32.gmra.mrb[0].mxu0 %v613
        %v1081 = vpop.f32.mrb[0].mxu0
        %v1082 = vadd.f32 %v862, %v1081
        %v1083 = vpop.f32.mrb[0].mxu0
        %1084 = vmatprep.mubr.f32.mxu0 0.0
        %1085 = vmatmul.mubr.f32.gmra.mrb[0].mxu0 %v616
        %v1086 = vpop.f32.mrb[0].mxu0
        %v1087 = vadd.f32 %v867, %v1086
        %v1088 = vpop.f32.mrb[0].mxu0
        %1089 = vmatprep.mubr.f32.mxu0 0.0
        %1090 = vmatmul.mubr.f32.gmra.mrb[0].mxu0 %v619
        %v1091 = vpop.f32.mrb[0].mxu0
        %v1092 = vadd.f32 %v872, %v1091
        %v1093 = vpop.f32.mrb[0].mxu0
        %1094 = vmatprep.mubr.f32.mxu0 0.0
        %1095 = vmatmul.mubr.f32.gmra.mrb[0].mxu0 %v622
        %v1096 = vpop.f32.mrb[0].mxu0
        %v1097 = vadd.f32 %v877, %v1096
        %v1098 = vpop.f32.mrb[0].mxu0
        %1099 = vmatprep.mubr.f32.mxu0 0.0
        %1100 = vmatmul.mubr.f32.gmra.mrb[0].mxu0 %v625
        %v1101 = vpop.f32.mrb[0].mxu0
        %v1102 = vadd.f32 %v882, %v1101
        %v1103 = vpop.f32.mrb[0].mxu0
        %1104 = vmatprep.mubr.f32.mxu0 0.0
        %1105 = vmatmul.mubr.f32.gmra.mrb[0].mxu0 %v628
        %v1106 = vpop.f32.mrb[0].mxu0
        %v1107 = vadd.f32 %v887, %v1106
        %v1108 = vpop.f32.mrb[0].mxu0
        %1109 = vmatprep.mubr.f32.mxu0 0.0
        %1110 = vmatmul.mubr.f32.gmra.mrb[0].mxu0 %v631
        %v1111 = vpop.f32.mrb[0].mxu0
        %v1112 = vadd.f32 %v892, %v1111
        %v1113 = vpop.f32.mrb[0].mxu0
        %1114 = vmatprep.mubr.f32.mxu0 0.0
        %1115 = vmatmul.mubr.f32.gmra.mrb[0].mxu0 %v634
        %v1116 = vpop.f32.mrb[0].mxu0
        %v1117 = vadd.f32 %v897, %v1116
        %v1118 = vpop.f32.mrb[0].mxu0
        %1119 = vmatprep.mubr.f32.mxu0 0.0
        %1120 = vmatmul.mubr.f32.gmra.mrb[0].mxu0 %v637
        %v1121 = vpop.f32.mrb[0].mxu0
        %v1122 = vadd.f32 %v902, %v1121
        %v1123 = vpop.f32.mrb[0].mxu0
        %1124 = vmatprep.mubr.f32.mxu0 0.0
        %1125 = vmatmul.mubr.f32.gmra.mrb[0].mxu0 %v640
        %v1126 = vpop.f32.mrb[0].mxu0
        %v1127 = vadd.f32 %v907, %v1126
        %v1128 = vpop.f32.mrb[0].mxu0
        %1129 = vmatprep.mubr.f32.mxu0 0.0
        %1130 = vmatmul.mubr.f32.gmra.mrb[0].mxu0 %v643
        %v1131 = vpop.f32.mrb[0].mxu0
        %v1132 = vadd.f32 %v912, %v1131
        %v1133 = vpop.f32.mrb[0].mxu0
        %1134 = vmatprep.mubr.f32.mxu0 0.0
        %1135 = vmatmul.mubr.f32.gmra.mrb[0].mxu0 %v646
        %v1136 = vpop.f32.mrb[0].mxu0
        %v1137 = vadd.f32 %v917, %v1136
        %v1138 = vpop.f32.mrb[0].mxu0
        %1139 = vmatprep.mubr.f32.mxu0 0.0
        %1140 = vmatmul.mubr.f32.gmra.mrb[0].mxu0 %v649
        %v1141 = vpop.f32.mrb[0].mxu0
        %v1142 = vadd.f32 %v922, %v1141
        %v1143 = vpop.f32.mrb[0].mxu0
        %1144 = vdwg.mxu0
        %v1145 = vmul.f32 %v992, 0.5
        %v1146 = vmul.f32 %v997, 0.5
        %v1147 = vmul.f32 %v1002, 0.5
        %v1148 = vmul.f32 %v1007, 0.5
        %v1149 = vmul.f32 %v1012, 0.5
        %v1150 = vmul.f32 %v1017, 0.5
        %v1151 = vmul.f32 %v1022, 0.5
        %v1152 = vmul.f32 %v1027, 0.5
        %v1153 = vmul.f32 %v1032, 0.5
        %v1154 = vmul.f32 %v1037, 0.5
        %v1155 = vmul.f32 %v1042, 0.5
        %v1156 = vmul.f32 %v1047, 0.5
        %v1157 = vmul.f32 %v1052, 0.5
        %v1158 = vmul.f32 %v1057, 0.5
        %v1159 = vmul.f32 %v1062, 0.5
        %v1160 = vmul.f32 %v1067, 0.5
        %v1161 = vmul.f32 %v1072, 0.5
        %v1162 = vmul.f32 %v1077, 0.5
        %v1163 = vmul.f32 %v1082, 0.5
        %v1164 = vmul.f32 %v1087, 0.5
        %v1165 = vmul.f32 %v1092, 0.5
        %v1166 = vmul.f32 %v1097, 0.5
        %v1167 = vmul.f32 %v1102, 0.5
        %v1168 = vmul.f32 %v1107, 0.5
        %v1169 = vmul.f32 %v1112, 0.5
        %v1170 = vmul.f32 %v1117, 0.5
        %v1171 = vmul.f32 %v1122, 0.5
        %v1172 = vmul.f32 %v1127, 0.5
        %v1173 = vmul.f32 %v1132, 0.5
        %v1174 = vmul.f32 %v1137, 0.5
        %v1175 = vmul.f32 %v1142, 0.5
        %v1176 = vmul.f32 %v992, 0.70710677
        %v1177 = vmul.f32 %v997, 0.70710677
        %v1178 = vmul.f32 %v1002, 0.70710677
        %v1179 = vmul.f32 %v1007, 0.70710677
        %v1180 = vmul.f32 %v1012, 0.70710677
        %v1181 = vmul.f32 %v1017, 0.70710677
        %v1182 = vmul.f32 %v1022, 0.70710677
        %v1183 = vmul.f32 %v1027, 0.70710677
        %v1184 = vmul.f32 %v1032, 0.70710677
        %v1185 = vmul.f32 %v1037, 0.70710677
        %v1186 = vmul.f32 %v1042, 0.70710677
        %v1187 = vmul.f32 %v1047, 0.70710677
        %v1188 = vmul.f32 %v1052, 0.70710677
        %v1189 = vmul.f32 %v1057, 0.70710677
        %v1190 = vmul.f32 %v1062, 0.70710677
        %v1191 = vmul.f32 %v1067, 0.70710677
        %v1192 = vmul.f32 %v1072, 0.70710677
        %v1193 = vmul.f32 %v1077, 0.70710677
        %v1194 = vmul.f32 %v1082, 0.70710677
        %v1195 = vmul.f32 %v1087, 0.70710677
        %v1196 = vmul.f32 %v1092, 0.70710677
        %v1197 = vmul.f32 %v1097, 0.70710677
        %v1198 = vmul.f32 %v1102, 0.70710677
        %v1199 = vmul.f32 %v1107, 0.70710677
        %v1200 = vmul.f32 %v1112, 0.70710677
        %v1201 = vmul.f32 %v1117, 0.70710677
        %v1202 = vmul.f32 %v1122, 0.70710677
        %v1203 = vmul.f32 %v1127, 0.70710677
        %v1204 = vmul.f32 %v1132, 0.70710677
        %v1205 = vmul.f32 %v1137, 0.70710677
        %v1206 = vmul.f32 %v1142, 0.70710677
        %v1207 = verf.f32.pop %v1176
        %v1208 = verf.f32.pop %v1177
        %v1209 = verf.f32.pop %v1178
        %v1210 = verf.f32.pop %v1179
        %v1211 = verf.f32.pop %v1180
        %v1212 = verf.f32.pop %v1181
        %v1213 = verf.f32.pop %v1182
        %v1214 = verf.f32.pop %v1183
        %v1215 = verf.f32.pop %v1184
        %v1216 = verf.f32.pop %v1185
        %v1217 = verf.f32.pop %v1186
        %v1218 = verf.f32.pop %v1187
        %v1219 = verf.f32.pop %v1188
        %v1220 = verf.f32.pop %v1189
        %v1221 = verf.f32.pop %v1190
        %v1222 = verf.f32.pop %v1191
        %v1223 = verf.f32.pop %v1192
        %v1224 = verf.f32.pop %v1193
        %v1225 = verf.f32.pop %v1194
        %v1226 = verf.f32.pop %v1195
        %v1227 = verf.f32.pop %v1196
        %v1228 = verf.f32.pop %v1197
        %v1229 = verf.f32.pop %v1198
        %v1230 = verf.f32.pop %v1199
        %v1231 = verf.f32.pop %v1200
        %v1232 = verf.f32.pop %v1201
        %v1233 = verf.f32.pop %v1202
        %v1234 = verf.f32.pop %v1203
        %v1235 = verf.f32.pop %v1204
        %v1236 = verf.f32.pop %v1205
        %v1237 = verf.f32.pop %v1206
        %v1238 = vadd.f32 %v1207, 1.0
        %v1239 = vadd.f32 %v1208, 1.0
        %v1240 = vadd.f32 %v1209, 1.0
        %v1241 = vadd.f32 %v1210, 1.0
        %v1242 = vadd.f32 %v1211, 1.0
        %v1243 = vadd.f32 %v1212, 1.0
        %v1244 = vadd.f32 %v1213, 1.0
        %v1245 = vadd.f32 %v1214, 1.0
        %v1246 = vadd.f32 %v1215, 1.0
        %v1247 = vadd.f32 %v1216, 1.0
        %v1248 = vadd.f32 %v1217, 1.0
        %v1249 = vadd.f32 %v1218, 1.0
        %v1250 = vadd.f32 %v1219, 1.0
        %v1251 = vadd.f32 %v1220, 1.0
        %v1252 = vadd.f32 %v1221, 1.0
        %v1253 = vadd.f32 %v1222, 1.0
        %v1254 = vadd.f32 %v1223, 1.0
        %v1255 = vadd.f32 %v1224, 1.0
        %v1256 = vadd.f32 %v1225, 1.0
        %v1257 = vadd.f32 %v1226, 1.0
        %v1258 = vadd.f32 %v1227, 1.0
        %v1259 = vadd.f32 %v1228, 1.0
        %v1260 = vadd.f32 %v1229, 1.0
        %v1261 = vadd.f32 %v1230, 1.0
        %v1262 = vadd.f32 %v1231, 1.0
        %v1263 = vadd.f32 %v1232, 1.0
        %v1264 = vadd.f32 %v1233, 1.0
        %v1265 = vadd.f32 %v1234, 1.0
        %v1266 = vadd.f32 %v1235, 1.0
        %v1267 = vadd.f32 %v1236, 1.0
        %v1268 = vadd.f32 %v1237, 1.0
        %v1269 = vmul.f32 %v1145, %v1238
        %v1270 = vmul.f32 %v1146, %v1239
        %v1271 = vmul.f32 %v1147, %v1240
        %v1272 = vmul.f32 %v1148, %v1241
        %v1273 = vmul.f32 %v1149, %v1242
        %v1274 = vmul.f32 %v1150, %v1243
        %v1275 = vmul.f32 %v1151, %v1244
        %v1276 = vmul.f32 %v1152, %v1245
        %v1277 = vmul.f32 %v1153, %v1246
        %v1278 = vmul.f32 %v1154, %v1247
        %v1279 = vmul.f32 %v1155, %v1248
        %v1280 = vmul.f32 %v1156, %v1249
        %v1281 = vmul.f32 %v1157, %v1250
        %v1282 = vmul.f32 %v1158, %v1251
        %v1283 = vmul.f32 %v1159, %v1252
        %v1284 = vmul.f32 %v1160, %v1253
        %v1285 = vmul.f32 %v1161, %v1254
        %v1286 = vmul.f32 %v1162, %v1255
        %v1287 = vmul.f32 %v1163, %v1256
        %v1288 = vmul.f32 %v1164, %v1257
        %v1289 = vmul.f32 %v1165, %v1258
        %v1290 = vmul.f32 %v1166, %v1259
        %v1291 = vmul.f32 %v1167, %v1260
        %v1292 = vmul.f32 %v1168, %v1261
        %v1293 = vmul.f32 %v1169, %v1262
        %v1294 = vmul.f32 %v1170, %v1263
        %v1295 = vmul.f32 %v1171, %v1264
        %v1296 = vmul.f32 %v1172, %v1265
        %v1297 = vmul.f32 %v1173, %v1266
        %v1298 = vmul.f32 %v1174, %v1267
        %v1299 = vmul.f32 %v1175, %v1268
        %v1300 = vlaneseq
        %v1301 = vshrl.u32 %v1300, 7
        %v1302 = vadd.s32 %v1301, 8
        %v1303 = vadd.s32 %v1301, 16
        %v1304 = vadd.s32 %v1301, 24
        %v1305 = vadd.s32 %v1301, 32
        %v1306 = vadd.s32 %v1301, 40
        %v1307 = vadd.s32 %v1301, 48
        %v1308 = vadd.s32 %v1301, 56
        %v1309 = vadd.s32 %v1301, 64
        %v1310 = vadd.s32 %v1301, 72
        %v1311 = vadd.s32 %v1301, 80
        %v1312 = vlaneseq
        %v1313 = vand.u32 %v1312, 127
        %v1314 = vadd.s32 %v1313, 128
        %v1315 = vmul.u32 %v1301, 3
        %v1316 = vmul.u32 %v1302, 3
        %v1317 = vmul.u32 %v1303, 3
        %v1318 = vmul.u32 %v1304, 3
        %v1319 = vmul.u32 %v1305, 3
        %v1320 = vmul.u32 %v1306, 3
        %v1321 = vmul.u32 %v1307, 3
        %v1322 = vmul.u32 %v1308, 3
        %v1323 = vmul.u32 %v1309, 3
        %v1324 = vmul.u32 %v1310, 3
        %v1325 = vmul.u32 %v1311, 3
        %vm1326 = vcmp.eq.s32.totalorder %v1313, %v1315
        %vm1327 = vcmp.eq.s32.totalorder %v1314, %v1315
        %vm1328 = vcmp.eq.s32.totalorder %v1313, %v1316
        %vm1329 = vcmp.eq.s32.totalorder %v1314, %v1316
        %vm1330 = vcmp.eq.s32.totalorder %v1313, %v1317
        %vm1331 = vcmp.eq.s32.totalorder %v1314, %v1317
        %vm1332 = vcmp.eq.s32.totalorder %v1313, %v1318
        %vm1333 = vcmp.eq.s32.totalorder %v1314, %v1318
        %vm1334 = vcmp.eq.s32.totalorder %v1313, %v1319
        %vm1335 = vcmp.eq.s32.totalorder %v1314, %v1319
        %vm1336 = vcmp.eq.s32.totalorder %v1313, %v1320
        %vm1337 = vcmp.eq.s32.totalorder %v1314, %v1320
        %vm1338 = vcmp.eq.s32.totalorder %v1313, %v1321
        %vm1339 = vcmp.eq.s32.totalorder %v1314, %v1321
        %vm1340 = vcmp.eq.s32.totalorder %v1313, %v1322
        %vm1341 = vcmp.eq.s32.totalorder %v1314, %v1322
        %vm1342 = vcmp.eq.s32.totalorder %v1313, %v1323
        %vm1343 = vcmp.eq.s32.totalorder %v1314, %v1323
        %vm1344 = vcmp.eq.s32.totalorder %v1313, %v1324
        %vm1345 = vcmp.eq.s32.totalorder %v1314, %v1324
        %vm1346 = vcmp.eq.s32.totalorder %v1313, %v1325
        %vm1347 = vcmp.eq.s32.totalorder %v1314, %v1325
        %v1348 = vsel %vm1326, 1, 0
        %v1349 = vsel %vm1327, 1, 0
        %v1350 = vsel %vm1328, 1, 0
        %v1351 = vsel %vm1329, 1, 0
        %v1352 = vsel %vm1330, 1, 0
        %v1353 = vsel %vm1331, 1, 0
        %v1354 = vsel %vm1332, 1, 0
        %v1355 = vsel %vm1333, 1, 0
        %v1356 = vsel %vm1334, 1, 0
        %v1357 = vsel %vm1335, 1, 0
        %v1358 = vsel %vm1336, 1, 0
        %v1359 = vsel %vm1337, 1, 0
        %v1360 = vsel %vm1338, 1, 0
        %v1361 = vsel %vm1339, 1, 0
        %v1362 = vsel %vm1340, 1, 0
        %v1363 = vsel %vm1341, 1, 0
        %v1364 = vsel %vm1342, 1, 0
        %v1365 = vsel %vm1343, 1, 0
        %v1366 = vsel %vm1344, 1, 0
        %v1367 = vsel %vm1345, 1, 0
        %v1368 = vsel %vm1346, 1, 0
        %v1369 = vsel %vm1347, 1, 0
        %v1370 = vcvt.s32.f32 %v1348
        %v1371 = vcvt.s32.f32 %v1349
        %v1372 = vcvt.s32.f32 %v1350
        %v1373 = vcvt.s32.f32 %v1351
        %v1374 = vcvt.s32.f32 %v1352
        %v1375 = vcvt.s32.f32 %v1353
        %v1376 = vcvt.s32.f32 %v1354
        %v1377 = vcvt.s32.f32 %v1355
        %v1378 = vcvt.s32.f32 %v1356
        %v1379 = vcvt.s32.f32 %v1357
        %v1380 = vcvt.s32.f32 %v1358
        %v1381 = vcvt.s32.f32 %v1359
        %v1382 = vcvt.s32.f32 %v1360
        %v1383 = vcvt.s32.f32 %v1361
        %v1384 = vcvt.s32.f32 %v1362
        %v1385 = vcvt.s32.f32 %v1363
        %v1386 = vcvt.s32.f32 %v1364
        %v1387 = vcvt.s32.f32 %v1365
        %v1388 = vcvt.s32.f32 %v1366
        %v1389 = vcvt.s32.f32 %v1367
        %v1390 = vcvt.s32.f32 %v1368
        %v1391 = vcvt.s32.f32 %v1369
        %vm1392 = vcmask 941056
        %v1394 = vsel %vm1392, %v1371, 0
        %v1397 = vsel %vm1392, %v1373, 0
        %v1400 = vsel %vm1392, %v1375, 0
        %v1403 = vsel %vm1392, %v1377, 0
        %v1406 = vsel %vm1392, %v1379, 0
        %v1409 = vsel %vm1392, %v1381, 0
        %v1412 = vsel %vm1392, %v1383, 0
        %v1415 = vsel %vm1392, %v1385, 0
        %v1418 = vsel %vm1392, %v1387, 0
        %v1421 = vsel %vm1392, %v1389, 0
        %v1424 = vsel %vm1392, %v1391, 0
        %vm1426 = vcmask 1042432
        %v1428 = vsel %vm1426, %v1299, 0
        %1430 = vmatprep.subr.mxu0 0.0
        %1431 = vmatpush1.msra.mxu0 %v1269
        %1432 = vmatprep.subr.mxu0 0.0
        %1433 = vmatpush1.msra.mxu0 %v1270
        %1434 = vmatprep.subr.mxu0 0.0
        %1435 = vmatpush1.msra.mxu0 %v1271
        %1436 = vmatprep.subr.mxu0 0.0
        %1437 = vmatpush1.msra.mxu0 %v1272
        %1438 = vmatprep.subr.mxu0 0.0
        %1439 = vmatpush1.msra.mxu0 %v1273
        %1440 = vmatprep.subr.mxu0 0.0
        %1441 = vmatpush1.msra.mxu0 %v1274
        %1442 = vmatprep.subr.mxu0 0.0
        %1443 = vmatpush1.msra.mxu0 %v1275
        %1444 = vmatprep.subr.mxu0 0.0
        %1445 = vmatpush1.msra.mxu0 %v1276
        %1446 = vmatprep.subr.mxu0 0.0
        %1447 = vmatpush1.msra.mxu0 %v1277
        %1448 = vmatprep.subr.mxu0 0.0
        %1449 = vmatpush1.msra.mxu0 %v1278
        %1450 = vmatprep.subr.mxu0 0.0
        %1451 = vmatpush1.msra.mxu0 %v1279
        %1452 = vmatprep.subr.mxu0 0.0
        %1453 = vmatpush1.msra.mxu0 %v1280
        %1454 = vmatprep.subr.mxu0 0.0
        %1455 = vmatpush1.msra.mxu0 %v1281
        %1456 = vmatprep.subr.mxu0 0.0
        %1457 = vmatpush1.msra.mxu0 %v1282
        %1458 = vmatprep.subr.mxu0 0.0
        %1459 = vmatpush1.msra.mxu0 %v1283
        %1460 = vmatprep.subr.mxu0 0.0
        %1461 = vmatpush1.msra.mxu0 %v1284
        %1462 = vmatprep.subr.mxu0 0.0
        %1463 = vmatpush1.msra.mxu0 %v1285
        %1464 = vmatprep.subr.mxu0 0.0
        %1465 = vmatpush1.msra.mxu0 %v1286
        %1466 = vmatprep.subr.mxu0 0.0
        %1467 = vmatpush1.msra.mxu0 %v1287
        %1468 = vmatprep.subr.mxu0 0.0
        %1469 = vmatpush1.msra.mxu0 %v1288
        %1470 = vmatprep.subr.mxu0 0.0
        %1471 = vmatpush1.msra.mxu0 %v1289
        %1472 = vmatprep.subr.mxu0 0.0
        %1473 = vmatpush1.msra.mxu0 %v1290
        %1474 = vmatprep.subr.mxu0 0.0
        %1475 = vmatpush1.msra.mxu0 %v1291
        %1476 = vmatprep.subr.mxu0 0.0
        %1477 = vmatpush1.msra.mxu0 %v1292
        %1478 = vmatprep.subr.mxu0 0.0
        %1479 = vmatpush1.msra.mxu0 %v1293
        %1480 = vmatprep.subr.mxu0 0.0
        %1481 = vmatpush1.msra.mxu0 %v1294
        %1482 = vmatprep.subr.mxu0 0.0
        %1483 = vmatpush1.msra.mxu0 %v1295
        %1484 = vmatprep.subr.mxu0 0.0
        %1485 = vmatpush1.msra.mxu0 %v1296
        %1486 = vmatprep.subr.mxu0 0.0
        %1487 = vmatpush1.msra.mxu0 %v1297
        %1488 = vmatprep.subr.mxu0 0.0
        %1489 = vmatpush1.msra.mxu0 %v1298
        %1490 = vmatprep.subr.mxu0 0.0
        %1491 = vmatpush1.msra.mxu0 %v1428
        %1492 = vmatprep.subr.mxu0 0.0
        %1493 = vmatpush1.msra.mxu0 0.0
        %1494 = vmatprep.mubr.f32.mxu0 %v1394
        %1495 = vmatmul.mubr.f32.gmra.mrb[0].mxu0 %v1370
        %v1496 = vpop.f32.mrb[0].mxu0
        %v1497 = vadd.f32 0.0, %v1496
        %v1498 = vpop.f32.mrb[0].mxu0
        %1499 = vmatprep.mubr.f32.mxu0 %v1397
        %1500 = vmatmul.mubr.f32.gmra.mrb[0].mxu0 %v1372
        %v1501 = vpop.f32.mrb[0].mxu0
        %v1502 = vadd.f32 0.0, %v1501
        %v1503 = vpop.f32.mrb[0].mxu0
        %1504 = vmatprep.mubr.f32.mxu0 %v1400
        %1505 = vmatmul.mubr.f32.gmra.mrb[0].mxu0 %v1374
        %v1506 = vpop.f32.mrb[0].mxu0
        %v1507 = vadd.f32 0.0, %v1506
        %v1508 = vpop.f32.mrb[0].mxu0
        %1509 = vmatprep.mubr.f32.mxu0 %v1403
        %1510 = vmatmul.mubr.f32.gmra.mrb[0].mxu0 %v1376
        %v1511 = vpop.f32.mrb[0].mxu0
        %v1512 = vadd.f32 0.0, %v1511
        %v1513 = vpop.f32.mrb[0].mxu0
        %1514 = vmatprep.mubr.f32.mxu0 %v1406
        %1515 = vmatmul.mubr.f32.gmra.mrb[0].mxu0 %v1378
        %v1516 = vpop.f32.mrb[0].mxu0
        %v1517 = vadd.f32 0.0, %v1516
        %v1518 = vpop.f32.mrb[0].mxu0
        %1519 = vmatprep.mubr.f32.mxu0 %v1409
        %1520 = vmatmul.mubr.f32.gmra.mrb[0].mxu0 %v1380
        %v1521 = vpop.f32.mrb[0].mxu0
        %v1522 = vadd.f32 0.0, %v1521
        %v1523 = vpop.f32.mrb[0].mxu0
        %1524 = vmatprep.mubr.f32.mxu0 %v1412
        %1525 = vmatmul.mubr.f32.gmra.mrb[0].mxu0 %v1382
        %v1526 = vpop.f32.mrb[0].mxu0
        %v1527 = vadd.f32 0.0, %v1526
        %v1528 = vpop.f32.mrb[0].mxu0
        %1529 = vmatprep.mubr.f32.mxu0 %v1415
        %1530 = vmatmul.mubr.f32.gmra.mrb[0].mxu0 %v1384
        %v1531 = vpop.f32.mrb[0].mxu0
        %v1532 = vadd.f32 0.0, %v1531
        %v1533 = vpop.f32.mrb[0].mxu0
        %1534 = vmatprep.mubr.f32.mxu0 %v1418
        %1535 = vmatmul.mubr.f32.gmra.mrb[0].mxu0 %v1386
        %v1536 = vpop.f32.mrb[0].mxu0
        %v1537 = vadd.f32 0.0, %v1536
        %v1538 = vpop.f32.mrb[0].mxu0
        %1539 = vmatprep.mubr.f32.mxu0 %v1421
        %1540 = vmatmul.mubr.f32.gmra.mrb[0].mxu0 %v1388
        %v1541 = vpop.f32.mrb[0].mxu0
        %v1542 = vadd.f32 0.0, %v1541
        %v1543 = vpop.f32.mrb[0].mxu0
        %1544 = vmatprep.mubr.f32.mxu0 %v1424
        %1545 = vmatmul.mubr.f32.gmra.mrb[0].mxu0 %v1390
        %v1546 = vpop.f32.mrb[0].mxu0
        %v1547 = vadd.f32 0.0, %v1546
        %v1548 = vpop.f32.mrb[0].mxu0
        %1549 = vdwg.mxu0
        %v1550 = vld [vmem:[%s3] sm:$0xff]
        %v1551 = vld [vmem:[%s3 + $0x8] sm:$0xff]
        %v1552 = vld [vmem:[%s3 + $0x10] sm:$0xff]
        %v1553 = vld [vmem:[%s3 + $0x18] sm:$0xff]
        %v1554 = vld [vmem:[%s3 + $0x20] sm:$0xff]
        %v1555 = vld [vmem:[%s3 + $0x28] sm:$0xff]
        %v1556 = vld [vmem:[%s3 + $0x30] sm:$0xff]
        %v1557 = vld [vmem:[%s3 + $0x38] sm:$0xff]
        %v1558 = vld [vmem:[%s3 + $0x40] sm:$0xff]
        %v1559 = vld [vmem:[%s3 + $0x48] sm:$0xff]
        %v1560 = vld [vmem:[%s3 + $0x50] sm:$0xff]
        %v1561 = vld [vmem:[%s3 + $0x58] sm:$0xff]
        %v1562 = vld [vmem:[%s3 + $0x60] sm:$0xff]
        %v1563 = vld [vmem:[%s3 + $0x68] sm:$0xff]
        %v1564 = vld [vmem:[%s3 + $0x70] sm:$0xff]
        %v1565 = vld [vmem:[%s3 + $0x78] sm:$0xff]
        %v1566 = vld [vmem:[%s3 + $0x80] sm:$0xff]
        %v1567 = vld [vmem:[%s3 + $0x88] sm:$0xff]
        %v1568 = vld [vmem:[%s3 + $0x90] sm:$0xff]
        %v1569 = vld [vmem:[%s3 + $0x98] sm:$0xff]
        %v1570 = vld [vmem:[%s3 + $0xa0] sm:$0xff]
        %v1571 = vld [vmem:[%s3 + $0xa8] sm:$0xff]
        %v1572 = vld [vmem:[%s3 + $0xb0] sm:$0xff]
        %v1573 = vld [vmem:[%s3 + $0xb8] sm:$0xff]
        %v1574 = vld [vmem:[%s3 + $0xc0] sm:$0xff]
        %v1575 = vld [vmem:[%s3 + $0xc8] sm:$0xff]
        %v1576 = vld [vmem:[%s3 + $0xd0] sm:$0xff]
        %v1577 = vld [vmem:[%s3 + $0xd8] sm:$0xff]
        %v1578 = vld [vmem:[%s3 + $0xe0] sm:$0xff]
        %v1579 = vld [vmem:[%s3 + $0xe8] sm:$0xff]
        %v1580 = vld [vmem:[%s3 + $0xf0] sm:$0xff]
        %v1581 = vld [vmem:[%s3 + $0xf8] sm:$0xff]
        %v1582 = vld [vmem:[%s3 + $0x100] sm:$0xff]
        %v1583 = vld [vmem:[%s3 + $0x108] sm:$0xff]
        %v1584 = vld [vmem:[%s3 + $0x110] sm:$0xff]
        %v1585 = vld [vmem:[%s3 + $0x118] sm:$0xff]
        %v1586 = vld [vmem:[%s3 + $0x120] sm:$0xff]
        %v1587 = vld [vmem:[%s3 + $0x128] sm:$0xff]
        %v1588 = vld [vmem:[%s3 + $0x130] sm:$0xff]
        %v1589 = vld [vmem:[%s3 + $0x138] sm:$0xff]
        %v1590 = vld [vmem:[%s3 + $0x140] sm:$0xff]
        %v1591 = vld [vmem:[%s3 + $0x148] sm:$0xff]
        %v1592 = vld [vmem:[%s3 + $0x150] sm:$0xff]
        %v1593 = vld [vmem:[%s3 + $0x158] sm:$0xff]
        %v1594 = vld [vmem:[%s3 + $0x160] sm:$0xff]
        %v1595 = vld [vmem:[%s3 + $0x168] sm:$0xff]
        %v1596 = vld [vmem:[%s3 + $0x170] sm:$0xff]
        %v1597 = vld [vmem:[%s3 + $0x178] sm:$0xff]
        %v1598 = vld [vmem:[%s3 + $0x180] sm:$0xff]
        %v1599 = vld [vmem:[%s3 + $0x188] sm:$0xff]
        %v1600 = vld [vmem:[%s3 + $0x190] sm:$0xff]
        %v1601 = vld [vmem:[%s3 + $0x198] sm:$0xff]
        %v1602 = vld [vmem:[%s3 + $0x1a0] sm:$0xff]
        %v1603 = vld [vmem:[%s3 + $0x1a8] sm:$0xff]
        %v1604 = vld [vmem:[%s3 + $0x1b0] sm:$0xff]
        %v1605 = vld [vmem:[%s3 + $0x1b8] sm:$0xff]
        %v1606 = vld [vmem:[%s3 + $0x1c0] sm:$0xff]
        %v1607 = vld [vmem:[%s3 + $0x1c8] sm:$0xff]
        %v1608 = vld [vmem:[%s3 + $0x1d0] sm:$0xff]
        %v1609 = vld [vmem:[%s3 + $0x1d8] sm:$0xff]
        %v1610 = vld [vmem:[%s3 + $0x1e0] sm:$0xff]
        %v1611 = vld [vmem:[%s3 + $0x1e8] sm:$0xff]
        %v1612 = vld [vmem:[%s3 + $0x1f0] sm:$0xff]
        %v1613 = vld [vmem:[%s3 + $0x1f8] sm:$0xff]
        %v1614 = vadd.s32 %v1315, 1
        %v1615 = vadd.s32 %v1316, 1
        %v1616 = vadd.s32 %v1317, 1
        %v1617 = vadd.s32 %v1318, 1
        %v1618 = vadd.s32 %v1319, 1
        %v1619 = vadd.s32 %v1320, 1
        %v1620 = vadd.s32 %v1321, 1
        %v1621 = vadd.s32 %v1322, 1
        %v1622 = vadd.s32 %v1323, 1
        %v1623 = vadd.s32 %v1324, 1
        %v1624 = vadd.s32 %v1325, 1
        %vm1625 = vcmp.eq.s32.totalorder %v1313, %v1614
        %vm1626 = vcmp.eq.s32.totalorder %v1314, %v1614
        %vm1627 = vcmp.eq.s32.totalorder %v1313, %v1615
        %vm1628 = vcmp.eq.s32.totalorder %v1314, %v1615
        %vm1629 = vcmp.eq.s32.totalorder %v1313, %v1616
        %vm1630 = vcmp.eq.s32.totalorder %v1314, %v1616
        %vm1631 = vcmp.eq.s32.totalorder %v1313, %v1617
        %vm1632 = vcmp.eq.s32.totalorder %v1314, %v1617
        %vm1633 = vcmp.eq.s32.totalorder %v1313, %v1618
        %vm1634 = vcmp.eq.s32.totalorder %v1314, %v1618
        %vm1635 = vcmp.eq.s32.totalorder %v1313, %v1619
        %vm1636 = vcmp.eq.s32.totalorder %v1314, %v1619
        %vm1637 = vcmp.eq.s32.totalorder %v1313, %v1620
        %vm1638 = vcmp.eq.s32.totalorder %v1314, %v1620
        %vm1639 = vcmp.eq.s32.totalorder %v1313, %v1621
        %vm1640 = vcmp.eq.s32.totalorder %v1314, %v1621
        %vm1641 = vcmp.eq.s32.totalorder %v1313, %v1622
        %vm1642 = vcmp.eq.s32.totalorder %v1314, %v1622
        %vm1643 = vcmp.eq.s32.totalorder %v1313, %v1623
        %vm1644 = vcmp.eq.s32.totalorder %v1314, %v1623
        %vm1645 = vcmp.eq.s32.totalorder %v1313, %v1624
        %vm1646 = vcmp.eq.s32.totalorder %v1314, %v1624
        %v1647 = vsel %vm1625, 1, 0
        %v1648 = vsel %vm1626, 1, 0
        %v1649 = vsel %vm1627, 1, 0
        %v1650 = vsel %vm1628, 1, 0
        %v1651 = vsel %vm1629, 1, 0
        %v1652 = vsel %vm1630, 1, 0
        %v1653 = vsel %vm1631, 1, 0
        %v1654 = vsel %vm1632, 1, 0
        %v1655 = vsel %vm1633, 1, 0
        %v1656 = vsel %vm1634, 1, 0
        %v1657 = vsel %vm1635, 1, 0
        %v1658 = vsel %vm1636, 1, 0
        %v1659 = vsel %vm1637, 1, 0
        %v1660 = vsel %vm1638, 1, 0
        %v1661 = vsel %vm1639, 1, 0
        %v1662 = vsel %vm1640, 1, 0
        %v1663 = vsel %vm1641, 1, 0
        %v1664 = vsel %vm1642, 1, 0
        %v1665 = vsel %vm1643, 1, 0
        %v1666 = vsel %vm1644, 1, 0
        %v1667 = vsel %vm1645, 1, 0
        %v1668 = vsel %vm1646, 1, 0
        %v1669 = vcvt.s32.f32 %v1647
        %v1670 = vcvt.s32.f32 %v1648
        %v1671 = vcvt.s32.f32 %v1649
        %v1672 = vcvt.s32.f32 %v1650
        %v1673 = vcvt.s32.f32 %v1651
        %v1674 = vcvt.s32.f32 %v1652
        %v1675 = vcvt.s32.f32 %v1653
        %v1676 = vcvt.s32.f32 %v1654
        %v1677 = vcvt.s32.f32 %v1655
        %v1678 = vcvt.s32.f32 %v1656
        %v1679 = vcvt.s32.f32 %v1657
        %v1680 = vcvt.s32.f32 %v1658
        %v1681 = vcvt.s32.f32 %v1659
        %v1682 = vcvt.s32.f32 %v1660
        %v1683 = vcvt.s32.f32 %v1661
        %v1684 = vcvt.s32.f32 %v1662
        %v1685 = vcvt.s32.f32 %v1663
        %v1686 = vcvt.s32.f32 %v1664
        %v1687 = vcvt.s32.f32 %v1665
        %v1688 = vcvt.s32.f32 %v1666
        %v1689 = vcvt.s32.f32 %v1667
        %v1690 = vcvt.s32.f32 %v1668
        %v1692 = vsel %vm1392, %v1670, 0
        %v1695 = vsel %vm1392, %v1672, 0
        %v1698 = vsel %vm1392, %v1674, 0
        %v1701 = vsel %vm1392, %v1676, 0
        %v1704 = vsel %vm1392, %v1678, 0
        %v1707 = vsel %vm1392, %v1680, 0
        %v1710 = vsel %vm1392, %v1682, 0
        %v1713 = vsel %vm1392, %v1684, 0
        %v1716 = vsel %vm1392, %v1686, 0
        %v1719 = vsel %vm1392, %v1688, 0
        %v1722 = vsel %vm1392, %v1690, 0
        %1724 = vmatprep.subr.mxu0 0.0
        %1725 = vmatpush1.msra.mxu0 %v1269
        %1726 = vmatprep.subr.mxu0 0.0
        %1727 = vmatpush1.msra.mxu0 %v1270
        %1728 = vmatprep.subr.mxu0 0.0
        %1729 = vmatpush1.msra.mxu0 %v1271
        %1730 = vmatprep.subr.mxu0 0.0
        %1731 = vmatpush1.msra.mxu0 %v1272
        %1732 = vmatprep.subr.mxu0 0.0
        %1733 = vmatpush1.msra.mxu0 %v1273
        %1734 = vmatprep.subr.mxu0 0.0
        %1735 = vmatpush1.msra.mxu0 %v1274
        %1736 = vmatprep.subr.mxu0 0.0
        %1737 = vmatpush1.msra.mxu0 %v1275
        %1738 = vmatprep.subr.mxu0 0.0
        %1739 = vmatpush1.msra.mxu0 %v1276
        %1740 = vmatprep.subr.mxu0 0.0
        %1741 = vmatpush1.msra.mxu0 %v1277
        %1742 = vmatprep.subr.mxu0 0.0
        %1743 = vmatpush1.msra.mxu0 %v1278
        %1744 = vmatprep.subr.mxu0 0.0
        %1745 = vmatpush1.msra.mxu0 %v1279
        %1746 = vmatprep.subr.mxu0 0.0
        %1747 = vmatpush1.msra.mxu0 %v1280
        %1748 = vmatprep.subr.mxu0 0.0
        %1749 = vmatpush1.msra.mxu0 %v1281
        %1750 = vmatprep.subr.mxu0 0.0
        %1751 = vmatpush1.msra.mxu0 %v1282
        %1752 = vmatprep.subr.mxu0 0.0
        %1753 = vmatpush1.msra.mxu0 %v1283
        %1754 = vmatprep.subr.mxu0 0.0
        %1755 = vmatpush1.msra.mxu0 %v1284
        %1756 = vmatprep.subr.mxu0 0.0
        %1757 = vmatpush1.msra.mxu0 %v1285
        %1758 = vmatprep.subr.mxu0 0.0
        %1759 = vmatpush1.msra.mxu0 %v1286
        %1760 = vmatprep.subr.mxu0 0.0
        %1761 = vmatpush1.msra.mxu0 %v1287
        %1762 = vmatprep.subr.mxu0 0.0
        %1763 = vmatpush1.msra.mxu0 %v1288
        %1764 = vmatprep.subr.mxu0 0.0
        %1765 = vmatpush1.msra.mxu0 %v1289
        %1766 = vmatprep.subr.mxu0 0.0
        %1767 = vmatpush1.msra.mxu0 %v1290
        %1768 = vmatprep.subr.mxu0 0.0
        %1769 = vmatpush1.msra.mxu0 %v1291
        %1770 = vmatprep.subr.mxu0 0.0
        %1771 = vmatpush1.msra.mxu0 %v1292
        %1772 = vmatprep.subr.mxu0 0.0
        %1773 = vmatpush1.msra.mxu0 %v1293
        %1774 = vmatprep.subr.mxu0 0.0
        %1775 = vmatpush1.msra.mxu0 %v1294
        %1776 = vmatprep.subr.mxu0 0.0
        %1777 = vmatpush1.msra.mxu0 %v1295
        %1778 = vmatprep.subr.mxu0 0.0
        %1779 = vmatpush1.msra.mxu0 %v1296
        %1780 = vmatprep.subr.mxu0 0.0
        %1781 = vmatpush1.msra.mxu0 %v1297
        %1782 = vmatprep.subr.mxu0 0.0
        %1783 = vmatpush1.msra.mxu0 %v1298
        %1784 = vmatprep.subr.mxu0 0.0
        %1785 = vmatpush1.msra.mxu0 %v1428
        %1786 = vmatprep.subr.mxu0 0.0
        %1787 = vmatpush1.msra.mxu0 0.0
        %1788 = vmatprep.mubr.f32.mxu0 %v1692
        %1789 = vmatmul.mubr.f32.gmra.mrb[0].mxu0 %v1669
        %v1790 = vpop.f32.mrb[0].mxu0
        %v1791 = vadd.f32 0.0, %v1790
        %v1792 = vpop.f32.mrb[0].mxu0
        %1793 = vmatprep.mubr.f32.mxu0 %v1695
        %1794 = vmatmul.mubr.f32.gmra.mrb[0].mxu0 %v1671
        %v1795 = vpop.f32.mrb[0].mxu0
        %v1796 = vadd.f32 0.0, %v1795
        %v1797 = vpop.f32.mrb[0].mxu0
        %1798 = vmatprep.mubr.f32.mxu0 %v1698
        %1799 = vmatmul.mubr.f32.gmra.mrb[0].mxu0 %v1673
        %v1800 = vpop.f32.mrb[0].mxu0
        %v1801 = vadd.f32 0.0, %v1800
        %v1802 = vpop.f32.mrb[0].mxu0
        %1803 = vmatprep.mubr.f32.mxu0 %v1701
        %1804 = vmatmul.mubr.f32.gmra.mrb[0].mxu0 %v1675
        %v1805 = vpop.f32.mrb[0].mxu0
        %v1806 = vadd.f32 0.0, %v1805
        %v1807 = vpop.f32.mrb[0].mxu0
        %1808 = vmatprep.mubr.f32.mxu0 %v1704
        %1809 = vmatmul.mubr.f32.gmra.mrb[0].mxu0 %v1677
        %v1810 = vpop.f32.mrb[0].mxu0
        %v1811 = vadd.f32 0.0, %v1810
        %v1812 = vpop.f32.mrb[0].mxu0
        %1813 = vmatprep.mubr.f32.mxu0 %v1707
        %1814 = vmatmul.mubr.f32.gmra.mrb[0].mxu0 %v1679
        %v1815 = vpop.f32.mrb[0].mxu0
        %v1816 = vadd.f32 0.0, %v1815
        %v1817 = vpop.f32.mrb[0].mxu0
        %1818 = vmatprep.mubr.f32.mxu0 %v1710
        %1819 = vmatmul.mubr.f32.gmra.mrb[0].mxu0 %v1681
        %v1820 = vpop.f32.mrb[0].mxu0
        %v1821 = vadd.f32 0.0, %v1820
        %v1822 = vpop.f32.mrb[0].mxu0
        %1823 = vmatprep.mubr.f32.mxu0 %v1713
        %1824 = vmatmul.mubr.f32.gmra.mrb[0].mxu0 %v1683
        %v1825 = vpop.f32.mrb[0].mxu0
        %v1826 = vadd.f32 0.0, %v1825
        %v1827 = vpop.f32.mrb[0].mxu0
        %1828 = vmatprep.mubr.f32.mxu0 %v1716
        %1829 = vmatmul.mubr.f32.gmra.mrb[0].mxu0 %v1685
        %v1830 = vpop.f32.mrb[0].mxu0
        %v1831 = vadd.f32 0.0, %v1830
        %v1832 = vpop.f32.mrb[0].mxu0
        %1833 = vmatprep.mubr.f32.mxu0 %v1719
        %1834 = vmatmul.mubr.f32.gmra.mrb[0].mxu0 %v1687
        %v1835 = vpop.f32.mrb[0].mxu0
        %v1836 = vadd.f32 0.0, %v1835
        %v1837 = vpop.f32.mrb[0].mxu0
        %1838 = vmatprep.mubr.f32.mxu0 %v1722
        %1839 = vmatmul.mubr.f32.gmra.mrb[0].mxu0 %v1689
        %v1840 = vpop.f32.mrb[0].mxu0
        %v1841 = vadd.f32 0.0, %v1840
        %v1842 = vpop.f32.mrb[0].mxu0
        %1843 = vdwg.mxu0
        %v1844 = vld [vmem:[%s3 + $0x200] sm:$0xff]
        %v1845 = vld [vmem:[%s3 + $0x208] sm:$0xff]
        %v1846 = vld [vmem:[%s3 + $0x210] sm:$0xff]
        %v1847 = vld [vmem:[%s3 + $0x218] sm:$0xff]
        %v1848 = vld [vmem:[%s3 + $0x220] sm:$0xff]
        %v1849 = vld [vmem:[%s3 + $0x228] sm:$0xff]
        %v1850 = vld [vmem:[%s3 + $0x230] sm:$0xff]
        %v1851 = vld [vmem:[%s3 + $0x238] sm:$0xff]
        %v1852 = vld [vmem:[%s3 + $0x240] sm:$0xff]
        %v1853 = vld [vmem:[%s3 + $0x248] sm:$0xff]
        %v1854 = vld [vmem:[%s3 + $0x250] sm:$0xff]
        %v1855 = vld [vmem:[%s3 + $0x258] sm:$0xff]
        %v1856 = vld [vmem:[%s3 + $0x260] sm:$0xff]
        %v1857 = vld [vmem:[%s3 + $0x268] sm:$0xff]
        %v1858 = vld [vmem:[%s3 + $0x270] sm:$0xff]
        %v1859 = vld [vmem:[%s3 + $0x278] sm:$0xff]
        %v1860 = vld [vmem:[%s3 + $0x280] sm:$0xff]
        %v1861 = vld [vmem:[%s3 + $0x288] sm:$0xff]
        %v1862 = vld [vmem:[%s3 + $0x290] sm:$0xff]
        %v1863 = vld [vmem:[%s3 + $0x298] sm:$0xff]
        %v1864 = vld [vmem:[%s3 + $0x2a0] sm:$0xff]
        %v1865 = vld [vmem:[%s3 + $0x2a8] sm:$0xff]
        %v1866 = vld [vmem:[%s3 + $0x2b0] sm:$0xff]
        %v1867 = vld [vmem:[%s3 + $0x2b8] sm:$0xff]
        %v1868 = vld [vmem:[%s3 + $0x2c0] sm:$0xff]
        %v1869 = vld [vmem:[%s3 + $0x2c8] sm:$0xff]
        %v1870 = vld [vmem:[%s3 + $0x2d0] sm:$0xff]
        %v1871 = vld [vmem:[%s3 + $0x2d8] sm:$0xff]
        %v1872 = vld [vmem:[%s3 + $0x2e0] sm:$0xff]
        %v1873 = vld [vmem:[%s3 + $0x2e8] sm:$0xff]
        %v1874 = vld [vmem:[%s3 + $0x2f0] sm:$0xff]
        %v1875 = vld [vmem:[%s3 + $0x2f8] sm:$0xff]
        %v1876 = vld [vmem:[%s3 + $0x300] sm:$0xff]
        %v1877 = vld [vmem:[%s3 + $0x308] sm:$0xff]
        %v1878 = vld [vmem:[%s3 + $0x310] sm:$0xff]
        %v1879 = vld [vmem:[%s3 + $0x318] sm:$0xff]
        %v1880 = vld [vmem:[%s3 + $0x320] sm:$0xff]
        %v1881 = vld [vmem:[%s3 + $0x328] sm:$0xff]
        %v1882 = vld [vmem:[%s3 + $0x330] sm:$0xff]
        %v1883 = vld [vmem:[%s3 + $0x338] sm:$0xff]
        %v1884 = vld [vmem:[%s3 + $0x340] sm:$0xff]
        %v1885 = vld [vmem:[%s3 + $0x348] sm:$0xff]
        %v1886 = vld [vmem:[%s3 + $0x350] sm:$0xff]
        %v1887 = vld [vmem:[%s3 + $0x358] sm:$0xff]
        %v1888 = vld [vmem:[%s3 + $0x360] sm:$0xff]
        %v1889 = vld [vmem:[%s3 + $0x368] sm:$0xff]
        %v1890 = vld [vmem:[%s3 + $0x370] sm:$0xff]
        %v1891 = vld [vmem:[%s3 + $0x378] sm:$0xff]
        %v1892 = vld [vmem:[%s3 + $0x380] sm:$0xff]
        %v1893 = vld [vmem:[%s3 + $0x388] sm:$0xff]
        %v1894 = vld [vmem:[%s3 + $0x390] sm:$0xff]
        %v1895 = vld [vmem:[%s3 + $0x398] sm:$0xff]
        %v1896 = vld [vmem:[%s3 + $0x3a0] sm:$0xff]
        %v1897 = vld [vmem:[%s3 + $0x3a8] sm:$0xff]
        %v1898 = vld [vmem:[%s3 + $0x3b0] sm:$0xff]
        %v1899 = vld [vmem:[%s3 + $0x3b8] sm:$0xff]
        %v1900 = vld [vmem:[%s3 + $0x3c0] sm:$0xff]
        %v1901 = vld [vmem:[%s3 + $0x3c8] sm:$0xff]
        %v1902 = vld [vmem:[%s3 + $0x3d0] sm:$0xff]
        %v1903 = vld [vmem:[%s3 + $0x3d8] sm:$0xff]
        %v1904 = vld [vmem:[%s3 + $0x3e0] sm:$0xff]
        %v1905 = vld [vmem:[%s3 + $0x3e8] sm:$0xff]
        %v1906 = vld [vmem:[%s3 + $0x3f0] sm:$0xff]
        %v1907 = vld [vmem:[%s3 + $0x3f8] sm:$0xff]
        %1908 = vmatprep.subr.mxu0 %v1845
        %1909 = vmatpush1.msra.mxu0 %v1844
        %1910 = vmatprep.subr.mxu0 %v1849
        %1911 = vmatpush1.msra.mxu0 %v1848
        %1912 = vmatprep.subr.mxu0 %v1853
        %1913 = vmatpush1.msra.mxu0 %v1852
        %1914 = vmatprep.subr.mxu0 %v1857
        %1915 = vmatpush1.msra.mxu0 %v1856
        %1916 = vmatprep.subr.mxu0 %v1861
        %1917 = vmatpush1.msra.mxu0 %v1860
        %1918 = vmatprep.subr.mxu0 %v1865
        %1919 = vmatpush1.msra.mxu0 %v1864
        %1920 = vmatprep.subr.mxu0 %v1869
        %1921 = vmatpush1.msra.mxu0 %v1868
        %1922 = vmatprep.subr.mxu0 %v1873
        %1923 = vmatpush1.msra.mxu0 %v1872
        %1924 = vmatprep.subr.mxu0 %v1877
        %1925 = vmatpush1.msra.mxu0 %v1876
        %1926 = vmatprep.subr.mxu0 %v1881
        %1927 = vmatpush1.msra.mxu0 %v1880
        %1928 = vmatprep.subr.mxu0 %v1885
        %1929 = vmatpush1.msra.mxu0 %v1884
        %1930 = vmatprep.subr.mxu0 %v1889
        %1931 = vmatpush1.msra.mxu0 %v1888
        %1932 = vmatprep.subr.mxu0 %v1893
        %1933 = vmatpush1.msra.mxu0 %v1892
        %1934 = vmatprep.subr.mxu0 %v1897
        %1935 = vmatpush1.msra.mxu0 %v1896
        %1936 = vmatprep.subr.mxu0 %v1901
        %1937 = vmatpush1.msra.mxu0 %v1900
        %1938 = vmatprep.subr.mxu0 %v1905
        %1939 = vmatpush1.msra.mxu0 %v1904
        %1940 = vmatprep.subr.mxu0 0.0
        %1941 = vmatpush1.msra.mxu0 0.0
        %1942 = vmatprep.subr.mxu0 0.0
        %1943 = vmatpush1.msra.mxu0 0.0
        %1944 = vmatprep.subr.mxu0 0.0
        %1945 = vmatpush1.msra.mxu0 0.0
        %1946 = vmatprep.subr.mxu0 0.0
        %1947 = vmatpush1.msra.mxu0 0.0
        %1948 = vmatprep.subr.mxu0 0.0
        %1949 = vmatpush1.msra.mxu0 0.0
        %1950 = vmatprep.subr.mxu0 0.0
        %1951 = vmatpush1.msra.mxu0 0.0
        %1952 = vmatprep.subr.mxu0 0.0
        %1953 = vmatpush1.msra.mxu0 0.0
        %1954 = vmatprep.subr.mxu0 0.0
        %1955 = vmatpush1.msra.mxu0 0.0
        %1956 = vmatprep.subr.mxu0 0.0
        %1957 = vmatpush1.msra.mxu0 0.0
        %1958 = vmatprep.subr.mxu0 0.0
        %1959 = vmatpush1.msra.mxu0 0.0
        %1960 = vmatprep.subr.mxu0 0.0
        %1961 = vmatpush1.msra.mxu0 0.0
        %1962 = vmatprep.subr.mxu0 0.0
        %1963 = vmatpush1.msra.mxu0 0.0
        %1964 = vmatprep.subr.mxu0 0.0
        %1965 = vmatpush1.msra.mxu0 0.0
        %1966 = vmatprep.subr.mxu0 0.0
        %1967 = vmatpush1.msra.mxu0 0.0
        %1968 = vmatprep.subr.mxu0 0.0
        %1969 = vmatpush1.msra.mxu0 0.0
        %1970 = vmatprep.subr.mxu0 0.0
        %1971 = vmatpush1.msra.mxu0 0.0
        %1972 = vmatprep.mubr.f32.mxu0 0.0
        %1973 = vmatmul.mubr.f32.gmra.mrb[0].mxu0 %v1791
        %v1974 = vpop.f32.mrb[0].mxu0
        %v1975 = vadd.f32 0.0, %v1974
        %v1976 = vpop.f32.mrb[0].mxu0
        %v1977 = vadd.f32 0.0, %v1976
        %1978 = vmatprep.mubr.f32.mxu0 0.0
        %1979 = vmatmul.mubr.f32.gmra.mrb[0].mxu0 %v1796
        %v1980 = vpop.f32.mrb[0].mxu0
        %v1981 = vadd.f32 0.0, %v1980
        %v1982 = vpop.f32.mrb[0].mxu0
        %v1983 = vadd.f32 0.0, %v1982
        %1984 = vmatprep.mubr.f32.mxu0 0.0
        %1985 = vmatmul.mubr.f32.gmra.mrb[0].mxu0 %v1801
        %v1986 = vpop.f32.mrb[0].mxu0
        %v1987 = vadd.f32 0.0, %v1986
        %v1988 = vpop.f32.mrb[0].mxu0
        %v1989 = vadd.f32 0.0, %v1988
        %1990 = vmatprep.mubr.f32.mxu0 0.0
        %1991 = vmatmul.mubr.f32.gmra.mrb[0].mxu0 %v1806
        %v1992 = vpop.f32.mrb[0].mxu0
        %v1993 = vadd.f32 0.0, %v1992
        %v1994 = vpop.f32.mrb[0].mxu0
        %v1995 = vadd.f32 0.0, %v1994
        %1996 = vmatprep.mubr.f32.mxu0 0.0
        %1997 = vmatmul.mubr.f32.gmra.mrb[0].mxu0 %v1811
        %v1998 = vpop.f32.mrb[0].mxu0
        %v1999 = vadd.f32 0.0, %v1998
        %v2000 = vpop.f32.mrb[0].mxu0
        %v2001 = vadd.f32 0.0, %v2000
        %2002 = vmatprep.mubr.f32.mxu0 0.0
        %2003 = vmatmul.mubr.f32.gmra.mrb[0].mxu0 %v1816
        %v2004 = vpop.f32.mrb[0].mxu0
        %v2005 = vadd.f32 0.0, %v2004
        %v2006 = vpop.f32.mrb[0].mxu0
        %v2007 = vadd.f32 0.0, %v2006
        %2008 = vmatprep.mubr.f32.mxu0 0.0
        %2009 = vmatmul.mubr.f32.gmra.mrb[0].mxu0 %v1821
        %v2010 = vpop.f32.mrb[0].mxu0
        %v2011 = vadd.f32 0.0, %v2010
        %v2012 = vpop.f32.mrb[0].mxu0
        %v2013 = vadd.f32 0.0, %v2012
        %2014 = vmatprep.mubr.f32.mxu0 0.0
        %2015 = vmatmul.mubr.f32.gmra.mrb[0].mxu0 %v1826
        %v2016 = vpop.f32.mrb[0].mxu0
        %v2017 = vadd.f32 0.0, %v2016
        %v2018 = vpop.f32.mrb[0].mxu0
        %v2019 = vadd.f32 0.0, %v2018
        %2020 = vmatprep.mubr.f32.mxu0 0.0
        %2021 = vmatmul.mubr.f32.gmra.mrb[0].mxu0 %v1831
        %v2022 = vpop.f32.mrb[0].mxu0
        %v2023 = vadd.f32 0.0, %v2022
        %v2024 = vpop.f32.mrb[0].mxu0
        %v2025 = vadd.f32 0.0, %v2024
        %2026 = vmatprep.mubr.f32.mxu0 0.0
        %2027 = vmatmul.mubr.f32.gmra.mrb[0].mxu0 %v1836
        %v2028 = vpop.f32.mrb[0].mxu0
        %v2029 = vadd.f32 0.0, %v2028
        %v2030 = vpop.f32.mrb[0].mxu0
        %v2031 = vadd.f32 0.0, %v2030
        %2032 = vmatprep.mubr.f32.mxu0 0.0
        %2033 = vmatmul.mubr.f32.gmra.mrb[0].mxu0 %v1841
        %v2034 = vpop.f32.mrb[0].mxu0
        %v2035 = vadd.f32 0.0, %v2034
        %v2036 = vpop.f32.mrb[0].mxu0
        %v2037 = vadd.f32 0.0, %v2036
        %2038 = vdwg.mxu0
        %2039 = vmatprep.subr.mxu0 %v1847
        %2040 = vmatpush1.msra.mxu0 %v1846
        %2041 = vmatprep.subr.mxu0 %v1851
        %2042 = vmatpush1.msra.mxu0 %v1850
        %2043 = vmatprep.subr.mxu0 %v1855
        %2044 = vmatpush1.msra.mxu0 %v1854
        %2045 = vmatprep.subr.mxu0 %v1859
        %2046 = vmatpush1.msra.mxu0 %v1858
        %2047 = vmatprep.subr.mxu0 %v1863
        %2048 = vmatpush1.msra.mxu0 %v1862
        %2049 = vmatprep.subr.mxu0 %v1867
        %2050 = vmatpush1.msra.mxu0 %v1866
        %2051 = vmatprep.subr.mxu0 %v1871
        %2052 = vmatpush1.msra.mxu0 %v1870
        %2053 = vmatprep.subr.mxu0 %v1875
        %2054 = vmatpush1.msra.mxu0 %v1874
        %2055 = vmatprep.subr.mxu0 %v1879
        %2056 = vmatpush1.msra.mxu0 %v1878
        %2057 = vmatprep.subr.mxu0 %v1883
        %2058 = vmatpush1.msra.mxu0 %v1882
        %2059 = vmatprep.subr.mxu0 %v1887
        %2060 = vmatpush1.msra.mxu0 %v1886
        %2061 = vmatprep.subr.mxu0 %v1891
        %2062 = vmatpush1.msra.mxu0 %v1890
        %2063 = vmatprep.subr.mxu0 %v1895
        %2064 = vmatpush1.msra.mxu0 %v1894
        %2065 = vmatprep.subr.mxu0 %v1899
        %2066 = vmatpush1.msra.mxu0 %v1898
        %2067 = vmatprep.subr.mxu0 %v1903
        %2068 = vmatpush1.msra.mxu0 %v1902
        %2069 = vmatprep.subr.mxu0 %v1907
        %2070 = vmatpush1.msra.mxu0 %v1906
        %2071 = vmatprep.subr.mxu0 0.0
        %2072 = vmatpush1.msra.mxu0 0.0
        %2073 = vmatprep.subr.mxu0 0.0
        %2074 = vmatpush1.msra.mxu0 0.0
        %2075 = vmatprep.subr.mxu0 0.0
        %2076 = vmatpush1.msra.mxu0 0.0
        %2077 = vmatprep.subr.mxu0 0.0
        %2078 = vmatpush1.msra.mxu0 0.0
        %2079 = vmatprep.subr.mxu0 0.0
        %2080 = vmatpush1.msra.mxu0 0.0
        %2081 = vmatprep.subr.mxu0 0.0
        %2082 = vmatpush1.msra.mxu0 0.0
        %2083 = vmatprep.subr.mxu0 0.0
        %2084 = vmatpush1.msra.mxu0 0.0
        %2085 = vmatprep.subr.mxu0 0.0
        %2086 = vmatpush1.msra.mxu0 0.0
        %2087 = vmatprep.subr.mxu0 0.0
        %2088 = vmatpush1.msra.mxu0 0.0
        %2089 = vmatprep.subr.mxu0 0.0
        %2090 = vmatpush1.msra.mxu0 0.0
        %2091 = vmatprep.subr.mxu0 0.0
        %2092 = vmatpush1.msra.mxu0 0.0
        %2093 = vmatprep.subr.mxu0 0.0
        %2094 = vmatpush1.msra.mxu0 0.0
        %2095 = vmatprep.subr.mxu0 0.0
        %2096 = vmatpush1.msra.mxu0 0.0
        %2097 = vmatprep.subr.mxu0 0.0
        %2098 = vmatpush1.msra.mxu0 0.0
        %2099 = vmatprep.subr.mxu0 0.0
        %2100 = vmatpush1.msra.mxu0 0.0
        %2101 = vmatprep.subr.mxu0 0.0
        %2102 = vmatpush1.msra.mxu0 0.0
        %2103 = vmatprep.mubr.f32.mxu0 0.0
        %2104 = vmatmul.mubr.f32.gmra.mrb[0].mxu0 %v1791
        %v2105 = vpop.f32.mrb[0].mxu0
        %v2106 = vadd.f32 0.0, %v2105
        %v2107 = vpop.f32.mrb[0].mxu0
        %v2108 = vadd.f32 0.0, %v2107
        %2109 = vmatprep.mubr.f32.mxu0 0.0
        %2110 = vmatmul.mubr.f32.gmra.mrb[0].mxu0 %v1796
        %v2111 = vpop.f32.mrb[0].mxu0
        %v2112 = vadd.f32 0.0, %v2111
        %v2113 = vpop.f32.mrb[0].mxu0
        %v2114 = vadd.f32 0.0, %v2113
        %2115 = vmatprep.mubr.f32.mxu0 0.0
        %2116 = vmatmul.mubr.f32.gmra.mrb[0].mxu0 %v1801
        %v2117 = vpop.f32.mrb[0].mxu0
        %v2118 = vadd.f32 0.0, %v2117
        %v2119 = vpop.f32.mrb[0].mxu0
        %v2120 = vadd.f32 0.0, %v2119
        %2121 = vmatprep.mubr.f32.mxu0 0.0
        %2122 = vmatmul.mubr.f32.gmra.mrb[0].mxu0 %v1806
        %v2123 = vpop.f32.mrb[0].mxu0
        %v2124 = vadd.f32 0.0, %v2123
        %v2125 = vpop.f32.mrb[0].mxu0
        %v2126 = vadd.f32 0.0, %v2125
        %2127 = vmatprep.mubr.f32.mxu0 0.0
        %2128 = vmatmul.mubr.f32.gmra.mrb[0].mxu0 %v1811
        %v2129 = vpop.f32.mrb[0].mxu0
        %v2130 = vadd.f32 0.0, %v2129
        %v2131 = vpop.f32.mrb[0].mxu0
        %v2132 = vadd.f32 0.0, %v2131
        %2133 = vmatprep.mubr.f32.mxu0 0.0
        %2134 = vmatmul.mubr.f32.gmra.mrb[0].mxu0 %v1816
        %v2135 = vpop.f32.mrb[0].mxu0
        %v2136 = vadd.f32 0.0, %v2135
        %v2137 = vpop.f32.mrb[0].mxu0
        %v2138 = vadd.f32 0.0, %v2137
        %2139 = vmatprep.mubr.f32.mxu0 0.0
        %2140 = vmatmul.mubr.f32.gmra.mrb[0].mxu0 %v1821
        %v2141 = vpop.f32.mrb[0].mxu0
        %v2142 = vadd.f32 0.0, %v2141
        %v2143 = vpop.f32.mrb[0].mxu0
        %v2144 = vadd.f32 0.0, %v2143
        %2145 = vmatprep.mubr.f32.mxu0 0.0
        %2146 = vmatmul.mubr.f32.gmra.mrb[0].mxu0 %v1826
        %v2147 = vpop.f32.mrb[0].mxu0
        %v2148 = vadd.f32 0.0, %v2147
        %v2149 = vpop.f32.mrb[0].mxu0
        %v2150 = vadd.f32 0.0, %v2149
        %2151 = vmatprep.mubr.f32.mxu0 0.0
        %2152 = vmatmul.mubr.f32.gmra.mrb[0].mxu0 %v1831
        %v2153 = vpop.f32.mrb[0].mxu0
        %v2154 = vadd.f32 0.0, %v2153
        %v2155 = vpop.f32.mrb[0].mxu0
        %v2156 = vadd.f32 0.0, %v2155
        %2157 = vmatprep.mubr.f32.mxu0 0.0
        %2158 = vmatmul.mubr.f32.gmra.mrb[0].mxu0 %v1836
        %v2159 = vpop.f32.mrb[0].mxu0
        %v2160 = vadd.f32 0.0, %v2159
        %v2161 = vpop.f32.mrb[0].mxu0
        %v2162 = vadd.f32 0.0, %v2161
        %2163 = vmatprep.mubr.f32.mxu0 0.0
        %2164 = vmatmul.mubr.f32.gmra.mrb[0].mxu0 %v1841
        %v2165 = vpop.f32.mrb[0].mxu0
        %v2166 = vadd.f32 0.0, %v2165
        %v2167 = vpop.f32.mrb[0].mxu0
        %v2168 = vadd.f32 0.0, %v2167
        %2169 = vdwg.mxu0
        %2170 = vmatprep.subr.mxu0 %v1551
        %2171 = vmatpush1.msra.mxu0 %v1550
        %2172 = vmatprep.subr.mxu0 %v1555
        %2173 = vmatpush1.msra.mxu0 %v1554
        %2174 = vmatprep.subr.mxu0 %v1559
        %2175 = vmatpush1.msra.mxu0 %v1558
        %2176 = vmatprep.subr.mxu0 %v1563
        %2177 = vmatpush1.msra.mxu0 %v1562
        %2178 = vmatprep.subr.mxu0 %v1567
        %2179 = vmatpush1.msra.mxu0 %v1566
        %2180 = vmatprep.subr.mxu0 %v1571
        %2181 = vmatpush1.msra.mxu0 %v1570
        %2182 = vmatprep.subr.mxu0 %v1575
        %2183 = vmatpush1.msra.mxu0 %v1574
        %2184 = vmatprep.subr.mxu0 %v1579
        %2185 = vmatpush1.msra.mxu0 %v1578
        %2186 = vmatprep.subr.mxu0 %v1583
        %2187 = vmatpush1.msra.mxu0 %v1582
        %2188 = vmatprep.subr.mxu0 %v1587
        %2189 = vmatpush1.msra.mxu0 %v1586
        %2190 = vmatprep.subr.mxu0 %v1591
        %2191 = vmatpush1.msra.mxu0 %v1590
        %2192 = vmatprep.subr.mxu0 %v1595
        %2193 = vmatpush1.msra.mxu0 %v1594
        %2194 = vmatprep.subr.mxu0 %v1599
        %2195 = vmatpush1.msra.mxu0 %v1598
        %2196 = vmatprep.subr.mxu0 %v1603
        %2197 = vmatpush1.msra.mxu0 %v1602
        %2198 = vmatprep.subr.mxu0 %v1607
        %2199 = vmatpush1.msra.mxu0 %v1606
        %2200 = vmatprep.subr.mxu0 %v1611
        %2201 = vmatpush1.msra.mxu0 %v1610
        %2202 = vmatprep.subr.mxu0 0.0
        %2203 = vmatpush1.msra.mxu0 0.0
        %2204 = vmatprep.subr.mxu0 0.0
        %2205 = vmatpush1.msra.mxu0 0.0
        %2206 = vmatprep.subr.mxu0 0.0
        %2207 = vmatpush1.msra.mxu0 0.0
        %2208 = vmatprep.subr.mxu0 0.0
        %2209 = vmatpush1.msra.mxu0 0.0
        %2210 = vmatprep.subr.mxu0 0.0
        %2211 = vmatpush1.msra.mxu0 0.0
        %2212 = vmatprep.subr.mxu0 0.0
        %2213 = vmatpush1.msra.mxu0 0.0
        %2214 = vmatprep.subr.mxu0 0.0
        %2215 = vmatpush1.msra.mxu0 0.0
        %2216 = vmatprep.subr.mxu0 0.0
        %2217 = vmatpush1.msra.mxu0 0.0
        %2218 = vmatprep.subr.mxu0 0.0
        %2219 = vmatpush1.msra.mxu0 0.0
        %2220 = vmatprep.subr.mxu0 0.0
        %2221 = vmatpush1.msra.mxu0 0.0
        %2222 = vmatprep.subr.mxu0 0.0
        %2223 = vmatpush1.msra.mxu0 0.0
        %2224 = vmatprep.subr.mxu0 0.0
        %2225 = vmatpush1.msra.mxu0 0.0
        %2226 = vmatprep.subr.mxu0 0.0
        %2227 = vmatpush1.msra.mxu0 0.0
        %2228 = vmatprep.subr.mxu0 0.0
        %2229 = vmatpush1.msra.mxu0 0.0
        %2230 = vmatprep.subr.mxu0 0.0
        %2231 = vmatpush1.msra.mxu0 0.0
        %2232 = vmatprep.subr.mxu0 0.0
        %2233 = vmatpush1.msra.mxu0 0.0
        %2234 = vmatprep.mubr.f32.mxu0 0.0
        %2235 = vmatmul.mubr.f32.gmra.mrb[0].mxu0 %v1497
        %v2236 = vpop.f32.mrb[0].mxu0
        %v2237 = vadd.f32 %v1975, %v2236
        %v2238 = vpop.f32.mrb[0].mxu0
        %v2239 = vadd.f32 %v1977, %v2238
        %2240 = vmatprep.mubr.f32.mxu0 0.0
        %2241 = vmatmul.mubr.f32.gmra.mrb[0].mxu0 %v1502
        %v2242 = vpop.f32.mrb[0].mxu0
        %v2243 = vadd.f32 %v1981, %v2242
        %v2244 = vpop.f32.mrb[0].mxu0
        %v2245 = vadd.f32 %v1983, %v2244
        %2246 = vmatprep.mubr.f32.mxu0 0.0
        %2247 = vmatmul.mubr.f32.gmra.mrb[0].mxu0 %v1507
        %v2248 = vpop.f32.mrb[0].mxu0
        %v2249 = vadd.f32 %v1987, %v2248
        %v2250 = vpop.f32.mrb[0].mxu0
        %v2251 = vadd.f32 %v1989, %v2250
        %2252 = vmatprep.mubr.f32.mxu0 0.0
        %2253 = vmatmul.mubr.f32.gmra.mrb[0].mxu0 %v1512
        %v2254 = vpop.f32.mrb[0].mxu0
        %v2255 = vadd.f32 %v1993, %v2254
        %v2256 = vpop.f32.mrb[0].mxu0
        %v2257 = vadd.f32 %v1995, %v2256
        %2258 = vmatprep.mubr.f32.mxu0 0.0
        %2259 = vmatmul.mubr.f32.gmra.mrb[0].mxu0 %v1517
        %v2260 = vpop.f32.mrb[0].mxu0
        %v2261 = vadd.f32 %v1999, %v2260
        %v2262 = vpop.f32.mrb[0].mxu0
        %v2263 = vadd.f32 %v2001, %v2262
        %2264 = vmatprep.mubr.f32.mxu0 0.0
        %2265 = vmatmul.mubr.f32.gmra.mrb[0].mxu0 %v1522
        %v2266 = vpop.f32.mrb[0].mxu0
        %v2267 = vadd.f32 %v2005, %v2266
        %v2268 = vpop.f32.mrb[0].mxu0
        %v2269 = vadd.f32 %v2007, %v2268
        %2270 = vmatprep.mubr.f32.mxu0 0.0
        %2271 = vmatmul.mubr.f32.gmra.mrb[0].mxu0 %v1527
        %v2272 = vpop.f32.mrb[0].mxu0
        %v2273 = vadd.f32 %v2011, %v2272
        %v2274 = vpop.f32.mrb[0].mxu0
        %v2275 = vadd.f32 %v2013, %v2274
        %2276 = vmatprep.mubr.f32.mxu0 0.0
        %2277 = vmatmul.mubr.f32.gmra.mrb[0].mxu0 %v1532
        %v2278 = vpop.f32.mrb[0].mxu0
        %v2279 = vadd.f32 %v2017, %v2278
        %v2280 = vpop.f32.mrb[0].mxu0
        %v2281 = vadd.f32 %v2019, %v2280
        %2282 = vmatprep.mubr.f32.mxu0 0.0
        %2283 = vmatmul.mubr.f32.gmra.mrb[0].mxu0 %v1537
        %v2284 = vpop.f32.mrb[0].mxu0
        %v2285 = vadd.f32 %v2023, %v2284
        %v2286 = vpop.f32.mrb[0].mxu0
        %v2287 = vadd.f32 %v2025, %v2286
        %2288 = vmatprep.mubr.f32.mxu0 0.0
        %2289 = vmatmul.mubr.f32.gmra.mrb[0].mxu0 %v1542
        %v2290 = vpop.f32.mrb[0].mxu0
        %v2291 = vadd.f32 %v2029, %v2290
        %v2292 = vpop.f32.mrb[0].mxu0
        %v2293 = vadd.f32 %v2031, %v2292
        %2294 = vmatprep.mubr.f32.mxu0 0.0
        %2295 = vmatmul.mubr.f32.gmra.mrb[0].mxu0 %v1547
        %v2296 = vpop.f32.mrb[0].mxu0
        %v2297 = vadd.f32 %v2035, %v2296
        %v2298 = vpop.f32.mrb[0].mxu0
        %v2299 = vadd.f32 %v2037, %v2298
        %2300 = vdwg.mxu0
        %2301 = vmatprep.subr.mxu0 %v1553
        %2302 = vmatpush1.msra.mxu0 %v1552
        %2303 = vmatprep.subr.mxu0 %v1557
        %2304 = vmatpush1.msra.mxu0 %v1556
        %2305 = vmatprep.subr.mxu0 %v1561
        %2306 = vmatpush1.msra.mxu0 %v1560
        %2307 = vmatprep.subr.mxu0 %v1565
        %2308 = vmatpush1.msra.mxu0 %v1564
        %2309 = vmatprep.subr.mxu0 %v1569
        %2310 = vmatpush1.msra.mxu0 %v1568
        %2311 = vmatprep.subr.mxu0 %v1573
        %2312 = vmatpush1.msra.mxu0 %v1572
        %2313 = vmatprep.subr.mxu0 %v1577
        %2314 = vmatpush1.msra.mxu0 %v1576
        %2315 = vmatprep.subr.mxu0 %v1581
        %2316 = vmatpush1.msra.mxu0 %v1580
        %2317 = vmatprep.subr.mxu0 %v1585
        %2318 = vmatpush1.msra.mxu0 %v1584
        %2319 = vmatprep.subr.mxu0 %v1589
        %2320 = vmatpush1.msra.mxu0 %v1588
        %2321 = vmatprep.subr.mxu0 %v1593
        %2322 = vmatpush1.msra.mxu0 %v1592
        %2323 = vmatprep.subr.mxu0 %v1597
        %2324 = vmatpush1.msra.mxu0 %v1596
        %2325 = vmatprep.subr.mxu0 %v1601
        %2326 = vmatpush1.msra.mxu0 %v1600
        %2327 = vmatprep.subr.mxu0 %v1605
        %2328 = vmatpush1.msra.mxu0 %v1604
        %2329 = vmatprep.subr.mxu0 %v1609
        %2330 = vmatpush1.msra.mxu0 %v1608
        %2331 = vmatprep.subr.mxu0 %v1613
        %2332 = vmatpush1.msra.mxu0 %v1612
        %2333 = vmatprep.subr.mxu0 0.0
        %2334 = vmatpush1.msra.mxu0 0.0
        %2335 = vmatprep.subr.mxu0 0.0
        %2336 = vmatpush1.msra.mxu0 0.0
        %2337 = vmatprep.subr.mxu0 0.0
        %2338 = vmatpush1.msra.mxu0 0.0
        %2339 = vmatprep.subr.mxu0 0.0
        %2340 = vmatpush1.msra.mxu0 0.0
        %2341 = vmatprep.subr.mxu0 0.0
        %2342 = vmatpush1.msra.mxu0 0.0
        %2343 = vmatprep.subr.mxu0 0.0
        %2344 = vmatpush1.msra.mxu0 0.0
        %2345 = vmatprep.subr.mxu0 0.0
        %2346 = vmatpush1.msra.mxu0 0.0
        %2347 = vmatprep.subr.mxu0 0.0
        %2348 = vmatpush1.msra.mxu0 0.0
        %2349 = vmatprep.subr.mxu0 0.0
        %2350 = vmatpush1.msra.mxu0 0.0
        %2351 = vmatprep.subr.mxu0 0.0
        %2352 = vmatpush1.msra.mxu0 0.0
        %2353 = vmatprep.subr.mxu0 0.0
        %2354 = vmatpush1.msra.mxu0 0.0
        %2355 = vmatprep.subr.mxu0 0.0
        %2356 = vmatpush1.msra.mxu0 0.0
        %2357 = vmatprep.subr.mxu0 0.0
        %2358 = vmatpush1.msra.mxu0 0.0
        %2359 = vmatprep.subr.mxu0 0.0
        %2360 = vmatpush1.msra.mxu0 0.0
        %2361 = vmatprep.subr.mxu0 0.0
        %2362 = vmatpush1.msra.mxu0 0.0
        %2363 = vmatprep.subr.mxu0 0.0
        %2364 = vmatpush1.msra.mxu0 0.0
        %2365 = vmatprep.mubr.f32.mxu0 0.0
        %2366 = vmatmul.mubr.f32.gmra.mrb[0].mxu0 %v1497
        %v2367 = vpop.f32.mrb[0].mxu0
        %v2368 = vadd.f32 %v2106, %v2367
        %v2369 = vpop.f32.mrb[0].mxu0
        %v2370 = vadd.f32 %v2108, %v2369
        %2371 = vmatprep.mubr.f32.mxu0 0.0
        %2372 = vmatmul.mubr.f32.gmra.mrb[0].mxu0 %v1502
        %v2373 = vpop.f32.mrb[0].mxu0
        %v2374 = vadd.f32 %v2112, %v2373
        %v2375 = vpop.f32.mrb[0].mxu0
        %v2376 = vadd.f32 %v2114, %v2375
        %2377 = vmatprep.mubr.f32.mxu0 0.0
        %2378 = vmatmul.mubr.f32.gmra.mrb[0].mxu0 %v1507
        %v2379 = vpop.f32.mrb[0].mxu0
        %v2380 = vadd.f32 %v2118, %v2379
        %v2381 = vpop.f32.mrb[0].mxu0
        %v2382 = vadd.f32 %v2120, %v2381
        %2383 = vmatprep.mubr.f32.mxu0 0.0
        %2384 = vmatmul.mubr.f32.gmra.mrb[0].mxu0 %v1512
        %v2385 = vpop.f32.mrb[0].mxu0
        %v2386 = vadd.f32 %v2124, %v2385
        %v2387 = vpop.f32.mrb[0].mxu0
        %v2388 = vadd.f32 %v2126, %v2387
        %2389 = vmatprep.mubr.f32.mxu0 0.0
        %2390 = vmatmul.mubr.f32.gmra.mrb[0].mxu0 %v1517
        %v2391 = vpop.f32.mrb[0].mxu0
        %v2392 = vadd.f32 %v2130, %v2391
        %v2393 = vpop.f32.mrb[0].mxu0
        %v2394 = vadd.f32 %v2132, %v2393
        %2395 = vmatprep.mubr.f32.mxu0 0.0
        %2396 = vmatmul.mubr.f32.gmra.mrb[0].mxu0 %v1522
        %v2397 = vpop.f32.mrb[0].mxu0
        %v2398 = vadd.f32 %v2136, %v2397
        %v2399 = vpop.f32.mrb[0].mxu0
        %v2400 = vadd.f32 %v2138, %v2399
        %2401 = vmatprep.mubr.f32.mxu0 0.0
        %2402 = vmatmul.mubr.f32.gmra.mrb[0].mxu0 %v1527
        %v2403 = vpop.f32.mrb[0].mxu0
        %v2404 = vadd.f32 %v2142, %v2403
        %v2405 = vpop.f32.mrb[0].mxu0
        %v2406 = vadd.f32 %v2144, %v2405
        %2407 = vmatprep.mubr.f32.mxu0 0.0
        %2408 = vmatmul.mubr.f32.gmra.mrb[0].mxu0 %v1532
        %v2409 = vpop.f32.mrb[0].mxu0
        %v2410 = vadd.f32 %v2148, %v2409
        %v2411 = vpop.f32.mrb[0].mxu0
        %v2412 = vadd.f32 %v2150, %v2411
        %2413 = vmatprep.mubr.f32.mxu0 0.0
        %2414 = vmatmul.mubr.f32.gmra.mrb[0].mxu0 %v1537
        %v2415 = vpop.f32.mrb[0].mxu0
        %v2416 = vadd.f32 %v2154, %v2415
        %v2417 = vpop.f32.mrb[0].mxu0
        %v2418 = vadd.f32 %v2156, %v2417
        %2419 = vmatprep.mubr.f32.mxu0 0.0
        %2420 = vmatmul.mubr.f32.gmra.mrb[0].mxu0 %v1542
        %v2421 = vpop.f32.mrb[0].mxu0
        %v2422 = vadd.f32 %v2160, %v2421
        %v2423 = vpop.f32.mrb[0].mxu0
        %v2424 = vadd.f32 %v2162, %v2423
        %2425 = vmatprep.mubr.f32.mxu0 0.0
        %2426 = vmatmul.mubr.f32.gmra.mrb[0].mxu0 %v1547
        %v2427 = vpop.f32.mrb[0].mxu0
        %v2428 = vadd.f32 %v2166, %v2427
        %v2429 = vpop.f32.mrb[0].mxu0
        %v2430 = vadd.f32 %v2168, %v2429
        %2431 = vdwg.mxu0
        %v2432 = vadd.s32 %v1315, 2
        %v2433 = vadd.s32 %v1316, 2
        %v2434 = vadd.s32 %v1317, 2
        %v2435 = vadd.s32 %v1318, 2
        %v2436 = vadd.s32 %v1319, 2
        %v2437 = vadd.s32 %v1320, 2
        %v2438 = vadd.s32 %v1321, 2
        %v2439 = vadd.s32 %v1322, 2
        %v2440 = vadd.s32 %v1323, 2
        %v2441 = vadd.s32 %v1324, 2
        %v2442 = vadd.s32 %v1325, 2
        %vm2443 = vcmp.eq.s32.totalorder %v1313, %v2432
        %vm2444 = vcmp.eq.s32.totalorder %v1314, %v2432
        %vm2445 = vcmp.eq.s32.totalorder %v1313, %v2433
        %vm2446 = vcmp.eq.s32.totalorder %v1314, %v2433
        %vm2447 = vcmp.eq.s32.totalorder %v1313, %v2434
        %vm2448 = vcmp.eq.s32.totalorder %v1314, %v2434
        %vm2449 = vcmp.eq.s32.totalorder %v1313, %v2435
        %vm2450 = vcmp.eq.s32.totalorder %v1314, %v2435
        %vm2451 = vcmp.eq.s32.totalorder %v1313, %v2436
        %vm2452 = vcmp.eq.s32.totalorder %v1314, %v2436
        %vm2453 = vcmp.eq.s32.totalorder %v1313, %v2437
        %vm2454 = vcmp.eq.s32.totalorder %v1314, %v2437
        %vm2455 = vcmp.eq.s32.totalorder %v1313, %v2438
        %vm2456 = vcmp.eq.s32.totalorder %v1314, %v2438
        %vm2457 = vcmp.eq.s32.totalorder %v1313, %v2439
        %vm2458 = vcmp.eq.s32.totalorder %v1314, %v2439
        %vm2459 = vcmp.eq.s32.totalorder %v1313, %v2440
        %vm2460 = vcmp.eq.s32.totalorder %v1314, %v2440
        %vm2461 = vcmp.eq.s32.totalorder %v1313, %v2441
        %vm2462 = vcmp.eq.s32.totalorder %v1314, %v2441
        %vm2463 = vcmp.eq.s32.totalorder %v1313, %v2442
        %vm2464 = vcmp.eq.s32.totalorder %v1314, %v2442
        %v2465 = vsel %vm2443, 1, 0
        %v2466 = vsel %vm2444, 1, 0
        %v2467 = vsel %vm2445, 1, 0
        %v2468 = vsel %vm2446, 1, 0
        %v2469 = vsel %vm2447, 1, 0
        %v2470 = vsel %vm2448, 1, 0
        %v2471 = vsel %vm2449, 1, 0
        %v2472 = vsel %vm2450, 1, 0
        %v2473 = vsel %vm2451, 1, 0
        %v2474 = vsel %vm2452, 1, 0
        %v2475 = vsel %vm2453, 1, 0
        %v2476 = vsel %vm2454, 1, 0
        %v2477 = vsel %vm2455, 1, 0
        %v2478 = vsel %vm2456, 1, 0
        %v2479 = vsel %vm2457, 1, 0
        %v2480 = vsel %vm2458, 1, 0
        %v2481 = vsel %vm2459, 1, 0
        %v2482 = vsel %vm2460, 1, 0
        %v2483 = vsel %vm2461, 1, 0
        %v2484 = vsel %vm2462, 1, 0
        %v2485 = vsel %vm2463, 1, 0
        %v2486 = vsel %vm2464, 1, 0
        %v2487 = vcvt.s32.f32 %v2465
        %v2488 = vcvt.s32.f32 %v2466
        %v2489 = vcvt.s32.f32 %v2467
        %v2490 = vcvt.s32.f32 %v2468
        %v2491 = vcvt.s32.f32 %v2469
        %v2492 = vcvt.s32.f32 %v2470
        %v2493 = vcvt.s32.f32 %v2471
        %v2494 = vcvt.s32.f32 %v2472
        %v2495 = vcvt.s32.f32 %v2473
        %v2496 = vcvt.s32.f32 %v2474
        %v2497 = vcvt.s32.f32 %v2475
        %v2498 = vcvt.s32.f32 %v2476
        %v2499 = vcvt.s32.f32 %v2477
        %v2500 = vcvt.s32.f32 %v2478
        %v2501 = vcvt.s32.f32 %v2479
        %v2502 = vcvt.s32.f32 %v2480
        %v2503 = vcvt.s32.f32 %v2481
        %v2504 = vcvt.s32.f32 %v2482
        %v2505 = vcvt.s32.f32 %v2483
        %v2506 = vcvt.s32.f32 %v2484
        %v2507 = vcvt.s32.f32 %v2485
        %v2508 = vcvt.s32.f32 %v2486
        %v2510 = vsel %vm1392, %v2488, 0
        %v2513 = vsel %vm1392, %v2490, 0
        %v2516 = vsel %vm1392, %v2492, 0
        %v2519 = vsel %vm1392, %v2494, 0
        %v2522 = vsel %vm1392, %v2496, 0
        %v2525 = vsel %vm1392, %v2498, 0
        %v2528 = vsel %vm1392, %v2500, 0
        %v2531 = vsel %vm1392, %v2502, 0
        %v2534 = vsel %vm1392, %v2504, 0
        %v2537 = vsel %vm1392, %v2506, 0
        %v2540 = vsel %vm1392, %v2508, 0
        %2542 = vmatprep.subr.mxu0 0.0
        %2543 = vmatpush1.msra.mxu0 %v1269
        %2544 = vmatprep.subr.mxu0 0.0
        %2545 = vmatpush1.msra.mxu0 %v1270
        %2546 = vmatprep.subr.mxu0 0.0
        %2547 = vmatpush1.msra.mxu0 %v1271
        %2548 = vmatprep.subr.mxu0 0.0
        %2549 = vmatpush1.msra.mxu0 %v1272
        %2550 = vmatprep.subr.mxu0 0.0
        %2551 = vmatpush1.msra.mxu0 %v1273
        %2552 = vmatprep.subr.mxu0 0.0
        %2553 = vmatpush1.msra.mxu0 %v1274
        %2554 = vmatprep.subr.mxu0 0.0
        %2555 = vmatpush1.msra.mxu0 %v1275
        %2556 = vmatprep.subr.mxu0 0.0
        %2557 = vmatpush1.msra.mxu0 %v1276
        %2558 = vmatprep.subr.mxu0 0.0
        %2559 = vmatpush1.msra.mxu0 %v1277
        %2560 = vmatprep.subr.mxu0 0.0
        %2561 = vmatpush1.msra.mxu0 %v1278
        %2562 = vmatprep.subr.mxu0 0.0
        %2563 = vmatpush1.msra.mxu0 %v1279
        %2564 = vmatprep.subr.mxu0 0.0
        %2565 = vmatpush1.msra.mxu0 %v1280
        %2566 = vmatprep.subr.mxu0 0.0
        %2567 = vmatpush1.msra.mxu0 %v1281
        %2568 = vmatprep.subr.mxu0 0.0
        %2569 = vmatpush1.msra.mxu0 %v1282
        %2570 = vmatprep.subr.mxu0 0.0
        %2571 = vmatpush1.msra.mxu0 %v1283
        %2572 = vmatprep.subr.mxu0 0.0
        %2573 = vmatpush1.msra.mxu0 %v1284
        %2574 = vmatprep.subr.mxu0 0.0
        %2575 = vmatpush1.msra.mxu0 %v1285
        %2576 = vmatprep.subr.mxu0 0.0
        %2577 = vmatpush1.msra.mxu0 %v1286
        %2578 = vmatprep.subr.mxu0 0.0
        %2579 = vmatpush1.msra.mxu0 %v1287
        %2580 = vmatprep.subr.mxu0 0.0
        %2581 = vmatpush1.msra.mxu0 %v1288
        %2582 = vmatprep.subr.mxu0 0.0
        %2583 = vmatpush1.msra.mxu0 %v1289
        %2584 = vmatprep.subr.mxu0 0.0
        %2585 = vmatpush1.msra.mxu0 %v1290
        %2586 = vmatprep.subr.mxu0 0.0
        %2587 = vmatpush1.msra.mxu0 %v1291
        %2588 = vmatprep.subr.mxu0 0.0
        %2589 = vmatpush1.msra.mxu0 %v1292
        %2590 = vmatprep.subr.mxu0 0.0
        %2591 = vmatpush1.msra.mxu0 %v1293
        %2592 = vmatprep.subr.mxu0 0.0
        %2593 = vmatpush1.msra.mxu0 %v1294
        %2594 = vmatprep.subr.mxu0 0.0
        %2595 = vmatpush1.msra.mxu0 %v1295
        %2596 = vmatprep.subr.mxu0 0.0
        %2597 = vmatpush1.msra.mxu0 %v1296
        %2598 = vmatprep.subr.mxu0 0.0
        %2599 = vmatpush1.msra.mxu0 %v1297
        %2600 = vmatprep.subr.mxu0 0.0
        %2601 = vmatpush1.msra.mxu0 %v1298
        %2602 = vmatprep.subr.mxu0 0.0
        %2603 = vmatpush1.msra.mxu0 %v1428
        %2604 = vmatprep.subr.mxu0 0.0
        %2605 = vmatpush1.msra.mxu0 0.0
        %2606 = vmatprep.mubr.f32.mxu0 %v2510
        %2607 = vmatmul.mubr.f32.gmra.mrb[0].mxu0 %v2487
        %v2608 = vpop.f32.mrb[0].mxu0
        %v2609 = vadd.f32 0.0, %v2608
        %v2610 = vpop.f32.mrb[0].mxu0
        %2611 = vmatprep.mubr.f32.mxu0 %v2513
        %2612 = vmatmul.mubr.f32.gmra.mrb[0].mxu0 %v2489
        %v2613 = vpop.f32.mrb[0].mxu0
        %v2614 = vadd.f32 0.0, %v2613
        %v2615 = vpop.f32.mrb[0].mxu0
        %2616 = vmatprep.mubr.f32.mxu0 %v2516
        %2617 = vmatmul.mubr.f32.gmra.mrb[0].mxu0 %v2491
        %v2618 = vpop.f32.mrb[0].mxu0
        %v2619 = vadd.f32 0.0, %v2618
        %v2620 = vpop.f32.mrb[0].mxu0
        %2621 = vmatprep.mubr.f32.mxu0 %v2519
        %2622 = vmatmul.mubr.f32.gmra.mrb[0].mxu0 %v2493
        %v2623 = vpop.f32.mrb[0].mxu0
        %v2624 = vadd.f32 0.0, %v2623
        %v2625 = vpop.f32.mrb[0].mxu0
        %2626 = vmatprep.mubr.f32.mxu0 %v2522
        %2627 = vmatmul.mubr.f32.gmra.mrb[0].mxu0 %v2495
        %v2628 = vpop.f32.mrb[0].mxu0
        %v2629 = vadd.f32 0.0, %v2628
        %v2630 = vpop.f32.mrb[0].mxu0
        %2631 = vmatprep.mubr.f32.mxu0 %v2525
        %2632 = vmatmul.mubr.f32.gmra.mrb[0].mxu0 %v2497
        %v2633 = vpop.f32.mrb[0].mxu0
        %v2634 = vadd.f32 0.0, %v2633
        %v2635 = vpop.f32.mrb[0].mxu0
        %2636 = vmatprep.mubr.f32.mxu0 %v2528
        %2637 = vmatmul.mubr.f32.gmra.mrb[0].mxu0 %v2499
        %v2638 = vpop.f32.mrb[0].mxu0
        %v2639 = vadd.f32 0.0, %v2638
        %v2640 = vpop.f32.mrb[0].mxu0
        %2641 = vmatprep.mubr.f32.mxu0 %v2531
        %2642 = vmatmul.mubr.f32.gmra.mrb[0].mxu0 %v2501
        %v2643 = vpop.f32.mrb[0].mxu0
        %v2644 = vadd.f32 0.0, %v2643
        %v2645 = vpop.f32.mrb[0].mxu0
        %2646 = vmatprep.mubr.f32.mxu0 %v2534
        %2647 = vmatmul.mubr.f32.gmra.mrb[0].mxu0 %v2503
        %v2648 = vpop.f32.mrb[0].mxu0
        %v2649 = vadd.f32 0.0, %v2648
        %v2650 = vpop.f32.mrb[0].mxu0
        %2651 = vmatprep.mubr.f32.mxu0 %v2537
        %2652 = vmatmul.mubr.f32.gmra.mrb[0].mxu0 %v2505
        %v2653 = vpop.f32.mrb[0].mxu0
        %v2654 = vadd.f32 0.0, %v2653
        %v2655 = vpop.f32.mrb[0].mxu0
        %2656 = vmatprep.mubr.f32.mxu0 %v2540
        %2657 = vmatmul.mubr.f32.gmra.mrb[0].mxu0 %v2507
        %v2658 = vpop.f32.mrb[0].mxu0
        %v2659 = vadd.f32 0.0, %v2658
        %v2660 = vpop.f32.mrb[0].mxu0
        %2661 = vdwg.mxu0
        %v2662 = vld [vmem:[%s3 + $0x400] sm:$0xff]
        %v2663 = vld [vmem:[%s3 + $0x408] sm:$0xff]
        %v2664 = vld [vmem:[%s3 + $0x410] sm:$0xff]
        %v2665 = vld [vmem:[%s3 + $0x418] sm:$0xff]
        %v2666 = vld [vmem:[%s3 + $0x420] sm:$0xff]
        %v2667 = vld [vmem:[%s3 + $0x428] sm:$0xff]
        %v2668 = vld [vmem:[%s3 + $0x430] sm:$0xff]
        %v2669 = vld [vmem:[%s3 + $0x438] sm:$0xff]
        %v2670 = vld [vmem:[%s3 + $0x440] sm:$0xff]
        %v2671 = vld [vmem:[%s3 + $0x448] sm:$0xff]
        %v2672 = vld [vmem:[%s3 + $0x450] sm:$0xff]
        %v2673 = vld [vmem:[%s3 + $0x458] sm:$0xff]
        %v2674 = vld [vmem:[%s3 + $0x460] sm:$0xff]
        %v2675 = vld [vmem:[%s3 + $0x468] sm:$0xff]
        %v2676 = vld [vmem:[%s3 + $0x470] sm:$0xff]
        %v2677 = vld [vmem:[%s3 + $0x478] sm:$0xff]
        %v2678 = vld [vmem:[%s3 + $0x480] sm:$0xff]
        %v2679 = vld [vmem:[%s3 + $0x488] sm:$0xff]
        %v2680 = vld [vmem:[%s3 + $0x490] sm:$0xff]
        %v2681 = vld [vmem:[%s3 + $0x498] sm:$0xff]
        %v2682 = vld [vmem:[%s3 + $0x4a0] sm:$0xff]
        %v2683 = vld [vmem:[%s3 + $0x4a8] sm:$0xff]
        %v2684 = vld [vmem:[%s3 + $0x4b0] sm:$0xff]
        %v2685 = vld [vmem:[%s3 + $0x4b8] sm:$0xff]
        %v2686 = vld [vmem:[%s3 + $0x4c0] sm:$0xff]
        %v2687 = vld [vmem:[%s3 + $0x4c8] sm:$0xff]
        %v2688 = vld [vmem:[%s3 + $0x4d0] sm:$0xff]
        %v2689 = vld [vmem:[%s3 + $0x4d8] sm:$0xff]
        %v2690 = vld [vmem:[%s3 + $0x4e0] sm:$0xff]
        %v2691 = vld [vmem:[%s3 + $0x4e8] sm:$0xff]
        %v2692 = vld [vmem:[%s3 + $0x4f0] sm:$0xff]
        %v2693 = vld [vmem:[%s3 + $0x4f8] sm:$0xff]
        %v2694 = vld [vmem:[%s3 + $0x500] sm:$0xff]
        %v2695 = vld [vmem:[%s3 + $0x508] sm:$0xff]
        %v2696 = vld [vmem:[%s3 + $0x510] sm:$0xff]
        %v2697 = vld [vmem:[%s3 + $0x518] sm:$0xff]
        %v2698 = vld [vmem:[%s3 + $0x520] sm:$0xff]
        %v2699 = vld [vmem:[%s3 + $0x528] sm:$0xff]
        %v2700 = vld [vmem:[%s3 + $0x530] sm:$0xff]
        %v2701 = vld [vmem:[%s3 + $0x538] sm:$0xff]
        %v2702 = vld [vmem:[%s3 + $0x540] sm:$0xff]
        %v2703 = vld [vmem:[%s3 + $0x548] sm:$0xff]
        %v2704 = vld [vmem:[%s3 + $0x550] sm:$0xff]
        %v2705 = vld [vmem:[%s3 + $0x558] sm:$0xff]
        %v2706 = vld [vmem:[%s3 + $0x560] sm:$0xff]
        %v2707 = vld [vmem:[%s3 + $0x568] sm:$0xff]
        %v2708 = vld [vmem:[%s3 + $0x570] sm:$0xff]
        %v2709 = vld [vmem:[%s3 + $0x578] sm:$0xff]
        %v2710 = vld [vmem:[%s3 + $0x580] sm:$0xff]
        %v2711 = vld [vmem:[%s3 + $0x588] sm:$0xff]
        %v2712 = vld [vmem:[%s3 + $0x590] sm:$0xff]
        %v2713 = vld [vmem:[%s3 + $0x598] sm:$0xff]
        %v2714 = vld [vmem:[%s3 + $0x5a0] sm:$0xff]
        %v2715 = vld [vmem:[%s3 + $0x5a8] sm:$0xff]
        %v2716 = vld [vmem:[%s3 + $0x5b0] sm:$0xff]
        %v2717 = vld [vmem:[%s3 + $0x5b8] sm:$0xff]
        %v2718 = vld [vmem:[%s3 + $0x5c0] sm:$0xff]
        %v2719 = vld [vmem:[%s3 + $0x5c8] sm:$0xff]
        %v2720 = vld [vmem:[%s3 + $0x5d0] sm:$0xff]
        %v2721 = vld [vmem:[%s3 + $0x5d8] sm:$0xff]
        %v2722 = vld [vmem:[%s3 + $0x5e0] sm:$0xff]
        %v2723 = vld [vmem:[%s3 + $0x5e8] sm:$0xff]
        %v2724 = vld [vmem:[%s3 + $0x5f0] sm:$0xff]
        %v2725 = vld [vmem:[%s3 + $0x5f8] sm:$0xff]
        %2726 = vmatprep.subr.mxu0 %v2663
        %2727 = vmatpush1.msra.mxu0 %v2662
        %2728 = vmatprep.subr.mxu0 %v2667
        %2729 = vmatpush1.msra.mxu0 %v2666
        %2730 = vmatprep.subr.mxu0 %v2671
        %2731 = vmatpush1.msra.mxu0 %v2670
        %2732 = vmatprep.subr.mxu0 %v2675
        %2733 = vmatpush1.msra.mxu0 %v2674
        %2734 = vmatprep.subr.mxu0 %v2679
        %2735 = vmatpush1.msra.mxu0 %v2678
        %2736 = vmatprep.subr.mxu0 %v2683
        %2737 = vmatpush1.msra.mxu0 %v2682
        %2738 = vmatprep.subr.mxu0 %v2687
        %2739 = vmatpush1.msra.mxu0 %v2686
        %2740 = vmatprep.subr.mxu0 %v2691
        %2741 = vmatpush1.msra.mxu0 %v2690
        %2742 = vmatprep.subr.mxu0 %v2695
        %2743 = vmatpush1.msra.mxu0 %v2694
        %2744 = vmatprep.subr.mxu0 %v2699
        %2745 = vmatpush1.msra.mxu0 %v2698
        %2746 = vmatprep.subr.mxu0 %v2703
        %2747 = vmatpush1.msra.mxu0 %v2702
        %2748 = vmatprep.subr.mxu0 %v2707
        %2749 = vmatpush1.msra.mxu0 %v2706
        %2750 = vmatprep.subr.mxu0 %v2711
        %2751 = vmatpush1.msra.mxu0 %v2710
        %2752 = vmatprep.subr.mxu0 %v2715
        %2753 = vmatpush1.msra.mxu0 %v2714
        %2754 = vmatprep.subr.mxu0 %v2719
        %2755 = vmatpush1.msra.mxu0 %v2718
        %2756 = vmatprep.subr.mxu0 %v2723
        %2757 = vmatpush1.msra.mxu0 %v2722
        %2758 = vmatprep.subr.mxu0 0.0
        %2759 = vmatpush1.msra.mxu0 0.0
        %2760 = vmatprep.subr.mxu0 0.0
        %2761 = vmatpush1.msra.mxu0 0.0
        %2762 = vmatprep.subr.mxu0 0.0
        %2763 = vmatpush1.msra.mxu0 0.0
        %2764 = vmatprep.subr.mxu0 0.0
        %2765 = vmatpush1.msra.mxu0 0.0
        %2766 = vmatprep.subr.mxu0 0.0
        %2767 = vmatpush1.msra.mxu0 0.0
        %2768 = vmatprep.subr.mxu0 0.0
        %2769 = vmatpush1.msra.mxu0 0.0
        %2770 = vmatprep.subr.mxu0 0.0
        %2771 = vmatpush1.msra.mxu0 0.0
        %2772 = vmatprep.subr.mxu0 0.0
        %2773 = vmatpush1.msra.mxu0 0.0
        %2774 = vmatprep.subr.mxu0 0.0
        %2775 = vmatpush1.msra.mxu0 0.0
        %2776 = vmatprep.subr.mxu0 0.0
        %2777 = vmatpush1.msra.mxu0 0.0
        %2778 = vmatprep.subr.mxu0 0.0
        %2779 = vmatpush1.msra.mxu0 0.0
        %2780 = vmatprep.subr.mxu0 0.0
        %2781 = vmatpush1.msra.mxu0 0.0
        %2782 = vmatprep.subr.mxu0 0.0
        %2783 = vmatpush1.msra.mxu0 0.0
        %2784 = vmatprep.subr.mxu0 0.0
        %2785 = vmatpush1.msra.mxu0 0.0
        %2786 = vmatprep.subr.mxu0 0.0
        %2787 = vmatpush1.msra.mxu0 0.0
        %2788 = vmatprep.subr.mxu0 0.0
        %2789 = vmatpush1.msra.mxu0 0.0
        %2790 = vmatprep.mubr.f32.mxu0 0.0
        %2791 = vmatmul.mubr.f32.gmra.mrb[0].mxu0 %v2609
        %v2792 = vpop.f32.mrb[0].mxu0
        %v2793 = vadd.f32 0.0, %v2792
        %v2794 = vpop.f32.mrb[0].mxu0
        %v2795 = vadd.f32 0.0, %v2794
        %2796 = vmatprep.mubr.f32.mxu0 0.0
        %2797 = vmatmul.mubr.f32.gmra.mrb[0].mxu0 %v2614
        %v2798 = vpop.f32.mrb[0].mxu0
        %v2799 = vadd.f32 0.0, %v2798
        %v2800 = vpop.f32.mrb[0].mxu0
        %v2801 = vadd.f32 0.0, %v2800
        %2802 = vmatprep.mubr.f32.mxu0 0.0
        %2803 = vmatmul.mubr.f32.gmra.mrb[0].mxu0 %v2619
        %v2804 = vpop.f32.mrb[0].mxu0
        %v2805 = vadd.f32 0.0, %v2804
        %v2806 = vpop.f32.mrb[0].mxu0
        %v2807 = vadd.f32 0.0, %v2806
        %2808 = vmatprep.mubr.f32.mxu0 0.0
        %2809 = vmatmul.mubr.f32.gmra.mrb[0].mxu0 %v2624
        %v2810 = vpop.f32.mrb[0].mxu0
        %v2811 = vadd.f32 0.0, %v2810
        %v2812 = vpop.f32.mrb[0].mxu0
        %v2813 = vadd.f32 0.0, %v2812
        %2814 = vmatprep.mubr.f32.mxu0 0.0
        %2815 = vmatmul.mubr.f32.gmra.mrb[0].mxu0 %v2629
        %v2816 = vpop.f32.mrb[0].mxu0
        %v2817 = vadd.f32 0.0, %v2816
        %v2818 = vpop.f32.mrb[0].mxu0
        %v2819 = vadd.f32 0.0, %v2818
        %2820 = vmatprep.mubr.f32.mxu0 0.0
        %2821 = vmatmul.mubr.f32.gmra.mrb[0].mxu0 %v2634
        %v2822 = vpop.f32.mrb[0].mxu0
        %v2823 = vadd.f32 0.0, %v2822
        %v2824 = vpop.f32.mrb[0].mxu0
        %v2825 = vadd.f32 0.0, %v2824
        %2826 = vmatprep.mubr.f32.mxu0 0.0
        %2827 = vmatmul.mubr.f32.gmra.mrb[0].mxu0 %v2639
        %v2828 = vpop.f32.mrb[0].mxu0
        %v2829 = vadd.f32 0.0, %v2828
        %v2830 = vpop.f32.mrb[0].mxu0
        %v2831 = vadd.f32 0.0, %v2830
        %2832 = vmatprep.mubr.f32.mxu0 0.0
        %2833 = vmatmul.mubr.f32.gmra.mrb[0].mxu0 %v2644
        %v2834 = vpop.f32.mrb[0].mxu0
        %v2835 = vadd.f32 0.0, %v2834
        %v2836 = vpop.f32.mrb[0].mxu0
        %v2837 = vadd.f32 0.0, %v2836
        %2838 = vmatprep.mubr.f32.mxu0 0.0
        %2839 = vmatmul.mubr.f32.gmra.mrb[0].mxu0 %v2649
        %v2840 = vpop.f32.mrb[0].mxu0
        %v2841 = vadd.f32 0.0, %v2840
        %v2842 = vpop.f32.mrb[0].mxu0
        %v2843 = vadd.f32 0.0, %v2842
        %2844 = vmatprep.mubr.f32.mxu0 0.0
        %2845 = vmatmul.mubr.f32.gmra.mrb[0].mxu0 %v2654
        %v2846 = vpop.f32.mrb[0].mxu0
        %v2847 = vadd.f32 0.0, %v2846
        %v2848 = vpop.f32.mrb[0].mxu0
        %v2849 = vadd.f32 0.0, %v2848
        %2850 = vmatprep.mubr.f32.mxu0 0.0
        %2851 = vmatmul.mubr.f32.gmra.mrb[0].mxu0 %v2659
        %v2852 = vpop.f32.mrb[0].mxu0
        %v2853 = vadd.f32 0.0, %v2852
        %v2854 = vpop.f32.mrb[0].mxu0
        %v2855 = vadd.f32 0.0, %v2854
        %2856 = vdwg.mxu0
        %2857 = vmatprep.subr.mxu0 %v2665
        %2858 = vmatpush1.msra.mxu0 %v2664
        %2859 = vmatprep.subr.mxu0 %v2669
        %2860 = vmatpush1.msra.mxu0 %v2668
        %2861 = vmatprep.subr.mxu0 %v2673
        %2862 = vmatpush1.msra.mxu0 %v2672
        %2863 = vmatprep.subr.mxu0 %v2677
        %2864 = vmatpush1.msra.mxu0 %v2676
        %2865 = vmatprep.subr.mxu0 %v2681
        %2866 = vmatpush1.msra.mxu0 %v2680
        %2867 = vmatprep.subr.mxu0 %v2685
        %2868 = vmatpush1.msra.mxu0 %v2684
        %2869 = vmatprep.subr.mxu0 %v2689
        %2870 = vmatpush1.msra.mxu0 %v2688
        %2871 = vmatprep.subr.mxu0 %v2693
        %2872 = vmatpush1.msra.mxu0 %v2692
        %2873 = vmatprep.subr.mxu0 %v2697
        %2874 = vmatpush1.msra.mxu0 %v2696
        %2875 = vmatprep.subr.mxu0 %v2701
        %2876 = vmatpush1.msra.mxu0 %v2700
        %2877 = vmatprep.subr.mxu0 %v2705
        %2878 = vmatpush1.msra.mxu0 %v2704
        %2879 = vmatprep.subr.mxu0 %v2709
        %2880 = vmatpush1.msra.mxu0 %v2708
        %2881 = vmatprep.subr.mxu0 %v2713
        %2882 = vmatpush1.msra.mxu0 %v2712
        %2883 = vmatprep.subr.mxu0 %v2717
        %2884 = vmatpush1.msra.mxu0 %v2716
        %2885 = vmatprep.subr.mxu0 %v2721
        %2886 = vmatpush1.msra.mxu0 %v2720
        %2887 = vmatprep.subr.mxu0 %v2725
        %2888 = vmatpush1.msra.mxu0 %v2724
        %2889 = vmatprep.subr.mxu0 0.0
        %2890 = vmatpush1.msra.mxu0 0.0
        %2891 = vmatprep.subr.mxu0 0.0
        %2892 = vmatpush1.msra.mxu0 0.0
        %2893 = vmatprep.subr.mxu0 0.0
        %2894 = vmatpush1.msra.mxu0 0.0
        %2895 = vmatprep.subr.mxu0 0.0
        %2896 = vmatpush1.msra.mxu0 0.0
        %2897 = vmatprep.subr.mxu0 0.0
        %2898 = vmatpush1.msra.mxu0 0.0
        %2899 = vmatprep.subr.mxu0 0.0
        %2900 = vmatpush1.msra.mxu0 0.0
        %2901 = vmatprep.subr.mxu0 0.0
        %2902 = vmatpush1.msra.mxu0 0.0
        %2903 = vmatprep.subr.mxu0 0.0
        %2904 = vmatpush1.msra.mxu0 0.0
        %2905 = vmatprep.subr.mxu0 0.0
        %2906 = vmatpush1.msra.mxu0 0.0
        %2907 = vmatprep.subr.mxu0 0.0
        %2908 = vmatpush1.msra.mxu0 0.0
        %2909 = vmatprep.subr.mxu0 0.0
        %2910 = vmatpush1.msra.mxu0 0.0
        %2911 = vmatprep.subr.mxu0 0.0
        %2912 = vmatpush1.msra.mxu0 0.0
        %2913 = vmatprep.subr.mxu0 0.0
        %2914 = vmatpush1.msra.mxu0 0.0
        %2915 = vmatprep.subr.mxu0 0.0
        %2916 = vmatpush1.msra.mxu0 0.0
        %2917 = vmatprep.subr.mxu0 0.0
        %2918 = vmatpush1.msra.mxu0 0.0
        %2919 = vmatprep.subr.mxu0 0.0
        %2920 = vmatpush1.msra.mxu0 0.0
        %2921 = vmatprep.mubr.f32.mxu0 0.0
        %2922 = vmatmul.mubr.f32.gmra.mrb[0].mxu0 %v2609
        %v2923 = vpop.f32.mrb[0].mxu0
        %v2924 = vadd.f32 0.0, %v2923
        %v2925 = vpop.f32.mrb[0].mxu0
        %v2926 = vadd.f32 0.0, %v2925
        %2927 = vmatprep.mubr.f32.mxu0 0.0
        %2928 = vmatmul.mubr.f32.gmra.mrb[0].mxu0 %v2614
        %v2929 = vpop.f32.mrb[0].mxu0
        %v2930 = vadd.f32 0.0, %v2929
        %v2931 = vpop.f32.mrb[0].mxu0
        %v2932 = vadd.f32 0.0, %v2931
        %2933 = vmatprep.mubr.f32.mxu0 0.0
        %2934 = vmatmul.mubr.f32.gmra.mrb[0].mxu0 %v2619
        %v2935 = vpop.f32.mrb[0].mxu0
        %v2936 = vadd.f32 0.0, %v2935
        %v2937 = vpop.f32.mrb[0].mxu0
        %v2938 = vadd.f32 0.0, %v2937
        %2939 = vmatprep.mubr.f32.mxu0 0.0
        %2940 = vmatmul.mubr.f32.gmra.mrb[0].mxu0 %v2624
        %v2941 = vpop.f32.mrb[0].mxu0
        %v2942 = vadd.f32 0.0, %v2941
        %v2943 = vpop.f32.mrb[0].mxu0
        %v2944 = vadd.f32 0.0, %v2943
        %2945 = vmatprep.mubr.f32.mxu0 0.0
        %2946 = vmatmul.mubr.f32.gmra.mrb[0].mxu0 %v2629
        %v2947 = vpop.f32.mrb[0].mxu0
        %v2948 = vadd.f32 0.0, %v2947
        %v2949 = vpop.f32.mrb[0].mxu0
        %v2950 = vadd.f32 0.0, %v2949
        %2951 = vmatprep.mubr.f32.mxu0 0.0
        %2952 = vmatmul.mubr.f32.gmra.mrb[0].mxu0 %v2634
        %v2953 = vpop.f32.mrb[0].mxu0
        %v2954 = vadd.f32 0.0, %v2953
        %v2955 = vpop.f32.mrb[0].mxu0
        %v2956 = vadd.f32 0.0, %v2955
        %2957 = vmatprep.mubr.f32.mxu0 0.0
        %2958 = vmatmul.mubr.f32.gmra.mrb[0].mxu0 %v2639
        %v2959 = vpop.f32.mrb[0].mxu0
        %v2960 = vadd.f32 0.0, %v2959
        %v2961 = vpop.f32.mrb[0].mxu0
        %v2962 = vadd.f32 0.0, %v2961
        %2963 = vmatprep.mubr.f32.mxu0 0.0
        %2964 = vmatmul.mubr.f32.gmra.mrb[0].mxu0 %v2644
        %v2965 = vpop.f32.mrb[0].mxu0
        %v2966 = vadd.f32 0.0, %v2965
        %v2967 = vpop.f32.mrb[0].mxu0
        %v2968 = vadd.f32 0.0, %v2967
        %2969 = vmatprep.mubr.f32.mxu0 0.0
        %2970 = vmatmul.mubr.f32.gmra.mrb[0].mxu0 %v2649
        %v2971 = vpop.f32.mrb[0].mxu0
        %v2972 = vadd.f32 0.0, %v2971
        %v2973 = vpop.f32.mrb[0].mxu0
        %v2974 = vadd.f32 0.0, %v2973
        %2975 = vmatprep.mubr.f32.mxu0 0.0
        %2976 = vmatmul.mubr.f32.gmra.mrb[0].mxu0 %v2654
        %v2977 = vpop.f32.mrb[0].mxu0
        %v2978 = vadd.f32 0.0, %v2977
        %v2979 = vpop.f32.mrb[0].mxu0
        %v2980 = vadd.f32 0.0, %v2979
        %2981 = vmatprep.mubr.f32.mxu0 0.0
        %2982 = vmatmul.mubr.f32.gmra.mrb[0].mxu0 %v2659
        %v2983 = vpop.f32.mrb[0].mxu0
        %v2984 = vadd.f32 0.0, %v2983
        %v2985 = vpop.f32.mrb[0].mxu0
        %v2986 = vadd.f32 0.0, %v2985
        %2987 = vdwg.mxu0
        %v2988 = vadd.f32 %v2237, %v2793
        %v2989 = vadd.f32 %v2239, %v2795
        %v2990 = vadd.f32 %v2368, %v2924
        %v2991 = vadd.f32 %v2370, %v2926
        %v2992 = vadd.f32 %v2243, %v2799
        %v2993 = vadd.f32 %v2245, %v2801
        %v2994 = vadd.f32 %v2374, %v2930
        %v2995 = vadd.f32 %v2376, %v2932
        %v2996 = vadd.f32 %v2249, %v2805
        %v2997 = vadd.f32 %v2251, %v2807
        %v2998 = vadd.f32 %v2380, %v2936
        %v2999 = vadd.f32 %v2382, %v2938
        %v3000 = vadd.f32 %v2255, %v2811
        %v3001 = vadd.f32 %v2257, %v2813
        %v3002 = vadd.f32 %v2386, %v2942
        %v3003 = vadd.f32 %v2388, %v2944
        %v3004 = vadd.f32 %v2261, %v2817
        %v3005 = vadd.f32 %v2263, %v2819
        %v3006 = vadd.f32 %v2392, %v2948
        %v3007 = vadd.f32 %v2394, %v2950
        %v3008 = vadd.f32 %v2267, %v2823
        %v3009 = vadd.f32 %v2269, %v2825
        %v3010 = vadd.f32 %v2398, %v2954
        %v3011 = vadd.f32 %v2400, %v2956
        %v3012 = vadd.f32 %v2273, %v2829
        %v3013 = vadd.f32 %v2275, %v2831
        %v3014 = vadd.f32 %v2404, %v2960
        %v3015 = vadd.f32 %v2406, %v2962
        %v3016 = vadd.f32 %v2279, %v2835
        %v3017 = vadd.f32 %v2281, %v2837
        %v3018 = vadd.f32 %v2410, %v2966
        %v3019 = vadd.f32 %v2412, %v2968
        %v3020 = vadd.f32 %v2285, %v2841
        %v3021 = vadd.f32 %v2287, %v2843
        %v3022 = vadd.f32 %v2416, %v2972
        %v3023 = vadd.f32 %v2418, %v2974
        %v3024 = vadd.f32 %v2291, %v2847
        %v3025 = vadd.f32 %v2293, %v2849
        %v3026 = vadd.f32 %v2422, %v2978
        %v3027 = vadd.f32 %v2424, %v2980
        %v3028 = vadd.f32 %v2297, %v2853
        %v3029 = vadd.f32 %v2299, %v2855
        %v3030 = vadd.f32 %v2428, %v2984
        %v3031 = vadd.f32 %v2430, %v2986
        %v3032 = vld [vmem:[#allocation5] sm:$0xf]
        %v3034 = vlaneseq
        %v3035 = vshrl.u32 %v3034, 7
        %v3036 = vsub.s32 0, %v3035
        %v3037 = vrot.slane %v3032, %v3036
        %v3038 = vlaneseq
        %v3039 = vshrl.u32 %v3038, 7
        %v3040 = vsub.s32 1, %v3039
        %v3041 = vrot.slane %v3032, %v3040
        %v3042 = vlaneseq
        %v3043 = vshrl.u32 %v3042, 7
        %v3044 = vsub.s32 2, %v3043
        %v3045 = vrot.slane %v3032, %v3044
        %v3046 = vlaneseq
        %v3047 = vshrl.u32 %v3046, 7
        %v3048 = vsub.s32 3, %v3047
        %v3049 = vrot.slane %v3032, %v3048
        %v3054 = vadd.f32 %v2988, %v3037
        %v3055 = vadd.f32 %v2989, %v3041
        %v3056 = vadd.f32 %v2990, %v3045
        %v3057 = vadd.f32 %v2991, %v3049
        %v3058 = vadd.f32 %v2992, %v3037
        %v3059 = vadd.f32 %v2993, %v3041
        %v3060 = vadd.f32 %v2994, %v3045
        %v3061 = vadd.f32 %v2995, %v3049
        %v3062 = vadd.f32 %v2996, %v3037
        %v3063 = vadd.f32 %v2997, %v3041
        %v3064 = vadd.f32 %v2998, %v3045
        %v3065 = vadd.f32 %v2999, %v3049
        %v3066 = vadd.f32 %v3000, %v3037
        %v3067 = vadd.f32 %v3001, %v3041
        %v3068 = vadd.f32 %v3002, %v3045
        %v3069 = vadd.f32 %v3003, %v3049
        %v3070 = vadd.f32 %v3004, %v3037
        %v3071 = vadd.f32 %v3005, %v3041
        %v3072 = vadd.f32 %v3006, %v3045
        %v3073 = vadd.f32 %v3007, %v3049
        %v3074 = vadd.f32 %v3008, %v3037
        %v3075 = vadd.f32 %v3009, %v3041
        %v3076 = vadd.f32 %v3010, %v3045
        %v3077 = vadd.f32 %v3011, %v3049
        %v3078 = vadd.f32 %v3012, %v3037
        %v3079 = vadd.f32 %v3013, %v3041
        %v3080 = vadd.f32 %v3014, %v3045
        %v3081 = vadd.f32 %v3015, %v3049
        %v3082 = vadd.f32 %v3016, %v3037
        %v3083 = vadd.f32 %v3017, %v3041
        %v3084 = vadd.f32 %v3018, %v3045
        %v3085 = vadd.f32 %v3019, %v3049
        %v3086 = vadd.f32 %v3020, %v3037
        %v3087 = vadd.f32 %v3021, %v3041
        %v3088 = vadd.f32 %v3022, %v3045
        %v3089 = vadd.f32 %v3023, %v3049
        %v3090 = vadd.f32 %v3024, %v3037
        %v3091 = vadd.f32 %v3025, %v3041
        %v3092 = vadd.f32 %v3026, %v3045
        %v3093 = vadd.f32 %v3027, %v3049
        %v3094 = vadd.f32 %v3028, %v3037
        %v3095 = vadd.f32 %v3029, %v3041
        %v3096 = vadd.f32 %v3030, %v3045
        %v3097 = vadd.f32 %v3031, %v3049
        %v3098 = vmul.f32 %v3054, 0.5
        %v3099 = vmul.f32 %v3055, 0.5
        %v3100 = vmul.f32 %v3056, 0.5
        %v3101 = vmul.f32 %v3057, 0.5
        %v3102 = vmul.f32 %v3058, 0.5
        %v3103 = vmul.f32 %v3059, 0.5
        %v3104 = vmul.f32 %v3060, 0.5
        %v3105 = vmul.f32 %v3061, 0.5
        %v3106 = vmul.f32 %v3062, 0.5
        %v3107 = vmul.f32 %v3063, 0.5
        %v3108 = vmul.f32 %v3064, 0.5
        %v3109 = vmul.f32 %v3065, 0.5
        %v3110 = vmul.f32 %v3066, 0.5
        %v3111 = vmul.f32 %v3067, 0.5
        %v3112 = vmul.f32 %v3068, 0.5
        %v3113 = vmul.f32 %v3069, 0.5
        %v3114 = vmul.f32 %v3070, 0.5
        %v3115 = vmul.f32 %v3071, 0.5
        %v3116 = vmul.f32 %v3072, 0.5
        %v3117 = vmul.f32 %v3073, 0.5
        %v3118 = vmul.f32 %v3074, 0.5
        %v3119 = vmul.f32 %v3075, 0.5
        %v3120 = vmul.f32 %v3076, 0.5
        %v3121 = vmul.f32 %v3077, 0.5
        %v3122 = vmul.f32 %v3078, 0.5
        %v3123 = vmul.f32 %v3079, 0.5
        %v3124 = vmul.f32 %v3080, 0.5
        %v3125 = vmul.f32 %v3081, 0.5
        %v3126 = vmul.f32 %v3082, 0.5
        %v3127 = vmul.f32 %v3083, 0.5
        %v3128 = vmul.f32 %v3084, 0.5
        %v3129 = vmul.f32 %v3085, 0.5
        %v3130 = vmul.f32 %v3086, 0.5
        %v3131 = vmul.f32 %v3087, 0.5
        %v3132 = vmul.f32 %v3088, 0.5
        %v3133 = vmul.f32 %v3089, 0.5
        %v3134 = vmul.f32 %v3090, 0.5
        %v3135 = vmul.f32 %v3091, 0.5
        %v3136 = vmul.f32 %v3092, 0.5
        %v3137 = vmul.f32 %v3093, 0.5
        %v3138 = vmul.f32 %v3094, 0.5
        %v3139 = vmul.f32 %v3095, 0.5
        %v3140 = vmul.f32 %v3096, 0.5
        %v3141 = vmul.f32 %v3097, 0.5
        %v3142 = vmul.f32 %v3054, 0.70710677
        %v3143 = vmul.f32 %v3055, 0.70710677
        %v3144 = vmul.f32 %v3056, 0.70710677
        %v3145 = vmul.f32 %v3057, 0.70710677
        %v3146 = vmul.f32 %v3058, 0.70710677
        %v3147 = vmul.f32 %v3059, 0.70710677
        %v3148 = vmul.f32 %v3060, 0.70710677
        %v3149 = vmul.f32 %v3061, 0.70710677
        %v3150 = vmul.f32 %v3062, 0.70710677
        %v3151 = vmul.f32 %v3063, 0.70710677
        %v3152 = vmul.f32 %v3064, 0.70710677
        %v3153 = vmul.f32 %v3065, 0.70710677
        %v3154 = vmul.f32 %v3066, 0.70710677
        %v3155 = vmul.f32 %v3067, 0.70710677
        %v3156 = vmul.f32 %v3068, 0.70710677
        %v3157 = vmul.f32 %v3069, 0.70710677
        %v3158 = vmul.f32 %v3070, 0.70710677
        %v3159 = vmul.f32 %v3071, 0.70710677
        %v3160 = vmul.f32 %v3072, 0.70710677
        %v3161 = vmul.f32 %v3073, 0.70710677
        %v3162 = vmul.f32 %v3074, 0.70710677
        %v3163 = vmul.f32 %v3075, 0.70710677
        %v3164 = vmul.f32 %v3076, 0.70710677
        %v3165 = vmul.f32 %v3077, 0.70710677
        %v3166 = vmul.f32 %v3078, 0.70710677
        %v3167 = vmul.f32 %v3079, 0.70710677
        %v3168 = vmul.f32 %v3080, 0.70710677
        %v3169 = vmul.f32 %v3081, 0.70710677
        %v3170 = vmul.f32 %v3082, 0.70710677
        %v3171 = vmul.f32 %v3083, 0.70710677
        %v3172 = vmul.f32 %v3084, 0.70710677
        %v3173 = vmul.f32 %v3085, 0.70710677
        %v3174 = vmul.f32 %v3086, 0.70710677
        %v3175 = vmul.f32 %v3087, 0.70710677
        %v3176 = vmul.f32 %v3088, 0.70710677
        %v3177 = vmul.f32 %v3089, 0.70710677
        %v3178 = vmul.f32 %v3090, 0.70710677
        %v3179 = vmul.f32 %v3091, 0.70710677
        %v3180 = vmul.f32 %v3092, 0.70710677
        %v3181 = vmul.f32 %v3093, 0.70710677
        %v3182 = vmul.f32 %v3094, 0.70710677
        %v3183 = vmul.f32 %v3095, 0.70710677
        %v3184 = vmul.f32 %v3096, 0.70710677
        %v3185 = vmul.f32 %v3097, 0.70710677
        %v3186 = verf.f32.pop %v3142
        %v3187 = verf.f32.pop %v3143
        %v3188 = verf.f32.pop %v3144
        %v3189 = verf.f32.pop %v3145
        %v3190 = verf.f32.pop %v3146
        %v3191 = verf.f32.pop %v3147
        %v3192 = verf.f32.pop %v3148
        %v3193 = verf.f32.pop %v3149
        %v3194 = verf.f32.pop %v3150
        %v3195 = verf.f32.pop %v3151
        %v3196 = verf.f32.pop %v3152
        %v3197 = verf.f32.pop %v3153
        %v3198 = verf.f32.pop %v3154
        %v3199 = verf.f32.pop %v3155
        %v3200 = verf.f32.pop %v3156
        %v3201 = verf.f32.pop %v3157
        %v3202 = verf.f32.pop %v3158
        %v3203 = verf.f32.pop %v3159
        %v3204 = verf.f32.pop %v3160
        %v3205 = verf.f32.pop %v3161
        %v3206 = verf.f32.pop %v3162
        %v3207 = verf.f32.pop %v3163
        %v3208 = verf.f32.pop %v3164
        %v3209 = verf.f32.pop %v3165
        %v3210 = verf.f32.pop %v3166
        %v3211 = verf.f32.pop %v3167
        %v3212 = verf.f32.pop %v3168
        %v3213 = verf.f32.pop %v3169
        %v3214 = verf.f32.pop %v3170
        %v3215 = verf.f32.pop %v3171
        %v3216 = verf.f32.pop %v3172
        %v3217 = verf.f32.pop %v3173
        %v3218 = verf.f32.pop %v3174
        %v3219 = verf.f32.pop %v3175
        %v3220 = verf.f32.pop %v3176
        %v3221 = verf.f32.pop %v3177
        %v3222 = verf.f32.pop %v3178
        %v3223 = verf.f32.pop %v3179
        %v3224 = verf.f32.pop %v3180
        %v3225 = verf.f32.pop %v3181
        %v3226 = verf.f32.pop %v3182
        %v3227 = verf.f32.pop %v3183
        %v3228 = verf.f32.pop %v3184
        %v3229 = verf.f32.pop %v3185
        %v3230 = vadd.f32 %v3186, 1.0
        %v3231 = vadd.f32 %v3187, 1.0
        %v3232 = vadd.f32 %v3188, 1.0
        %v3233 = vadd.f32 %v3189, 1.0
        %v3234 = vadd.f32 %v3190, 1.0
        %v3235 = vadd.f32 %v3191, 1.0
        %v3236 = vadd.f32 %v3192, 1.0
        %v3237 = vadd.f32 %v3193, 1.0
        %v3238 = vadd.f32 %v3194, 1.0
        %v3239 = vadd.f32 %v3195, 1.0
        %v3240 = vadd.f32 %v3196, 1.0
        %v3241 = vadd.f32 %v3197, 1.0
        %v3242 = vadd.f32 %v3198, 1.0
        %v3243 = vadd.f32 %v3199, 1.0
        %v3244 = vadd.f32 %v3200, 1.0
        %v3245 = vadd.f32 %v3201, 1.0
        %v3246 = vadd.f32 %v3202, 1.0
        %v3247 = vadd.f32 %v3203, 1.0
        %v3248 = vadd.f32 %v3204, 1.0
        %v3249 = vadd.f32 %v3205, 1.0
        %v3250 = vadd.f32 %v3206, 1.0
        %v3251 = vadd.f32 %v3207, 1.0
        %v3252 = vadd.f32 %v3208, 1.0
        %v3253 = vadd.f32 %v3209, 1.0
        %v3254 = vadd.f32 %v3210, 1.0
        %v3255 = vadd.f32 %v3211, 1.0
        %v3256 = vadd.f32 %v3212, 1.0
        %v3257 = vadd.f32 %v3213, 1.0
        %v3258 = vadd.f32 %v3214, 1.0
        %v3259 = vadd.f32 %v3215, 1.0
        %v3260 = vadd.f32 %v3216, 1.0
        %v3261 = vadd.f32 %v3217, 1.0
        %v3262 = vadd.f32 %v3218, 1.0
        %v3263 = vadd.f32 %v3219, 1.0
        %v3264 = vadd.f32 %v3220, 1.0
        %v3265 = vadd.f32 %v3221, 1.0
        %v3266 = vadd.f32 %v3222, 1.0
        %v3267 = vadd.f32 %v3223, 1.0
        %v3268 = vadd.f32 %v3224, 1.0
        %v3269 = vadd.f32 %v3225, 1.0
        %v3270 = vadd.f32 %v3226, 1.0
        %v3271 = vadd.f32 %v3227, 1.0
        %v3272 = vadd.f32 %v3228, 1.0
        %v3273 = vadd.f32 %v3229, 1.0
        %v3274 = vmul.f32 %v3098, %v3230
        %v3275 = vmul.f32 %v3099, %v3231
        %v3276 = vmul.f32 %v3100, %v3232
        %v3277 = vmul.f32 %v3101, %v3233
        %v3278 = vmul.f32 %v3102, %v3234
        %v3279 = vmul.f32 %v3103, %v3235
        %v3280 = vmul.f32 %v3104, %v3236
        %v3281 = vmul.f32 %v3105, %v3237
        %v3282 = vmul.f32 %v3106, %v3238
        %v3283 = vmul.f32 %v3107, %v3239
        %v3284 = vmul.f32 %v3108, %v3240
        %v3285 = vmul.f32 %v3109, %v3241
        %v3286 = vmul.f32 %v3110, %v3242
        %v3287 = vmul.f32 %v3111, %v3243
        %v3288 = vmul.f32 %v3112, %v3244
        %v3289 = vmul.f32 %v3113, %v3245
        %v3290 = vmul.f32 %v3114, %v3246
        %v3291 = vmul.f32 %v3115, %v3247
        %v3292 = vmul.f32 %v3116, %v3248
        %v3293 = vmul.f32 %v3117, %v3249
        %v3294 = vmul.f32 %v3118, %v3250
        %v3295 = vmul.f32 %v3119, %v3251
        %v3296 = vmul.f32 %v3120, %v3252
        %v3297 = vmul.f32 %v3121, %v3253
        %v3298 = vmul.f32 %v3122, %v3254
        %v3299 = vmul.f32 %v3123, %v3255
        %v3300 = vmul.f32 %v3124, %v3256
        %v3301 = vmul.f32 %v3125, %v3257
        %v3302 = vmul.f32 %v3126, %v3258
        %v3303 = vmul.f32 %v3127, %v3259
        %v3304 = vmul.f32 %v3128, %v3260
        %v3305 = vmul.f32 %v3129, %v3261
        %v3306 = vmul.f32 %v3130, %v3262
        %v3307 = vmul.f32 %v3131, %v3263
        %v3308 = vmul.f32 %v3132, %v3264
        %v3309 = vmul.f32 %v3133, %v3265
        %v3310 = vmul.f32 %v3134, %v3266
        %v3311 = vmul.f32 %v3135, %v3267
        %v3312 = vmul.f32 %v3136, %v3268
        %v3313 = vmul.f32 %v3137, %v3269
        %v3314 = vmul.f32 %v3138, %v3270
        %v3315 = vmul.f32 %v3139, %v3271
        %v3316 = vmul.f32 %v3140, %v3272
        %v3317 = vmul.f32 %v3141, %v3273
        %vm3318 = vcmask 662528
        %v3320 = vsel %vm3318, %v1370, 0
        %v3323 = vsel %vm3318, %v1372, 0
        %v3326 = vsel %vm3318, %v1374, 0
        %v3329 = vsel %vm3318, %v1376, 0
        %vm3331 = vcmask 1040384
        %v3333 = vsel %vm3331, %v3314, 0
        %v3336 = vsel %vm3331, %v3315, 0
        %v3339 = vsel %vm3331, %v3316, 0
        %v3342 = vsel %vm3331, %v3317, 0
        %3344 = vmatprep.subr.mxu0 %v3275
        %3345 = vmatpush1.msra.mxu0 %v3274
        %3346 = vmatprep.subr.mxu0 %v3279
        %3347 = vmatpush1.msra.mxu0 %v3278
        %3348 = vmatprep.subr.mxu0 %v3283
        %3349 = vmatpush1.msra.mxu0 %v3282
        %3350 = vmatprep.subr.mxu0 %v3287
        %3351 = vmatpush1.msra.mxu0 %v3286
        %3352 = vmatprep.subr.mxu0 %v3291
        %3353 = vmatpush1.msra.mxu0 %v3290
        %3354 = vmatprep.subr.mxu0 %v3295
        %3355 = vmatpush1.msra.mxu0 %v3294
        %3356 = vmatprep.subr.mxu0 %v3299
        %3357 = vmatpush1.msra.mxu0 %v3298
        %3358 = vmatprep.subr.mxu0 %v3303
        %3359 = vmatpush1.msra.mxu0 %v3302
        %3360 = vmatprep.subr.mxu0 %v3307
        %3361 = vmatpush1.msra.mxu0 %v3306
        %3362 = vmatprep.subr.mxu0 %v3311
        %3363 = vmatpush1.msra.mxu0 %v3310
        %3364 = vmatprep.subr.mxu0 %v3336
        %3365 = vmatpush1.msra.mxu0 %v3333
        %3366 = vmatprep.subr.mxu0 0.0
        %3367 = vmatpush1.msra.mxu0 0.0
        %3368 = vmatprep.subr.mxu0 0.0
        %3369 = vmatpush1.msra.mxu0 0.0
        %3370 = vmatprep.subr.mxu0 0.0
        %3371 = vmatpush1.msra.mxu0 0.0
        %3372 = vmatprep.subr.mxu0 0.0
        %3373 = vmatpush1.msra.mxu0 0.0
        %3374 = vmatprep.subr.mxu0 0.0
        %3375 = vmatpush1.msra.mxu0 0.0
        %3376 = vmatprep.subr.mxu0 0.0
        %3377 = vmatpush1.msra.mxu0 0.0
        %3378 = vmatprep.subr.mxu0 0.0
        %3379 = vmatpush1.msra.mxu0 0.0
        %3380 = vmatprep.subr.mxu0 0.0
        %3381 = vmatpush1.msra.mxu0 0.0
        %3382 = vmatprep.subr.mxu0 0.0
        %3383 = vmatpush1.msra.mxu0 0.0
        %3384 = vmatprep.subr.mxu0 0.0
        %3385 = vmatpush1.msra.mxu0 0.0
        %3386 = vmatprep.subr.mxu0 0.0
        %3387 = vmatpush1.msra.mxu0 0.0
        %3388 = vmatprep.subr.mxu0 0.0
        %3389 = vmatpush1.msra.mxu0 0.0
        %3390 = vmatprep.subr.mxu0 0.0
        %3391 = vmatpush1.msra.mxu0 0.0
        %3392 = vmatprep.subr.mxu0 0.0
        %3393 = vmatpush1.msra.mxu0 0.0
        %3394 = vmatprep.subr.mxu0 0.0
        %3395 = vmatpush1.msra.mxu0 0.0
        %3396 = vmatprep.subr.mxu0 0.0
        %3397 = vmatpush1.msra.mxu0 0.0
        %3398 = vmatprep.subr.mxu0 0.0
        %3399 = vmatpush1.msra.mxu0 0.0
        %3400 = vmatprep.subr.mxu0 0.0
        %3401 = vmatpush1.msra.mxu0 0.0
        %3402 = vmatprep.subr.mxu0 0.0
        %3403 = vmatpush1.msra.mxu0 0.0
        %3404 = vmatprep.subr.mxu0 0.0
        %3405 = vmatpush1.msra.mxu0 0.0
        %3406 = vmatprep.subr.mxu0 0.0
        %3407 = vmatpush1.msra.mxu0 0.0
        %3408 = vmatprep.mubr.f32.mxu0 0.0
        %3409 = vmatmul.mubr.f32.gmra.mrb[0].mxu0 %v3320
        %v3410 = vpop.f32.mrb[0].mxu0
        %v3411 = vadd.f32 0.0, %v3410
        %v3412 = vpop.f32.mrb[0].mxu0
        %v3413 = vadd.f32 0.0, %v3412
        %3414 = vmatprep.mubr.f32.mxu0 0.0
        %3415 = vmatmul.mubr.f32.gmra.mrb[0].mxu0 %v3323
        %v3416 = vpop.f32.mrb[0].mxu0
        %v3417 = vadd.f32 0.0, %v3416
        %v3418 = vpop.f32.mrb[0].mxu0
        %v3419 = vadd.f32 0.0, %v3418
        %3420 = vmatprep.mubr.f32.mxu0 0.0
        %3421 = vmatmul.mubr.f32.gmra.mrb[0].mxu0 %v3326
        %v3422 = vpop.f32.mrb[0].mxu0
        %v3423 = vadd.f32 0.0, %v3422
        %v3424 = vpop.f32.mrb[0].mxu0
        %v3425 = vadd.f32 0.0, %v3424
        %3426 = vmatprep.mubr.f32.mxu0 0.0
        %3427 = vmatmul.mubr.f32.gmra.mrb[0].mxu0 %v3329
        %v3428 = vpop.f32.mrb[0].mxu0
        %v3429 = vadd.f32 0.0, %v3428
        %v3430 = vpop.f32.mrb[0].mxu0
        %v3431 = vadd.f32 0.0, %v3430
        %3432 = vdwg.mxu0
        %3433 = vmatprep.subr.mxu0 %v3277
        %3434 = vmatpush1.msra.mxu0 %v3276
        %3435 = vmatprep.subr.mxu0 %v3281
        %3436 = vmatpush1.msra.mxu0 %v3280
        %3437 = vmatprep.subr.mxu0 %v3285
        %3438 = vmatpush1.msra.mxu0 %v3284
        %3439 = vmatprep.subr.mxu0 %v3289
        %3440 = vmatpush1.msra.mxu0 %v3288
        %3441 = vmatprep.subr.mxu0 %v3293
        %3442 = vmatpush1.msra.mxu0 %v3292
        %3443 = vmatprep.subr.mxu0 %v3297
        %3444 = vmatpush1.msra.mxu0 %v3296
        %3445 = vmatprep.subr.mxu0 %v3301
        %3446 = vmatpush1.msra.mxu0 %v3300
        %3447 = vmatprep.subr.mxu0 %v3305
        %3448 = vmatpush1.msra.mxu0 %v3304
        %3449 = vmatprep.subr.mxu0 %v3309
        %3450 = vmatpush1.msra.mxu0 %v3308
        %3451 = vmatprep.subr.mxu0 %v3313
        %3452 = vmatpush1.msra.mxu0 %v3312
        %3453 = vmatprep.subr.mxu0 %v3342
        %3454 = vmatpush1.msra.mxu0 %v3339
        %3455 = vmatprep.subr.mxu0 0.0
        %3456 = vmatpush1.msra.mxu0 0.0
        %3457 = vmatprep.subr.mxu0 0.0
        %3458 = vmatpush1.msra.mxu0 0.0
        %3459 = vmatprep.subr.mxu0 0.0
        %3460 = vmatpush1.msra.mxu0 0.0
        %3461 = vmatprep.subr.mxu0 0.0
        %3462 = vmatpush1.msra.mxu0 0.0
        %3463 = vmatprep.subr.mxu0 0.0
        %3464 = vmatpush1.msra.mxu0 0.0
        %3465 = vmatprep.subr.mxu0 0.0
        %3466 = vmatpush1.msra.mxu0 0.0
        %3467 = vmatprep.subr.mxu0 0.0
        %3468 = vmatpush1.msra.mxu0 0.0
        %3469 = vmatprep.subr.mxu0 0.0
        %3470 = vmatpush1.msra.mxu0 0.0
        %3471 = vmatprep.subr.mxu0 0.0
        %3472 = vmatpush1.msra.mxu0 0.0
        %3473 = vmatprep.subr.mxu0 0.0
        %3474 = vmatpush1.msra.mxu0 0.0
        %3475 = vmatprep.subr.mxu0 0.0
        %3476 = vmatpush1.msra.mxu0 0.0
        %3477 = vmatprep.subr.mxu0 0.0
        %3478 = vmatpush1.msra.mxu0 0.0
        %3479 = vmatprep.subr.mxu0 0.0
        %3480 = vmatpush1.msra.mxu0 0.0
        %3481 = vmatprep.subr.mxu0 0.0
        %3482 = vmatpush1.msra.mxu0 0.0
        %3483 = vmatprep.subr.mxu0 0.0
        %3484 = vmatpush1.msra.mxu0 0.0
        %3485 = vmatprep.subr.mxu0 0.0
        %3486 = vmatpush1.msra.mxu0 0.0
        %3487 = vmatprep.subr.mxu0 0.0
        %3488 = vmatpush1.msra.mxu0 0.0
        %3489 = vmatprep.subr.mxu0 0.0
        %3490 = vmatpush1.msra.mxu0 0.0
        %3491 = vmatprep.subr.mxu0 0.0
        %3492 = vmatpush1.msra.mxu0 0.0
        %3493 = vmatprep.subr.mxu0 0.0
        %3494 = vmatpush1.msra.mxu0 0.0
        %3495 = vmatprep.subr.mxu0 0.0
        %3496 = vmatpush1.msra.mxu0 0.0
        %3497 = vmatprep.mubr.f32.mxu0 0.0
        %3498 = vmatmul.mubr.f32.gmra.mrb[0].mxu0 %v3320
        %v3499 = vpop.f32.mrb[0].mxu0
        %v3500 = vadd.f32 0.0, %v3499
        %v3501 = vpop.f32.mrb[0].mxu0
        %v3502 = vadd.f32 0.0, %v3501
        %3503 = vmatprep.mubr.f32.mxu0 0.0
        %3504 = vmatmul.mubr.f32.gmra.mrb[0].mxu0 %v3323
        %v3505 = vpop.f32.mrb[0].mxu0
        %v3506 = vadd.f32 0.0, %v3505
        %v3507 = vpop.f32.mrb[0].mxu0
        %v3508 = vadd.f32 0.0, %v3507
        %3509 = vmatprep.mubr.f32.mxu0 0.0
        %3510 = vmatmul.mubr.f32.gmra.mrb[0].mxu0 %v3326
        %v3511 = vpop.f32.mrb[0].mxu0
        %v3512 = vadd.f32 0.0, %v3511
        %v3513 = vpop.f32.mrb[0].mxu0
        %v3514 = vadd.f32 0.0, %v3513
        %3515 = vmatprep.mubr.f32.mxu0 0.0
        %3516 = vmatmul.mubr.f32.gmra.mrb[0].mxu0 %v3329
        %v3517 = vpop.f32.mrb[0].mxu0
        %v3518 = vadd.f32 0.0, %v3517
        %v3519 = vpop.f32.mrb[0].mxu0
        %v3520 = vadd.f32 0.0, %v3519
        %3521 = vdwg.mxu0
        %v3522 = vld [vmem:[#allocation7] sm:$0xff]
        %v3523 = vld [vmem:[#allocation7 + $0x8] sm:$0xff]
        %v3524 = vld [vmem:[#allocation7 + $0x10] sm:$0xff]
        %v3525 = vld [vmem:[#allocation7 + $0x18] sm:$0xff]
        %v3526 = vld [vmem:[#allocation7 + $0x20] sm:$0xff]
        %v3527 = vld [vmem:[#allocation7 + $0x28] sm:$0xff]
        %v3528 = vld [vmem:[#allocation7 + $0x30] sm:$0xff]
        %v3529 = vld [vmem:[#allocation7 + $0x38] sm:$0xff]
        %v3530 = vld [vmem:[#allocation7 + $0x40] sm:$0xff]
        %v3531 = vld [vmem:[#allocation7 + $0x48] sm:$0xff]
        %v3532 = vld [vmem:[#allocation7 + $0x50] sm:$0xff]
        %v3533 = vld [vmem:[#allocation7 + $0x58] sm:$0xff]
        %v3534 = vld [vmem:[#allocation7 + $0x60] sm:$0xff]
        %v3535 = vld [vmem:[#allocation7 + $0x68] sm:$0xff]
        %v3536 = vld [vmem:[#allocation7 + $0x70] sm:$0xff]
        %v3537 = vld [vmem:[#allocation7 + $0x78] sm:$0xff]
        %v3538 = vld [vmem:[#allocation7 + $0x80] sm:$0xff]
        %v3539 = vld [vmem:[#allocation7 + $0x88] sm:$0xff]
        %v3540 = vld [vmem:[#allocation7 + $0x90] sm:$0xff]
        %v3541 = vld [vmem:[#allocation7 + $0x98] sm:$0xff]
        %v3542 = vld [vmem:[#allocation7 + $0xa0] sm:$0xff]
        %v3543 = vld [vmem:[#allocation7 + $0xa8] sm:$0xff]
        %v3544 = vld [vmem:[#allocation7 + $0xb0] sm:$0xff]
        %v3545 = vld [vmem:[#allocation7 + $0xb8] sm:$0xff]
        %v3546 = vld [vmem:[#allocation7 + $0xc0] sm:$0xff]
        %v3547 = vld [vmem:[#allocation7 + $0xc8] sm:$0xff]
        %v3548 = vld [vmem:[#allocation7 + $0xd0] sm:$0xff]
        %v3549 = vld [vmem:[#allocation7 + $0xd8] sm:$0xff]
        %v3550 = vld [vmem:[#allocation7 + $0xe0] sm:$0xff]
        %v3551 = vld [vmem:[#allocation7 + $0xe8] sm:$0xff]
        %v3552 = vld [vmem:[#allocation7 + $0xf0] sm:$0xff]
        %v3553 = vld [vmem:[#allocation7 + $0xf8] sm:$0xff]
        %v3554 = vld [vmem:[#allocation7 + $0x100] sm:$0xff]
        %v3555 = vld [vmem:[#allocation7 + $0x108] sm:$0xff]
        %v3556 = vld [vmem:[#allocation7 + $0x110] sm:$0xff]
        %v3557 = vld [vmem:[#allocation7 + $0x118] sm:$0xff]
        %v3558 = vld [vmem:[#allocation7 + $0x120] sm:$0xff]
        %v3559 = vld [vmem:[#allocation7 + $0x128] sm:$0xff]
        %v3560 = vld [vmem:[#allocation7 + $0x130] sm:$0xff]
        %v3561 = vld [vmem:[#allocation7 + $0x138] sm:$0xff]
        %v3562 = vld [vmem:[#allocation7 + $0x140] sm:$0xff]
        %v3563 = vld [vmem:[#allocation7 + $0x148] sm:$0xff]
        %v3564 = vld [vmem:[#allocation7 + $0x150] sm:$0xff]
        %v3565 = vld [vmem:[#allocation7 + $0x158] sm:$0xff]
        %v3566 = vld [vmem:[#allocation7 + $0x160] sm:$0xff]
        %v3567 = vld [vmem:[#allocation7 + $0x168] sm:$0xff]
        %v3568 = vld [vmem:[#allocation7 + $0x170] sm:$0xff]
        %v3569 = vld [vmem:[#allocation7 + $0x178] sm:$0xff]
        %v3570 = vld [vmem:[#allocation7 + $0x180] sm:$0xff]
        %v3571 = vld [vmem:[#allocation7 + $0x188] sm:$0xff]
        %v3572 = vld [vmem:[#allocation7 + $0x190] sm:$0xff]
        %v3573 = vld [vmem:[#allocation7 + $0x198] sm:$0xff]
        %v3574 = vld [vmem:[#allocation7 + $0x1a0] sm:$0xff]
        %v3575 = vld [vmem:[#allocation7 + $0x1a8] sm:$0xff]
        %v3576 = vld [vmem:[#allocation7 + $0x1b0] sm:$0xff]
        %v3577 = vld [vmem:[#allocation7 + $0x1b8] sm:$0xff]
        %v3578 = vld [vmem:[#allocation7 + $0x1c0] sm:$0xff]
        %v3579 = vld [vmem:[#allocation7 + $0x1c8] sm:$0xff]
        %v3580 = vld [vmem:[#allocation7 + $0x1d0] sm:$0xff]
        %v3581 = vld [vmem:[#allocation7 + $0x1d8] sm:$0xff]
        %v3582 = vld [vmem:[#allocation7 + $0x1e0] sm:$0xff]
        %v3583 = vld [vmem:[#allocation7 + $0x1e8] sm:$0xff]
        %v3584 = vld [vmem:[#allocation7 + $0x1f0] sm:$0xff]
        %v3585 = vld [vmem:[#allocation7 + $0x1f8] sm:$0xff]
        %v3586 = vld [vmem:[#allocation7 + $0x200] sm:$0xff]
        %v3587 = vld [vmem:[#allocation7 + $0x208] sm:$0xff]
        %v3588 = vld [vmem:[#allocation7 + $0x210] sm:$0xff]
        %v3589 = vld [vmem:[#allocation7 + $0x218] sm:$0xff]
        %v3590 = vld [vmem:[#allocation7 + $0x220] sm:$0xff]
        %v3591 = vld [vmem:[#allocation7 + $0x228] sm:$0xff]
        %v3592 = vld [vmem:[#allocation7 + $0x230] sm:$0xff]
        %v3593 = vld [vmem:[#allocation7 + $0x238] sm:$0xff]
        %v3594 = vld [vmem:[#allocation7 + $0x240] sm:$0xff]
        %v3595 = vld [vmem:[#allocation7 + $0x248] sm:$0xff]
        %v3596 = vld [vmem:[#allocation7 + $0x250] sm:$0xff]
        %v3597 = vld [vmem:[#allocation7 + $0x258] sm:$0xff]
        %v3598 = vld [vmem:[#allocation7 + $0x260] sm:$0xff]
        %v3599 = vld [vmem:[#allocation7 + $0x268] sm:$0xff]
        %v3600 = vld [vmem:[#allocation7 + $0x270] sm:$0xff]
        %v3601 = vld [vmem:[#allocation7 + $0x278] sm:$0xff]
        %v3602 = vld [vmem:[#allocation7 + $0x280] sm:$0xff]
        %v3603 = vld [vmem:[#allocation7 + $0x288] sm:$0xff]
        %v3604 = vld [vmem:[#allocation7 + $0x290] sm:$0xff]
        %v3605 = vld [vmem:[#allocation7 + $0x298] sm:$0xff]
        %v3606 = vld [vmem:[#allocation7 + $0x2a0] sm:$0xff]
        %v3607 = vld [vmem:[#allocation7 + $0x2a8] sm:$0xff]
        %v3608 = vld [vmem:[#allocation7 + $0x2b0] sm:$0xff]
        %v3609 = vld [vmem:[#allocation7 + $0x2b8] sm:$0xff]
        %v3610 = vld [vmem:[#allocation7 + $0x2c0] sm:$0xff]
        %v3611 = vld [vmem:[#allocation7 + $0x2c8] sm:$0xff]
        %v3612 = vld [vmem:[#allocation7 + $0x2d0] sm:$0xff]
        %v3613 = vld [vmem:[#allocation7 + $0x2d8] sm:$0xff]
        %v3614 = vld [vmem:[#allocation7 + $0x2e0] sm:$0xff]
        %v3615 = vld [vmem:[#allocation7 + $0x2e8] sm:$0xff]
        %v3616 = vld [vmem:[#allocation7 + $0x2f0] sm:$0xff]
        %v3617 = vld [vmem:[#allocation7 + $0x2f8] sm:$0xff]
        %v3618 = vld [vmem:[#allocation7 + $0x300] sm:$0xff]
        %v3619 = vld [vmem:[#allocation7 + $0x308] sm:$0xff]
        %v3620 = vld [vmem:[#allocation7 + $0x310] sm:$0xff]
        %v3621 = vld [vmem:[#allocation7 + $0x318] sm:$0xff]
        %v3622 = vld [vmem:[#allocation7 + $0x320] sm:$0xff]
        %v3623 = vld [vmem:[#allocation7 + $0x328] sm:$0xff]
        %v3624 = vld [vmem:[#allocation7 + $0x330] sm:$0xff]
        %v3625 = vld [vmem:[#allocation7 + $0x338] sm:$0xff]
        %v3626 = vld [vmem:[#allocation7 + $0x340] sm:$0xff]
        %v3627 = vld [vmem:[#allocation7 + $0x348] sm:$0xff]
        %v3628 = vld [vmem:[#allocation7 + $0x350] sm:$0xff]
        %v3629 = vld [vmem:[#allocation7 + $0x358] sm:$0xff]
        %v3630 = vld [vmem:[#allocation7 + $0x360] sm:$0xff]
        %v3631 = vld [vmem:[#allocation7 + $0x368] sm:$0xff]
        %v3632 = vld [vmem:[#allocation7 + $0x370] sm:$0xff]
        %v3633 = vld [vmem:[#allocation7 + $0x378] sm:$0xff]
        %v3634 = vld [vmem:[#allocation7 + $0x380] sm:$0xff]
        %v3635 = vld [vmem:[#allocation7 + $0x388] sm:$0xff]
        %v3636 = vld [vmem:[#allocation7 + $0x390] sm:$0xff]
        %v3637 = vld [vmem:[#allocation7 + $0x398] sm:$0xff]
        %v3638 = vld [vmem:[#allocation7 + $0x3a0] sm:$0xff]
        %v3639 = vld [vmem:[#allocation7 + $0x3a8] sm:$0xff]
        %v3640 = vld [vmem:[#allocation7 + $0x3b0] sm:$0xff]
        %v3641 = vld [vmem:[#allocation7 + $0x3b8] sm:$0xff]
        %v3642 = vld [vmem:[#allocation7 + $0x3c0] sm:$0xff]
        %v3643 = vld [vmem:[#allocation7 + $0x3c8] sm:$0xff]
        %v3644 = vld [vmem:[#allocation7 + $0x3d0] sm:$0xff]
        %v3645 = vld [vmem:[#allocation7 + $0x3d8] sm:$0xff]
        %v3646 = vld [vmem:[#allocation7 + $0x3e0] sm:$0xff]
        %v3647 = vld [vmem:[#allocation7 + $0x3e8] sm:$0xff]
        %v3648 = vld [vmem:[#allocation7 + $0x3f0] sm:$0xff]
        %v3649 = vld [vmem:[#allocation7 + $0x3f8] sm:$0xff]
        %v3651 = vsel %vm3318, %v1669, 0
        %v3654 = vsel %vm3318, %v1671, 0
        %v3657 = vsel %vm3318, %v1673, 0
        %v3660 = vsel %vm3318, %v1675, 0
        %3662 = vmatprep.subr.mxu0 %v3275
        %3663 = vmatpush1.msra.mxu0 %v3274
        %3664 = vmatprep.subr.mxu0 %v3279
        %3665 = vmatpush1.msra.mxu0 %v3278
        %3666 = vmatprep.subr.mxu0 %v3283
        %3667 = vmatpush1.msra.mxu0 %v3282
        %3668 = vmatprep.subr.mxu0 %v3287
        %3669 = vmatpush1.msra.mxu0 %v3286
        %3670 = vmatprep.subr.mxu0 %v3291
        %3671 = vmatpush1.msra.mxu0 %v3290
        %3672 = vmatprep.subr.mxu0 %v3295
        %3673 = vmatpush1.msra.mxu0 %v3294
        %3674 = vmatprep.subr.mxu0 %v3299
        %3675 = vmatpush1.msra.mxu0 %v3298
        %3676 = vmatprep.subr.mxu0 %v3303
        %3677 = vmatpush1.msra.mxu0 %v3302
        %3678 = vmatprep.subr.mxu0 %v3307
        %3679 = vmatpush1.msra.mxu0 %v3306
        %3680 = vmatprep.subr.mxu0 %v3311
        %3681 = vmatpush1.msra.mxu0 %v3310
        %3682 = vmatprep.subr.mxu0 %v3336
        %3683 = vmatpush1.msra.mxu0 %v3333
        %3684 = vmatprep.subr.mxu0 0.0
        %3685 = vmatpush1.msra.mxu0 0.0
        %3686 = vmatprep.subr.mxu0 0.0
        %3687 = vmatpush1.msra.mxu0 0.0
        %3688 = vmatprep.subr.mxu0 0.0
        %3689 = vmatpush1.msra.mxu0 0.0
        %3690 = vmatprep.subr.mxu0 0.0
        %3691 = vmatpush1.msra.mxu0 0.0
        %3692 = vmatprep.subr.mxu0 0.0
        %3693 = vmatpush1.msra.mxu0 0.0
        %3694 = vmatprep.subr.mxu0 0.0
        %3695 = vmatpush1.msra.mxu0 0.0
        %3696 = vmatprep.subr.mxu0 0.0
        %3697 = vmatpush1.msra.mxu0 0.0
        %3698 = vmatprep.subr.mxu0 0.0
        %3699 = vmatpush1.msra.mxu0 0.0
        %3700 = vmatprep.subr.mxu0 0.0
        %3701 = vmatpush1.msra.mxu0 0.0
        %3702 = vmatprep.subr.mxu0 0.0
        %3703 = vmatpush1.msra.mxu0 0.0
        %3704 = vmatprep.subr.mxu0 0.0
        %3705 = vmatpush1.msra.mxu0 0.0
        %3706 = vmatprep.subr.mxu0 0.0
        %3707 = vmatpush1.msra.mxu0 0.0
        %3708 = vmatprep.subr.mxu0 0.0
        %3709 = vmatpush1.msra.mxu0 0.0
        %3710 = vmatprep.subr.mxu0 0.0
        %3711 = vmatpush1.msra.mxu0 0.0
        %3712 = vmatprep.subr.mxu0 0.0
        %3713 = vmatpush1.msra.mxu0 0.0
        %3714 = vmatprep.subr.mxu0 0.0
        %3715 = vmatpush1.msra.mxu0 0.0
        %3716 = vmatprep.subr.mxu0 0.0
        %3717 = vmatpush1.msra.mxu0 0.0
        %3718 = vmatprep.subr.mxu0 0.0
        %3719 = vmatpush1.msra.mxu0 0.0
        %3720 = vmatprep.subr.mxu0 0.0
        %3721 = vmatpush1.msra.mxu0 0.0
        %3722 = vmatprep.subr.mxu0 0.0
        %3723 = vmatpush1.msra.mxu0 0.0
        %3724 = vmatprep.subr.mxu0 0.0
        %3725 = vmatpush1.msra.mxu0 0.0
        %3726 = vmatprep.mubr.f32.mxu0 0.0
        %3727 = vmatmul.mubr.f32.gmra.mrb[0].mxu0 %v3651
        %v3728 = vpop.f32.mrb[0].mxu0
        %v3729 = vadd.f32 0.0, %v3728
        %v3730 = vpop.f32.mrb[0].mxu0
        %v3731 = vadd.f32 0.0, %v3730
        %3732 = vmatprep.mubr.f32.mxu0 0.0
        %3733 = vmatmul.mubr.f32.gmra.mrb[0].mxu0 %v3654
        %v3734 = vpop.f32.mrb[0].mxu0
        %v3735 = vadd.f32 0.0, %v3734
        %v3736 = vpop.f32.mrb[0].mxu0
        %v3737 = vadd.f32 0.0, %v3736
        %3738 = vmatprep.mubr.f32.mxu0 0.0
        %3739 = vmatmul.mubr.f32.gmra.mrb[0].mxu0 %v3657
        %v3740 = vpop.f32.mrb[0].mxu0
        %v3741 = vadd.f32 0.0, %v3740
        %v3742 = vpop.f32.mrb[0].mxu0
        %v3743 = vadd.f32 0.0, %v3742
        %3744 = vmatprep.mubr.f32.mxu0 0.0
        %3745 = vmatmul.mubr.f32.gmra.mrb[0].mxu0 %v3660
        %v3746 = vpop.f32.mrb[0].mxu0
        %v3747 = vadd.f32 0.0, %v3746
        %v3748 = vpop.f32.mrb[0].mxu0
        %v3749 = vadd.f32 0.0, %v3748
        %3750 = vdwg.mxu0
        %3751 = vmatprep.subr.mxu0 %v3277
        %3752 = vmatpush1.msra.mxu0 %v3276
        %3753 = vmatprep.subr.mxu0 %v3281
        %3754 = vmatpush1.msra.mxu0 %v3280
        %3755 = vmatprep.subr.mxu0 %v3285
        %3756 = vmatpush1.msra.mxu0 %v3284
        %3757 = vmatprep.subr.mxu0 %v3289
        %3758 = vmatpush1.msra.mxu0 %v3288
        %3759 = vmatprep.subr.mxu0 %v3293
        %3760 = vmatpush1.msra.mxu0 %v3292
        %3761 = vmatprep.subr.mxu0 %v3297
        %3762 = vmatpush1.msra.mxu0 %v3296
        %3763 = vmatprep.subr.mxu0 %v3301
        %3764 = vmatpush1.msra.mxu0 %v3300
        %3765 = vmatprep.subr.mxu0 %v3305
        %3766 = vmatpush1.msra.mxu0 %v3304
        %3767 = vmatprep.subr.mxu0 %v3309
        %3768 = vmatpush1.msra.mxu0 %v3308
        %3769 = vmatprep.subr.mxu0 %v3313
        %3770 = vmatpush1.msra.mxu0 %v3312
        %3771 = vmatprep.subr.mxu0 %v3342
        %3772 = vmatpush1.msra.mxu0 %v3339
        %3773 = vmatprep.subr.mxu0 0.0
        %3774 = vmatpush1.msra.mxu0 0.0
        %3775 = vmatprep.subr.mxu0 0.0
        %3776 = vmatpush1.msra.mxu0 0.0
        %3777 = vmatprep.subr.mxu0 0.0
        %3778 = vmatpush1.msra.mxu0 0.0
        %3779 = vmatprep.subr.mxu0 0.0
        %3780 = vmatpush1.msra.mxu0 0.0
        %3781 = vmatprep.subr.mxu0 0.0
        %3782 = vmatpush1.msra.mxu0 0.0
        %3783 = vmatprep.subr.mxu0 0.0
        %3784 = vmatpush1.msra.mxu0 0.0
        %3785 = vmatprep.subr.mxu0 0.0
        %3786 = vmatpush1.msra.mxu0 0.0
        %3787 = vmatprep.subr.mxu0 0.0
        %3788 = vmatpush1.msra.mxu0 0.0
        %3789 = vmatprep.subr.mxu0 0.0
        %3790 = vmatpush1.msra.mxu0 0.0
        %3791 = vmatprep.subr.mxu0 0.0
        %3792 = vmatpush1.msra.mxu0 0.0
        %3793 = vmatprep.subr.mxu0 0.0
        %3794 = vmatpush1.msra.mxu0 0.0
        %3795 = vmatprep.subr.mxu0 0.0
        %3796 = vmatpush1.msra.mxu0 0.0
        %3797 = vmatprep.subr.mxu0 0.0
        %3798 = vmatpush1.msra.mxu0 0.0
        %3799 = vmatprep.subr.mxu0 0.0
        %3800 = vmatpush1.msra.mxu0 0.0
        %3801 = vmatprep.subr.mxu0 0.0
        %3802 = vmatpush1.msra.mxu0 0.0
        %3803 = vmatprep.subr.mxu0 0.0
        %3804 = vmatpush1.msra.mxu0 0.0
        %3805 = vmatprep.subr.mxu0 0.0
        %3806 = vmatpush1.msra.mxu0 0.0
        %3807 = vmatprep.subr.mxu0 0.0
        %3808 = vmatpush1.msra.mxu0 0.0
        %3809 = vmatprep.subr.mxu0 0.0
        %3810 = vmatpush1.msra.mxu0 0.0
        %3811 = vmatprep.subr.mxu0 0.0
        %3812 = vmatpush1.msra.mxu0 0.0
        %3813 = vmatprep.subr.mxu0 0.0
        %3814 = vmatpush1.msra.mxu0 0.0
        %3815 = vmatprep.mubr.f32.mxu0 0.0
        %3816 = vmatmul.mubr.f32.gmra.mrb[0].mxu0 %v3651
        %v3817 = vpop.f32.mrb[0].mxu0
        %v3818 = vadd.f32 0.0, %v3817
        %v3819 = vpop.f32.mrb[0].mxu0
        %v3820 = vadd.f32 0.0, %v3819
        %3821 = vmatprep.mubr.f32.mxu0 0.0
        %3822 = vmatmul.mubr.f32.gmra.mrb[0].mxu0 %v3654
        %v3823 = vpop.f32.mrb[0].mxu0
        %v3824 = vadd.f32 0.0, %v3823
        %v3825 = vpop.f32.mrb[0].mxu0
        %v3826 = vadd.f32 0.0, %v3825
        %3827 = vmatprep.mubr.f32.mxu0 0.0
        %3828 = vmatmul.mubr.f32.gmra.mrb[0].mxu0 %v3657
        %v3829 = vpop.f32.mrb[0].mxu0
        %v3830 = vadd.f32 0.0, %v3829
        %v3831 = vpop.f32.mrb[0].mxu0
        %v3832 = vadd.f32 0.0, %v3831
        %3833 = vmatprep.mubr.f32.mxu0 0.0
        %3834 = vmatmul.mubr.f32.gmra.mrb[0].mxu0 %v3660
        %v3835 = vpop.f32.mrb[0].mxu0
        %v3836 = vadd.f32 0.0, %v3835
        %v3837 = vpop.f32.mrb[0].mxu0
        %v3838 = vadd.f32 0.0, %v3837
        %3839 = vdwg.mxu0
        %v3840 = vld [vmem:[#allocation7 + $0x400] sm:$0xff]
        %v3841 = vld [vmem:[#allocation7 + $0x408] sm:$0xff]
        %v3842 = vld [vmem:[#allocation7 + $0x410] sm:$0xff]
        %v3843 = vld [vmem:[#allocation7 + $0x418] sm:$0xff]
        %v3844 = vld [vmem:[#allocation7 + $0x420] sm:$0xff]
        %v3845 = vld [vmem:[#allocation7 + $0x428] sm:$0xff]
        %v3846 = vld [vmem:[#allocation7 + $0x430] sm:$0xff]
        %v3847 = vld [vmem:[#allocation7 + $0x438] sm:$0xff]
        %v3848 = vld [vmem:[#allocation7 + $0x440] sm:$0xff]
        %v3849 = vld [vmem:[#allocation7 + $0x448] sm:$0xff]
        %v3850 = vld [vmem:[#allocation7 + $0x450] sm:$0xff]
        %v3851 = vld [vmem:[#allocation7 + $0x458] sm:$0xff]
        %v3852 = vld [vmem:[#allocation7 + $0x460] sm:$0xff]
        %v3853 = vld [vmem:[#allocation7 + $0x468] sm:$0xff]
        %v3854 = vld [vmem:[#allocation7 + $0x470] sm:$0xff]
        %v3855 = vld [vmem:[#allocation7 + $0x478] sm:$0xff]
        %v3856 = vld [vmem:[#allocation7 + $0x480] sm:$0xff]
        %v3857 = vld [vmem:[#allocation7 + $0x488] sm:$0xff]
        %v3858 = vld [vmem:[#allocation7 + $0x490] sm:$0xff]
        %v3859 = vld [vmem:[#allocation7 + $0x498] sm:$0xff]
        %v3860 = vld [vmem:[#allocation7 + $0x4a0] sm:$0xff]
        %v3861 = vld [vmem:[#allocation7 + $0x4a8] sm:$0xff]
        %v3862 = vld [vmem:[#allocation7 + $0x4b0] sm:$0xff]
        %v3863 = vld [vmem:[#allocation7 + $0x4b8] sm:$0xff]
        %v3864 = vld [vmem:[#allocation7 + $0x4c0] sm:$0xff]
        %v3865 = vld [vmem:[#allocation7 + $0x4c8] sm:$0xff]
        %v3866 = vld [vmem:[#allocation7 + $0x4d0] sm:$0xff]
        %v3867 = vld [vmem:[#allocation7 + $0x4d8] sm:$0xff]
        %v3868 = vld [vmem:[#allocation7 + $0x4e0] sm:$0xff]
        %v3869 = vld [vmem:[#allocation7 + $0x4e8] sm:$0xff]
        %v3870 = vld [vmem:[#allocation7 + $0x4f0] sm:$0xff]
        %v3871 = vld [vmem:[#allocation7 + $0x4f8] sm:$0xff]
        %v3872 = vld [vmem:[#allocation7 + $0x500] sm:$0xff]
        %v3873 = vld [vmem:[#allocation7 + $0x508] sm:$0xff]
        %v3874 = vld [vmem:[#allocation7 + $0x510] sm:$0xff]
        %v3875 = vld [vmem:[#allocation7 + $0x518] sm:$0xff]
        %v3876 = vld [vmem:[#allocation7 + $0x520] sm:$0xff]
        %v3877 = vld [vmem:[#allocation7 + $0x528] sm:$0xff]
        %v3878 = vld [vmem:[#allocation7 + $0x530] sm:$0xff]
        %v3879 = vld [vmem:[#allocation7 + $0x538] sm:$0xff]
        %v3880 = vld [vmem:[#allocation7 + $0x540] sm:$0xff]
        %v3881 = vld [vmem:[#allocation7 + $0x548] sm:$0xff]
        %v3882 = vld [vmem:[#allocation7 + $0x550] sm:$0xff]
        %v3883 = vld [vmem:[#allocation7 + $0x558] sm:$0xff]
        %v3884 = vld [vmem:[#allocation7 + $0x560] sm:$0xff]
        %v3885 = vld [vmem:[#allocation7 + $0x568] sm:$0xff]
        %v3886 = vld [vmem:[#allocation7 + $0x570] sm:$0xff]
        %v3887 = vld [vmem:[#allocation7 + $0x578] sm:$0xff]
        %v3888 = vld [vmem:[#allocation7 + $0x580] sm:$0xff]
        %v3889 = vld [vmem:[#allocation7 + $0x588] sm:$0xff]
        %v3890 = vld [vmem:[#allocation7 + $0x590] sm:$0xff]
        %v3891 = vld [vmem:[#allocation7 + $0x598] sm:$0xff]
        %v3892 = vld [vmem:[#allocation7 + $0x5a0] sm:$0xff]
        %v3893 = vld [vmem:[#allocation7 + $0x5a8] sm:$0xff]
        %v3894 = vld [vmem:[#allocation7 + $0x5b0] sm:$0xff]
        %v3895 = vld [vmem:[#allocation7 + $0x5b8] sm:$0xff]
        %v3896 = vld [vmem:[#allocation7 + $0x5c0] sm:$0xff]
        %v3897 = vld [vmem:[#allocation7 + $0x5c8] sm:$0xff]
        %v3898 = vld [vmem:[#allocation7 + $0x5d0] sm:$0xff]
        %v3899 = vld [vmem:[#allocation7 + $0x5d8] sm:$0xff]
        %v3900 = vld [vmem:[#allocation7 + $0x5e0] sm:$0xff]
        %v3901 = vld [vmem:[#allocation7 + $0x5e8] sm:$0xff]
        %v3902 = vld [vmem:[#allocation7 + $0x5f0] sm:$0xff]
        %v3903 = vld [vmem:[#allocation7 + $0x5f8] sm:$0xff]
        %v3904 = vld [vmem:[#allocation7 + $0x600] sm:$0xff]
        %v3905 = vld [vmem:[#allocation7 + $0x608] sm:$0xff]
        %v3906 = vld [vmem:[#allocation7 + $0x610] sm:$0xff]
        %v3907 = vld [vmem:[#allocation7 + $0x618] sm:$0xff]
        %v3908 = vld [vmem:[#allocation7 + $0x620] sm:$0xff]
        %v3909 = vld [vmem:[#allocation7 + $0x628] sm:$0xff]
        %v3910 = vld [vmem:[#allocation7 + $0x630] sm:$0xff]
        %v3911 = vld [vmem:[#allocation7 + $0x638] sm:$0xff]
        %v3912 = vld [vmem:[#allocation7 + $0x640] sm:$0xff]
        %v3913 = vld [vmem:[#allocation7 + $0x648] sm:$0xff]
        %v3914 = vld [vmem:[#allocation7 + $0x650] sm:$0xff]
        %v3915 = vld [vmem:[#allocation7 + $0x658] sm:$0xff]
        %v3916 = vld [vmem:[#allocation7 + $0x660] sm:$0xff]
        %v3917 = vld [vmem:[#allocation7 + $0x668] sm:$0xff]
        %v3918 = vld [vmem:[#allocation7 + $0x670] sm:$0xff]
        %v3919 = vld [vmem:[#allocation7 + $0x678] sm:$0xff]
        %v3920 = vld [vmem:[#allocation7 + $0x680] sm:$0xff]
        %v3921 = vld [vmem:[#allocation7 + $0x688] sm:$0xff]
        %v3922 = vld [vmem:[#allocation7 + $0x690] sm:$0xff]
        %v3923 = vld [vmem:[#allocation7 + $0x698] sm:$0xff]
        %v3924 = vld [vmem:[#allocation7 + $0x6a0] sm:$0xff]
        %v3925 = vld [vmem:[#allocation7 + $0x6a8] sm:$0xff]
        %v3926 = vld [vmem:[#allocation7 + $0x6b0] sm:$0xff]
        %v3927 = vld [vmem:[#allocation7 + $0x6b8] sm:$0xff]
        %v3928 = vld [vmem:[#allocation7 + $0x6c0] sm:$0xff]
        %v3929 = vld [vmem:[#allocation7 + $0x6c8] sm:$0xff]
        %v3930 = vld [vmem:[#allocation7 + $0x6d0] sm:$0xff]
        %v3931 = vld [vmem:[#allocation7 + $0x6d8] sm:$0xff]
        %v3932 = vld [vmem:[#allocation7 + $0x6e0] sm:$0xff]
        %v3933 = vld [vmem:[#allocation7 + $0x6e8] sm:$0xff]
        %v3934 = vld [vmem:[#allocation7 + $0x6f0] sm:$0xff]
        %v3935 = vld [vmem:[#allocation7 + $0x6f8] sm:$0xff]
        %v3936 = vld [vmem:[#allocation7 + $0x700] sm:$0xff]
        %v3937 = vld [vmem:[#allocation7 + $0x708] sm:$0xff]
        %v3938 = vld [vmem:[#allocation7 + $0x710] sm:$0xff]
        %v3939 = vld [vmem:[#allocation7 + $0x718] sm:$0xff]
        %v3940 = vld [vmem:[#allocation7 + $0x720] sm:$0xff]
        %v3941 = vld [vmem:[#allocation7 + $0x728] sm:$0xff]
        %v3942 = vld [vmem:[#allocation7 + $0x730] sm:$0xff]
        %v3943 = vld [vmem:[#allocation7 + $0x738] sm:$0xff]
        %v3944 = vld [vmem:[#allocation7 + $0x740] sm:$0xff]
        %v3945 = vld [vmem:[#allocation7 + $0x748] sm:$0xff]
        %v3946 = vld [vmem:[#allocation7 + $0x750] sm:$0xff]
        %v3947 = vld [vmem:[#allocation7 + $0x758] sm:$0xff]
        %v3948 = vld [vmem:[#allocation7 + $0x760] sm:$0xff]
        %v3949 = vld [vmem:[#allocation7 + $0x768] sm:$0xff]
        %v3950 = vld [vmem:[#allocation7 + $0x770] sm:$0xff]
        %v3951 = vld [vmem:[#allocation7 + $0x778] sm:$0xff]
        %v3952 = vld [vmem:[#allocation7 + $0x780] sm:$0xff]
        %v3953 = vld [vmem:[#allocation7 + $0x788] sm:$0xff]
        %v3954 = vld [vmem:[#allocation7 + $0x790] sm:$0xff]
        %v3955 = vld [vmem:[#allocation7 + $0x798] sm:$0xff]
        %v3956 = vld [vmem:[#allocation7 + $0x7a0] sm:$0xff]
        %v3957 = vld [vmem:[#allocation7 + $0x7a8] sm:$0xff]
        %v3958 = vld [vmem:[#allocation7 + $0x7b0] sm:$0xff]
        %v3959 = vld [vmem:[#allocation7 + $0x7b8] sm:$0xff]
        %v3960 = vld [vmem:[#allocation7 + $0x7c0] sm:$0xff]
        %v3961 = vld [vmem:[#allocation7 + $0x7c8] sm:$0xff]
        %v3962 = vld [vmem:[#allocation7 + $0x7d0] sm:$0xff]
        %v3963 = vld [vmem:[#allocation7 + $0x7d8] sm:$0xff]
        %v3964 = vld [vmem:[#allocation7 + $0x7e0] sm:$0xff]
        %v3965 = vld [vmem:[#allocation7 + $0x7e8] sm:$0xff]
        %v3966 = vld [vmem:[#allocation7 + $0x7f0] sm:$0xff]
        %v3967 = vld [vmem:[#allocation7 + $0x7f8] sm:$0xff]
        %3968 = vmatprep.subr.mxu0 %v3841
        %3969 = vmatpush1.msra.mxu0 %v3840
        %3970 = vmatprep.subr.mxu0 %v3843
        %3971 = vmatpush1.msra.mxu0 %v3842
        %3972 = vmatprep.subr.mxu0 %v3845
        %3973 = vmatpush1.msra.mxu0 %v3844
        %3974 = vmatprep.subr.mxu0 %v3847
        %3975 = vmatpush1.msra.mxu0 %v3846
        %3976 = vmatprep.subr.mxu0 %v3849
        %3977 = vmatpush1.msra.mxu0 %v3848
        %3978 = vmatprep.subr.mxu0 %v3851
        %3979 = vmatpush1.msra.mxu0 %v3850
        %3980 = vmatprep.subr.mxu0 %v3853
        %3981 = vmatpush1.msra.mxu0 %v3852
        %3982 = vmatprep.subr.mxu0 %v3855
        %3983 = vmatpush1.msra.mxu0 %v3854
        %3984 = vmatprep.subr.mxu0 %v3857
        %3985 = vmatpush1.msra.mxu0 %v3856
        %3986 = vmatprep.subr.mxu0 %v3859
        %3987 = vmatpush1.msra.mxu0 %v3858
        %3988 = vmatprep.subr.mxu0 %v3861
        %3989 = vmatpush1.msra.mxu0 %v3860
        %3990 = vmatprep.subr.mxu0 %v3863
        %3991 = vmatpush1.msra.mxu0 %v3862
        %3992 = vmatprep.subr.mxu0 %v3865
        %3993 = vmatpush1.msra.mxu0 %v3864
        %3994 = vmatprep.subr.mxu0 %v3867
        %3995 = vmatpush1.msra.mxu0 %v3866
        %3996 = vmatprep.subr.mxu0 %v3869
        %3997 = vmatpush1.msra.mxu0 %v3868
        %3998 = vmatprep.subr.mxu0 %v3871
        %3999 = vmatpush1.msra.mxu0 %v3870
        %4000 = vmatprep.subr.mxu0 %v3873
        %4001 = vmatpush1.msra.mxu0 %v3872
        %4002 = vmatprep.subr.mxu0 %v3875
        %4003 = vmatpush1.msra.mxu0 %v3874
        %4004 = vmatprep.subr.mxu0 %v3877
        %4005 = vmatpush1.msra.mxu0 %v3876
        %4006 = vmatprep.subr.mxu0 %v3879
        %4007 = vmatpush1.msra.mxu0 %v3878
        %4008 = vmatprep.subr.mxu0 %v3881
        %4009 = vmatpush1.msra.mxu0 %v3880
        %4010 = vmatprep.subr.mxu0 %v3883
        %4011 = vmatpush1.msra.mxu0 %v3882
        %4012 = vmatprep.subr.mxu0 %v3885
        %4013 = vmatpush1.msra.mxu0 %v3884
        %4014 = vmatprep.subr.mxu0 %v3887
        %4015 = vmatpush1.msra.mxu0 %v3886
        %4016 = vmatprep.subr.mxu0 %v3889
        %4017 = vmatpush1.msra.mxu0 %v3888
        %4018 = vmatprep.subr.mxu0 %v3891
        %4019 = vmatpush1.msra.mxu0 %v3890
        %4020 = vmatprep.subr.mxu0 %v3893
        %4021 = vmatpush1.msra.mxu0 %v3892
        %4022 = vmatprep.subr.mxu0 %v3895
        %4023 = vmatpush1.msra.mxu0 %v3894
        %4024 = vmatprep.subr.mxu0 %v3897
        %4025 = vmatpush1.msra.mxu0 %v3896
        %4026 = vmatprep.subr.mxu0 %v3899
        %4027 = vmatpush1.msra.mxu0 %v3898
        %4028 = vmatprep.subr.mxu0 %v3901
        %4029 = vmatpush1.msra.mxu0 %v3900
        %4030 = vmatprep.subr.mxu0 %v3903
        %4031 = vmatpush1.msra.mxu0 %v3902
        %4032 = vmatprep.mubr.f32.mxu0 %v3731
        %4033 = vmatmul.mubr.f32.gmra.mrb[0].mxu0 %v3729
        %v4034 = vpop.f32.mrb[0].mxu0
        %v4035 = vadd.f32 0.0, %v4034
        %v4036 = vpop.f32.mrb[0].mxu0
        %v4037 = vadd.f32 0.0, %v4036
        %4038 = vmatprep.mubr.f32.mxu0 %v3737
        %4039 = vmatmul.mubr.f32.gmra.mrb[0].mxu0 %v3735
        %v4040 = vpop.f32.mrb[0].mxu0
        %v4041 = vadd.f32 0.0, %v4040
        %v4042 = vpop.f32.mrb[0].mxu0
        %v4043 = vadd.f32 0.0, %v4042
        %4044 = vmatprep.mubr.f32.mxu0 %v3743
        %4045 = vmatmul.mubr.f32.gmra.mrb[0].mxu0 %v3741
        %v4046 = vpop.f32.mrb[0].mxu0
        %v4047 = vadd.f32 0.0, %v4046
        %v4048 = vpop.f32.mrb[0].mxu0
        %v4049 = vadd.f32 0.0, %v4048
        %4050 = vmatprep.mubr.f32.mxu0 %v3749
        %4051 = vmatmul.mubr.f32.gmra.mrb[0].mxu0 %v3747
        %v4052 = vpop.f32.mrb[0].mxu0
        %v4053 = vadd.f32 0.0, %v4052
        %v4054 = vpop.f32.mrb[0].mxu0
        %v4055 = vadd.f32 0.0, %v4054
        %4056 = vdwg.mxu0
        %4057 = vmatprep.subr.mxu0 %v3905
        %4058 = vmatpush1.msra.mxu0 %v3904
        %4059 = vmatprep.subr.mxu0 %v3907
        %4060 = vmatpush1.msra.mxu0 %v3906
        %4061 = vmatprep.subr.mxu0 %v3909
        %4062 = vmatpush1.msra.mxu0 %v3908
        %4063 = vmatprep.subr.mxu0 %v3911
        %4064 = vmatpush1.msra.mxu0 %v3910
        %4065 = vmatprep.subr.mxu0 %v3913
        %4066 = vmatpush1.msra.mxu0 %v3912
        %4067 = vmatprep.subr.mxu0 %v3915
        %4068 = vmatpush1.msra.mxu0 %v3914
        %4069 = vmatprep.subr.mxu0 %v3917
        %4070 = vmatpush1.msra.mxu0 %v3916
        %4071 = vmatprep.subr.mxu0 %v3919
        %4072 = vmatpush1.msra.mxu0 %v3918
        %4073 = vmatprep.subr.mxu0 %v3921
        %4074 = vmatpush1.msra.mxu0 %v3920
        %4075 = vmatprep.subr.mxu0 %v3923
        %4076 = vmatpush1.msra.mxu0 %v3922
        %4077 = vmatprep.subr.mxu0 %v3925
        %4078 = vmatpush1.msra.mxu0 %v3924
        %4079 = vmatprep.subr.mxu0 %v3927
        %4080 = vmatpush1.msra.mxu0 %v3926
        %4081 = vmatprep.subr.mxu0 %v3929
        %4082 = vmatpush1.msra.mxu0 %v3928
        %4083 = vmatprep.subr.mxu0 %v3931
        %4084 = vmatpush1.msra.mxu0 %v3930
        %4085 = vmatprep.subr.mxu0 %v3933
        %4086 = vmatpush1.msra.mxu0 %v3932
        %4087 = vmatprep.subr.mxu0 %v3935
        %4088 = vmatpush1.msra.mxu0 %v3934
        %4089 = vmatprep.subr.mxu0 %v3937
        %4090 = vmatpush1.msra.mxu0 %v3936
        %4091 = vmatprep.subr.mxu0 %v3939
        %4092 = vmatpush1.msra.mxu0 %v3938
        %4093 = vmatprep.subr.mxu0 %v3941
        %4094 = vmatpush1.msra.mxu0 %v3940
        %4095 = vmatprep.subr.mxu0 %v3943
        %4096 = vmatpush1.msra.mxu0 %v3942
        %4097 = vmatprep.subr.mxu0 %v3945
        %4098 = vmatpush1.msra.mxu0 %v3944
        %4099 = vmatprep.subr.mxu0 %v3947
        %4100 = vmatpush1.msra.mxu0 %v3946
        %4101 = vmatprep.subr.mxu0 %v3949
        %4102 = vmatpush1.msra.mxu0 %v3948
        %4103 = vmatprep.subr.mxu0 %v3951
        %4104 = vmatpush1.msra.mxu0 %v3950
        %4105 = vmatprep.subr.mxu0 %v3953
        %4106 = vmatpush1.msra.mxu0 %v3952
        %4107 = vmatprep.subr.mxu0 %v3955
        %4108 = vmatpush1.msra.mxu0 %v3954
        %4109 = vmatprep.subr.mxu0 %v3957
        %4110 = vmatpush1.msra.mxu0 %v3956
        %4111 = vmatprep.subr.mxu0 %v3959
        %4112 = vmatpush1.msra.mxu0 %v3958
        %4113 = vmatprep.subr.mxu0 %v3961
        %4114 = vmatpush1.msra.mxu0 %v3960
        %4115 = vmatprep.subr.mxu0 %v3963
        %4116 = vmatpush1.msra.mxu0 %v3962
        %4117 = vmatprep.subr.mxu0 %v3965
        %4118 = vmatpush1.msra.mxu0 %v3964
        %4119 = vmatprep.subr.mxu0 %v3967
        %4120 = vmatpush1.msra.mxu0 %v3966
        %4121 = vmatprep.mubr.f32.mxu0 %v3820
        %4122 = vmatmul.mubr.f32.gmra.mrb[0].mxu0 %v3818
        %v4123 = vpop.f32.mrb[0].mxu0
        %v4124 = vadd.f32 %v4035, %v4123
        %v4125 = vpop.f32.mrb[0].mxu0
        %v4126 = vadd.f32 %v4037, %v4125
        %4127 = vmatprep.mubr.f32.mxu0 %v3826
        %4128 = vmatmul.mubr.f32.gmra.mrb[0].mxu0 %v3824
        %v4129 = vpop.f32.mrb[0].mxu0
        %v4130 = vadd.f32 %v4041, %v4129
        %v4131 = vpop.f32.mrb[0].mxu0
        %v4132 = vadd.f32 %v4043, %v4131
        %4133 = vmatprep.mubr.f32.mxu0 %v3832
        %4134 = vmatmul.mubr.f32.gmra.mrb[0].mxu0 %v3830
        %v4135 = vpop.f32.mrb[0].mxu0
        %v4136 = vadd.f32 %v4047, %v4135
        %v4137 = vpop.f32.mrb[0].mxu0
        %v4138 = vadd.f32 %v4049, %v4137
        %4139 = vmatprep.mubr.f32.mxu0 %v3838
        %4140 = vmatmul.mubr.f32.gmra.mrb[0].mxu0 %v3836
        %v4141 = vpop.f32.mrb[0].mxu0
        %v4142 = vadd.f32 %v4053, %v4141
        %v4143 = vpop.f32.mrb[0].mxu0
        %v4144 = vadd.f32 %v4055, %v4143
        %4145 = vdwg.mxu0
        %4146 = vmatprep.subr.mxu0 %v3523
        %4147 = vmatpush1.msra.mxu0 %v3522
        %4148 = vmatprep.subr.mxu0 %v3525
        %4149 = vmatpush1.msra.mxu0 %v3524
        %4150 = vmatprep.subr.mxu0 %v3527
        %4151 = vmatpush1.msra.mxu0 %v3526
        %4152 = vmatprep.subr.mxu0 %v3529
        %4153 = vmatpush1.msra.mxu0 %v3528
        %4154 = vmatprep.subr.mxu0 %v3531
        %4155 = vmatpush1.msra.mxu0 %v3530
        %4156 = vmatprep.subr.mxu0 %v3533
        %4157 = vmatpush1.msra.mxu0 %v3532
        %4158 = vmatprep.subr.mxu0 %v3535
        %4159 = vmatpush1.msra.mxu0 %v3534
        %4160 = vmatprep.subr.mxu0 %v3537
        %4161 = vmatpush1.msra.mxu0 %v3536
        %4162 = vmatprep.subr.mxu0 %v3539
        %4163 = vmatpush1.msra.mxu0 %v3538
        %4164 = vmatprep.subr.mxu0 %v3541
        %4165 = vmatpush1.msra.mxu0 %v3540
        %4166 = vmatprep.subr.mxu0 %v3543
        %4167 = vmatpush1.msra.mxu0 %v3542
        %4168 = vmatprep.subr.mxu0 %v3545
        %4169 = vmatpush1.msra.mxu0 %v3544
        %4170 = vmatprep.subr.mxu0 %v3547
        %4171 = vmatpush1.msra.mxu0 %v3546
        %4172 = vmatprep.subr.mxu0 %v3549
        %4173 = vmatpush1.msra.mxu0 %v3548
        %4174 = vmatprep.subr.mxu0 %v3551
        %4175 = vmatpush1.msra.mxu0 %v3550
        %4176 = vmatprep.subr.mxu0 %v3553
        %4177 = vmatpush1.msra.mxu0 %v3552
        %4178 = vmatprep.subr.mxu0 %v3555
        %4179 = vmatpush1.msra.mxu0 %v3554
        %4180 = vmatprep.subr.mxu0 %v3557
        %4181 = vmatpush1.msra.mxu0 %v3556
        %4182 = vmatprep.subr.mxu0 %v3559
        %4183 = vmatpush1.msra.mxu0 %v3558
        %4184 = vmatprep.subr.mxu0 %v3561
        %4185 = vmatpush1.msra.mxu0 %v3560
        %4186 = vmatprep.subr.mxu0 %v3563
        %4187 = vmatpush1.msra.mxu0 %v3562
        %4188 = vmatprep.subr.mxu0 %v3565
        %4189 = vmatpush1.msra.mxu0 %v3564
        %4190 = vmatprep.subr.mxu0 %v3567
        %4191 = vmatpush1.msra.mxu0 %v3566
        %4192 = vmatprep.subr.mxu0 %v3569
        %4193 = vmatpush1.msra.mxu0 %v3568
        %4194 = vmatprep.subr.mxu0 %v3571
        %4195 = vmatpush1.msra.mxu0 %v3570
        %4196 = vmatprep.subr.mxu0 %v3573
        %4197 = vmatpush1.msra.mxu0 %v3572
        %4198 = vmatprep.subr.mxu0 %v3575
        %4199 = vmatpush1.msra.mxu0 %v3574
        %4200 = vmatprep.subr.mxu0 %v3577
        %4201 = vmatpush1.msra.mxu0 %v3576
        %4202 = vmatprep.subr.mxu0 %v3579
        %4203 = vmatpush1.msra.mxu0 %v3578
        %4204 = vmatprep.subr.mxu0 %v3581
        %4205 = vmatpush1.msra.mxu0 %v3580
        %4206 = vmatprep.subr.mxu0 %v3583
        %4207 = vmatpush1.msra.mxu0 %v3582
        %4208 = vmatprep.subr.mxu0 %v3585
        %4209 = vmatpush1.msra.mxu0 %v3584
        %4210 = vmatprep.mubr.f32.mxu0 %v3413
        %4211 = vmatmul.mubr.f32.gmra.mrb[0].mxu0 %v3411
        %v4212 = vpop.f32.mrb[0].mxu0
        %v4213 = vadd.f32 %v4124, %v4212
        %v4214 = vpop.f32.mrb[0].mxu0
        %v4215 = vadd.f32 %v4126, %v4214
        %4216 = vmatprep.mubr.f32.mxu0 %v3419
        %4217 = vmatmul.mubr.f32.gmra.mrb[0].mxu0 %v3417
        %v4218 = vpop.f32.mrb[0].mxu0
        %v4219 = vadd.f32 %v4130, %v4218
        %v4220 = vpop.f32.mrb[0].mxu0
        %v4221 = vadd.f32 %v4132, %v4220
        %4222 = vmatprep.mubr.f32.mxu0 %v3425
        %4223 = vmatmul.mubr.f32.gmra.mrb[0].mxu0 %v3423
        %v4224 = vpop.f32.mrb[0].mxu0
        %v4225 = vadd.f32 %v4136, %v4224
        %v4226 = vpop.f32.mrb[0].mxu0
        %v4227 = vadd.f32 %v4138, %v4226
        %4228 = vmatprep.mubr.f32.mxu0 %v3431
        %4229 = vmatmul.mubr.f32.gmra.mrb[0].mxu0 %v3429
        %v4230 = vpop.f32.mrb[0].mxu0
        %v4231 = vadd.f32 %v4142, %v4230
        %v4232 = vpop.f32.mrb[0].mxu0
        %v4233 = vadd.f32 %v4144, %v4232
        %4234 = vdwg.mxu0
        %4235 = vmatprep.subr.mxu0 %v3587
        %4236 = vmatpush1.msra.mxu0 %v3586
        %4237 = vmatprep.subr.mxu0 %v3589
        %4238 = vmatpush1.msra.mxu0 %v3588
        %4239 = vmatprep.subr.mxu0 %v3591
        %4240 = vmatpush1.msra.mxu0 %v3590
        %4241 = vmatprep.subr.mxu0 %v3593
        %4242 = vmatpush1.msra.mxu0 %v3592
        %4243 = vmatprep.subr.mxu0 %v3595
        %4244 = vmatpush1.msra.mxu0 %v3594
        %4245 = vmatprep.subr.mxu0 %v3597
        %4246 = vmatpush1.msra.mxu0 %v3596
        %4247 = vmatprep.subr.mxu0 %v3599
        %4248 = vmatpush1.msra.mxu0 %v3598
        %4249 = vmatprep.subr.mxu0 %v3601
        %4250 = vmatpush1.msra.mxu0 %v3600
        %4251 = vmatprep.subr.mxu0 %v3603
        %4252 = vmatpush1.msra.mxu0 %v3602
        %4253 = vmatprep.subr.mxu0 %v3605
        %4254 = vmatpush1.msra.mxu0 %v3604
        %4255 = vmatprep.subr.mxu0 %v3607
        %4256 = vmatpush1.msra.mxu0 %v3606
        %4257 = vmatprep.subr.mxu0 %v3609
        %4258 = vmatpush1.msra.mxu0 %v3608
        %4259 = vmatprep.subr.mxu0 %v3611
        %4260 = vmatpush1.msra.mxu0 %v3610
        %4261 = vmatprep.subr.mxu0 %v3613
        %4262 = vmatpush1.msra.mxu0 %v3612
        %4263 = vmatprep.subr.mxu0 %v3615
        %4264 = vmatpush1.msra.mxu0 %v3614
        %4265 = vmatprep.subr.mxu0 %v3617
        %4266 = vmatpush1.msra.mxu0 %v3616
        %4267 = vmatprep.subr.mxu0 %v3619
        %4268 = vmatpush1.msra.mxu0 %v3618
        %4269 = vmatprep.subr.mxu0 %v3621
        %4270 = vmatpush1.msra.mxu0 %v3620
        %4271 = vmatprep.subr.mxu0 %v3623
        %4272 = vmatpush1.msra.mxu0 %v3622
        %4273 = vmatprep.subr.mxu0 %v3625
        %4274 = vmatpush1.msra.mxu0 %v3624
        %4275 = vmatprep.subr.mxu0 %v3627
        %4276 = vmatpush1.msra.mxu0 %v3626
        %4277 = vmatprep.subr.mxu0 %v3629
        %4278 = vmatpush1.msra.mxu0 %v3628
        %4279 = vmatprep.subr.mxu0 %v3631
        %4280 = vmatpush1.msra.mxu0 %v3630
        %4281 = vmatprep.subr.mxu0 %v3633
        %4282 = vmatpush1.msra.mxu0 %v3632
        %4283 = vmatprep.subr.mxu0 %v3635
        %4284 = vmatpush1.msra.mxu0 %v3634
        %4285 = vmatprep.subr.mxu0 %v3637
        %4286 = vmatpush1.msra.mxu0 %v3636
        %4287 = vmatprep.subr.mxu0 %v3639
        %4288 = vmatpush1.msra.mxu0 %v3638
        %4289 = vmatprep.subr.mxu0 %v3641
        %4290 = vmatpush1.msra.mxu0 %v3640
        %4291 = vmatprep.subr.mxu0 %v3643
        %4292 = vmatpush1.msra.mxu0 %v3642
        %4293 = vmatprep.subr.mxu0 %v3645
        %4294 = vmatpush1.msra.mxu0 %v3644
        %4295 = vmatprep.subr.mxu0 %v3647
        %4296 = vmatpush1.msra.mxu0 %v3646
        %4297 = vmatprep.subr.mxu0 %v3649
        %4298 = vmatpush1.msra.mxu0 %v3648
        %4299 = vmatprep.mubr.f32.mxu0 %v3502
        %4300 = vmatmul.mubr.f32.gmra.mrb[0].mxu0 %v3500
        %v4301 = vpop.f32.mrb[0].mxu0
        %v4302 = vadd.f32 %v4213, %v4301
        %v4303 = vpop.f32.mrb[0].mxu0
        %v4304 = vadd.f32 %v4215, %v4303
        %4305 = vmatprep.mubr.f32.mxu0 %v3508
        %4306 = vmatmul.mubr.f32.gmra.mrb[0].mxu0 %v3506
        %v4307 = vpop.f32.mrb[0].mxu0
        %v4308 = vadd.f32 %v4219, %v4307
        %v4309 = vpop.f32.mrb[0].mxu0
        %v4310 = vadd.f32 %v4221, %v4309
        %4311 = vmatprep.mubr.f32.mxu0 %v3514
        %4312 = vmatmul.mubr.f32.gmra.mrb[0].mxu0 %v3512
        %v4313 = vpop.f32.mrb[0].mxu0
        %v4314 = vadd.f32 %v4225, %v4313
        %v4315 = vpop.f32.mrb[0].mxu0
        %v4316 = vadd.f32 %v4227, %v4315
        %4317 = vmatprep.mubr.f32.mxu0 %v3520
        %4318 = vmatmul.mubr.f32.gmra.mrb[0].mxu0 %v3518
        %v4319 = vpop.f32.mrb[0].mxu0
        %v4320 = vadd.f32 %v4231, %v4319
        %v4321 = vpop.f32.mrb[0].mxu0
        %v4322 = vadd.f32 %v4233, %v4321
        %4323 = vdwg.mxu0
        %v4325 = vsel %vm3318, %v2487, 0
        %v4328 = vsel %vm3318, %v2489, 0
        %v4331 = vsel %vm3318, %v2491, 0
        %v4334 = vsel %vm3318, %v2493, 0
        %4336 = vmatprep.subr.mxu0 %v3275
        %4337 = vmatpush1.msra.mxu0 %v3274
        %4338 = vmatprep.subr.mxu0 %v3279
        %4339 = vmatpush1.msra.mxu0 %v3278
        %4340 = vmatprep.subr.mxu0 %v3283
        %4341 = vmatpush1.msra.mxu0 %v3282
        %4342 = vmatprep.subr.mxu0 %v3287
        %4343 = vmatpush1.msra.mxu0 %v3286
        %4344 = vmatprep.subr.mxu0 %v3291
        %4345 = vmatpush1.msra.mxu0 %v3290
        %4346 = vmatprep.subr.mxu0 %v3295
        %4347 = vmatpush1.msra.mxu0 %v3294
        %4348 = vmatprep.subr.mxu0 %v3299
        %4349 = vmatpush1.msra.mxu0 %v3298
        %4350 = vmatprep.subr.mxu0 %v3303
        %4351 = vmatpush1.msra.mxu0 %v3302
        %4352 = vmatprep.subr.mxu0 %v3307
        %4353 = vmatpush1.msra.mxu0 %v3306
        %4354 = vmatprep.subr.mxu0 %v3311
        %4355 = vmatpush1.msra.mxu0 %v3310
        %4356 = vmatprep.subr.mxu0 %v3336
        %4357 = vmatpush1.msra.mxu0 %v3333
        %4358 = vmatprep.subr.mxu0 0.0
        %4359 = vmatpush1.msra.mxu0 0.0
        %4360 = vmatprep.subr.mxu0 0.0
        %4361 = vmatpush1.msra.mxu0 0.0
        %4362 = vmatprep.subr.mxu0 0.0
        %4363 = vmatpush1.msra.mxu0 0.0
        %4364 = vmatprep.subr.mxu0 0.0
        %4365 = vmatpush1.msra.mxu0 0.0
        %4366 = vmatprep.subr.mxu0 0.0
        %4367 = vmatpush1.msra.mxu0 0.0
        %4368 = vmatprep.subr.mxu0 0.0
        %4369 = vmatpush1.msra.mxu0 0.0
        %4370 = vmatprep.subr.mxu0 0.0
        %4371 = vmatpush1.msra.mxu0 0.0
        %4372 = vmatprep.subr.mxu0 0.0
        %4373 = vmatpush1.msra.mxu0 0.0
        %4374 = vmatprep.subr.mxu0 0.0
        %4375 = vmatpush1.msra.mxu0 0.0
        %4376 = vmatprep.subr.mxu0 0.0
        %4377 = vmatpush1.msra.mxu0 0.0
        %4378 = vmatprep.subr.mxu0 0.0
        %4379 = vmatpush1.msra.mxu0 0.0
        %4380 = vmatprep.subr.mxu0 0.0
        %4381 = vmatpush1.msra.mxu0 0.0
        %4382 = vmatprep.subr.mxu0 0.0
        %4383 = vmatpush1.msra.mxu0 0.0
        %4384 = vmatprep.subr.mxu0 0.0
        %4385 = vmatpush1.msra.mxu0 0.0
        %4386 = vmatprep.subr.mxu0 0.0
        %4387 = vmatpush1.msra.mxu0 0.0
        %4388 = vmatprep.subr.mxu0 0.0
        %4389 = vmatpush1.msra.mxu0 0.0
        %4390 = vmatprep.subr.mxu0 0.0
        %4391 = vmatpush1.msra.mxu0 0.0
        %4392 = vmatprep.subr.mxu0 0.0
        %4393 = vmatpush1.msra.mxu0 0.0
        %4394 = vmatprep.subr.mxu0 0.0
        %4395 = vmatpush1.msra.mxu0 0.0
        %4396 = vmatprep.subr.mxu0 0.0
        %4397 = vmatpush1.msra.mxu0 0.0
        %4398 = vmatprep.subr.mxu0 0.0
        %4399 = vmatpush1.msra.mxu0 0.0
        %4400 = vmatprep.mubr.f32.mxu0 0.0
        %4401 = vmatmul.mubr.f32.gmra.mrb[0].mxu0 %v4325
        %v4402 = vpop.f32.mrb[0].mxu0
        %v4403 = vadd.f32 0.0, %v4402
        %v4404 = vpop.f32.mrb[0].mxu0
        %v4405 = vadd.f32 0.0, %v4404
        %4406 = vmatprep.mubr.f32.mxu0 0.0
        %4407 = vmatmul.mubr.f32.gmra.mrb[0].mxu0 %v4328
        %v4408 = vpop.f32.mrb[0].mxu0
        %v4409 = vadd.f32 0.0, %v4408
        %v4410 = vpop.f32.mrb[0].mxu0
        %v4411 = vadd.f32 0.0, %v4410
        %4412 = vmatprep.mubr.f32.mxu0 0.0
        %4413 = vmatmul.mubr.f32.gmra.mrb[0].mxu0 %v4331
        %v4414 = vpop.f32.mrb[0].mxu0
        %v4415 = vadd.f32 0.0, %v4414
        %v4416 = vpop.f32.mrb[0].mxu0
        %v4417 = vadd.f32 0.0, %v4416
        %4418 = vmatprep.mubr.f32.mxu0 0.0
        %4419 = vmatmul.mubr.f32.gmra.mrb[0].mxu0 %v4334
        %v4420 = vpop.f32.mrb[0].mxu0
        %v4421 = vadd.f32 0.0, %v4420
        %v4422 = vpop.f32.mrb[0].mxu0
        %v4423 = vadd.f32 0.0, %v4422
        %4424 = vdwg.mxu0
        %4425 = vmatprep.subr.mxu0 %v3277
        %4426 = vmatpush1.msra.mxu0 %v3276
        %4427 = vmatprep.subr.mxu0 %v3281
        %4428 = vmatpush1.msra.mxu0 %v3280
        %4429 = vmatprep.subr.mxu0 %v3285
        %4430 = vmatpush1.msra.mxu0 %v3284
        %4431 = vmatprep.subr.mxu0 %v3289
        %4432 = vmatpush1.msra.mxu0 %v3288
        %4433 = vmatprep.subr.mxu0 %v3293
        %4434 = vmatpush1.msra.mxu0 %v3292
        %4435 = vmatprep.subr.mxu0 %v3297
        %4436 = vmatpush1.msra.mxu0 %v3296
        %4437 = vmatprep.subr.mxu0 %v3301
        %4438 = vmatpush1.msra.mxu0 %v3300
        %4439 = vmatprep.subr.mxu0 %v3305
        %4440 = vmatpush1.msra.mxu0 %v3304
        %4441 = vmatprep.subr.mxu0 %v3309
        %4442 = vmatpush1.msra.mxu0 %v3308
        %4443 = vmatprep.subr.mxu0 %v3313
        %4444 = vmatpush1.msra.mxu0 %v3312
        %4445 = vmatprep.subr.mxu0 %v3342
        %4446 = vmatpush1.msra.mxu0 %v3339
        %4447 = vmatprep.subr.mxu0 0.0
        %4448 = vmatpush1.msra.mxu0 0.0
        %4449 = vmatprep.subr.mxu0 0.0
        %4450 = vmatpush1.msra.mxu0 0.0
        %4451 = vmatprep.subr.mxu0 0.0
        %4452 = vmatpush1.msra.mxu0 0.0
        %4453 = vmatprep.subr.mxu0 0.0
        %4454 = vmatpush1.msra.mxu0 0.0
        %4455 = vmatprep.subr.mxu0 0.0
        %4456 = vmatpush1.msra.mxu0 0.0
        %4457 = vmatprep.subr.mxu0 0.0
        %4458 = vmatpush1.msra.mxu0 0.0
        %4459 = vmatprep.subr.mxu0 0.0
        %4460 = vmatpush1.msra.mxu0 0.0
        %4461 = vmatprep.subr.mxu0 0.0
        %4462 = vmatpush1.msra.mxu0 0.0
        %4463 = vmatprep.subr.mxu0 0.0
        %4464 = vmatpush1.msra.mxu0 0.0
        %4465 = vmatprep.subr.mxu0 0.0
        %4466 = vmatpush1.msra.mxu0 0.0
        %4467 = vmatprep.subr.mxu0 0.0
        %4468 = vmatpush1.msra.mxu0 0.0
        %4469 = vmatprep.subr.mxu0 0.0
        %4470 = vmatpush1.msra.mxu0 0.0
        %4471 = vmatprep.subr.mxu0 0.0
        %4472 = vmatpush1.msra.mxu0 0.0
        %4473 = vmatprep.subr.mxu0 0.0
        %4474 = vmatpush1.msra.mxu0 0.0
        %4475 = vmatprep.subr.mxu0 0.0
        %4476 = vmatpush1.msra.mxu0 0.0
        %4477 = vmatprep.subr.mxu0 0.0
        %4478 = vmatpush1.msra.mxu0 0.0
        %4479 = vmatprep.subr.mxu0 0.0
        %4480 = vmatpush1.msra.mxu0 0.0
        %4481 = vmatprep.subr.mxu0 0.0
        %4482 = vmatpush1.msra.mxu0 0.0
        %4483 = vmatprep.subr.mxu0 0.0
        %4484 = vmatpush1.msra.mxu0 0.0
        %4485 = vmatprep.subr.mxu0 0.0
        %4486 = vmatpush1.msra.mxu0 0.0
        %4487 = vmatprep.subr.mxu0 0.0
        %4488 = vmatpush1.msra.mxu0 0.0
        %4489 = vmatprep.mubr.f32.mxu0 0.0
        %4490 = vmatmul.mubr.f32.gmra.mrb[0].mxu0 %v4325
        %v4491 = vpop.f32.mrb[0].mxu0
        %v4492 = vadd.f32 0.0, %v4491
        %v4493 = vpop.f32.mrb[0].mxu0
        %v4494 = vadd.f32 0.0, %v4493
        %4495 = vmatprep.mubr.f32.mxu0 0.0
        %4496 = vmatmul.mubr.f32.gmra.mrb[0].mxu0 %v4328
        %v4497 = vpop.f32.mrb[0].mxu0
        %v4498 = vadd.f32 0.0, %v4497
        %v4499 = vpop.f32.mrb[0].mxu0
        %v4500 = vadd.f32 0.0, %v4499
        %4501 = vmatprep.mubr.f32.mxu0 0.0
        %4502 = vmatmul.mubr.f32.gmra.mrb[0].mxu0 %v4331
        %v4503 = vpop.f32.mrb[0].mxu0
        %v4504 = vadd.f32 0.0, %v4503
        %v4505 = vpop.f32.mrb[0].mxu0
        %v4506 = vadd.f32 0.0, %v4505
        %4507 = vmatprep.mubr.f32.mxu0 0.0
        %4508 = vmatmul.mubr.f32.gmra.mrb[0].mxu0 %v4334
        %v4509 = vpop.f32.mrb[0].mxu0
        %v4510 = vadd.f32 0.0, %v4509
        %v4511 = vpop.f32.mrb[0].mxu0
        %v4512 = vadd.f32 0.0, %v4511
        %4513 = vdwg.mxu0
        %v4514 = vld [vmem:[#allocation7 + $0x800] sm:$0xff]
        %v4515 = vld [vmem:[#allocation7 + $0x808] sm:$0xff]
        %v4516 = vld [vmem:[#allocation7 + $0x810] sm:$0xff]
        %v4517 = vld [vmem:[#allocation7 + $0x818] sm:$0xff]
        %v4518 = vld [vmem:[#allocation7 + $0x820] sm:$0xff]
        %v4519 = vld [vmem:[#allocation7 + $0x828] sm:$0xff]
        %v4520 = vld [vmem:[#allocation7 + $0x830] sm:$0xff]
        %v4521 = vld [vmem:[#allocation7 + $0x838] sm:$0xff]
        %v4522 = vld [vmem:[#allocation7 + $0x840] sm:$0xff]
        %v4523 = vld [vmem:[#allocation7 + $0x848] sm:$0xff]
        %v4524 = vld [vmem:[#allocation7 + $0x850] sm:$0xff]
        %v4525 = vld [vmem:[#allocation7 + $0x858] sm:$0xff]
        %v4526 = vld [vmem:[#allocation7 + $0x860] sm:$0xff]
        %v4527 = vld [vmem:[#allocation7 + $0x868] sm:$0xff]
        %v4528 = vld [vmem:[#allocation7 + $0x870] sm:$0xff]
        %v4529 = vld [vmem:[#allocation7 + $0x878] sm:$0xff]
        %v4530 = vld [vmem:[#allocation7 + $0x880] sm:$0xff]
        %v4531 = vld [vmem:[#allocation7 + $0x888] sm:$0xff]
        %v4532 = vld [vmem:[#allocation7 + $0x890] sm:$0xff]
        %v4533 = vld [vmem:[#allocation7 + $0x898] sm:$0xff]
        %v4534 = vld [vmem:[#allocation7 + $0x8a0] sm:$0xff]
        %v4535 = vld [vmem:[#allocation7 + $0x8a8] sm:$0xff]
        %v4536 = vld [vmem:[#allocation7 + $0x8b0] sm:$0xff]
        %v4537 = vld [vmem:[#allocation7 + $0x8b8] sm:$0xff]
        %v4538 = vld [vmem:[#allocation7 + $0x8c0] sm:$0xff]
        %v4539 = vld [vmem:[#allocation7 + $0x8c8] sm:$0xff]
        %v4540 = vld [vmem:[#allocation7 + $0x8d0] sm:$0xff]
        %v4541 = vld [vmem:[#allocation7 + $0x8d8] sm:$0xff]
        %v4542 = vld [vmem:[#allocation7 + $0x8e0] sm:$0xff]
        %v4543 = vld [vmem:[#allocation7 + $0x8e8] sm:$0xff]
        %v4544 = vld [vmem:[#allocation7 + $0x8f0] sm:$0xff]
        %v4545 = vld [vmem:[#allocation7 + $0x8f8] sm:$0xff]
        %v4546 = vld [vmem:[#allocation7 + $0x900] sm:$0xff]
        %v4547 = vld [vmem:[#allocation7 + $0x908] sm:$0xff]
        %v4548 = vld [vmem:[#allocation7 + $0x910] sm:$0xff]
        %v4549 = vld [vmem:[#allocation7 + $0x918] sm:$0xff]
        %v4550 = vld [vmem:[#allocation7 + $0x920] sm:$0xff]
        %v4551 = vld [vmem:[#allocation7 + $0x928] sm:$0xff]
        %v4552 = vld [vmem:[#allocation7 + $0x930] sm:$0xff]
        %v4553 = vld [vmem:[#allocation7 + $0x938] sm:$0xff]
        %v4554 = vld [vmem:[#allocation7 + $0x940] sm:$0xff]
        %v4555 = vld [vmem:[#allocation7 + $0x948] sm:$0xff]
        %v4556 = vld [vmem:[#allocation7 + $0x950] sm:$0xff]
        %v4557 = vld [vmem:[#allocation7 + $0x958] sm:$0xff]
        %v4558 = vld [vmem:[#allocation7 + $0x960] sm:$0xff]
        %v4559 = vld [vmem:[#allocation7 + $0x968] sm:$0xff]
        %v4560 = vld [vmem:[#allocation7 + $0x970] sm:$0xff]
        %v4561 = vld [vmem:[#allocation7 + $0x978] sm:$0xff]
        %v4562 = vld [vmem:[#allocation7 + $0x980] sm:$0xff]
        %v4563 = vld [vmem:[#allocation7 + $0x988] sm:$0xff]
        %v4564 = vld [vmem:[#allocation7 + $0x990] sm:$0xff]
        %v4565 = vld [vmem:[#allocation7 + $0x998] sm:$0xff]
        %v4566 = vld [vmem:[#allocation7 + $0x9a0] sm:$0xff]
        %v4567 = vld [vmem:[#allocation7 + $0x9a8] sm:$0xff]
        %v4568 = vld [vmem:[#allocation7 + $0x9b0] sm:$0xff]
        %v4569 = vld [vmem:[#allocation7 + $0x9b8] sm:$0xff]
        %v4570 = vld [vmem:[#allocation7 + $0x9c0] sm:$0xff]
        %v4571 = vld [vmem:[#allocation7 + $0x9c8] sm:$0xff]
        %v4572 = vld [vmem:[#allocation7 + $0x9d0] sm:$0xff]
        %v4573 = vld [vmem:[#allocation7 + $0x9d8] sm:$0xff]
        %v4574 = vld [vmem:[#allocation7 + $0x9e0] sm:$0xff]
        %v4575 = vld [vmem:[#allocation7 + $0x9e8] sm:$0xff]
        %v4576 = vld [vmem:[#allocation7 + $0x9f0] sm:$0xff]
        %v4577 = vld [vmem:[#allocation7 + $0x9f8] sm:$0xff]
        %v4578 = vld [vmem:[#allocation7 + $0xa00] sm:$0xff]
        %v4579 = vld [vmem:[#allocation7 + $0xa08] sm:$0xff]
        %v4580 = vld [vmem:[#allocation7 + $0xa10] sm:$0xff]
        %v4581 = vld [vmem:[#allocation7 + $0xa18] sm:$0xff]
        %v4582 = vld [vmem:[#allocation7 + $0xa20] sm:$0xff]
        %v4583 = vld [vmem:[#allocation7 + $0xa28] sm:$0xff]
        %v4584 = vld [vmem:[#allocation7 + $0xa30] sm:$0xff]
        %v4585 = vld [vmem:[#allocation7 + $0xa38] sm:$0xff]
        %v4586 = vld [vmem:[#allocation7 + $0xa40] sm:$0xff]
        %v4587 = vld [vmem:[#allocation7 + $0xa48] sm:$0xff]
        %v4588 = vld [vmem:[#allocation7 + $0xa50] sm:$0xff]
        %v4589 = vld [vmem:[#allocation7 + $0xa58] sm:$0xff]
        %v4590 = vld [vmem:[#allocation7 + $0xa60] sm:$0xff]
        %v4591 = vld [vmem:[#allocation7 + $0xa68] sm:$0xff]
        %v4592 = vld [vmem:[#allocation7 + $0xa70] sm:$0xff]
        %v4593 = vld [vmem:[#allocation7 + $0xa78] sm:$0xff]
        %v4594 = vld [vmem:[#allocation7 + $0xa80] sm:$0xff]
        %v4595 = vld [vmem:[#allocation7 + $0xa88] sm:$0xff]
        %v4596 = vld [vmem:[#allocation7 + $0xa90] sm:$0xff]
        %v4597 = vld [vmem:[#allocation7 + $0xa98] sm:$0xff]
        %v4598 = vld [vmem:[#allocation7 + $0xaa0] sm:$0xff]
        %v4599 = vld [vmem:[#allocation7 + $0xaa8] sm:$0xff]
        %v4600 = vld [vmem:[#allocation7 + $0xab0] sm:$0xff]
        %v4601 = vld [vmem:[#allocation7 + $0xab8] sm:$0xff]
        %v4602 = vld [vmem:[#allocation7 + $0xac0] sm:$0xff]
        %v4603 = vld [vmem:[#allocation7 + $0xac8] sm:$0xff]
        %v4604 = vld [vmem:[#allocation7 + $0xad0] sm:$0xff]
        %v4605 = vld [vmem:[#allocation7 + $0xad8] sm:$0xff]
        %v4606 = vld [vmem:[#allocation7 + $0xae0] sm:$0xff]
        %v4607 = vld [vmem:[#allocation7 + $0xae8] sm:$0xff]
        %v4608 = vld [vmem:[#allocation7 + $0xaf0] sm:$0xff]
        %v4609 = vld [vmem:[#allocation7 + $0xaf8] sm:$0xff]
        %v4610 = vld [vmem:[#allocation7 + $0xb00] sm:$0xff]
        %v4611 = vld [vmem:[#allocation7 + $0xb08] sm:$0xff]
        %v4612 = vld [vmem:[#allocation7 + $0xb10] sm:$0xff]
        %v4613 = vld [vmem:[#allocation7 + $0xb18] sm:$0xff]
        %v4614 = vld [vmem:[#allocation7 + $0xb20] sm:$0xff]
        %v4615 = vld [vmem:[#allocation7 + $0xb28] sm:$0xff]
        %v4616 = vld [vmem:[#allocation7 + $0xb30] sm:$0xff]
        %v4617 = vld [vmem:[#allocation7 + $0xb38] sm:$0xff]
        %v4618 = vld [vmem:[#allocation7 + $0xb40] sm:$0xff]
        %v4619 = vld [vmem:[#allocation7 + $0xb48] sm:$0xff]
        %v4620 = vld [vmem:[#allocation7 + $0xb50] sm:$0xff]
        %v4621 = vld [vmem:[#allocation7 + $0xb58] sm:$0xff]
        %v4622 = vld [vmem:[#allocation7 + $0xb60] sm:$0xff]
        %v4623 = vld [vmem:[#allocation7 + $0xb68] sm:$0xff]
        %v4624 = vld [vmem:[#allocation7 + $0xb70] sm:$0xff]
        %v4625 = vld [vmem:[#allocation7 + $0xb78] sm:$0xff]
        %v4626 = vld [vmem:[#allocation7 + $0xb80] sm:$0xff]
        %v4627 = vld [vmem:[#allocation7 + $0xb88] sm:$0xff]
        %v4628 = vld [vmem:[#allocation7 + $0xb90] sm:$0xff]
        %v4629 = vld [vmem:[#allocation7 + $0xb98] sm:$0xff]
        %v4630 = vld [vmem:[#allocation7 + $0xba0] sm:$0xff]
        %v4631 = vld [vmem:[#allocation7 + $0xba8] sm:$0xff]
        %v4632 = vld [vmem:[#allocation7 + $0xbb0] sm:$0xff]
        %v4633 = vld [vmem:[#allocation7 + $0xbb8] sm:$0xff]
        %v4634 = vld [vmem:[#allocation7 + $0xbc0] sm:$0xff]
        %v4635 = vld [vmem:[#allocation7 + $0xbc8] sm:$0xff]
        %v4636 = vld [vmem:[#allocation7 + $0xbd0] sm:$0xff]
        %v4637 = vld [vmem:[#allocation7 + $0xbd8] sm:$0xff]
        %v4638 = vld [vmem:[#allocation7 + $0xbe0] sm:$0xff]
        %v4639 = vld [vmem:[#allocation7 + $0xbe8] sm:$0xff]
        %v4640 = vld [vmem:[#allocation7 + $0xbf0] sm:$0xff]
        %v4641 = vld [vmem:[#allocation7 + $0xbf8] sm:$0xff]
        %4642 = vmatprep.subr.mxu0 %v4515
        %4643 = vmatpush1.msra.mxu0 %v4514
        %4644 = vmatprep.subr.mxu0 %v4517
        %4645 = vmatpush1.msra.mxu0 %v4516
        %4646 = vmatprep.subr.mxu0 %v4519
        %4647 = vmatpush1.msra.mxu0 %v4518
        %4648 = vmatprep.subr.mxu0 %v4521
        %4649 = vmatpush1.msra.mxu0 %v4520
        %4650 = vmatprep.subr.mxu0 %v4523
        %4651 = vmatpush1.msra.mxu0 %v4522
        %4652 = vmatprep.subr.mxu0 %v4525
        %4653 = vmatpush1.msra.mxu0 %v4524
        %4654 = vmatprep.subr.mxu0 %v4527
        %4655 = vmatpush1.msra.mxu0 %v4526
        %4656 = vmatprep.subr.mxu0 %v4529
        %4657 = vmatpush1.msra.mxu0 %v4528
        %4658 = vmatprep.subr.mxu0 %v4531
        %4659 = vmatpush1.msra.mxu0 %v4530
        %4660 = vmatprep.subr.mxu0 %v4533
        %4661 = vmatpush1.msra.mxu0 %v4532
        %4662 = vmatprep.subr.mxu0 %v4535
        %4663 = vmatpush1.msra.mxu0 %v4534
        %4664 = vmatprep.subr.mxu0 %v4537
        %4665 = vmatpush1.msra.mxu0 %v4536
        %4666 = vmatprep.subr.mxu0 %v4539
        %4667 = vmatpush1.msra.mxu0 %v4538
        %4668 = vmatprep.subr.mxu0 %v4541
        %4669 = vmatpush1.msra.mxu0 %v4540
        %4670 = vmatprep.subr.mxu0 %v4543
        %4671 = vmatpush1.msra.mxu0 %v4542
        %4672 = vmatprep.subr.mxu0 %v4545
        %4673 = vmatpush1.msra.mxu0 %v4544
        %4674 = vmatprep.subr.mxu0 %v4547
        %4675 = vmatpush1.msra.mxu0 %v4546
        %4676 = vmatprep.subr.mxu0 %v4549
        %4677 = vmatpush1.msra.mxu0 %v4548
        %4678 = vmatprep.subr.mxu0 %v4551
        %4679 = vmatpush1.msra.mxu0 %v4550
        %4680 = vmatprep.subr.mxu0 %v4553
        %4681 = vmatpush1.msra.mxu0 %v4552
        %4682 = vmatprep.subr.mxu0 %v4555
        %4683 = vmatpush1.msra.mxu0 %v4554
        %4684 = vmatprep.subr.mxu0 %v4557
        %4685 = vmatpush1.msra.mxu0 %v4556
        %4686 = vmatprep.subr.mxu0 %v4559
        %4687 = vmatpush1.msra.mxu0 %v4558
        %4688 = vmatprep.subr.mxu0 %v4561
        %4689 = vmatpush1.msra.mxu0 %v4560
        %4690 = vmatprep.subr.mxu0 %v4563
        %4691 = vmatpush1.msra.mxu0 %v4562
        %4692 = vmatprep.subr.mxu0 %v4565
        %4693 = vmatpush1.msra.mxu0 %v4564
        %4694 = vmatprep.subr.mxu0 %v4567
        %4695 = vmatpush1.msra.mxu0 %v4566
        %4696 = vmatprep.subr.mxu0 %v4569
        %4697 = vmatpush1.msra.mxu0 %v4568
        %4698 = vmatprep.subr.mxu0 %v4571
        %4699 = vmatpush1.msra.mxu0 %v4570
        %4700 = vmatprep.subr.mxu0 %v4573
        %4701 = vmatpush1.msra.mxu0 %v4572
        %4702 = vmatprep.subr.mxu0 %v4575
        %4703 = vmatpush1.msra.mxu0 %v4574
        %4704 = vmatprep.subr.mxu0 %v4577
        %4705 = vmatpush1.msra.mxu0 %v4576
        %4706 = vmatprep.mubr.f32.mxu0 %v4405
        %4707 = vmatmul.mubr.f32.gmra.mrb[0].mxu0 %v4403
        %v4708 = vpop.f32.mrb[0].mxu0
        %v4709 = vadd.f32 0.0, %v4708
        %v4710 = vpop.f32.mrb[0].mxu0
        %v4711 = vadd.f32 0.0, %v4710
        %4712 = vmatprep.mubr.f32.mxu0 %v4411
        %4713 = vmatmul.mubr.f32.gmra.mrb[0].mxu0 %v4409
        %v4714 = vpop.f32.mrb[0].mxu0
        %v4715 = vadd.f32 0.0, %v4714
        %v4716 = vpop.f32.mrb[0].mxu0
        %v4717 = vadd.f32 0.0, %v4716
        %4718 = vmatprep.mubr.f32.mxu0 %v4417
        %4719 = vmatmul.mubr.f32.gmra.mrb[0].mxu0 %v4415
        %v4720 = vpop.f32.mrb[0].mxu0
        %v4721 = vadd.f32 0.0, %v4720
        %v4722 = vpop.f32.mrb[0].mxu0
        %v4723 = vadd.f32 0.0, %v4722
        %4724 = vmatprep.mubr.f32.mxu0 %v4423
        %4725 = vmatmul.mubr.f32.gmra.mrb[0].mxu0 %v4421
        %v4726 = vpop.f32.mrb[0].mxu0
        %v4727 = vadd.f32 0.0, %v4726
        %v4728 = vpop.f32.mrb[0].mxu0
        %v4729 = vadd.f32 0.0, %v4728
        %4730 = vdwg.mxu0
        %4731 = vmatprep.subr.mxu0 %v4579
        %4732 = vmatpush1.msra.mxu0 %v4578
        %4733 = vmatprep.subr.mxu0 %v4581
        %4734 = vmatpush1.msra.mxu0 %v4580
        %4735 = vmatprep.subr.mxu0 %v4583
        %4736 = vmatpush1.msra.mxu0 %v4582
        %4737 = vmatprep.subr.mxu0 %v4585
        %4738 = vmatpush1.msra.mxu0 %v4584
        %4739 = vmatprep.subr.mxu0 %v4587
        %4740 = vmatpush1.msra.mxu0 %v4586
        %4741 = vmatprep.subr.mxu0 %v4589
        %4742 = vmatpush1.msra.mxu0 %v4588
        %4743 = vmatprep.subr.mxu0 %v4591
        %4744 = vmatpush1.msra.mxu0 %v4590
        %4745 = vmatprep.subr.mxu0 %v4593
        %4746 = vmatpush1.msra.mxu0 %v4592
        %4747 = vmatprep.subr.mxu0 %v4595
        %4748 = vmatpush1.msra.mxu0 %v4594
        %4749 = vmatprep.subr.mxu0 %v4597
        %4750 = vmatpush1.msra.mxu0 %v4596
        %4751 = vmatprep.subr.mxu0 %v4599
        %4752 = vmatpush1.msra.mxu0 %v4598
        %4753 = vmatprep.subr.mxu0 %v4601
        %4754 = vmatpush1.msra.mxu0 %v4600
        %4755 = vmatprep.subr.mxu0 %v4603
        %4756 = vmatpush1.msra.mxu0 %v4602
        %4757 = vmatprep.subr.mxu0 %v4605
        %4758 = vmatpush1.msra.mxu0 %v4604
        %4759 = vmatprep.subr.mxu0 %v4607
        %4760 = vmatpush1.msra.mxu0 %v4606
        %4761 = vmatprep.subr.mxu0 %v4609
        %4762 = vmatpush1.msra.mxu0 %v4608
        %4763 = vmatprep.subr.mxu0 %v4611
        %4764 = vmatpush1.msra.mxu0 %v4610
        %4765 = vmatprep.subr.mxu0 %v4613
        %4766 = vmatpush1.msra.mxu0 %v4612
        %4767 = vmatprep.subr.mxu0 %v4615
        %4768 = vmatpush1.msra.mxu0 %v4614
        %4769 = vmatprep.subr.mxu0 %v4617
        %4770 = vmatpush1.msra.mxu0 %v4616
        %4771 = vmatprep.subr.mxu0 %v4619
        %4772 = vmatpush1.msra.mxu0 %v4618
        %4773 = vmatprep.subr.mxu0 %v4621
        %4774 = vmatpush1.msra.mxu0 %v4620
        %4775 = vmatprep.subr.mxu0 %v4623
        %4776 = vmatpush1.msra.mxu0 %v4622
        %4777 = vmatprep.subr.mxu0 %v4625
        %4778 = vmatpush1.msra.mxu0 %v4624
        %4779 = vmatprep.subr.mxu0 %v4627
        %4780 = vmatpush1.msra.mxu0 %v4626
        %4781 = vmatprep.subr.mxu0 %v4629
        %4782 = vmatpush1.msra.mxu0 %v4628
        %4783 = vmatprep.subr.mxu0 %v4631
        %4784 = vmatpush1.msra.mxu0 %v4630
        %4785 = vmatprep.subr.mxu0 %v4633
        %4786 = vmatpush1.msra.mxu0 %v4632
        %4787 = vmatprep.subr.mxu0 %v4635
        %4788 = vmatpush1.msra.mxu0 %v4634
        %4789 = vmatprep.subr.mxu0 %v4637
        %4790 = vmatpush1.msra.mxu0 %v4636
        %4791 = vmatprep.subr.mxu0 %v4639
        %4792 = vmatpush1.msra.mxu0 %v4638
        %4793 = vmatprep.subr.mxu0 %v4641
        %4794 = vmatpush1.msra.mxu0 %v4640
        %4795 = vmatprep.mubr.f32.mxu0 %v4494
        %4796 = vmatmul.mubr.f32.gmra.mrb[0].mxu0 %v4492
        %v4797 = vpop.f32.mrb[0].mxu0
        %v4798 = vadd.f32 %v4709, %v4797
        %v4799 = vpop.f32.mrb[0].mxu0
        %v4800 = vadd.f32 %v4711, %v4799
        %4801 = vmatprep.mubr.f32.mxu0 %v4500
        %4802 = vmatmul.mubr.f32.gmra.mrb[0].mxu0 %v4498
        %v4803 = vpop.f32.mrb[0].mxu0
        %v4804 = vadd.f32 %v4715, %v4803
        %v4805 = vpop.f32.mrb[0].mxu0
        %v4806 = vadd.f32 %v4717, %v4805
        %4807 = vmatprep.mubr.f32.mxu0 %v4506
        %4808 = vmatmul.mubr.f32.gmra.mrb[0].mxu0 %v4504
        %v4809 = vpop.f32.mrb[0].mxu0
        %v4810 = vadd.f32 %v4721, %v4809
        %v4811 = vpop.f32.mrb[0].mxu0
        %v4812 = vadd.f32 %v4723, %v4811
        %4813 = vmatprep.mubr.f32.mxu0 %v4512
        %4814 = vmatmul.mubr.f32.gmra.mrb[0].mxu0 %v4510
        %v4815 = vpop.f32.mrb[0].mxu0
        %v4816 = vadd.f32 %v4727, %v4815
        %v4817 = vpop.f32.mrb[0].mxu0
        %v4818 = vadd.f32 %v4729, %v4817
        %4819 = vdwg.mxu0
        %v4820 = vadd.f32 %v4302, %v4798
        %v4821 = vadd.f32 %v4304, %v4800
        %v4822 = vadd.f32 %v4308, %v4804
        %v4823 = vadd.f32 %v4310, %v4806
        %v4824 = vadd.f32 %v4314, %v4810
        %v4825 = vadd.f32 %v4316, %v4812
        %v4826 = vadd.f32 %v4320, %v4816
        %v4827 = vadd.f32 %v4322, %v4818
        %v4828 = vld [vmem:[#allocation8] sm:$0x3]
        %v4830 = vlaneseq
        %v4831 = vshrl.u32 %v4830, 7
        %v4832 = vsub.s32 0, %v4831
        %v4833 = vrot.slane %v4828, %v4832
        %v4834 = vlaneseq
        %v4835 = vshrl.u32 %v4834, 7
        %v4836 = vsub.s32 1, %v4835
        %v4837 = vrot.slane %v4828, %v4836
        %v4840 = vadd.f32 %v4820, %v4833
        %v4841 = vadd.f32 %v4821, %v4837
        %v4842 = vadd.f32 %v4822, %v4833
        %v4843 = vadd.f32 %v4823, %v4837
        %v4844 = vadd.f32 %v4824, %v4833
        %v4845 = vadd.f32 %v4825, %v4837
        %v4846 = vadd.f32 %v4826, %v4833
        %v4847 = vadd.f32 %v4827, %v4837
        %v4848 = vmul.f32 %v4840, 0.5
        %v4849 = vmul.f32 %v4841, 0.5
        %v4850 = vmul.f32 %v4842, 0.5
        %v4851 = vmul.f32 %v4843, 0.5
        %v4852 = vmul.f32 %v4844, 0.5
        %v4853 = vmul.f32 %v4845, 0.5
        %v4854 = vmul.f32 %v4846, 0.5
        %v4855 = vmul.f32 %v4847, 0.5
        %v4856 = vmul.f32 %v4840, 0.70710677
        %v4857 = vmul.f32 %v4841, 0.70710677
        %v4858 = vmul.f32 %v4842, 0.70710677
        %v4859 = vmul.f32 %v4843, 0.70710677
        %v4860 = vmul.f32 %v4844, 0.70710677
        %v4861 = vmul.f32 %v4845, 0.70710677
        %v4862 = vmul.f32 %v4846, 0.70710677
        %v4863 = vmul.f32 %v4847, 0.70710677
        %v4864 = verf.f32.pop %v4856
        %v4865 = verf.f32.pop %v4857
        %v4866 = verf.f32.pop %v4858
        %v4867 = verf.f32.pop %v4859
        %v4868 = verf.f32.pop %v4860
        %v4869 = verf.f32.pop %v4861
        %v4870 = verf.f32.pop %v4862
        %v4871 = verf.f32.pop %v4863
        %v4872 = vadd.f32 %v4864, 1.0
        %v4873 = vadd.f32 %v4865, 1.0
        %v4874 = vadd.f32 %v4866, 1.0
        %v4875 = vadd.f32 %v4867, 1.0
        %v4876 = vadd.f32 %v4868, 1.0
        %v4877 = vadd.f32 %v4869, 1.0
        %v4878 = vadd.f32 %v4870, 1.0
        %v4879 = vadd.f32 %v4871, 1.0
        %v4880 = vmul.f32 %v4848, %v4872
        %v4881 = vmul.f32 %v4849, %v4873
        %v4882 = vmul.f32 %v4850, %v4874
        %v4883 = vmul.f32 %v4851, %v4875
        %v4884 = vmul.f32 %v4852, %v4876
        %v4885 = vmul.f32 %v4853, %v4877
        %v4886 = vmul.f32 %v4854, %v4878
        %v4887 = vmul.f32 %v4855, %v4879
        %vm4888 = vcmask 220160
        %v4889 = vsel %vm4888, %v1370, 0
        %v4891 = vsel %vm4888, %v1372, 0
        %v4894 = vsel %vm1426, %v4886, 0
        %v4897 = vsel %vm1426, %v4887, 0
        %4899 = vmatprep.subr.mxu0 %v4881
        %4900 = vmatpush1.msra.mxu0 %v4880
        %4901 = vmatprep.subr.mxu0 %v4883
        %4902 = vmatpush1.msra.mxu0 %v4882
        %4903 = vmatprep.subr.mxu0 %v4885
        %4904 = vmatpush1.msra.mxu0 %v4884
        %4905 = vmatprep.subr.mxu0 %v4897
        %4906 = vmatpush1.msra.mxu0 %v4894
        %4907 = vmatprep.subr.mxu0 0.0
        %4908 = vmatpush1.msra.mxu0 0.0
        %4909 = vmatprep.subr.mxu0 0.0
        %4910 = vmatpush1.msra.mxu0 0.0
        %4911 = vmatprep.subr.mxu0 0.0
        %4912 = vmatpush1.msra.mxu0 0.0
        %4913 = vmatprep.subr.mxu0 0.0
        %4914 = vmatpush1.msra.mxu0 0.0
        %4915 = vmatprep.subr.mxu0 0.0
        %4916 = vmatpush1.msra.mxu0 0.0
        %4917 = vmatprep.subr.mxu0 0.0
        %4918 = vmatpush1.msra.mxu0 0.0
        %4919 = vmatprep.subr.mxu0 0.0
        %4920 = vmatpush1.msra.mxu0 0.0
        %4921 = vmatprep.subr.mxu0 0.0
        %4922 = vmatpush1.msra.mxu0 0.0
        %4923 = vmatprep.subr.mxu0 0.0
        %4924 = vmatpush1.msra.mxu0 0.0
        %4925 = vmatprep.subr.mxu0 0.0
        %4926 = vmatpush1.msra.mxu0 0.0
        %4927 = vmatprep.subr.mxu0 0.0
        %4928 = vmatpush1.msra.mxu0 0.0
        %4929 = vmatprep.subr.mxu0 0.0
        %4930 = vmatpush1.msra.mxu0 0.0
        %4931 = vmatprep.subr.mxu0 0.0
        %4932 = vmatpush1.msra.mxu0 0.0
        %4933 = vmatprep.subr.mxu0 0.0
        %4934 = vmatpush1.msra.mxu0 0.0
        %4935 = vmatprep.subr.mxu0 0.0
        %4936 = vmatpush1.msra.mxu0 0.0
        %4937 = vmatprep.subr.mxu0 0.0
        %4938 = vmatpush1.msra.mxu0 0.0
        %4939 = vmatprep.subr.mxu0 0.0
        %4940 = vmatpush1.msra.mxu0 0.0
        %4941 = vmatprep.subr.mxu0 0.0
        %4942 = vmatpush1.msra.mxu0 0.0
        %4943 = vmatprep.subr.mxu0 0.0
        %4944 = vmatpush1.msra.mxu0 0.0
        %4945 = vmatprep.subr.mxu0 0.0
        %4946 = vmatpush1.msra.mxu0 0.0
        %4947 = vmatprep.subr.mxu0 0.0
        %4948 = vmatpush1.msra.mxu0 0.0
        %4949 = vmatprep.subr.mxu0 0.0
        %4950 = vmatpush1.msra.mxu0 0.0
        %4951 = vmatprep.subr.mxu0 0.0
        %4952 = vmatpush1.msra.mxu0 0.0
        %4953 = vmatprep.subr.mxu0 0.0
        %4954 = vmatpush1.msra.mxu0 0.0
        %4955 = vmatprep.subr.mxu0 0.0
        %4956 = vmatpush1.msra.mxu0 0.0
        %4957 = vmatprep.subr.mxu0 0.0
        %4958 = vmatpush1.msra.mxu0 0.0
        %4959 = vmatprep.subr.mxu0 0.0
        %4960 = vmatpush1.msra.mxu0 0.0
        %4961 = vmatprep.subr.mxu0 0.0
        %4962 = vmatpush1.msra.mxu0 0.0
        %4963 = vmatprep.mubr.f32.mxu0 0.0
        %4964 = vmatmul.mubr.f32.gmra.mrb[0].mxu0 %v4889
        %v4965 = vpop.f32.mrb[0].mxu0
        %v4966 = vadd.f32 0.0, %v4965
        %v4967 = vpop.f32.mrb[0].mxu0
        %v4968 = vadd.f32 0.0, %v4967
        %4969 = vmatprep.mubr.f32.mxu0 0.0
        %4970 = vmatmul.mubr.f32.gmra.mrb[0].mxu0 %v4891
        %v4971 = vpop.f32.mrb[0].mxu0
        %v4972 = vadd.f32 0.0, %v4971
        %v4973 = vpop.f32.mrb[0].mxu0
        %v4974 = vadd.f32 0.0, %v4973
        %4975 = vdwg.mxu0
        %v4976 = vld [vmem:[#allocation10] sm:$0xff]
        %v4977 = vld [vmem:[#allocation10 + $0x8] sm:$0xff]
        %v4978 = vld [vmem:[#allocation10 + $0x10] sm:$0xff]
        %v4979 = vld [vmem:[#allocation10 + $0x18] sm:$0xff]
        %v4980 = vld [vmem:[#allocation10 + $0x20] sm:$0xff]
        %v4981 = vld [vmem:[#allocation10 + $0x28] sm:$0xff]
        %v4982 = vld [vmem:[#allocation10 + $0x30] sm:$0xff]
        %v4983 = vld [vmem:[#allocation10 + $0x38] sm:$0xff]
        %v4984 = vld [vmem:[#allocation10 + $0x40] sm:$0xff]
        %v4985 = vld [vmem:[#allocation10 + $0x48] sm:$0xff]
        %v4986 = vld [vmem:[#allocation10 + $0x50] sm:$0xff]
        %v4987 = vld [vmem:[#allocation10 + $0x58] sm:$0xff]
        %v4988 = vld [vmem:[#allocation10 + $0x60] sm:$0xff]
        %v4989 = vld [vmem:[#allocation10 + $0x68] sm:$0xff]
        %v4990 = vld [vmem:[#allocation10 + $0x70] sm:$0xff]
        %v4991 = vld [vmem:[#allocation10 + $0x78] sm:$0xff]
        %v4992 = vld [vmem:[#allocation10 + $0x80] sm:$0xff]
        %v4993 = vld [vmem:[#allocation10 + $0x88] sm:$0xff]
        %v4994 = vld [vmem:[#allocation10 + $0x90] sm:$0xff]
        %v4995 = vld [vmem:[#allocation10 + $0x98] sm:$0xff]
        %v4996 = vld [vmem:[#allocation10 + $0xa0] sm:$0xff]
        %v4997 = vld [vmem:[#allocation10 + $0xa8] sm:$0xff]
        %v4998 = vld [vmem:[#allocation10 + $0xb0] sm:$0xff]
        %v4999 = vld [vmem:[#allocation10 + $0xb8] sm:$0xff]
        %v5000 = vld [vmem:[#allocation10 + $0xc0] sm:$0xff]
        %v5001 = vld [vmem:[#allocation10 + $0xc8] sm:$0xff]
        %v5002 = vld [vmem:[#allocation10 + $0xd0] sm:$0xff]
        %v5003 = vld [vmem:[#allocation10 + $0xd8] sm:$0xff]
        %v5004 = vld [vmem:[#allocation10 + $0xe0] sm:$0xff]
        %v5005 = vld [vmem:[#allocation10 + $0xe8] sm:$0xff]
        %v5006 = vld [vmem:[#allocation10 + $0xf0] sm:$0xff]
        %v5007 = vld [vmem:[#allocation10 + $0xf8] sm:$0xff]
        %v5008 = vld [vmem:[#allocation10 + $0x100] sm:$0xff]
        %v5009 = vld [vmem:[#allocation10 + $0x108] sm:$0xff]
        %v5010 = vld [vmem:[#allocation10 + $0x110] sm:$0xff]
        %v5011 = vld [vmem:[#allocation10 + $0x118] sm:$0xff]
        %v5012 = vld [vmem:[#allocation10 + $0x120] sm:$0xff]
        %v5013 = vld [vmem:[#allocation10 + $0x128] sm:$0xff]
        %v5014 = vld [vmem:[#allocation10 + $0x130] sm:$0xff]
        %v5015 = vld [vmem:[#allocation10 + $0x138] sm:$0xff]
        %v5016 = vld [vmem:[#allocation10 + $0x140] sm:$0xff]
        %v5017 = vld [vmem:[#allocation10 + $0x148] sm:$0xff]
        %v5018 = vld [vmem:[#allocation10 + $0x150] sm:$0xff]
        %v5019 = vld [vmem:[#allocation10 + $0x158] sm:$0xff]
        %v5020 = vld [vmem:[#allocation10 + $0x160] sm:$0xff]
        %v5021 = vld [vmem:[#allocation10 + $0x168] sm:$0xff]
        %v5022 = vld [vmem:[#allocation10 + $0x170] sm:$0xff]
        %v5023 = vld [vmem:[#allocation10 + $0x178] sm:$0xff]
        %v5024 = vld [vmem:[#allocation10 + $0x180] sm:$0xff]
        %v5025 = vld [vmem:[#allocation10 + $0x188] sm:$0xff]
        %v5026 = vld [vmem:[#allocation10 + $0x190] sm:$0xff]
        %v5027 = vld [vmem:[#allocation10 + $0x198] sm:$0xff]
        %v5028 = vld [vmem:[#allocation10 + $0x1a0] sm:$0xff]
        %v5029 = vld [vmem:[#allocation10 + $0x1a8] sm:$0xff]
        %v5030 = vld [vmem:[#allocation10 + $0x1b0] sm:$0xff]
        %v5031 = vld [vmem:[#allocation10 + $0x1b8] sm:$0xff]
        %v5032 = vld [vmem:[#allocation10 + $0x1c0] sm:$0xff]
        %v5033 = vld [vmem:[#allocation10 + $0x1c8] sm:$0xff]
        %v5034 = vld [vmem:[#allocation10 + $0x1d0] sm:$0xff]
        %v5035 = vld [vmem:[#allocation10 + $0x1d8] sm:$0xff]
        %v5036 = vld [vmem:[#allocation10 + $0x1e0] sm:$0xff]
        %v5037 = vld [vmem:[#allocation10 + $0x1e8] sm:$0xff]
        %v5038 = vld [vmem:[#allocation10 + $0x1f0] sm:$0xff]
        %v5039 = vld [vmem:[#allocation10 + $0x1f8] sm:$0xff]
        %v5040 = vsel %vm4888, %v1669, 0
        %v5042 = vsel %vm4888, %v1671, 0
        %5044 = vmatprep.subr.mxu0 %v4881
        %5045 = vmatpush1.msra.mxu0 %v4880
        %5046 = vmatprep.subr.mxu0 %v4883
        %5047 = vmatpush1.msra.mxu0 %v4882
        %5048 = vmatprep.subr.mxu0 %v4885
        %5049 = vmatpush1.msra.mxu0 %v4884
        %5050 = vmatprep.subr.mxu0 %v4897
        %5051 = vmatpush1.msra.mxu0 %v4894
        %5052 = vmatprep.subr.mxu0 0.0
        %5053 = vmatpush1.msra.mxu0 0.0
        %5054 = vmatprep.subr.mxu0 0.0
        %5055 = vmatpush1.msra.mxu0 0.0
        %5056 = vmatprep.subr.mxu0 0.0
        %5057 = vmatpush1.msra.mxu0 0.0
        %5058 = vmatprep.subr.mxu0 0.0
        %5059 = vmatpush1.msra.mxu0 0.0
        %5060 = vmatprep.subr.mxu0 0.0
        %5061 = vmatpush1.msra.mxu0 0.0
        %5062 = vmatprep.subr.mxu0 0.0
        %5063 = vmatpush1.msra.mxu0 0.0
        %5064 = vmatprep.subr.mxu0 0.0
        %5065 = vmatpush1.msra.mxu0 0.0
        %5066 = vmatprep.subr.mxu0 0.0
        %5067 = vmatpush1.msra.mxu0 0.0
        %5068 = vmatprep.subr.mxu0 0.0
        %5069 = vmatpush1.msra.mxu0 0.0
        %5070 = vmatprep.subr.mxu0 0.0
        %5071 = vmatpush1.msra.mxu0 0.0
        %5072 = vmatprep.subr.mxu0 0.0
        %5073 = vmatpush1.msra.mxu0 0.0
        %5074 = vmatprep.subr.mxu0 0.0
        %5075 = vmatpush1.msra.mxu0 0.0
        %5076 = vmatprep.subr.mxu0 0.0
        %5077 = vmatpush1.msra.mxu0 0.0
        %5078 = vmatprep.subr.mxu0 0.0
        %5079 = vmatpush1.msra.mxu0 0.0
        %5080 = vmatprep.subr.mxu0 0.0
        %5081 = vmatpush1.msra.mxu0 0.0
        %5082 = vmatprep.subr.mxu0 0.0
        %5083 = vmatpush1.msra.mxu0 0.0
        %5084 = vmatprep.subr.mxu0 0.0
        %5085 = vmatpush1.msra.mxu0 0.0
        %5086 = vmatprep.subr.mxu0 0.0
        %5087 = vmatpush1.msra.mxu0 0.0
        %5088 = vmatprep.subr.mxu0 0.0
        %5089 = vmatpush1.msra.mxu0 0.0
        %5090 = vmatprep.subr.mxu0 0.0
        %5091 = vmatpush1.msra.mxu0 0.0
        %5092 = vmatprep.subr.mxu0 0.0
        %5093 = vmatpush1.msra.mxu0 0.0
        %5094 = vmatprep.subr.mxu0 0.0
        %5095 = vmatpush1.msra.mxu0 0.0
        %5096 = vmatprep.subr.mxu0 0.0
        %5097 = vmatpush1.msra.mxu0 0.0
        %5098 = vmatprep.subr.mxu0 0.0
        %5099 = vmatpush1.msra.mxu0 0.0
        %5100 = vmatprep.subr.mxu0 0.0
        %5101 = vmatpush1.msra.mxu0 0.0
        %5102 = vmatprep.subr.mxu0 0.0
        %5103 = vmatpush1.msra.mxu0 0.0
        %5104 = vmatprep.subr.mxu0 0.0
        %5105 = vmatpush1.msra.mxu0 0.0
        %5106 = vmatprep.subr.mxu0 0.0
        %5107 = vmatpush1.msra.mxu0 0.0
        %5108 = vmatprep.mubr.f32.mxu0 0.0
        %5109 = vmatmul.mubr.f32.gmra.mrb[0].mxu0 %v5040
        %v5110 = vpop.f32.mrb[0].mxu0
        %v5111 = vadd.f32 0.0, %v5110
        %v5112 = vpop.f32.mrb[0].mxu0
        %v5113 = vadd.f32 0.0, %v5112
        %5114 = vmatprep.mubr.f32.mxu0 0.0
        %5115 = vmatmul.mubr.f32.gmra.mrb[0].mxu0 %v5042
        %v5116 = vpop.f32.mrb[0].mxu0
        %v5117 = vadd.f32 0.0, %v5116
        %v5118 = vpop.f32.mrb[0].mxu0
        %v5119 = vadd.f32 0.0, %v5118
        %5120 = vdwg.mxu0
        %v5121 = vld [vmem:[#allocation10 + $0x200] sm:$0xff]
        %v5122 = vld [vmem:[#allocation10 + $0x208] sm:$0xff]
        %v5123 = vld [vmem:[#allocation10 + $0x210] sm:$0xff]
        %v5124 = vld [vmem:[#allocation10 + $0x218] sm:$0xff]
        %v5125 = vld [vmem:[#allocation10 + $0x220] sm:$0xff]
        %v5126 = vld [vmem:[#allocation10 + $0x228] sm:$0xff]
        %v5127 = vld [vmem:[#allocation10 + $0x230] sm:$0xff]
        %v5128 = vld [vmem:[#allocation10 + $0x238] sm:$0xff]
        %v5129 = vld [vmem:[#allocation10 + $0x240] sm:$0xff]
        %v5130 = vld [vmem:[#allocation10 + $0x248] sm:$0xff]
        %v5131 = vld [vmem:[#allocation10 + $0x250] sm:$0xff]
        %v5132 = vld [vmem:[#allocation10 + $0x258] sm:$0xff]
        %v5133 = vld [vmem:[#allocation10 + $0x260] sm:$0xff]
        %v5134 = vld [vmem:[#allocation10 + $0x268] sm:$0xff]
        %v5135 = vld [vmem:[#allocation10 + $0x270] sm:$0xff]
        %v5136 = vld [vmem:[#allocation10 + $0x278] sm:$0xff]
        %v5137 = vld [vmem:[#allocation10 + $0x280] sm:$0xff]
        %v5138 = vld [vmem:[#allocation10 + $0x288] sm:$0xff]
        %v5139 = vld [vmem:[#allocation10 + $0x290] sm:$0xff]
        %v5140 = vld [vmem:[#allocation10 + $0x298] sm:$0xff]
        %v5141 = vld [vmem:[#allocation10 + $0x2a0] sm:$0xff]
        %v5142 = vld [vmem:[#allocation10 + $0x2a8] sm:$0xff]
        %v5143 = vld [vmem:[#allocation10 + $0x2b0] sm:$0xff]
        %v5144 = vld [vmem:[#allocation10 + $0x2b8] sm:$0xff]
        %v5145 = vld [vmem:[#allocation10 + $0x2c0] sm:$0xff]
        %v5146 = vld [vmem:[#allocation10 + $0x2c8] sm:$0xff]
        %v5147 = vld [vmem:[#allocation10 + $0x2d0] sm:$0xff]
        %v5148 = vld [vmem:[#allocation10 + $0x2d8] sm:$0xff]
        %v5149 = vld [vmem:[#allocation10 + $0x2e0] sm:$0xff]
        %v5150 = vld [vmem:[#allocation10 + $0x2e8] sm:$0xff]
        %v5151 = vld [vmem:[#allocation10 + $0x2f0] sm:$0xff]
        %v5152 = vld [vmem:[#allocation10 + $0x2f8] sm:$0xff]
        %v5153 = vld [vmem:[#allocation10 + $0x300] sm:$0xff]
        %v5154 = vld [vmem:[#allocation10 + $0x308] sm:$0xff]
        %v5155 = vld [vmem:[#allocation10 + $0x310] sm:$0xff]
        %v5156 = vld [vmem:[#allocation10 + $0x318] sm:$0xff]
        %v5157 = vld [vmem:[#allocation10 + $0x320] sm:$0xff]
        %v5158 = vld [vmem:[#allocation10 + $0x328] sm:$0xff]
        %v5159 = vld [vmem:[#allocation10 + $0x330] sm:$0xff]
        %v5160 = vld [vmem:[#allocation10 + $0x338] sm:$0xff]
        %v5161 = vld [vmem:[#allocation10 + $0x340] sm:$0xff]
        %v5162 = vld [vmem:[#allocation10 + $0x348] sm:$0xff]
        %v5163 = vld [vmem:[#allocation10 + $0x350] sm:$0xff]
        %v5164 = vld [vmem:[#allocation10 + $0x358] sm:$0xff]
        %v5165 = vld [vmem:[#allocation10 + $0x360] sm:$0xff]
        %v5166 = vld [vmem:[#allocation10 + $0x368] sm:$0xff]
        %v5167 = vld [vmem:[#allocation10 + $0x370] sm:$0xff]
        %v5168 = vld [vmem:[#allocation10 + $0x378] sm:$0xff]
        %v5169 = vld [vmem:[#allocation10 + $0x380] sm:$0xff]
        %v5170 = vld [vmem:[#allocation10 + $0x388] sm:$0xff]
        %v5171 = vld [vmem:[#allocation10 + $0x390] sm:$0xff]
        %v5172 = vld [vmem:[#allocation10 + $0x398] sm:$0xff]
        %v5173 = vld [vmem:[#allocation10 + $0x3a0] sm:$0xff]
        %v5174 = vld [vmem:[#allocation10 + $0x3a8] sm:$0xff]
        %v5175 = vld [vmem:[#allocation10 + $0x3b0] sm:$0xff]
        %v5176 = vld [vmem:[#allocation10 + $0x3b8] sm:$0xff]
        %v5177 = vld [vmem:[#allocation10 + $0x3c0] sm:$0xff]
        %v5178 = vld [vmem:[#allocation10 + $0x3c8] sm:$0xff]
        %v5179 = vld [vmem:[#allocation10 + $0x3d0] sm:$0xff]
        %v5180 = vld [vmem:[#allocation10 + $0x3d8] sm:$0xff]
        %v5181 = vld [vmem:[#allocation10 + $0x3e0] sm:$0xff]
        %v5182 = vld [vmem:[#allocation10 + $0x3e8] sm:$0xff]
        %v5183 = vld [vmem:[#allocation10 + $0x3f0] sm:$0xff]
        %v5184 = vld [vmem:[#allocation10 + $0x3f8] sm:$0xff]
        %5185 = vmatprep.subr.mxu0 %v5122
        %5186 = vmatpush1.msra.mxu0 %v5121
        %5187 = vmatprep.subr.mxu0 %v5124
        %5188 = vmatpush1.msra.mxu0 %v5123
        %5189 = vmatprep.subr.mxu0 %v5126
        %5190 = vmatpush1.msra.mxu0 %v5125
        %5191 = vmatprep.subr.mxu0 %v5128
        %5192 = vmatpush1.msra.mxu0 %v5127
        %5193 = vmatprep.subr.mxu0 %v5130
        %5194 = vmatpush1.msra.mxu0 %v5129
        %5195 = vmatprep.subr.mxu0 %v5132
        %5196 = vmatpush1.msra.mxu0 %v5131
        %5197 = vmatprep.subr.mxu0 %v5134
        %5198 = vmatpush1.msra.mxu0 %v5133
        %5199 = vmatprep.subr.mxu0 %v5136
        %5200 = vmatpush1.msra.mxu0 %v5135
        %5201 = vmatprep.subr.mxu0 %v5138
        %5202 = vmatpush1.msra.mxu0 %v5137
        %5203 = vmatprep.subr.mxu0 %v5140
        %5204 = vmatpush1.msra.mxu0 %v5139
        %5205 = vmatprep.subr.mxu0 %v5142
        %5206 = vmatpush1.msra.mxu0 %v5141
        %5207 = vmatprep.subr.mxu0 %v5144
        %5208 = vmatpush1.msra.mxu0 %v5143
        %5209 = vmatprep.subr.mxu0 %v5146
        %5210 = vmatpush1.msra.mxu0 %v5145
        %5211 = vmatprep.subr.mxu0 %v5148
        %5212 = vmatpush1.msra.mxu0 %v5147
        %5213 = vmatprep.subr.mxu0 %v5150
        %5214 = vmatpush1.msra.mxu0 %v5149
        %5215 = vmatprep.subr.mxu0 %v5152
        %5216 = vmatpush1.msra.mxu0 %v5151
        %5217 = vmatprep.subr.mxu0 %v5154
        %5218 = vmatpush1.msra.mxu0 %v5153
        %5219 = vmatprep.subr.mxu0 %v5156
        %5220 = vmatpush1.msra.mxu0 %v5155
        %5221 = vmatprep.subr.mxu0 %v5158
        %5222 = vmatpush1.msra.mxu0 %v5157
        %5223 = vmatprep.subr.mxu0 %v5160
        %5224 = vmatpush1.msra.mxu0 %v5159
        %5225 = vmatprep.subr.mxu0 %v5162
        %5226 = vmatpush1.msra.mxu0 %v5161
        %5227 = vmatprep.subr.mxu0 %v5164
        %5228 = vmatpush1.msra.mxu0 %v5163
        %5229 = vmatprep.subr.mxu0 %v5166
        %5230 = vmatpush1.msra.mxu0 %v5165
        %5231 = vmatprep.subr.mxu0 %v5168
        %5232 = vmatpush1.msra.mxu0 %v5167
        %5233 = vmatprep.subr.mxu0 %v5170
        %5234 = vmatpush1.msra.mxu0 %v5169
        %5235 = vmatprep.subr.mxu0 %v5172
        %5236 = vmatpush1.msra.mxu0 %v5171
        %5237 = vmatprep.subr.mxu0 %v5174
        %5238 = vmatpush1.msra.mxu0 %v5173
        %5239 = vmatprep.subr.mxu0 %v5176
        %5240 = vmatpush1.msra.mxu0 %v5175
        %5241 = vmatprep.subr.mxu0 %v5178
        %5242 = vmatpush1.msra.mxu0 %v5177
        %5243 = vmatprep.subr.mxu0 %v5180
        %5244 = vmatpush1.msra.mxu0 %v5179
        %5245 = vmatprep.subr.mxu0 %v5182
        %5246 = vmatpush1.msra.mxu0 %v5181
        %5247 = vmatprep.subr.mxu0 %v5184
        %5248 = vmatpush1.msra.mxu0 %v5183
        %5249 = vmatprep.mubr.f32.mxu0 %v5113
        %5250 = vmatmul.mubr.f32.gmra.mrb[0].mxu0 %v5111
        %v5251 = vpop.f32.mrb[0].mxu0
        %v5252 = vadd.f32 0.0, %v5251
        %v5253 = vpop.f32.mrb[0].mxu0
        %v5254 = vadd.f32 0.0, %v5253
        %5255 = vmatprep.mubr.f32.mxu0 %v5119
        %5256 = vmatmul.mubr.f32.gmra.mrb[0].mxu0 %v5117
        %v5257 = vpop.f32.mrb[0].mxu0
        %v5258 = vadd.f32 0.0, %v5257
        %v5259 = vpop.f32.mrb[0].mxu0
        %v5260 = vadd.f32 0.0, %v5259
        %5261 = vdwg.mxu0
        %5262 = vmatprep.subr.mxu0 %v4977
        %5263 = vmatpush1.msra.mxu0 %v4976
        %5264 = vmatprep.subr.mxu0 %v4979
        %5265 = vmatpush1.msra.mxu0 %v4978
        %5266 = vmatprep.subr.mxu0 %v4981
        %5267 = vmatpush1.msra.mxu0 %v4980
        %5268 = vmatprep.subr.mxu0 %v4983
        %5269 = vmatpush1.msra.mxu0 %v4982
        %5270 = vmatprep.subr.mxu0 %v4985
        %5271 = vmatpush1.msra.mxu0 %v4984
        %5272 = vmatprep.subr.mxu0 %v4987
        %5273 = vmatpush1.msra.mxu0 %v4986
        %5274 = vmatprep.subr.mxu0 %v4989
        %5275 = vmatpush1.msra.mxu0 %v4988
        %5276 = vmatprep.subr.mxu0 %v4991
        %5277 = vmatpush1.msra.mxu0 %v4990
        %5278 = vmatprep.subr.mxu0 %v4993
        %5279 = vmatpush1.msra.mxu0 %v4992
        %5280 = vmatprep.subr.mxu0 %v4995
        %5281 = vmatpush1.msra.mxu0 %v4994
        %5282 = vmatprep.subr.mxu0 %v4997
        %5283 = vmatpush1.msra.mxu0 %v4996
        %5284 = vmatprep.subr.mxu0 %v4999
        %5285 = vmatpush1.msra.mxu0 %v4998
        %5286 = vmatprep.subr.mxu0 %v5001
        %5287 = vmatpush1.msra.mxu0 %v5000
        %5288 = vmatprep.subr.mxu0 %v5003
        %5289 = vmatpush1.msra.mxu0 %v5002
        %5290 = vmatprep.subr.mxu0 %v5005
        %5291 = vmatpush1.msra.mxu0 %v5004
        %5292 = vmatprep.subr.mxu0 %v5007
        %5293 = vmatpush1.msra.mxu0 %v5006
        %5294 = vmatprep.subr.mxu0 %v5009
        %5295 = vmatpush1.msra.mxu0 %v5008
        %5296 = vmatprep.subr.mxu0 %v5011
        %5297 = vmatpush1.msra.mxu0 %v5010
        %5298 = vmatprep.subr.mxu0 %v5013
        %5299 = vmatpush1.msra.mxu0 %v5012
        %5300 = vmatprep.subr.mxu0 %v5015
        %5301 = vmatpush1.msra.mxu0 %v5014
        %5302 = vmatprep.subr.mxu0 %v5017
        %5303 = vmatpush1.msra.mxu0 %v5016
        %5304 = vmatprep.subr.mxu0 %v5019
        %5305 = vmatpush1.msra.mxu0 %v5018
        %5306 = vmatprep.subr.mxu0 %v5021
        %5307 = vmatpush1.msra.mxu0 %v5020
        %5308 = vmatprep.subr.mxu0 %v5023
        %5309 = vmatpush1.msra.mxu0 %v5022
        %5310 = vmatprep.subr.mxu0 %v5025
        %5311 = vmatpush1.msra.mxu0 %v5024
        %5312 = vmatprep.subr.mxu0 %v5027
        %5313 = vmatpush1.msra.mxu0 %v5026
        %5314 = vmatprep.subr.mxu0 %v5029
        %5315 = vmatpush1.msra.mxu0 %v5028
        %5316 = vmatprep.subr.mxu0 %v5031
        %5317 = vmatpush1.msra.mxu0 %v5030
        %5318 = vmatprep.subr.mxu0 %v5033
        %5319 = vmatpush1.msra.mxu0 %v5032
        %5320 = vmatprep.subr.mxu0 %v5035
        %5321 = vmatpush1.msra.mxu0 %v5034
        %5322 = vmatprep.subr.mxu0 %v5037
        %5323 = vmatpush1.msra.mxu0 %v5036
        %5324 = vmatprep.subr.mxu0 %v5039
        %5325 = vmatpush1.msra.mxu0 %v5038
        %5326 = vmatprep.mubr.f32.mxu0 %v4968
        %5327 = vmatmul.mubr.f32.gmra.mrb[0].mxu0 %v4966
        %v5328 = vpop.f32.mrb[0].mxu0
        %v5329 = vadd.f32 %v5252, %v5328
        %v5330 = vpop.f32.mrb[0].mxu0
        %v5331 = vadd.f32 %v5254, %v5330
        %5332 = vmatprep.mubr.f32.mxu0 %v4974
        %5333 = vmatmul.mubr.f32.gmra.mrb[0].mxu0 %v4972
        %v5334 = vpop.f32.mrb[0].mxu0
        %v5335 = vadd.f32 %v5258, %v5334
        %v5336 = vpop.f32.mrb[0].mxu0
        %v5337 = vadd.f32 %v5260, %v5336
        %5338 = vdwg.mxu0
        %v5339 = vsel %vm4888, %v2487, 0
        %v5341 = vsel %vm4888, %v2489, 0
        %5343 = vmatprep.subr.mxu0 %v4881
        %5344 = vmatpush1.msra.mxu0 %v4880
        %5345 = vmatprep.subr.mxu0 %v4883
        %5346 = vmatpush1.msra.mxu0 %v4882
        %5347 = vmatprep.subr.mxu0 %v4885
        %5348 = vmatpush1.msra.mxu0 %v4884
        %5349 = vmatprep.subr.mxu0 %v4897
        %5350 = vmatpush1.msra.mxu0 %v4894
        %5351 = vmatprep.subr.mxu0 0.0
        %5352 = vmatpush1.msra.mxu0 0.0
        %5353 = vmatprep.subr.mxu0 0.0
        %5354 = vmatpush1.msra.mxu0 0.0
        %5355 = vmatprep.subr.mxu0 0.0
        %5356 = vmatpush1.msra.mxu0 0.0
        %5357 = vmatprep.subr.mxu0 0.0
        %5358 = vmatpush1.msra.mxu0 0.0
        %5359 = vmatprep.subr.mxu0 0.0
        %5360 = vmatpush1.msra.mxu0 0.0
        %5361 = vmatprep.subr.mxu0 0.0
        %5362 = vmatpush1.msra.mxu0 0.0
        %5363 = vmatprep.subr.mxu0 0.0
        %5364 = vmatpush1.msra.mxu0 0.0
        %5365 = vmatprep.subr.mxu0 0.0
        %5366 = vmatpush1.msra.mxu0 0.0
        %5367 = vmatprep.subr.mxu0 0.0
        %5368 = vmatpush1.msra.mxu0 0.0
        %5369 = vmatprep.subr.mxu0 0.0
        %5370 = vmatpush1.msra.mxu0 0.0
        %5371 = vmatprep.subr.mxu0 0.0
        %5372 = vmatpush1.msra.mxu0 0.0
        %5373 = vmatprep.subr.mxu0 0.0
        %5374 = vmatpush1.msra.mxu0 0.0
        %5375 = vmatprep.subr.mxu0 0.0
        %5376 = vmatpush1.msra.mxu0 0.0
        %5377 = vmatprep.subr.mxu0 0.0
        %5378 = vmatpush1.msra.mxu0 0.0
        %5379 = vmatprep.subr.mxu0 0.0
        %5380 = vmatpush1.msra.mxu0 0.0
        %5381 = vmatprep.subr.mxu0 0.0
        %5382 = vmatpush1.msra.mxu0 0.0
        %5383 = vmatprep.subr.mxu0 0.0
        %5384 = vmatpush1.msra.mxu0 0.0
        %5385 = vmatprep.subr.mxu0 0.0
        %5386 = vmatpush1.msra.mxu0 0.0
        %5387 = vmatprep.subr.mxu0 0.0
        %5388 = vmatpush1.msra.mxu0 0.0
        %5389 = vmatprep.subr.mxu0 0.0
        %5390 = vmatpush1.msra.mxu0 0.0
        %5391 = vmatprep.subr.mxu0 0.0
        %5392 = vmatpush1.msra.mxu0 0.0
        %5393 = vmatprep.subr.mxu0 0.0
        %5394 = vmatpush1.msra.mxu0 0.0
        %5395 = vmatprep.subr.mxu0 0.0
        %5396 = vmatpush1.msra.mxu0 0.0
        %5397 = vmatprep.subr.mxu0 0.0
        %5398 = vmatpush1.msra.mxu0 0.0
        %5399 = vmatprep.subr.mxu0 0.0
        %5400 = vmatpush1.msra.mxu0 0.0
        %5401 = vmatprep.subr.mxu0 0.0
        %5402 = vmatpush1.msra.mxu0 0.0
        %5403 = vmatprep.subr.mxu0 0.0
        %5404 = vmatpush1.msra.mxu0 0.0
        %5405 = vmatprep.subr.mxu0 0.0
        %5406 = vmatpush1.msra.mxu0 0.0
        %5407 = vmatprep.mubr.f32.mxu0 0.0
        %5408 = vmatmul.mubr.f32.gmra.mrb[0].mxu0 %v5339
        %v5409 = vpop.f32.mrb[0].mxu0
        %v5410 = vadd.f32 0.0, %v5409
        %v5411 = vpop.f32.mrb[0].mxu0
        %v5412 = vadd.f32 0.0, %v5411
        %5413 = vmatprep.mubr.f32.mxu0 0.0
        %5414 = vmatmul.mubr.f32.gmra.mrb[0].mxu0 %v5341
        %v5415 = vpop.f32.mrb[0].mxu0
        %v5416 = vadd.f32 0.0, %v5415
        %v5417 = vpop.f32.mrb[0].mxu0
        %v5418 = vadd.f32 0.0, %v5417
        %5419 = vdwg.mxu0
        %v5420 = vld [vmem:[#allocation10 + $0x400] sm:$0xff]
        %v5421 = vld [vmem:[#allocation10 + $0x408] sm:$0xff]
        %v5422 = vld [vmem:[#allocation10 + $0x410] sm:$0xff]
        %v5423 = vld [vmem:[#allocation10 + $0x418] sm:$0xff]
        %v5424 = vld [vmem:[#allocation10 + $0x420] sm:$0xff]
        %v5425 = vld [vmem:[#allocation10 + $0x428] sm:$0xff]
        %v5426 = vld [vmem:[#allocation10 + $0x430] sm:$0xff]
        %v5427 = vld [vmem:[#allocation10 + $0x438] sm:$0xff]
        %v5428 = vld [vmem:[#allocation10 + $0x440] sm:$0xff]
        %v5429 = vld [vmem:[#allocation10 + $0x448] sm:$0xff]
        %v5430 = vld [vmem:[#allocation10 + $0x450] sm:$0xff]
        %v5431 = vld [vmem:[#allocation10 + $0x458] sm:$0xff]
        %v5432 = vld [vmem:[#allocation10 + $0x460] sm:$0xff]
        %v5433 = vld [vmem:[#allocation10 + $0x468] sm:$0xff]
        %v5434 = vld [vmem:[#allocation10 + $0x470] sm:$0xff]
        %v5435 = vld [vmem:[#allocation10 + $0x478] sm:$0xff]
        %v5436 = vld [vmem:[#allocation10 + $0x480] sm:$0xff]
        %v5437 = vld [vmem:[#allocation10 + $0x488] sm:$0xff]
        %v5438 = vld [vmem:[#allocation10 + $0x490] sm:$0xff]
        %v5439 = vld [vmem:[#allocation10 + $0x498] sm:$0xff]
        %v5440 = vld [vmem:[#allocation10 + $0x4a0] sm:$0xff]
        %v5441 = vld [vmem:[#allocation10 + $0x4a8] sm:$0xff]
        %v5442 = vld [vmem:[#allocation10 + $0x4b0] sm:$0xff]
        %v5443 = vld [vmem:[#allocation10 + $0x4b8] sm:$0xff]
        %v5444 = vld [vmem:[#allocation10 + $0x4c0] sm:$0xff]
        %v5445 = vld [vmem:[#allocation10 + $0x4c8] sm:$0xff]
        %v5446 = vld [vmem:[#allocation10 + $0x4d0] sm:$0xff]
        %v5447 = vld [vmem:[#allocation10 + $0x4d8] sm:$0xff]
        %v5448 = vld [vmem:[#allocation10 + $0x4e0] sm:$0xff]
        %v5449 = vld [vmem:[#allocation10 + $0x4e8] sm:$0xff]
        %v5450 = vld [vmem:[#allocation10 + $0x4f0] sm:$0xff]
        %v5451 = vld [vmem:[#allocation10 + $0x4f8] sm:$0xff]
        %v5452 = vld [vmem:[#allocation10 + $0x500] sm:$0xff]
        %v5453 = vld [vmem:[#allocation10 + $0x508] sm:$0xff]
        %v5454 = vld [vmem:[#allocation10 + $0x510] sm:$0xff]
        %v5455 = vld [vmem:[#allocation10 + $0x518] sm:$0xff]
        %v5456 = vld [vmem:[#allocation10 + $0x520] sm:$0xff]
        %v5457 = vld [vmem:[#allocation10 + $0x528] sm:$0xff]
        %v5458 = vld [vmem:[#allocation10 + $0x530] sm:$0xff]
        %v5459 = vld [vmem:[#allocation10 + $0x538] sm:$0xff]
        %v5460 = vld [vmem:[#allocation10 + $0x540] sm:$0xff]
        %v5461 = vld [vmem:[#allocation10 + $0x548] sm:$0xff]
        %v5462 = vld [vmem:[#allocation10 + $0x550] sm:$0xff]
        %v5463 = vld [vmem:[#allocation10 + $0x558] sm:$0xff]
        %v5464 = vld [vmem:[#allocation10 + $0x560] sm:$0xff]
        %v5465 = vld [vmem:[#allocation10 + $0x568] sm:$0xff]
        %v5466 = vld [vmem:[#allocation10 + $0x570] sm:$0xff]
        %v5467 = vld [vmem:[#allocation10 + $0x578] sm:$0xff]
        %v5468 = vld [vmem:[#allocation10 + $0x580] sm:$0xff]
        %v5469 = vld [vmem:[#allocation10 + $0x588] sm:$0xff]
        %v5470 = vld [vmem:[#allocation10 + $0x590] sm:$0xff]
        %v5471 = vld [vmem:[#allocation10 + $0x598] sm:$0xff]
        %v5472 = vld [vmem:[#allocation10 + $0x5a0] sm:$0xff]
        %v5473 = vld [vmem:[#allocation10 + $0x5a8] sm:$0xff]
        %v5474 = vld [vmem:[#allocation10 + $0x5b0] sm:$0xff]
        %v5475 = vld [vmem:[#allocation10 + $0x5b8] sm:$0xff]
        %v5476 = vld [vmem:[#allocation10 + $0x5c0] sm:$0xff]
        %v5477 = vld [vmem:[#allocation10 + $0x5c8] sm:$0xff]
        %v5478 = vld [vmem:[#allocation10 + $0x5d0] sm:$0xff]
        %v5479 = vld [vmem:[#allocation10 + $0x5d8] sm:$0xff]
        %v5480 = vld [vmem:[#allocation10 + $0x5e0] sm:$0xff]
        %v5481 = vld [vmem:[#allocation10 + $0x5e8] sm:$0xff]
        %v5482 = vld [vmem:[#allocation10 + $0x5f0] sm:$0xff]
        %v5483 = vld [vmem:[#allocation10 + $0x5f8] sm:$0xff]
        %5484 = vmatprep.subr.mxu0 %v5421
        %5485 = vmatpush1.msra.mxu0 %v5420
        %5486 = vmatprep.subr.mxu0 %v5423
        %5487 = vmatpush1.msra.mxu0 %v5422
        %5488 = vmatprep.subr.mxu0 %v5425
        %5489 = vmatpush1.msra.mxu0 %v5424
        %5490 = vmatprep.subr.mxu0 %v5427
        %5491 = vmatpush1.msra.mxu0 %v5426
        %5492 = vmatprep.subr.mxu0 %v5429
        %5493 = vmatpush1.msra.mxu0 %v5428
        %5494 = vmatprep.subr.mxu0 %v5431
        %5495 = vmatpush1.msra.mxu0 %v5430
        %5496 = vmatprep.subr.mxu0 %v5433
        %5497 = vmatpush1.msra.mxu0 %v5432
        %5498 = vmatprep.subr.mxu0 %v5435
        %5499 = vmatpush1.msra.mxu0 %v5434
        %5500 = vmatprep.subr.mxu0 %v5437
        %5501 = vmatpush1.msra.mxu0 %v5436
        %5502 = vmatprep.subr.mxu0 %v5439
        %5503 = vmatpush1.msra.mxu0 %v5438
        %5504 = vmatprep.subr.mxu0 %v5441
        %5505 = vmatpush1.msra.mxu0 %v5440
        %5506 = vmatprep.subr.mxu0 %v5443
        %5507 = vmatpush1.msra.mxu0 %v5442
        %5508 = vmatprep.subr.mxu0 %v5445
        %5509 = vmatpush1.msra.mxu0 %v5444
        %5510 = vmatprep.subr.mxu0 %v5447
        %5511 = vmatpush1.msra.mxu0 %v5446
        %5512 = vmatprep.subr.mxu0 %v5449
        %5513 = vmatpush1.msra.mxu0 %v5448
        %5514 = vmatprep.subr.mxu0 %v5451
        %5515 = vmatpush1.msra.mxu0 %v5450
        %5516 = vmatprep.subr.mxu0 %v5453
        %5517 = vmatpush1.msra.mxu0 %v5452
        %5518 = vmatprep.subr.mxu0 %v5455
        %5519 = vmatpush1.msra.mxu0 %v5454
        %5520 = vmatprep.subr.mxu0 %v5457
        %5521 = vmatpush1.msra.mxu0 %v5456
        %5522 = vmatprep.subr.mxu0 %v5459
        %5523 = vmatpush1.msra.mxu0 %v5458
        %5524 = vmatprep.subr.mxu0 %v5461
        %5525 = vmatpush1.msra.mxu0 %v5460
        %5526 = vmatprep.subr.mxu0 %v5463
        %5527 = vmatpush1.msra.mxu0 %v5462
        %5528 = vmatprep.subr.mxu0 %v5465
        %5529 = vmatpush1.msra.mxu0 %v5464
        %5530 = vmatprep.subr.mxu0 %v5467
        %5531 = vmatpush1.msra.mxu0 %v5466
        %5532 = vmatprep.subr.mxu0 %v5469
        %5533 = vmatpush1.msra.mxu0 %v5468
        %5534 = vmatprep.subr.mxu0 %v5471
        %5535 = vmatpush1.msra.mxu0 %v5470
        %5536 = vmatprep.subr.mxu0 %v5473
        %5537 = vmatpush1.msra.mxu0 %v5472
        %5538 = vmatprep.subr.mxu0 %v5475
        %5539 = vmatpush1.msra.mxu0 %v5474
        %5540 = vmatprep.subr.mxu0 %v5477
        %5541 = vmatpush1.msra.mxu0 %v5476
        %5542 = vmatprep.subr.mxu0 %v5479
        %5543 = vmatpush1.msra.mxu0 %v5478
        %5544 = vmatprep.subr.mxu0 %v5481
        %5545 = vmatpush1.msra.mxu0 %v5480
        %5546 = vmatprep.subr.mxu0 %v5483
        %5547 = vmatpush1.msra.mxu0 %v5482
        %5548 = vmatprep.mubr.f32.mxu0 %v5412
        %5549 = vmatmul.mubr.f32.gmra.mrb[0].mxu0 %v5410
        %v5550 = vpop.f32.mrb[0].mxu0
        %v5551 = vadd.f32 0.0, %v5550
        %v5552 = vpop.f32.mrb[0].mxu0
        %v5553 = vadd.f32 0.0, %v5552
        %5554 = vmatprep.mubr.f32.mxu0 %v5418
        %5555 = vmatmul.mubr.f32.gmra.mrb[0].mxu0 %v5416
        %v5556 = vpop.f32.mrb[0].mxu0
        %v5557 = vadd.f32 0.0, %v5556
        %v5558 = vpop.f32.mrb[0].mxu0
        %v5559 = vadd.f32 0.0, %v5558
        %5560 = vdwg.mxu0
        %v5561 = vadd.f32 %v5329, %v5551
        %v5562 = vadd.f32 %v5331, %v5553
        %v5563 = vadd.f32 %v5335, %v5557
        %v5564 = vadd.f32 %v5337, %v5559
        %v5565 = vld [vmem:[#allocation11] sm:$0x3]
        %v5567 = vlaneseq
        %v5568 = vshrl.u32 %v5567, 7
        %v5569 = vsub.s32 0, %v5568
        %v5570 = vrot.slane %v5565, %v5569
        %v5571 = vlaneseq
        %v5572 = vshrl.u32 %v5571, 7
        %v5573 = vsub.s32 1, %v5572
        %v5574 = vrot.slane %v5565, %v5573
        %v5577 = vadd.f32 %v5561, %v5570
        %v5578 = vadd.f32 %v5562, %v5574
        %v5579 = vadd.f32 %v5563, %v5570
        %v5580 = vadd.f32 %v5564, %v5574
        %v5581 = vmul.f32 %v5577, 0.5
        %v5582 = vmul.f32 %v5578, 0.5
        %v5583 = vmul.f32 %v5579, 0.5
        %v5584 = vmul.f32 %v5580, 0.5
        %v5585 = vmul.f32 %v5577, 0.70710677
        %v5586 = vmul.f32 %v5578, 0.70710677
        %v5587 = vmul.f32 %v5579, 0.70710677
        %v5588 = vmul.f32 %v5580, 0.70710677
        %v5589 = verf.f32.pop %v5585
        %v5590 = verf.f32.pop %v5586
        %v5591 = verf.f32.pop %v5587
        %v5592 = verf.f32.pop %v5588
        %v5593 = vadd.f32 %v5589, 1.0
        %v5594 = vadd.f32 %v5590, 1.0
        %v5595 = vadd.f32 %v5591, 1.0
        %v5596 = vadd.f32 %v5592, 1.0
        %v5597 = vmul.f32 %v5581, %v5593
        %v5598 = vmul.f32 %v5582, %v5594
        %v5599 = vmul.f32 %v5583, %v5595
        %v5600 = vmul.f32 %v5584, %v5596
        %vm5601 = vcmask 72704
        %v5602 = vsel %vm5601, %v1370, 0
        %v5605 = vsel %vm3331, %v5599, 0
        %v5608 = vsel %vm3331, %v5600, 0
        %5610 = vmatprep.subr.mxu0 %v5598
        %5611 = vmatpush1.msra.mxu0 %v5597
        %5612 = vmatprep.subr.mxu0 %v5608
        %5613 = vmatpush1.msra.mxu0 %v5605
        %5614 = vmatprep.subr.mxu0 0.0
        %5615 = vmatpush1.msra.mxu0 0.0
        %5616 = vmatprep.subr.mxu0 0.0
        %5617 = vmatpush1.msra.mxu0 0.0
        %5618 = vmatprep.subr.mxu0 0.0
        %5619 = vmatpush1.msra.mxu0 0.0
        %5620 = vmatprep.subr.mxu0 0.0
        %5621 = vmatpush1.msra.mxu0 0.0
        %5622 = vmatprep.subr.mxu0 0.0
        %5623 = vmatpush1.msra.mxu0 0.0
        %5624 = vmatprep.subr.mxu0 0.0
        %5625 = vmatpush1.msra.mxu0 0.0
        %5626 = vmatprep.subr.mxu0 0.0
        %5627 = vmatpush1.msra.mxu0 0.0
        %5628 = vmatprep.subr.mxu0 0.0
        %5629 = vmatpush1.msra.mxu0 0.0
        %5630 = vmatprep.subr.mxu0 0.0
        %5631 = vmatpush1.msra.mxu0 0.0
        %5632 = vmatprep.subr.mxu0 0.0
        %5633 = vmatpush1.msra.mxu0 0.0
        %5634 = vmatprep.subr.mxu0 0.0
        %5635 = vmatpush1.msra.mxu0 0.0
        %5636 = vmatprep.subr.mxu0 0.0
        %5637 = vmatpush1.msra.mxu0 0.0
        %5638 = vmatprep.subr.mxu0 0.0
        %5639 = vmatpush1.msra.mxu0 0.0
        %5640 = vmatprep.subr.mxu0 0.0
        %5641 = vmatpush1.msra.mxu0 0.0
        %5642 = vmatprep.subr.mxu0 0.0
        %5643 = vmatpush1.msra.mxu0 0.0
        %5644 = vmatprep.subr.mxu0 0.0
        %5645 = vmatpush1.msra.mxu0 0.0
        %5646 = vmatprep.subr.mxu0 0.0
        %5647 = vmatpush1.msra.mxu0 0.0
        %5648 = vmatprep.subr.mxu0 0.0
        %5649 = vmatpush1.msra.mxu0 0.0
        %5650 = vmatprep.subr.mxu0 0.0
        %5651 = vmatpush1.msra.mxu0 0.0
        %5652 = vmatprep.subr.mxu0 0.0
        %5653 = vmatpush1.msra.mxu0 0.0
        %5654 = vmatprep.subr.mxu0 0.0
        %5655 = vmatpush1.msra.mxu0 0.0
        %5656 = vmatprep.subr.mxu0 0.0
        %5657 = vmatpush1.msra.mxu0 0.0
        %5658 = vmatprep.subr.mxu0 0.0
        %5659 = vmatpush1.msra.mxu0 0.0
        %5660 = vmatprep.subr.mxu0 0.0
        %5661 = vmatpush1.msra.mxu0 0.0
        %5662 = vmatprep.subr.mxu0 0.0
        %5663 = vmatpush1.msra.mxu0 0.0
        %5664 = vmatprep.subr.mxu0 0.0
        %5665 = vmatpush1.msra.mxu0 0.0
        %5666 = vmatprep.subr.mxu0 0.0
        %5667 = vmatpush1.msra.mxu0 0.0
        %5668 = vmatprep.subr.mxu0 0.0
        %5669 = vmatpush1.msra.mxu0 0.0
        %5670 = vmatprep.subr.mxu0 0.0
        %5671 = vmatpush1.msra.mxu0 0.0
        %5672 = vmatprep.subr.mxu0 0.0
        %5673 = vmatpush1.msra.mxu0 0.0
        %5674 = vmatprep.mubr.f32.mxu0 0.0
        %5675 = vmatmul.mubr.f32.gmra.mrb[0].mxu0 %v5602
        %v5676 = vpop.f32.mrb[0].mxu0
        %v5677 = vadd.f32 0.0, %v5676
        %v5678 = vpop.f32.mrb[0].mxu0
        %v5679 = vadd.f32 0.0, %v5678
        %5680 = vdwg.mxu0
        %v5681 = vld [vmem:[%s9] sm:$0xff]
        %v5682 = vld [vmem:[%s9 + $0x8] sm:$0xff]
        %v5683 = vld [vmem:[%s9 + $0x10] sm:$0xff]
        %v5684 = vld [vmem:[%s9 + $0x18] sm:$0xff]
        %v5685 = vld [vmem:[%s9 + $0x20] sm:$0xff]
        %v5686 = vld [vmem:[%s9 + $0x28] sm:$0xff]
        %v5687 = vld [vmem:[%s9 + $0x30] sm:$0xff]
        %v5688 = vld [vmem:[%s9 + $0x38] sm:$0xff]
        %v5689 = vld [vmem:[%s9 + $0x40] sm:$0xff]
        %v5690 = vld [vmem:[%s9 + $0x48] sm:$0xff]
        %v5691 = vld [vmem:[%s9 + $0x50] sm:$0xff]
        %v5692 = vld [vmem:[%s9 + $0x58] sm:$0xff]
        %v5693 = vld [vmem:[%s9 + $0x60] sm:$0xff]
        %v5694 = vld [vmem:[%s9 + $0x68] sm:$0xff]
        %v5695 = vld [vmem:[%s9 + $0x70] sm:$0xff]
        %v5696 = vld [vmem:[%s9 + $0x78] sm:$0xff]
        %v5697 = vld [vmem:[%s9 + $0x80] sm:$0xff]
        %v5698 = vld [vmem:[%s9 + $0x88] sm:$0xff]
        %v5699 = vld [vmem:[%s9 + $0x90] sm:$0xff]
        %v5700 = vld [vmem:[%s9 + $0x98] sm:$0xff]
        %v5701 = vld [vmem:[%s9 + $0xa0] sm:$0xff]
        %v5702 = vld [vmem:[%s9 + $0xa8] sm:$0xff]
        %v5703 = vld [vmem:[%s9 + $0xb0] sm:$0xff]
        %v5704 = vld [vmem:[%s9 + $0xb8] sm:$0xff]
        %v5705 = vld [vmem:[%s9 + $0xc0] sm:$0xff]
        %v5706 = vld [vmem:[%s9 + $0xc8] sm:$0xff]
        %v5707 = vld [vmem:[%s9 + $0xd0] sm:$0xff]
        %v5708 = vld [vmem:[%s9 + $0xd8] sm:$0xff]
        %v5709 = vld [vmem:[%s9 + $0xe0] sm:$0xff]
        %v5710 = vld [vmem:[%s9 + $0xe8] sm:$0xff]
        %v5711 = vld [vmem:[%s9 + $0xf0] sm:$0xff]
        %v5712 = vld [vmem:[%s9 + $0xf8] sm:$0xff]
        %v5713 = vsel %vm5601, %v1669, 0
        %5715 = vmatprep.subr.mxu0 %v5598
        %5716 = vmatpush1.msra.mxu0 %v5597
        %5717 = vmatprep.subr.mxu0 %v5608
        %5718 = vmatpush1.msra.mxu0 %v5605
        %5719 = vmatprep.subr.mxu0 0.0
        %5720 = vmatpush1.msra.mxu0 0.0
        %5721 = vmatprep.subr.mxu0 0.0
        %5722 = vmatpush1.msra.mxu0 0.0
        %5723 = vmatprep.subr.mxu0 0.0
        %5724 = vmatpush1.msra.mxu0 0.0
        %5725 = vmatprep.subr.mxu0 0.0
        %5726 = vmatpush1.msra.mxu0 0.0
        %5727 = vmatprep.subr.mxu0 0.0
        %5728 = vmatpush1.msra.mxu0 0.0
        %5729 = vmatprep.subr.mxu0 0.0
        %5730 = vmatpush1.msra.mxu0 0.0
        %5731 = vmatprep.subr.mxu0 0.0
        %5732 = vmatpush1.msra.mxu0 0.0
        %5733 = vmatprep.subr.mxu0 0.0
        %5734 = vmatpush1.msra.mxu0 0.0
        %5735 = vmatprep.subr.mxu0 0.0
        %5736 = vmatpush1.msra.mxu0 0.0
        %5737 = vmatprep.subr.mxu0 0.0
        %5738 = vmatpush1.msra.mxu0 0.0
        %5739 = vmatprep.subr.mxu0 0.0
        %5740 = vmatpush1.msra.mxu0 0.0
        %5741 = vmatprep.subr.mxu0 0.0
        %5742 = vmatpush1.msra.mxu0 0.0
        %5743 = vmatprep.subr.mxu0 0.0
        %5744 = vmatpush1.msra.mxu0 0.0
        %5745 = vmatprep.subr.mxu0 0.0
        %5746 = vmatpush1.msra.mxu0 0.0
        %5747 = vmatprep.subr.mxu0 0.0
        %5748 = vmatpush1.msra.mxu0 0.0
        %5749 = vmatprep.subr.mxu0 0.0
        %5750 = vmatpush1.msra.mxu0 0.0
        %5751 = vmatprep.subr.mxu0 0.0
        %5752 = vmatpush1.msra.mxu0 0.0
        %5753 = vmatprep.subr.mxu0 0.0
        %5754 = vmatpush1.msra.mxu0 0.0
        %5755 = vmatprep.subr.mxu0 0.0
        %5756 = vmatpush1.msra.mxu0 0.0
        %5757 = vmatprep.subr.mxu0 0.0
        %5758 = vmatpush1.msra.mxu0 0.0
        %5759 = vmatprep.subr.mxu0 0.0
        %5760 = vmatpush1.msra.mxu0 0.0
        %5761 = vmatprep.subr.mxu0 0.0
        %5762 = vmatpush1.msra.mxu0 0.0
        %5763 = vmatprep.subr.mxu0 0.0
        %5764 = vmatpush1.msra.mxu0 0.0
        %5765 = vmatprep.subr.mxu0 0.0
        %5766 = vmatpush1.msra.mxu0 0.0
        %5767 = vmatprep.subr.mxu0 0.0
        %5768 = vmatpush1.msra.mxu0 0.0
        %5769 = vmatprep.subr.mxu0 0.0
        %5770 = vmatpush1.msra.mxu0 0.0
        %5771 = vmatprep.subr.mxu0 0.0
        %5772 = vmatpush1.msra.mxu0 0.0
        %5773 = vmatprep.subr.mxu0 0.0
        %5774 = vmatpush1.msra.mxu0 0.0
        %5775 = vmatprep.subr.mxu0 0.0
        %5776 = vmatpush1.msra.mxu0 0.0
        %5777 = vmatprep.subr.mxu0 0.0
        %5778 = vmatpush1.msra.mxu0 0.0
        %5779 = vmatprep.mubr.f32.mxu0 0.0
        %5780 = vmatmul.mubr.f32.gmra.mrb[0].mxu0 %v5713
        %v5781 = vpop.f32.mrb[0].mxu0
        %v5782 = vadd.f32 0.0, %v5781
        %v5783 = vpop.f32.mrb[0].mxu0
        %v5784 = vadd.f32 0.0, %v5783
        %5785 = vdwg.mxu0
        %v5786 = vld [vmem:[%s9 + $0x100] sm:$0xff]
        %v5787 = vld [vmem:[%s9 + $0x108] sm:$0xff]
        %v5788 = vld [vmem:[%s9 + $0x110] sm:$0xff]
        %v5789 = vld [vmem:[%s9 + $0x118] sm:$0xff]
        %v5790 = vld [vmem:[%s9 + $0x120] sm:$0xff]
        %v5791 = vld [vmem:[%s9 + $0x128] sm:$0xff]
        %v5792 = vld [vmem:[%s9 + $0x130] sm:$0xff]
        %v5793 = vld [vmem:[%s9 + $0x138] sm:$0xff]
        %v5794 = vld [vmem:[%s9 + $0x140] sm:$0xff]
        %v5795 = vld [vmem:[%s9 + $0x148] sm:$0xff]
        %v5796 = vld [vmem:[%s9 + $0x150] sm:$0xff]
        %v5797 = vld [vmem:[%s9 + $0x158] sm:$0xff]
        %v5798 = vld [vmem:[%s9 + $0x160] sm:$0xff]
        %v5799 = vld [vmem:[%s9 + $0x168] sm:$0xff]
        %v5800 = vld [vmem:[%s9 + $0x170] sm:$0xff]
        %v5801 = vld [vmem:[%s9 + $0x178] sm:$0xff]
        %v5802 = vld [vmem:[%s9 + $0x180] sm:$0xff]
        %v5803 = vld [vmem:[%s9 + $0x188] sm:$0xff]
        %v5804 = vld [vmem:[%s9 + $0x190] sm:$0xff]
        %v5805 = vld [vmem:[%s9 + $0x198] sm:$0xff]
        %v5806 = vld [vmem:[%s9 + $0x1a0] sm:$0xff]
        %v5807 = vld [vmem:[%s9 + $0x1a8] sm:$0xff]
        %v5808 = vld [vmem:[%s9 + $0x1b0] sm:$0xff]
        %v5809 = vld [vmem:[%s9 + $0x1b8] sm:$0xff]
        %v5810 = vld [vmem:[%s9 + $0x1c0] sm:$0xff]
        %v5811 = vld [vmem:[%s9 + $0x1c8] sm:$0xff]
        %v5812 = vld [vmem:[%s9 + $0x1d0] sm:$0xff]
        %v5813 = vld [vmem:[%s9 + $0x1d8] sm:$0xff]
        %v5814 = vld [vmem:[%s9 + $0x1e0] sm:$0xff]
        %v5815 = vld [vmem:[%s9 + $0x1e8] sm:$0xff]
        %v5816 = vld [vmem:[%s9 + $0x1f0] sm:$0xff]
        %v5817 = vld [vmem:[%s9 + $0x1f8] sm:$0xff]
        %5818 = vmatprep.subr.mxu0 0.0
        %5819 = vmatpush1.msra.mxu0 %v5786
        %5820 = vmatprep.subr.mxu0 0.0
        %5821 = vmatpush1.msra.mxu0 %v5787
        %5822 = vmatprep.subr.mxu0 0.0
        %5823 = vmatpush1.msra.mxu0 %v5788
        %5824 = vmatprep.subr.mxu0 0.0
        %5825 = vmatpush1.msra.mxu0 %v5789
        %5826 = vmatprep.subr.mxu0 0.0
        %5827 = vmatpush1.msra.mxu0 %v5790
        %5828 = vmatprep.subr.mxu0 0.0
        %5829 = vmatpush1.msra.mxu0 %v5791
        %5830 = vmatprep.subr.mxu0 0.0
        %5831 = vmatpush1.msra.mxu0 %v5792
        %5832 = vmatprep.subr.mxu0 0.0
        %5833 = vmatpush1.msra.mxu0 %v5793
        %5834 = vmatprep.subr.mxu0 0.0
        %5835 = vmatpush1.msra.mxu0 %v5794
        %5836 = vmatprep.subr.mxu0 0.0
        %5837 = vmatpush1.msra.mxu0 %v5795
        %5838 = vmatprep.subr.mxu0 0.0
        %5839 = vmatpush1.msra.mxu0 %v5796
        %5840 = vmatprep.subr.mxu0 0.0
        %5841 = vmatpush1.msra.mxu0 %v5797
        %5842 = vmatprep.subr.mxu0 0.0
        %5843 = vmatpush1.msra.mxu0 %v5798
        %5844 = vmatprep.subr.mxu0 0.0
        %5845 = vmatpush1.msra.mxu0 %v5799
        %5846 = vmatprep.subr.mxu0 0.0
        %5847 = vmatpush1.msra.mxu0 %v5800
        %5848 = vmatprep.subr.mxu0 0.0
        %5849 = vmatpush1.msra.mxu0 %v5801
        %5850 = vmatprep.subr.mxu0 0.0
        %5851 = vmatpush1.msra.mxu0 %v5802
        %5852 = vmatprep.subr.mxu0 0.0
        %5853 = vmatpush1.msra.mxu0 %v5803
        %5854 = vmatprep.subr.mxu0 0.0
        %5855 = vmatpush1.msra.mxu0 %v5804
        %5856 = vmatprep.subr.mxu0 0.0
        %5857 = vmatpush1.msra.mxu0 %v5805
        %5858 = vmatprep.subr.mxu0 0.0
        %5859 = vmatpush1.msra.mxu0 %v5806
        %5860 = vmatprep.subr.mxu0 0.0
        %5861 = vmatpush1.msra.mxu0 %v5807
        %5862 = vmatprep.subr.mxu0 0.0
        %5863 = vmatpush1.msra.mxu0 %v5808
        %5864 = vmatprep.subr.mxu0 0.0
        %5865 = vmatpush1.msra.mxu0 %v5809
        %5866 = vmatprep.subr.mxu0 0.0
        %5867 = vmatpush1.msra.mxu0 %v5810
        %5868 = vmatprep.subr.mxu0 0.0
        %5869 = vmatpush1.msra.mxu0 %v5811
        %5870 = vmatprep.subr.mxu0 0.0
        %5871 = vmatpush1.msra.mxu0 %v5812
        %5872 = vmatprep.subr.mxu0 0.0
        %5873 = vmatpush1.msra.mxu0 %v5813
        %5874 = vmatprep.subr.mxu0 0.0
        %5875 = vmatpush1.msra.mxu0 %v5814
        %5876 = vmatprep.subr.mxu0 0.0
        %5877 = vmatpush1.msra.mxu0 %v5815
        %5878 = vmatprep.subr.mxu0 0.0
        %5879 = vmatpush1.msra.mxu0 %v5816
        %5880 = vmatprep.subr.mxu0 0.0
        %5881 = vmatpush1.msra.mxu0 %v5817
        %5882 = vmatprep.mubr.f32.mxu0 %v5784
        %5883 = vmatmul.mubr.f32.gmra.mrb[0].mxu0 %v5782
        %v5884 = vpop.f32.mrb[0].mxu0
        %v5885 = vadd.f32 0.0, %v5884
        %v5886 = vpop.f32.mrb[0].mxu0
        %5887 = vdwg.mxu0
        %5888 = vmatprep.subr.mxu0 0.0
        %5889 = vmatpush1.msra.mxu0 %v5681
        %5890 = vmatprep.subr.mxu0 0.0
        %5891 = vmatpush1.msra.mxu0 %v5682
        %5892 = vmatprep.subr.mxu0 0.0
        %5893 = vmatpush1.msra.mxu0 %v5683
        %5894 = vmatprep.subr.mxu0 0.0
        %5895 = vmatpush1.msra.mxu0 %v5684
        %5896 = vmatprep.subr.mxu0 0.0
        %5897 = vmatpush1.msra.mxu0 %v5685
        %5898 = vmatprep.subr.mxu0 0.0
        %5899 = vmatpush1.msra.mxu0 %v5686
        %5900 = vmatprep.subr.mxu0 0.0
        %5901 = vmatpush1.msra.mxu0 %v5687
        %5902 = vmatprep.subr.mxu0 0.0
        %5903 = vmatpush1.msra.mxu0 %v5688
        %5904 = vmatprep.subr.mxu0 0.0
        %5905 = vmatpush1.msra.mxu0 %v5689
        %5906 = vmatprep.subr.mxu0 0.0
        %5907 = vmatpush1.msra.mxu0 %v5690
        %5908 = vmatprep.subr.mxu0 0.0
        %5909 = vmatpush1.msra.mxu0 %v5691
        %5910 = vmatprep.subr.mxu0 0.0
        %5911 = vmatpush1.msra.mxu0 %v5692
        %5912 = vmatprep.subr.mxu0 0.0
        %5913 = vmatpush1.msra.mxu0 %v5693
        %5914 = vmatprep.subr.mxu0 0.0
        %5915 = vmatpush1.msra.mxu0 %v5694
        %5916 = vmatprep.subr.mxu0 0.0
        %5917 = vmatpush1.msra.mxu0 %v5695
        %5918 = vmatprep.subr.mxu0 0.0
        %5919 = vmatpush1.msra.mxu0 %v5696
        %5920 = vmatprep.subr.mxu0 0.0
        %5921 = vmatpush1.msra.mxu0 %v5697
        %5922 = vmatprep.subr.mxu0 0.0
        %5923 = vmatpush1.msra.mxu0 %v5698
        %5924 = vmatprep.subr.mxu0 0.0
        %5925 = vmatpush1.msra.mxu0 %v5699
        %5926 = vmatprep.subr.mxu0 0.0
        %5927 = vmatpush1.msra.mxu0 %v5700
        %5928 = vmatprep.subr.mxu0 0.0
        %5929 = vmatpush1.msra.mxu0 %v5701
        %5930 = vmatprep.subr.mxu0 0.0
        %5931 = vmatpush1.msra.mxu0 %v5702
        %5932 = vmatprep.subr.mxu0 0.0
        %5933 = vmatpush1.msra.mxu0 %v5703
        %5934 = vmatprep.subr.mxu0 0.0
        %5935 = vmatpush1.msra.mxu0 %v5704
        %5936 = vmatprep.subr.mxu0 0.0
        %5937 = vmatpush1.msra.mxu0 %v5705
        %5938 = vmatprep.subr.mxu0 0.0
        %5939 = vmatpush1.msra.mxu0 %v5706
        %5940 = vmatprep.subr.mxu0 0.0
        %5941 = vmatpush1.msra.mxu0 %v5707
        %5942 = vmatprep.subr.mxu0 0.0
        %5943 = vmatpush1.msra.mxu0 %v5708
        %5944 = vmatprep.subr.mxu0 0.0
        %5945 = vmatpush1.msra.mxu0 %v5709
        %5946 = vmatprep.subr.mxu0 0.0
        %5947 = vmatpush1.msra.mxu0 %v5710
        %5948 = vmatprep.subr.mxu0 0.0
        %5949 = vmatpush1.msra.mxu0 %v5711
        %5950 = vmatprep.subr.mxu0 0.0
        %5951 = vmatpush1.msra.mxu0 %v5712
        %5952 = vmatprep.mubr.f32.mxu0 %v5679
        %5953 = vmatmul.mubr.f32.gmra.mrb[0].mxu0 %v5677
        %v5954 = vpop.f32.mrb[0].mxu0
        %v5955 = vadd.f32 %v5885, %v5954
        %v5956 = vpop.f32.mrb[0].mxu0
        %5957 = vdwg.mxu0
        %v5958 = vsel %vm5601, %v2487, 0
        %5960 = vmatprep.subr.mxu0 %v5598
        %5961 = vmatpush1.msra.mxu0 %v5597
        %5962 = vmatprep.subr.mxu0 %v5608
        %5963 = vmatpush1.msra.mxu0 %v5605
        %5964 = vmatprep.subr.mxu0 0.0
        %5965 = vmatpush1.msra.mxu0 0.0
        %5966 = vmatprep.subr.mxu0 0.0
        %5967 = vmatpush1.msra.mxu0 0.0
        %5968 = vmatprep.subr.mxu0 0.0
        %5969 = vmatpush1.msra.mxu0 0.0
        %5970 = vmatprep.subr.mxu0 0.0
        %5971 = vmatpush1.msra.mxu0 0.0
        %5972 = vmatprep.subr.mxu0 0.0
        %5973 = vmatpush1.msra.mxu0 0.0
        %5974 = vmatprep.subr.mxu0 0.0
        %5975 = vmatpush1.msra.mxu0 0.0
        %5976 = vmatprep.subr.mxu0 0.0
        %5977 = vmatpush1.msra.mxu0 0.0
        %5978 = vmatprep.subr.mxu0 0.0
        %5979 = vmatpush1.msra.mxu0 0.0
        %5980 = vmatprep.subr.mxu0 0.0
        %5981 = vmatpush1.msra.mxu0 0.0
        %5982 = vmatprep.subr.mxu0 0.0
        %5983 = vmatpush1.msra.mxu0 0.0
        %5984 = vmatprep.subr.mxu0 0.0
        %5985 = vmatpush1.msra.mxu0 0.0
        %5986 = vmatprep.subr.mxu0 0.0
        %5987 = vmatpush1.msra.mxu0 0.0
        %5988 = vmatprep.subr.mxu0 0.0
        %5989 = vmatpush1.msra.mxu0 0.0
        %5990 = vmatprep.subr.mxu0 0.0
        %5991 = vmatpush1.msra.mxu0 0.0
        %5992 = vmatprep.subr.mxu0 0.0
        %5993 = vmatpush1.msra.mxu0 0.0
        %5994 = vmatprep.subr.mxu0 0.0
        %5995 = vmatpush1.msra.mxu0 0.0
        %5996 = vmatprep.subr.mxu0 0.0
        %5997 = vmatpush1.msra.mxu0 0.0
        %5998 = vmatprep.subr.mxu0 0.0
        %5999 = vmatpush1.msra.mxu0 0.0
        %6000 = vmatprep.subr.mxu0 0.0
        %6001 = vmatpush1.msra.mxu0 0.0
        %6002 = vmatprep.subr.mxu0 0.0
        %6003 = vmatpush1.msra.mxu0 0.0
        %6004 = vmatprep.subr.mxu0 0.0
        %6005 = vmatpush1.msra.mxu0 0.0
        %6006 = vmatprep.subr.mxu0 0.0
        %6007 = vmatpush1.msra.mxu0 0.0
        %6008 = vmatprep.subr.mxu0 0.0
        %6009 = vmatpush1.msra.mxu0 0.0
        %6010 = vmatprep.subr.mxu0 0.0
        %6011 = vmatpush1.msra.mxu0 0.0
        %6012 = vmatprep.subr.mxu0 0.0
        %6013 = vmatpush1.msra.mxu0 0.0
        %6014 = vmatprep.subr.mxu0 0.0
        %6015 = vmatpush1.msra.mxu0 0.0
        %6016 = vmatprep.subr.mxu0 0.0
        %6017 = vmatpush1.msra.mxu0 0.0
        %6018 = vmatprep.subr.mxu0 0.0
        %6019 = vmatpush1.msra.mxu0 0.0
        %6020 = vmatprep.subr.mxu0 0.0
        %6021 = vmatpush1.msra.mxu0 0.0
        %6022 = vmatprep.subr.mxu0 0.0
        %6023 = vmatpush1.msra.mxu0 0.0
        %6024 = vmatprep.mubr.f32.mxu0 0.0
        %6025 = vmatmul.mubr.f32.gmra.mrb[0].mxu0 %v5958
        %v6026 = vpop.f32.mrb[0].mxu0
        %v6027 = vadd.f32 0.0, %v6026
        %v6028 = vpop.f32.mrb[0].mxu0
        %v6029 = vadd.f32 0.0, %v6028
        %6030 = vdwg.mxu0
        %v6031 = vld [vmem:[%s9 + $0x200] sm:$0xff]
        %v6032 = vld [vmem:[%s9 + $0x208] sm:$0xff]
        %v6033 = vld [vmem:[%s9 + $0x210] sm:$0xff]
        %v6034 = vld [vmem:[%s9 + $0x218] sm:$0xff]
        %v6035 = vld [vmem:[%s9 + $0x220] sm:$0xff]
        %v6036 = vld [vmem:[%s9 + $0x228] sm:$0xff]
        %v6037 = vld [vmem:[%s9 + $0x230] sm:$0xff]
        %v6038 = vld [vmem:[%s9 + $0x238] sm:$0xff]
        %v6039 = vld [vmem:[%s9 + $0x240] sm:$0xff]
        %v6040 = vld [vmem:[%s9 + $0x248] sm:$0xff]
        %v6041 = vld [vmem:[%s9 + $0x250] sm:$0xff]
        %v6042 = vld [vmem:[%s9 + $0x258] sm:$0xff]
        %v6043 = vld [vmem:[%s9 + $0x260] sm:$0xff]
        %v6044 = vld [vmem:[%s9 + $0x268] sm:$0xff]
        %v6045 = vld [vmem:[%s9 + $0x270] sm:$0xff]
        %v6046 = vld [vmem:[%s9 + $0x278] sm:$0xff]
        %v6047 = vld [vmem:[%s9 + $0x280] sm:$0xff]
        %v6048 = vld [vmem:[%s9 + $0x288] sm:$0xff]
        %v6049 = vld [vmem:[%s9 + $0x290] sm:$0xff]
        %v6050 = vld [vmem:[%s9 + $0x298] sm:$0xff]
        %v6051 = vld [vmem:[%s9 + $0x2a0] sm:$0xff]
        %v6052 = vld [vmem:[%s9 + $0x2a8] sm:$0xff]
        %v6053 = vld [vmem:[%s9 + $0x2b0] sm:$0xff]
        %v6054 = vld [vmem:[%s9 + $0x2b8] sm:$0xff]
        %v6055 = vld [vmem:[%s9 + $0x2c0] sm:$0xff]
        %v6056 = vld [vmem:[%s9 + $0x2c8] sm:$0xff]
        %v6057 = vld [vmem:[%s9 + $0x2d0] sm:$0xff]
        %v6058 = vld [vmem:[%s9 + $0x2d8] sm:$0xff]
        %v6059 = vld [vmem:[%s9 + $0x2e0] sm:$0xff]
        %v6060 = vld [vmem:[%s9 + $0x2e8] sm:$0xff]
        %v6061 = vld [vmem:[%s9 + $0x2f0] sm:$0xff]
        %v6062 = vld [vmem:[%s9 + $0x2f8] sm:$0xff]
        %6063 = vmatprep.subr.mxu0 0.0
        %6064 = vmatpush1.msra.mxu0 %v6031
        %6065 = vmatprep.subr.mxu0 0.0
        %6066 = vmatpush1.msra.mxu0 %v6032
        %6067 = vmatprep.subr.mxu0 0.0
        %6068 = vmatpush1.msra.mxu0 %v6033
        %6069 = vmatprep.subr.mxu0 0.0
        %6070 = vmatpush1.msra.mxu0 %v6034
        %6071 = vmatprep.subr.mxu0 0.0
        %6072 = vmatpush1.msra.mxu0 %v6035
        %6073 = vmatprep.subr.mxu0 0.0
        %6074 = vmatpush1.msra.mxu0 %v6036
        %6075 = vmatprep.subr.mxu0 0.0
        %6076 = vmatpush1.msra.mxu0 %v6037
        %6077 = vmatprep.subr.mxu0 0.0
        %6078 = vmatpush1.msra.mxu0 %v6038
        %6079 = vmatprep.subr.mxu0 0.0
        %6080 = vmatpush1.msra.mxu0 %v6039
        %6081 = vmatprep.subr.mxu0 0.0
        %6082 = vmatpush1.msra.mxu0 %v6040
        %6083 = vmatprep.subr.mxu0 0.0
        %6084 = vmatpush1.msra.mxu0 %v6041
        %6085 = vmatprep.subr.mxu0 0.0
        %6086 = vmatpush1.msra.mxu0 %v6042
        %6087 = vmatprep.subr.mxu0 0.0
        %6088 = vmatpush1.msra.mxu0 %v6043
        %6089 = vmatprep.subr.mxu0 0.0
        %6090 = vmatpush1.msra.mxu0 %v6044
        %6091 = vmatprep.subr.mxu0 0.0
        %6092 = vmatpush1.msra.mxu0 %v6045
        %6093 = vmatprep.subr.mxu0 0.0
        %6094 = vmatpush1.msra.mxu0 %v6046
        %6095 = vmatprep.subr.mxu0 0.0
        %6096 = vmatpush1.msra.mxu0 %v6047
        %6097 = vmatprep.subr.mxu0 0.0
        %6098 = vmatpush1.msra.mxu0 %v6048
        %6099 = vmatprep.subr.mxu0 0.0
        %6100 = vmatpush1.msra.mxu0 %v6049
        %6101 = vmatprep.subr.mxu0 0.0
        %6102 = vmatpush1.msra.mxu0 %v6050
        %6103 = vmatprep.subr.mxu0 0.0
        %6104 = vmatpush1.msra.mxu0 %v6051
        %6105 = vmatprep.subr.mxu0 0.0
        %6106 = vmatpush1.msra.mxu0 %v6052
        %6107 = vmatprep.subr.mxu0 0.0
        %6108 = vmatpush1.msra.mxu0 %v6053
        %6109 = vmatprep.subr.mxu0 0.0
        %6110 = vmatpush1.msra.mxu0 %v6054
        %6111 = vmatprep.subr.mxu0 0.0
        %6112 = vmatpush1.msra.mxu0 %v6055
        %6113 = vmatprep.subr.mxu0 0.0
        %6114 = vmatpush1.msra.mxu0 %v6056
        %6115 = vmatprep.subr.mxu0 0.0
        %6116 = vmatpush1.msra.mxu0 %v6057
        %6117 = vmatprep.subr.mxu0 0.0
        %6118 = vmatpush1.msra.mxu0 %v6058
        %6119 = vmatprep.subr.mxu0 0.0
        %6120 = vmatpush1.msra.mxu0 %v6059
        %6121 = vmatprep.subr.mxu0 0.0
        %6122 = vmatpush1.msra.mxu0 %v6060
        %6123 = vmatprep.subr.mxu0 0.0
        %6124 = vmatpush1.msra.mxu0 %v6061
        %6125 = vmatprep.subr.mxu0 0.0
        %6126 = vmatpush1.msra.mxu0 %v6062
        %6127 = vmatprep.mubr.f32.mxu0 %v6029
        %6128 = vmatmul.mubr.f32.gmra.mrb[0].mxu0 %v6027
        %v6129 = vpop.f32.mrb[0].mxu0
        %v6130 = vadd.f32 0.0, %v6129
        %v6131 = vpop.f32.mrb[0].mxu0
        %6132 = vdwg.mxu0
        %v6133 = vadd.f32 %v5955, %v6130
        %v6134 = vld [vmem:[#allocation13] sm:$0x1]
        %v6136 = vlaneseq
        %v6137 = vshrl.u32 %v6136, 7
        %v6138 = vsub.s32 0, %v6137
        %v6139 = vrot.slane %v6134, %v6138
        %v6141 = vadd.f32 %v6133, %v6139
        %v6142 = vmul.f32 %v6141, 0.5
        %v6143 = vmul.f32 %v6141, 0.70710677
        %v6144 = verf.f32.pop %v6143
        %v6145 = vadd.f32 %v6144, 1.0
        %v6146 = vmul.f32 %v6142, %v6145
        %vm6147 = vcmask 23552
        %v6148 = vsel %vm6147, %v1370, 0
        %v6151 = vsel %vm1426, %v6146, 0
        %6153 = vmatprep.subr.mxu0 0.0
        %6154 = vmatpush1.msra.mxu0 %v6151
        %6155 = vmatprep.subr.mxu0 0.0
        %6156 = vmatpush1.msra.mxu0 0.0
        %6157 = vmatprep.subr.mxu0 0.0
        %6158 = vmatpush1.msra.mxu0 0.0
        %6159 = vmatprep.subr.mxu0 0.0
        %6160 = vmatpush1.msra.mxu0 0.0
        %6161 = vmatprep.subr.mxu0 0.0
        %6162 = vmatpush1.msra.mxu0 0.0
        %6163 = vmatprep.subr.mxu0 0.0
        %6164 = vmatpush1.msra.mxu0 0.0
        %6165 = vmatprep.subr.mxu0 0.0
        %6166 = vmatpush1.msra.mxu0 0.0
        %6167 = vmatprep.subr.mxu0 0.0
        %6168 = vmatpush1.msra.mxu0 0.0
        %6169 = vmatprep.subr.mxu0 0.0
        %6170 = vmatpush1.msra.mxu0 0.0
        %6171 = vmatprep.subr.mxu0 0.0
        %6172 = vmatpush1.msra.mxu0 0.0
        %6173 = vmatprep.subr.mxu0 0.0
        %6174 = vmatpush1.msra.mxu0 0.0
        %6175 = vmatprep.subr.mxu0 0.0
        %6176 = vmatpush1.msra.mxu0 0.0
        %6177 = vmatprep.subr.mxu0 0.0
        %6178 = vmatpush1.msra.mxu0 0.0
        %6179 = vmatprep.subr.mxu0 0.0
        %6180 = vmatpush1.msra.mxu0 0.0
        %6181 = vmatprep.subr.mxu0 0.0
        %6182 = vmatpush1.msra.mxu0 0.0
        %6183 = vmatprep.subr.mxu0 0.0
        %6184 = vmatpush1.msra.mxu0 0.0
        %6185 = vmatprep.subr.mxu0 0.0
        %6186 = vmatpush1.msra.mxu0 0.0
        %6187 = vmatprep.subr.mxu0 0.0
        %6188 = vmatpush1.msra.mxu0 0.0
        %6189 = vmatprep.subr.mxu0 0.0
        %6190 = vmatpush1.msra.mxu0 0.0
        %6191 = vmatprep.subr.mxu0 0.0
        %6192 = vmatpush1.msra.mxu0 0.0
        %6193 = vmatprep.subr.mxu0 0.0
        %6194 = vmatpush1.msra.mxu0 0.0
        %6195 = vmatprep.subr.mxu0 0.0
        %6196 = vmatpush1.msra.mxu0 0.0
        %6197 = vmatprep.subr.mxu0 0.0
        %6198 = vmatpush1.msra.mxu0 0.0
        %6199 = vmatprep.subr.mxu0 0.0
        %6200 = vmatpush1.msra.mxu0 0.0
        %6201 = vmatprep.subr.mxu0 0.0
        %6202 = vmatpush1.msra.mxu0 0.0
        %6203 = vmatprep.subr.mxu0 0.0
        %6204 = vmatpush1.msra.mxu0 0.0
        %6205 = vmatprep.subr.mxu0 0.0
        %6206 = vmatpush1.msra.mxu0 0.0
        %6207 = vmatprep.subr.mxu0 0.0
        %6208 = vmatpush1.msra.mxu0 0.0
        %6209 = vmatprep.subr.mxu0 0.0
        %6210 = vmatpush1.msra.mxu0 0.0
        %6211 = vmatprep.subr.mxu0 0.0
        %6212 = vmatpush1.msra.mxu0 0.0
        %6213 = vmatprep.subr.mxu0 0.0
        %6214 = vmatpush1.msra.mxu0 0.0
        %6215 = vmatprep.subr.mxu0 0.0
        %6216 = vmatpush1.msra.mxu0 0.0
        %6217 = vmatprep.mubr.f32.mxu0 0.0
        %6218 = vmatmul.mubr.f32.gmra.mrb[0].mxu0 %v6148
        %v6219 = vpop.f32.mrb[0].mxu0
        %v6220 = vadd.f32 0.0, %v6219
        %v6221 = vpop.f32.mrb[0].mxu0
        %6222 = vdwg.mxu0
        %v6223 = vld [vmem:[#allocation14] sm:$0xff]
        %v6224 = vld [vmem:[#allocation14 + $0x8] sm:$0xff]
        %v6225 = vld [vmem:[#allocation14 + $0x10] sm:$0xff]
        %v6226 = vld [vmem:[#allocation14 + $0x18] sm:$0xff]
        %v6227 = vld [vmem:[#allocation14 + $0x20] sm:$0xff]
        %v6228 = vld [vmem:[#allocation14 + $0x28] sm:$0xff]
        %v6229 = vld [vmem:[#allocation14 + $0x30] sm:$0xff]
        %v6230 = vld [vmem:[#allocation14 + $0x38] sm:$0xff]
        %v6231 = vld [vmem:[#allocation14 + $0x40] sm:$0xff]
        %v6232 = vld [vmem:[#allocation14 + $0x48] sm:$0xff]
        %v6233 = vld [vmem:[#allocation14 + $0x50] sm:$0xff]
        %v6234 = vld [vmem:[#allocation14 + $0x58] sm:$0xff]
        %v6235 = vld [vmem:[#allocation14 + $0x60] sm:$0xff]
        %v6236 = vld [vmem:[#allocation14 + $0x68] sm:$0xff]
        %v6237 = vld [vmem:[#allocation14 + $0x70] sm:$0xff]
        %v6238 = vld [vmem:[#allocation14 + $0x78] sm:$0xff]
        %v6239 = vsel %vm6147, %v1669, 0
        %6241 = vmatprep.subr.mxu0 0.0
        %6242 = vmatpush1.msra.mxu0 %v6151
        %6243 = vmatprep.subr.mxu0 0.0
        %6244 = vmatpush1.msra.mxu0 0.0
        %6245 = vmatprep.subr.mxu0 0.0
        %6246 = vmatpush1.msra.mxu0 0.0
        %6247 = vmatprep.subr.mxu0 0.0
        %6248 = vmatpush1.msra.mxu0 0.0
        %6249 = vmatprep.subr.mxu0 0.0
        %6250 = vmatpush1.msra.mxu0 0.0
        %6251 = vmatprep.subr.mxu0 0.0
        %6252 = vmatpush1.msra.mxu0 0.0
        %6253 = vmatprep.subr.mxu0 0.0
        %6254 = vmatpush1.msra.mxu0 0.0
        %6255 = vmatprep.subr.mxu0 0.0
        %6256 = vmatpush1.msra.mxu0 0.0
        %6257 = vmatprep.subr.mxu0 0.0
        %6258 = vmatpush1.msra.mxu0 0.0
        %6259 = vmatprep.subr.mxu0 0.0
        %6260 = vmatpush1.msra.mxu0 0.0
        %6261 = vmatprep.subr.mxu0 0.0
        %6262 = vmatpush1.msra.mxu0 0.0
        %6263 = vmatprep.subr.mxu0 0.0
        %6264 = vmatpush1.msra.mxu0 0.0
        %6265 = vmatprep.subr.mxu0 0.0
        %6266 = vmatpush1.msra.mxu0 0.0
        %6267 = vmatprep.subr.mxu0 0.0
        %6268 = vmatpush1.msra.mxu0 0.0
        %6269 = vmatprep.subr.mxu0 0.0
        %6270 = vmatpush1.msra.mxu0 0.0
        %6271 = vmatprep.subr.mxu0 0.0
        %6272 = vmatpush1.msra.mxu0 0.0
        %6273 = vmatprep.subr.mxu0 0.0
        %6274 = vmatpush1.msra.mxu0 0.0
        %6275 = vmatprep.subr.mxu0 0.0
        %6276 = vmatpush1.msra.mxu0 0.0
        %6277 = vmatprep.subr.mxu0 0.0
        %6278 = vmatpush1.msra.mxu0 0.0
        %6279 = vmatprep.subr.mxu0 0.0
        %6280 = vmatpush1.msra.mxu0 0.0
        %6281 = vmatprep.subr.mxu0 0.0
        %6282 = vmatpush1.msra.mxu0 0.0
        %6283 = vmatprep.subr.mxu0 0.0
        %6284 = vmatpush1.msra.mxu0 0.0
        %6285 = vmatprep.subr.mxu0 0.0
        %6286 = vmatpush1.msra.mxu0 0.0
        %6287 = vmatprep.subr.mxu0 0.0
        %6288 = vmatpush1.msra.mxu0 0.0
        %6289 = vmatprep.subr.mxu0 0.0
        %6290 = vmatpush1.msra.mxu0 0.0
        %6291 = vmatprep.subr.mxu0 0.0
        %6292 = vmatpush1.msra.mxu0 0.0
        %6293 = vmatprep.subr.mxu0 0.0
        %6294 = vmatpush1.msra.mxu0 0.0
        %6295 = vmatprep.subr.mxu0 0.0
        %6296 = vmatpush1.msra.mxu0 0.0
        %6297 = vmatprep.subr.mxu0 0.0
        %6298 = vmatpush1.msra.mxu0 0.0
        %6299 = vmatprep.subr.mxu0 0.0
        %6300 = vmatpush1.msra.mxu0 0.0
        %6301 = vmatprep.subr.mxu0 0.0
        %6302 = vmatpush1.msra.mxu0 0.0
        %6303 = vmatprep.subr.mxu0 0.0
        %6304 = vmatpush1.msra.mxu0 0.0
        %6305 = vmatprep.mubr.f32.mxu0 0.0
        %6306 = vmatmul.mubr.f32.gmra.mrb[0].mxu0 %v6239
        %v6307 = vpop.f32.mrb[0].mxu0
        %v6308 = vadd.f32 0.0, %v6307
        %v6309 = vpop.f32.mrb[0].mxu0
        %6310 = vdwg.mxu0
        %v6311 = vld [vmem:[#allocation14 + $0x80] sm:$0xff]
        %v6312 = vld [vmem:[#allocation14 + $0x88] sm:$0xff]
        %v6313 = vld [vmem:[#allocation14 + $0x90] sm:$0xff]
        %v6314 = vld [vmem:[#allocation14 + $0x98] sm:$0xff]
        %v6315 = vld [vmem:[#allocation14 + $0xa0] sm:$0xff]
        %v6316 = vld [vmem:[#allocation14 + $0xa8] sm:$0xff]
        %v6317 = vld [vmem:[#allocation14 + $0xb0] sm:$0xff]
        %v6318 = vld [vmem:[#allocation14 + $0xb8] sm:$0xff]
        %v6319 = vld [vmem:[#allocation14 + $0xc0] sm:$0xff]
        %v6320 = vld [vmem:[#allocation14 + $0xc8] sm:$0xff]
        %v6321 = vld [vmem:[#allocation14 + $0xd0] sm:$0xff]
        %v6322 = vld [vmem:[#allocation14 + $0xd8] sm:$0xff]
        %v6323 = vld [vmem:[#allocation14 + $0xe0] sm:$0xff]
        %v6324 = vld [vmem:[#allocation14 + $0xe8] sm:$0xff]
        %v6325 = vld [vmem:[#allocation14 + $0xf0] sm:$0xff]
        %v6326 = vld [vmem:[#allocation14 + $0xf8] sm:$0xff]
        %6327 = vmatprep.subr.mxu0 0.0
        %6328 = vmatpush1.msra.mxu0 %v6311
        %6329 = vmatprep.subr.mxu0 0.0
        %6330 = vmatpush1.msra.mxu0 %v6312
        %6331 = vmatprep.subr.mxu0 0.0
        %6332 = vmatpush1.msra.mxu0 %v6313
        %6333 = vmatprep.subr.mxu0 0.0
        %6334 = vmatpush1.msra.mxu0 %v6314
        %6335 = vmatprep.subr.mxu0 0.0
        %6336 = vmatpush1.msra.mxu0 %v6315
        %6337 = vmatprep.subr.mxu0 0.0
        %6338 = vmatpush1.msra.mxu0 %v6316
        %6339 = vmatprep.subr.mxu0 0.0
        %6340 = vmatpush1.msra.mxu0 %v6317
        %6341 = vmatprep.subr.mxu0 0.0
        %6342 = vmatpush1.msra.mxu0 %v6318
        %6343 = vmatprep.subr.mxu0 0.0
        %6344 = vmatpush1.msra.mxu0 %v6319
        %6345 = vmatprep.subr.mxu0 0.0
        %6346 = vmatpush1.msra.mxu0 %v6320
        %6347 = vmatprep.subr.mxu0 0.0
        %6348 = vmatpush1.msra.mxu0 %v6321
        %6349 = vmatprep.subr.mxu0 0.0
        %6350 = vmatpush1.msra.mxu0 %v6322
        %6351 = vmatprep.subr.mxu0 0.0
        %6352 = vmatpush1.msra.mxu0 %v6323
        %6353 = vmatprep.subr.mxu0 0.0
        %6354 = vmatpush1.msra.mxu0 %v6324
        %6355 = vmatprep.subr.mxu0 0.0
        %6356 = vmatpush1.msra.mxu0 %v6325
        %6357 = vmatprep.subr.mxu0 0.0
        %6358 = vmatpush1.msra.mxu0 %v6326
        %6359 = vmatprep.subr.mxu0 0.0
        %6360 = vmatpush1.msra.mxu0 0.0
        %6361 = vmatprep.subr.mxu0 0.0
        %6362 = vmatpush1.msra.mxu0 0.0
        %6363 = vmatprep.subr.mxu0 0.0
        %6364 = vmatpush1.msra.mxu0 0.0
        %6365 = vmatprep.subr.mxu0 0.0
        %6366 = vmatpush1.msra.mxu0 0.0
        %6367 = vmatprep.subr.mxu0 0.0
        %6368 = vmatpush1.msra.mxu0 0.0
        %6369 = vmatprep.subr.mxu0 0.0
        %6370 = vmatpush1.msra.mxu0 0.0
        %6371 = vmatprep.subr.mxu0 0.0
        %6372 = vmatpush1.msra.mxu0 0.0
        %6373 = vmatprep.subr.mxu0 0.0
        %6374 = vmatpush1.msra.mxu0 0.0
        %6375 = vmatprep.subr.mxu0 0.0
        %6376 = vmatpush1.msra.mxu0 0.0
        %6377 = vmatprep.subr.mxu0 0.0
        %6378 = vmatpush1.msra.mxu0 0.0
        %6379 = vmatprep.subr.mxu0 0.0
        %6380 = vmatpush1.msra.mxu0 0.0
        %6381 = vmatprep.subr.mxu0 0.0
        %6382 = vmatpush1.msra.mxu0 0.0
        %6383 = vmatprep.subr.mxu0 0.0
        %6384 = vmatpush1.msra.mxu0 0.0
        %6385 = vmatprep.subr.mxu0 0.0
        %6386 = vmatpush1.msra.mxu0 0.0
        %6387 = vmatprep.subr.mxu0 0.0
        %6388 = vmatpush1.msra.mxu0 0.0
        %6389 = vmatprep.subr.mxu0 0.0
        %6390 = vmatpush1.msra.mxu0 0.0
        %6391 = vmatprep.mubr.f32.mxu0 0.0
        %6392 = vmatmul.mubr.f32.gmra.mrb[0].mxu0 %v6308
        %v6393 = vpop.f32.mrb[0].mxu0
        %v6394 = vadd.f32 0.0, %v6393
        %v6395 = vpop.f32.mrb[0].mxu0
        %6396 = vdwg.mxu0
        %6397 = vmatprep.subr.mxu0 0.0
        %6398 = vmatpush1.msra.mxu0 %v6223
        %6399 = vmatprep.subr.mxu0 0.0
        %6400 = vmatpush1.msra.mxu0 %v6224
        %6401 = vmatprep.subr.mxu0 0.0
        %6402 = vmatpush1.msra.mxu0 %v6225
        %6403 = vmatprep.subr.mxu0 0.0
        %6404 = vmatpush1.msra.mxu0 %v6226
        %6405 = vmatprep.subr.mxu0 0.0
        %6406 = vmatpush1.msra.mxu0 %v6227
        %6407 = vmatprep.subr.mxu0 0.0
        %6408 = vmatpush1.msra.mxu0 %v6228
        %6409 = vmatprep.subr.mxu0 0.0
        %6410 = vmatpush1.msra.mxu0 %v6229
        %6411 = vmatprep.subr.mxu0 0.0
        %6412 = vmatpush1.msra.mxu0 %v6230
        %6413 = vmatprep.subr.mxu0 0.0
        %6414 = vmatpush1.msra.mxu0 %v6231
        %6415 = vmatprep.subr.mxu0 0.0
        %6416 = vmatpush1.msra.mxu0 %v6232
        %6417 = vmatprep.subr.mxu0 0.0
        %6418 = vmatpush1.msra.mxu0 %v6233
        %6419 = vmatprep.subr.mxu0 0.0
        %6420 = vmatpush1.msra.mxu0 %v6234
        %6421 = vmatprep.subr.mxu0 0.0
        %6422 = vmatpush1.msra.mxu0 %v6235
        %6423 = vmatprep.subr.mxu0 0.0
        %6424 = vmatpush1.msra.mxu0 %v6236
        %6425 = vmatprep.subr.mxu0 0.0
        %6426 = vmatpush1.msra.mxu0 %v6237
        %6427 = vmatprep.subr.mxu0 0.0
        %6428 = vmatpush1.msra.mxu0 %v6238
        %6429 = vmatprep.subr.mxu0 0.0
        %6430 = vmatpush1.msra.mxu0 0.0
        %6431 = vmatprep.subr.mxu0 0.0
        %6432 = vmatpush1.msra.mxu0 0.0
        %6433 = vmatprep.subr.mxu0 0.0
        %6434 = vmatpush1.msra.mxu0 0.0
        %6435 = vmatprep.subr.mxu0 0.0
        %6436 = vmatpush1.msra.mxu0 0.0
        %6437 = vmatprep.subr.mxu0 0.0
        %6438 = vmatpush1.msra.mxu0 0.0
        %6439 = vmatprep.subr.mxu0 0.0
        %6440 = vmatpush1.msra.mxu0 0.0
        %6441 = vmatprep.subr.mxu0 0.0
        %6442 = vmatpush1.msra.mxu0 0.0
        %6443 = vmatprep.subr.mxu0 0.0
        %6444 = vmatpush1.msra.mxu0 0.0
        %6445 = vmatprep.subr.mxu0 0.0
        %6446 = vmatpush1.msra.mxu0 0.0
        %6447 = vmatprep.subr.mxu0 0.0
        %6448 = vmatpush1.msra.mxu0 0.0
        %6449 = vmatprep.subr.mxu0 0.0
        %6450 = vmatpush1.msra.mxu0 0.0
        %6451 = vmatprep.subr.mxu0 0.0
        %6452 = vmatpush1.msra.mxu0 0.0
        %6453 = vmatprep.subr.mxu0 0.0
        %6454 = vmatpush1.msra.mxu0 0.0
        %6455 = vmatprep.subr.mxu0 0.0
        %6456 = vmatpush1.msra.mxu0 0.0
        %6457 = vmatprep.subr.mxu0 0.0
        %6458 = vmatpush1.msra.mxu0 0.0
        %6459 = vmatprep.subr.mxu0 0.0
        %6460 = vmatpush1.msra.mxu0 0.0
        %6461 = vmatprep.mubr.f32.mxu0 0.0
        %6462 = vmatmul.mubr.f32.gmra.mrb[0].mxu0 %v6220
        %v6463 = vpop.f32.mrb[0].mxu0
        %v6464 = vadd.f32 %v6394, %v6463
        %v6465 = vpop.f32.mrb[0].mxu0
        %6466 = vdwg.mxu0
        %v6467 = vsel %vm6147, %v2487, 0
        %6469 = vmatprep.subr.mxu0 0.0
        %6470 = vmatpush1.msra.mxu0 %v6151
        %6471 = vmatprep.subr.mxu0 0.0
        %6472 = vmatpush1.msra.mxu0 0.0
        %6473 = vmatprep.subr.mxu0 0.0
        %6474 = vmatpush1.msra.mxu0 0.0
        %6475 = vmatprep.subr.mxu0 0.0
        %6476 = vmatpush1.msra.mxu0 0.0
        %6477 = vmatprep.subr.mxu0 0.0
        %6478 = vmatpush1.msra.mxu0 0.0
        %6479 = vmatprep.subr.mxu0 0.0
        %6480 = vmatpush1.msra.mxu0 0.0
        %6481 = vmatprep.subr.mxu0 0.0
        %6482 = vmatpush1.msra.mxu0 0.0
        %6483 = vmatprep.subr.mxu0 0.0
        %6484 = vmatpush1.msra.mxu0 0.0
        %6485 = vmatprep.subr.mxu0 0.0
        %6486 = vmatpush1.msra.mxu0 0.0
        %6487 = vmatprep.subr.mxu0 0.0
        %6488 = vmatpush1.msra.mxu0 0.0
        %6489 = vmatprep.subr.mxu0 0.0
        %6490 = vmatpush1.msra.mxu0 0.0
        %6491 = vmatprep.subr.mxu0 0.0
        %6492 = vmatpush1.msra.mxu0 0.0
        %6493 = vmatprep.subr.mxu0 0.0
        %6494 = vmatpush1.msra.mxu0 0.0
        %6495 = vmatprep.subr.mxu0 0.0
        %6496 = vmatpush1.msra.mxu0 0.0
        %6497 = vmatprep.subr.mxu0 0.0
        %6498 = vmatpush1.msra.mxu0 0.0
        %6499 = vmatprep.subr.mxu0 0.0
        %6500 = vmatpush1.msra.mxu0 0.0
        %6501 = vmatprep.subr.mxu0 0.0
        %6502 = vmatpush1.msra.mxu0 0.0
        %6503 = vmatprep.subr.mxu0 0.0
        %6504 = vmatpush1.msra.mxu0 0.0
        %6505 = vmatprep.subr.mxu0 0.0
        %6506 = vmatpush1.msra.mxu0 0.0
        %6507 = vmatprep.subr.mxu0 0.0
        %6508 = vmatpush1.msra.mxu0 0.0
        %6509 = vmatprep.subr.mxu0 0.0
        %6510 = vmatpush1.msra.mxu0 0.0
        %6511 = vmatprep.subr.mxu0 0.0
        %6512 = vmatpush1.msra.mxu0 0.0
        %6513 = vmatprep.subr.mxu0 0.0
        %6514 = vmatpush1.msra.mxu0 0.0
        %6515 = vmatprep.subr.mxu0 0.0
        %6516 = vmatpush1.msra.mxu0 0.0
        %6517 = vmatprep.subr.mxu0 0.0
        %6518 = vmatpush1.msra.mxu0 0.0
        %6519 = vmatprep.subr.mxu0 0.0
        %6520 = vmatpush1.msra.mxu0 0.0
        %6521 = vmatprep.subr.mxu0 0.0
        %6522 = vmatpush1.msra.mxu0 0.0
        %6523 = vmatprep.subr.mxu0 0.0
        %6524 = vmatpush1.msra.mxu0 0.0
        %6525 = vmatprep.subr.mxu0 0.0
        %6526 = vmatpush1.msra.mxu0 0.0
        %6527 = vmatprep.subr.mxu0 0.0
        %6528 = vmatpush1.msra.mxu0 0.0
        %6529 = vmatprep.subr.mxu0 0.0
        %6530 = vmatpush1.msra.mxu0 0.0
        %6531 = vmatprep.subr.mxu0 0.0
        %6532 = vmatpush1.msra.mxu0 0.0
        %6533 = vmatprep.mubr.f32.mxu0 0.0
        %6534 = vmatmul.mubr.f32.gmra.mrb[0].mxu0 %v6467
        %v6535 = vpop.f32.mrb[0].mxu0
        %v6536 = vadd.f32 0.0, %v6535
        %v6537 = vpop.f32.mrb[0].mxu0
        %6538 = vdwg.mxu0
        %v6539 = vld [vmem:[#allocation14 + $0x100] sm:$0xff]
        %v6540 = vld [vmem:[#allocation14 + $0x108] sm:$0xff]
        %v6541 = vld [vmem:[#allocation14 + $0x110] sm:$0xff]
        %v6542 = vld [vmem:[#allocation14 + $0x118] sm:$0xff]
        %v6543 = vld [vmem:[#allocation14 + $0x120] sm:$0xff]
        %v6544 = vld [vmem:[#allocation14 + $0x128] sm:$0xff]
        %v6545 = vld [vmem:[#allocation14 + $0x130] sm:$0xff]
        %v6546 = vld [vmem:[#allocation14 + $0x138] sm:$0xff]
        %v6547 = vld [vmem:[#allocation14 + $0x140] sm:$0xff]
        %v6548 = vld [vmem:[#allocation14 + $0x148] sm:$0xff]
        %v6549 = vld [vmem:[#allocation14 + $0x150] sm:$0xff]
        %v6550 = vld [vmem:[#allocation14 + $0x158] sm:$0xff]
        %v6551 = vld [vmem:[#allocation14 + $0x160] sm:$0xff]
        %v6552 = vld [vmem:[#allocation14 + $0x168] sm:$0xff]
        %v6553 = vld [vmem:[#allocation14 + $0x170] sm:$0xff]
        %v6554 = vld [vmem:[#allocation14 + $0x178] sm:$0xff]
        %6555 = vmatprep.subr.mxu0 0.0
        %6556 = vmatpush1.msra.mxu0 %v6539
        %6557 = vmatprep.subr.mxu0 0.0
        %6558 = vmatpush1.msra.mxu0 %v6540
        %6559 = vmatprep.subr.mxu0 0.0
        %6560 = vmatpush1.msra.mxu0 %v6541
        %6561 = vmatprep.subr.mxu0 0.0
        %6562 = vmatpush1.msra.mxu0 %v6542
        %6563 = vmatprep.subr.mxu0 0.0
        %6564 = vmatpush1.msra.mxu0 %v6543
        %6565 = vmatprep.subr.mxu0 0.0
        %6566 = vmatpush1.msra.mxu0 %v6544
        %6567 = vmatprep.subr.mxu0 0.0
        %6568 = vmatpush1.msra.mxu0 %v6545
        %6569 = vmatprep.subr.mxu0 0.0
        %6570 = vmatpush1.msra.mxu0 %v6546
        %6571 = vmatprep.subr.mxu0 0.0
        %6572 = vmatpush1.msra.mxu0 %v6547
        %6573 = vmatprep.subr.mxu0 0.0
        %6574 = vmatpush1.msra.mxu0 %v6548
        %6575 = vmatprep.subr.mxu0 0.0
        %6576 = vmatpush1.msra.mxu0 %v6549
        %6577 = vmatprep.subr.mxu0 0.0
        %6578 = vmatpush1.msra.mxu0 %v6550
        %6579 = vmatprep.subr.mxu0 0.0
        %6580 = vmatpush1.msra.mxu0 %v6551
        %6581 = vmatprep.subr.mxu0 0.0
        %6582 = vmatpush1.msra.mxu0 %v6552
        %6583 = vmatprep.subr.mxu0 0.0
        %6584 = vmatpush1.msra.mxu0 %v6553
        %6585 = vmatprep.subr.mxu0 0.0
        %6586 = vmatpush1.msra.mxu0 %v6554
        %6587 = vmatprep.subr.mxu0 0.0
        %6588 = vmatpush1.msra.mxu0 0.0
        %6589 = vmatprep.subr.mxu0 0.0
        %6590 = vmatpush1.msra.mxu0 0.0
        %6591 = vmatprep.subr.mxu0 0.0
        %6592 = vmatpush1.msra.mxu0 0.0
        %6593 = vmatprep.subr.mxu0 0.0
        %6594 = vmatpush1.msra.mxu0 0.0
        %6595 = vmatprep.subr.mxu0 0.0
        %6596 = vmatpush1.msra.mxu0 0.0
        %6597 = vmatprep.subr.mxu0 0.0
        %6598 = vmatpush1.msra.mxu0 0.0
        %6599 = vmatprep.subr.mxu0 0.0
        %6600 = vmatpush1.msra.mxu0 0.0
        %6601 = vmatprep.subr.mxu0 0.0
        %6602 = vmatpush1.msra.mxu0 0.0
        %6603 = vmatprep.subr.mxu0 0.0
        %6604 = vmatpush1.msra.mxu0 0.0
        %6605 = vmatprep.subr.mxu0 0.0
        %6606 = vmatpush1.msra.mxu0 0.0
        %6607 = vmatprep.subr.mxu0 0.0
        %6608 = vmatpush1.msra.mxu0 0.0
        %6609 = vmatprep.subr.mxu0 0.0
        %6610 = vmatpush1.msra.mxu0 0.0
        %6611 = vmatprep.subr.mxu0 0.0
        %6612 = vmatpush1.msra.mxu0 0.0
        %6613 = vmatprep.subr.mxu0 0.0
        %6614 = vmatpush1.msra.mxu0 0.0
        %6615 = vmatprep.subr.mxu0 0.0
        %6616 = vmatpush1.msra.mxu0 0.0
        %6617 = vmatprep.subr.mxu0 0.0
        %6618 = vmatpush1.msra.mxu0 0.0
        %6619 = vmatprep.mubr.f32.mxu0 0.0
        %6620 = vmatmul.mubr.f32.gmra.mrb[0].mxu0 %v6536
        %v6621 = vpop.f32.mrb[0].mxu0
        %v6622 = vadd.f32 0.0, %v6621
        %v6623 = vpop.f32.mrb[0].mxu0
        %6624 = vdwg.mxu0
        %v6625 = vadd.f32 %v6464, %v6622
        %v6626 = vld [vmem:[#allocation16] sm:$0x1]
        %v6627 = vadd.f32 %v6625, %v6626
        %v6628 = vmul.f32 %v6627, 0.5
        %v6629 = vmul.f32 %v6627, 0.70710677
        %v6630 = verf.f32.pop %v6629
        %v6631 = vadd.f32 %v6630, 1.0
        %v6632 = vmul.f32 %v6628, %v6631
        %6633 = vst [vmem:[%s551] sm:$0x1] %v6632
        %s6634 = sand.u32 %s318, 1
        %s6635 = scalar_lea.sflag [#allocation4], %s6634
        %s6636 = sand.u32 %s318, 1
        %s6637 = scalar_lea.vmem [#allocation17], %s6636
        // Predicated region
        $region109: #{tpu_custom_call.1} parent=71 // pred_check
          %p6638 = pneg %p328
        $region110: #{tpu_custom_call.1} parent=71 // pred_check_branch
          %6640 = sbr.rel (%p6638) target = $region112
        $region111: #{tpu_custom_call.1} parent=71 // pred_region
          %s6642 = ssub.s32 16, 16
          %6643 = vsyncadd %s6635, %s6642
          %s6644 = smul.addr %s32, 16
          %s6645 = scalar_lea.hbm %s13, %s6644
          %s6647 = sshll.u32 %s6637, 4
          %s6648 = int_to_ptr.vmem [resolvable:$true] %s6647
          %6650 = dma.vmem_to_hbm [thread:$0]  %s6648, 16, %s6645, %s6635
        $region112: #{tpu_custom_call.1} parent=71 // pred_fallthru
          _
      $region72: #{tpu_custom_call.1} parent=5 // pred_fallthru
        _
      %p6651 = scmp.le.s32.totalorder 2, %s27
      // Predicated region
      $region113: #{tpu_custom_call.1} parent=5 // pred_check
        %p6652 = pneg %p6651
      $region114: #{tpu_custom_call.1} parent=5 // pred_check_branch
        %6654 = sbr.rel (%p6652) target = $region116
      $region115: #{tpu_custom_call.1} parent=5 // pred_region
        %s6655 = ssub.s32 %s27, 2
        // Predicated region
        $region117: #{tpu_custom_call.1} parent=115 // pred_check
          %p6656 = pneg %p334
        $region118: #{tpu_custom_call.1} parent=115 // pred_check_branch
          %6658 = sbr.rel (%p6656) target = $region120
        $region119: #{tpu_custom_call.1} parent=115 // pred_region
          %s6659 = sand.u32 %s319, 1
          %s6660 = scalar_lea.sflag [#allocation4], %s6659
          %s6661 = sand.u32 %s319, 1
          %s6662 = scalar_lea.vmem [#allocation17], %s6661
          %6663 = dma.done %s6660, 16
        $region120: #{tpu_custom_call.1} parent=115 // pred_fallthru
          _
      $region116: #{tpu_custom_call.1} parent=5 // pred_fallthru
        _
    $region6: #{tpu_custom_call.1} parent=1 // loop_footer
      %s31 = sadd.s32 1, %s27
    $region7: #{tpu_custom_call.1} parent=1 // loop_footer_branch
      %26 = sbr.rel target = $region3
    $region8: #{tpu_custom_call.1} parent=1 // loop_exit
      _
    %6664 = vsyncpa [#allocation3], 1
    %s6665 = scalar_lea.sflag [#allocation3], 1
    %6666 = vsyncpa %s6665, 1
    %6667 = vsyncpa [#allocation6], 1
    %6668 = vsyncpa [#allocation9], 1
    %6669 = vsyncpa [#allocation12], 1
    %6670 = vsyncpa [#allocation15], 1
    %6671 = vsyncpa [#allocation4], 1
    %s6672 = scalar_lea.sflag [#allocation4], 1
    %6673 = vsyncpa %s6672, 1

</llo_original>
